<compile_context>
chip_gen: v6e
topology: v6e:2x2x1
jax: 0.10.0
libtpu: 0.0.40
codegen_flags: <defaults>
</compile_context>

<pallas_src>
from functools import partial

import jax
import jax.numpy as jnp
from jax.experimental import pallas as pl
from jax.experimental.pallas import tpu as pltpu


def _round_up(x, m):
    return ((x + m - 1) // m) * m


def _zero_border(ref):
    """Zero only the 1-element halo border of a (H+2, W+2, C) staging buffer."""
    n_rows, n_cols, c = ref.shape
    row0 = jnp.zeros((1, n_cols, c), ref.dtype)
    col0 = jnp.zeros((n_rows, 1, c), ref.dtype)
    ref[0:1, :, :] = row0
    ref[n_rows - 1:n_rows, :, :] = row0
    ref[:, 0:1, :] = col0
    ref[:, n_cols - 1:n_cols, :] = col0


def _convblock_fused_kernel(x_ref, w1_ref, b1_ref, w2_ref, s2_ref, t2_ref,
                            o_ref, xp_ref, hp_ref):
    # x_ref:  (1, H, W, Cp_in)       one batch element (NHWC, channel-padded, f32)
    # w1_ref: (9, Cp_in, Cp_out)     conv1 per-tap weights, bf16
    # b1_ref: (1, Cp_out)            conv1 bias, f32
    # w2_ref: (9, Cp_out, Cp_out)    conv2 per-tap weights, bf16
    # s2_ref: (1, Cp_out)            folded BN scale, f32
    # t2_ref: (1, Cp_out)            folded BN shift (includes conv2 bias), f32
    # o_ref:  (1, H, W, Cp_out)      f32 output
    # xp_ref: VMEM (H+2, W+2, Cp_in) zero-halo padded input staging
    # hp_ref: VMEM (H+2, W+2, Cp_out) zero-halo padded intermediate staging
    Hp, Wp, Cp_in = xp_ref.shape
    H, W = Hp - 2, Wp - 2
    Cp_out = hp_ref.shape[-1]

    # Halo borders only (interiors are fully overwritten below each grid step).
    _zero_border(xp_ref)
    _zero_border(hp_ref)

    # Stage the current batch element into the padded-input interior.
    xp_ref[1:H + 1, 1:W + 1, :] = x_ref[0]

    def conv3x3(src_ref, w_ref, cin):
        # 9 per-tap bf16 MXU matmuls accumulated in f32 (no im2col buffer).
        acc = None
        for kh in range(3):
            for kw in range(3):
                lhs = (src_ref[kh:kh + H, kw:kw + W, :]
                       .reshape(H * W, cin)
                       .astype(jnp.bfloat16))
                part = jnp.dot(lhs, w_ref[kh * 3 + kw],
                               preferred_element_type=jnp.float32)
                acc = part if acc is None else acc + part
        return acc

    # conv1 + bias + ReLU (dropout = identity in eval mode); epilogue in f32.
    h = jnp.maximum(conv3x3(xp_ref, w1_ref, Cp_in) + b1_ref[...], 0.0)
    hp_ref[1:H + 1, 1:W + 1, :] = h.reshape(H, W, Cp_out)

    # conv2 + folded BatchNorm affine + ReLU; epilogue in f32.
    y = conv3x3(hp_ref, w2_ref, Cp_out)
    y = jnp.maximum(y * s2_ref[...] + t2_ref[...], 0.0)
    o_ref[...] = y.reshape(1, H, W, Cp_out).astype(o_ref.dtype)


def convblock_pallas_nhwc(x_nhwc, prep):
    """Fused ConvBlock forward on channel-padded NHWC f32 activations (one pallas_call)."""
    N, H, W, Cp_in = x_nhwc.shape
    Cp_out = prep["w1_taps"].shape[-1]

    flops = 2 * N * H * W * 9 * (Cp_in * Cp_out + Cp_out * Cp_out)
    bytes_accessed = (4 * N * H * W * (Cp_in + Cp_out)
                      + 2 * 9 * (Cp_in * Cp_out + Cp_out * Cp_out)
                      + 4 * 3 * Cp_out)

    # Explicit scoped-VMEM budget: staging scratch + double-buffered in/out blocks +
    # weights, plus headroom for the in-flight f32 accumulators.
    scratch_bytes = 4 * (H + 2) * (W + 2) * (Cp_in + Cp_out)
    io_bytes = 2 * 4 * H * W * (Cp_in + Cp_out)
    weight_bytes = 2 * (2 * 9 * (Cp_in * Cp_out + Cp_out * Cp_out) + 3 * 4 * Cp_out)
    vmem_limit = int(min(64 << 20,
                         max(32 << 20,
                             scratch_bytes + io_bytes + weight_bytes + (8 << 20))))

    return pl.pallas_call(
        _convblock_fused_kernel,
        out_shape=jax.ShapeDtypeStruct((N, H, W, Cp_out), jnp.float32),
        grid=(N,),
        in_specs=[
            pl.BlockSpec((1, H, W, Cp_in), lambda n: (n, 0, 0, 0)),
            pl.BlockSpec((9, Cp_in, Cp_out), lambda n: (0, 0, 0)),
            pl.BlockSpec((1, Cp_out), lambda n: (0, 0)),
            pl.BlockSpec((9, Cp_out, Cp_out), lambda n: (0, 0, 0)),
            pl.BlockSpec((1, Cp_out), lambda n: (0, 0)),
            pl.BlockSpec((1, Cp_out), lambda n: (0, 0)),
        ],
        out_specs=pl.BlockSpec((1, H, W, Cp_out), lambda n: (n, 0, 0, 0)),
        scratch_shapes=[
            pltpu.VMEM((H + 2, W + 2, Cp_in), jnp.float32),
            pltpu.VMEM((H + 2, W + 2, Cp_out), jnp.float32),
        ],
        compiler_params=pltpu.CompilerParams(
            dimension_semantics=("parallel",),
            vmem_limit_bytes=vmem_limit),
        cost_estimate=pl.CostEstimate(
            flops=flops, transcendentals=0, bytes_accessed=bytes_accessed),
    )(x_nhwc, prep["w1_taps"], prep["b1"], prep["w2_taps"],
      prep["bn_scale"], prep["bn_shift"])


def make_convblock_params(key, inchannels, outchannels):
    """Deterministic parameter init (shapes match the PyTorch module __init__)."""
    ks = jax.random.split(key, 6)
    fan1 = inchannels * 9
    fan2 = outchannels * 9
    w1_oihw = jax.random.normal(ks[0], (outchannels, inchannels, 3, 3), jnp.float32) / jnp.sqrt(fan1)
    b1 = jax.random.normal(ks[1], (outchannels,), jnp.float32) * 0.01
    w2_oihw = jax.random.normal(ks[2], (outchannels, outchannels, 3, 3), jnp.float32) / jnp.sqrt(fan2)
    b2 = jax.random.normal(ks[3], (outchannels,), jnp.float32) * 0.01
    gamma = 1.0 + 0.1 * jax.random.normal(ks[4], (outchannels,), jnp.float32)
    beta = 0.1 * jax.random.normal(ks[5], (outchannels,), jnp.float32)
    running_mean = jnp.zeros((outchannels,), jnp.float32)
    running_var = jnp.ones((outchannels,), jnp.float32)
    return dict(w1=w1_oihw, b1=b1, w2=w2_oihw, b2=b2,
                gamma=gamma, beta=beta,
                running_mean=running_mean, running_var=running_var)


def prepare_convblock_params(params, eps=1e-5):
    """One-time folding: OIHW -> per-tap bf16 weights (zero-padded to 128-lane
    multiples), BatchNorm -> per-channel f32 affine.  Hoisted out of the per-step
    path so the kernel never re-transposes weights or re-derives BN scale/shift."""
    cout, cin = params["w1"].shape[0], params["w1"].shape[1]
    cp_in = _round_up(cin, 128)
    cp_out = _round_up(cout, 128)

    # OIHW -> (kh, kw, ci, co) -> (9, Cin, Cout), tap index = kh*3 + kw (matches kernel).
    w1_taps = jnp.transpose(params["w1"], (2, 3, 1, 0)).reshape(9, cin, cout)
    w2_taps = jnp.transpose(params["w2"], (2, 3, 1, 0)).reshape(9, cout, cout)
    w1_taps = jnp.pad(w1_taps, ((0, 0), (0, cp_in - cin), (0, cp_out - cout))).astype(jnp.bfloat16)
    w2_taps = jnp.pad(w2_taps, ((0, 0), (0, cp_out - cout), (0, cp_out - cout))).astype(jnp.bfloat16)

    bn_scale = params["gamma"] / jnp.sqrt(params["running_var"] + eps)
    bn_shift = (params["b2"] - params["running_mean"]) * bn_scale + params["beta"]

    def pad_vec(v):
        return jnp.pad(v, (0, cp_out - cout)).reshape(1, cp_out).astype(jnp.float32)

    return dict(w1_taps=w1_taps, w2_taps=w2_taps,
                b1=pad_vec(params["b1"]),
                bn_scale=pad_vec(bn_scale),
                bn_shift=pad_vec(bn_shift))


@partial(jax.jit, static_argnames=("out_channels",))
def convblock_forward(x_nchw, prep, *, out_channels):
    """ConvBlock forward with the PyTorch NCHW interface (inference semantics).

    The NCHW<->NHWC transposes and channel padding exist only to match the PyTorch
    interface / align lanes; a model kept NHWC with 128-multiple channels end-to-end
    should call convblock_pallas_nhwc directly and skip them.
    """
    # TODO(synk): training-mode Dropout/Dropout2d (stateful RNG masking) and BatchNorm
    #             batch-statistics update are not implemented; eval-mode semantics only.
    cp_in = prep["w1_taps"].shape[1]
    x = jnp.transpose(x_nchw, (0, 2, 3, 1))          # NCHW -> NHWC
    cin = x.shape[-1]
    if cp_in != cin:
        x = jnp.pad(x, ((0, 0), (0, 0), (0, 0), (0, cp_in - cin)))
    y = convblock_pallas_nhwc(x, prep)
    y = y[..., :out_channels]
    return jnp.transpose(y, (0, 3, 1, 2))            # NHWC -> NCHW


def _reference_forward(x_nchw, params, eps=1e-5):
    """Pure-JAX reference (lax conv, f32) for correctness checking."""
    dn = jax.lax.conv_dimension_numbers(x_nchw.shape, params["w1"].shape,
                                        ("NCHW", "OIHW", "NCHW"))
    y = jax.lax.conv_general_dilated(x_nchw, params["w1"], (1, 1), ((1, 1), (1, 1)),
                                     dimension_numbers=dn)
    y = y + params["b1"][None, :, None, None]
    y = jnp.maximum(y, 0.0)  # dropout is identity in eval mode
    dn2 = jax.lax.conv_dimension_numbers(y.shape, params["w2"].shape,
                                         ("NCHW", "OIHW", "NCHW"))
    z = jax.lax.conv_general_dilated(y, params["w2"], (1, 1), ((1, 1), (1, 1)),
                                     dimension_numbers=dn2)
    z = z + params["b2"][None, :, None, None]
    z = (z - params["running_mean"][None, :, None, None]) / jnp.sqrt(
        params["running_var"][None, :, None, None] + eps)
    z = z * params["gamma"][None, :, None, None] + params["beta"][None, :, None, None]
    return jnp.maximum(z, 0.0)


if __name__ == "__main__":
    key = jax.random.PRNGKey(0)
    k_x, k_p = jax.random.split(key)

    N, Cin, H, W = 2, 4, 16, 16
    Cout = 8
    x = jax.random.normal(k_x, (N, Cin, H, W), jnp.float32)
    params = make_convblock_params(k_p, Cin, Cout)
    prep = prepare_convblock_params(params)

    out = convblock_forward(x, prep, out_channels=Cout)
    out = jax.block_until_ready(out)

    ref = _reference_forward(x, params)
    assert out.shape == (N, Cout, H, W), out.shape
    # bf16 MXU operands (f32 accumulation/epilogue) -> slightly looser tolerance.
    assert jnp.allclose(out, ref, rtol=5e-2, atol=3e-2), float(jnp.max(jnp.abs(out - ref)))

    print("KERNEL_OK")
</pallas_src>

<mosaic_0001>
module attributes {stable_mosaic.version = 11 : i64} {
  func.func @_convblock_fused_kernel(%arg0: i32, %arg1: memref<1x16x16x128xf32, #tpu.memory_space<vmem>>, %arg2: memref<9x128x128xbf16, #tpu.memory_space<vmem>>, %arg3: memref<1x128xf32, #tpu.memory_space<vmem>>, %arg4: memref<9x128x128xbf16, #tpu.memory_space<vmem>>, %arg5: memref<1x128xf32, #tpu.memory_space<vmem>>, %arg6: memref<1x128xf32, #tpu.memory_space<vmem>>, %arg7: memref<1x16x16x128xf32, #tpu.memory_space<vmem>>, %arg8: memref<18x18x128xf32, #tpu.memory_space<vmem>>, %arg9: memref<18x18x128xf32, #tpu.memory_space<vmem>>) attributes {dimension_semantics = [#tpu.dimension_semantics<parallel>], iteration_bounds = array<i64: 2>, scalar_prefetch = 0 : i64, scratch_operands = 2 : i64, tpu.core_type = #tpu.core_type<tc>, window_params = [{transform_indices = @transform_0, window_bounds = array<i64: 1, 16, 16, 128>}, {pipeline_mode = #tpu.pipeline_mode<synchronous>, transform_indices = @transform_1, window_bounds = array<i64: 9, 128, 128>}, {pipeline_mode = #tpu.pipeline_mode<synchronous>, transform_indices = @transform_2, window_bounds = array<i64: 1, 128>}, {pipeline_mode = #tpu.pipeline_mode<synchronous>, transform_indices = @transform_3, window_bounds = array<i64: 9, 128, 128>}, {pipeline_mode = #tpu.pipeline_mode<synchronous>, transform_indices = @transform_4, window_bounds = array<i64: 1, 128>}, {pipeline_mode = #tpu.pipeline_mode<synchronous>, transform_indices = @transform_5, window_bounds = array<i64: 1, 128>}, {transform_indices = @transform_6, window_bounds = array<i64: 1, 16, 16, 128>}]} {
    %cst = arith.constant 0.000000e+00 : f32
    %0 = vector.broadcast %cst : f32 to vector<1x18x128xf32>
    %cst_0 = arith.constant 0.000000e+00 : f32
    %1 = vector.broadcast %cst_0 : f32 to vector<18x1x128xf32>
    %c0 = arith.constant 0 : index
    %c0_1 = arith.constant 0 : index
    %c0_2 = arith.constant 0 : index
    %2 = vector.load %arg8[%c0, %c0_1, %c0_2] : memref<18x18x128xf32, #tpu.memory_space<vmem>>, vector<1x18x128xf32>
    tpu.vector_store %arg8[%c0, %c0_1, %c0_2], %0 {strides = array<i32>} : memref<18x18x128xf32, #tpu.memory_space<vmem>>, vector<1x18x128xf32>,
    %c17 = arith.constant 17 : index
    %c0_3 = arith.constant 0 : index
    %c0_4 = arith.constant 0 : index
    %3 = vector.load %arg8[%c17, %c0_3, %c0_4] : memref<18x18x128xf32, #tpu.memory_space<vmem>>, vector<1x18x128xf32>
    tpu.vector_store %arg8[%c17, %c0_3, %c0_4], %0 {strides = array<i32>} : memref<18x18x128xf32, #tpu.memory_space<vmem>>, vector<1x18x128xf32>,
    %c0_5 = arith.constant 0 : index
    %c0_6 = arith.constant 0 : index
    %c0_7 = arith.constant 0 : index
    %4 = vector.load %arg8[%c0_5, %c0_6, %c0_7] : memref<18x18x128xf32, #tpu.memory_space<vmem>>, vector<18x1x128xf32>
    tpu.vector_store %arg8[%c0_5, %c0_6, %c0_7], %1 {strides = array<i32>} : memref<18x18x128xf32, #tpu.memory_space<vmem>>, vector<18x1x128xf32>,
    %c0_8 = arith.constant 0 : index
    %c17_9 = arith.constant 17 : index
    %c0_10 = arith.constant 0 : index
    %5 = vector.load %arg8[%c0_8, %c17_9, %c0_10] : memref<18x18x128xf32, #tpu.memory_space<vmem>>, vector<18x1x128xf32>
    tpu.vector_store %arg8[%c0_8, %c17_9, %c0_10], %1 {strides = array<i32>} : memref<18x18x128xf32, #tpu.memory_space<vmem>>, vector<18x1x128xf32>,
    %cst_11 = arith.constant 0.000000e+00 : f32
    %6 = vector.broadcast %cst_11 : f32 to vector<1x18x128xf32>
    %cst_12 = arith.constant 0.000000e+00 : f32
    %7 = vector.broadcast %cst_12 : f32 to vector<18x1x128xf32>
    %c0_13 = arith.constant 0 : index
    %c0_14 = arith.constant 0 : index
    %c0_15 = arith.constant 0 : index
    %8 = vector.load %arg9[%c0_13, %c0_14, %c0_15] : memref<18x18x128xf32, #tpu.memory_space<vmem>>, vector<1x18x128xf32>
    tpu.vector_store %arg9[%c0_13, %c0_14, %c0_15], %6 {strides = array<i32>} : memref<18x18x128xf32, #tpu.memory_space<vmem>>, vector<1x18x128xf32>,
    %c17_16 = arith.constant 17 : index
    %c0_17 = arith.constant 0 : index
    %c0_18 = arith.constant 0 : index
    %9 = vector.load %arg9[%c17_16, %c0_17, %c0_18] : memref<18x18x128xf32, #tpu.memory_space<vmem>>, vector<1x18x128xf32>
    tpu.vector_store %arg9[%c17_16, %c0_17, %c0_18], %6 {strides = array<i32>} : memref<18x18x128xf32, #tpu.memory_space<vmem>>, vector<1x18x128xf32>,
    %c0_19 = arith.constant 0 : index
    %c0_20 = arith.constant 0 : index
    %c0_21 = arith.constant 0 : index
    %10 = vector.load %arg9[%c0_19, %c0_20, %c0_21] : memref<18x18x128xf32, #tpu.memory_space<vmem>>, vector<18x1x128xf32>
    tpu.vector_store %arg9[%c0_19, %c0_20, %c0_21], %7 {strides = array<i32>} : memref<18x18x128xf32, #tpu.memory_space<vmem>>, vector<18x1x128xf32>,
    %c0_22 = arith.constant 0 : index
    %c17_23 = arith.constant 17 : index
    %c0_24 = arith.constant 0 : index
    %11 = vector.load %arg9[%c0_22, %c17_23, %c0_24] : memref<18x18x128xf32, #tpu.memory_space<vmem>>, vector<18x1x128xf32>
    tpu.vector_store %arg9[%c0_22, %c17_23, %c0_24], %7 {strides = array<i32>} : memref<18x18x128xf32, #tpu.memory_space<vmem>>, vector<18x1x128xf32>,
    %c0_25 = arith.constant 0 : index
    %c0_26 = arith.constant 0 : index
    %c0_27 = arith.constant 0 : index
    %c0_28 = arith.constant 0 : index
    %12 = vector.load %arg1[%c0_25, %c0_26, %c0_27, %c0_28] : memref<1x16x16x128xf32, #tpu.memory_space<vmem>>, vector<1x16x16x128xf32>
    %13 = vector.shape_cast %12 : vector<1x16x16x128xf32> to vector<16x16x128xf32>
    %c1 = arith.constant 1 : index
    %c1_29 = arith.constant 1 : index
    %c0_30 = arith.constant 0 : index
    %14 = vector.load %arg8[%c1, %c1_29, %c0_30] : memref<18x18x128xf32, #tpu.memory_space<vmem>>, vector<16x16x128xf32>
    tpu.vector_store %arg8[%c1, %c1_29, %c0_30], %13 {strides = array<i32>} : memref<18x18x128xf32, #tpu.memory_space<vmem>>, vector<16x16x128xf32>,
    %c0_31 = arith.constant 0 : index
    %c0_32 = arith.constant 0 : index
    %c0_33 = arith.constant 0 : index
    %15 = vector.load %arg8[%c0_31, %c0_32, %c0_33] : memref<18x18x128xf32, #tpu.memory_space<vmem>>, vector<16x16x128xf32>
    %16 = vector.shape_cast %15 : vector<16x16x128xf32> to vector<256x128xf32>
    %17 = arith.truncf %16 : vector<256x128xf32> to vector<256x128xbf16>
    %c0_34 = arith.constant 0 : index
    %c0_35 = arith.constant 0 : index
    %c0_36 = arith.constant 0 : index
    %18 = vector.load %arg2[%c0_34, %c0_35, %c0_36] : memref<9x128x128xbf16, #tpu.memory_space<vmem>>, vector<1x128x128xbf16>
    %19 = vector.shape_cast %18 : vector<1x128x128xbf16> to vector<128x128xbf16>
    %cst_37 = arith.constant dense<0.000000e+00> : vector<256x128xf32>
    %20 = tpu.matmul %17, %19, %cst_37 {dimension_numbers = #tpu.dot_dimension_numbers<[1], [0], [0], [1], [0, 0, 1, 1], [], []>} : vector<256x128xbf16>, vector<128x128xbf16>, vector<256x128xf32> -> vector<256x128xf32>
    %c0_38 = arith.constant 0 : index
    %c1_39 = arith.constant 1 : index
    %c0_40 = arith.constant 0 : index
    %21 = vector.load %arg8[%c0_38, %c1_39, %c0_40] : memref<18x18x128xf32, #tpu.memory_space<vmem>>, vector<16x16x128xf32>
    %22 = vector.shape_cast %21 : vector<16x16x128xf32> to vector<256x128xf32>
    %23 = arith.truncf %22 : vector<256x128xf32> to vector<256x128xbf16>
    %c1_41 = arith.constant 1 : index
    %c0_42 = arith.constant 0 : index
    %c0_43 = arith.constant 0 : index
    %24 = vector.load %arg2[%c1_41, %c0_42, %c0_43] : memref<9x128x128xbf16, #tpu.memory_space<vmem>>, vector<1x128x128xbf16>
    %25 = vector.shape_cast %24 : vector<1x128x128xbf16> to vector<128x128xbf16>
    %cst_44 = arith.constant dense<0.000000e+00> : vector<256x128xf32>
    %26 = tpu.matmul %23, %25, %cst_44 {dimension_numbers = #tpu.dot_dimension_numbers<[1], [0], [0], [1], [0, 0, 1, 1], [], []>} : vector<256x128xbf16>, vector<128x128xbf16>, vector<256x128xf32> -> vector<256x128xf32>
    %27 = arith.addf %20, %26 : vector<256x128xf32>
    %c0_45 = arith.constant 0 : index
    %c2 = arith.constant 2 : index
    %c0_46 = arith.constant 0 : index
    %28 = vector.load %arg8[%c0_45, %c2, %c0_46] : memref<18x18x128xf32, #tpu.memory_space<vmem>>, vector<16x16x128xf32>
    %29 = vector.shape_cast %28 : vector<16x16x128xf32> to vector<256x128xf32>
    %30 = arith.truncf %29 : vector<256x128xf32> to vector<256x128xbf16>
    %c2_47 = arith.constant 2 : index
    %c0_48 = arith.constant 0 : index
    %c0_49 = arith.constant 0 : index
    %31 = vector.load %arg2[%c2_47, %c0_48, %c0_49] : memref<9x128x128xbf16, #tpu.memory_space<vmem>>, vector<1x128x128xbf16>
    %32 = vector.shape_cast %31 : vector<1x128x128xbf16> to vector<128x128xbf16>
    %cst_50 = arith.constant dense<0.000000e+00> : vector<256x128xf32>
    %33 = tpu.matmul %30, %32, %cst_50 {dimension_numbers = #tpu.dot_dimension_numbers<[1], [0], [0], [1], [0, 0, 1, 1], [], []>} : vector<256x128xbf16>, vector<128x128xbf16>, vector<256x128xf32> -> vector<256x128xf32>
    %34 = arith.addf %27, %33 : vector<256x128xf32>
    %c1_51 = arith.constant 1 : index
    %c0_52 = arith.constant 0 : index
    %c0_53 = arith.constant 0 : index
    %35 = vector.load %arg8[%c1_51, %c0_52, %c0_53] : memref<18x18x128xf32, #tpu.memory_space<vmem>>, vector<16x16x128xf32>
    %36 = vector.shape_cast %35 : vector<16x16x128xf32> to vector<256x128xf32>
    %37 = arith.truncf %36 : vector<256x128xf32> to vector<256x128xbf16>
    %c3 = arith.constant 3 : index
    %c0_54 = arith.constant 0 : index
    %c0_55 = arith.constant 0 : index
    %38 = vector.load %arg2[%c3, %c0_54, %c0_55] : memref<9x128x128xbf16, #tpu.memory_space<vmem>>, vector<1x128x128xbf16>
    %39 = vector.shape_cast %38 : vector<1x128x128xbf16> to vector<128x128xbf16>
    %cst_56 = arith.constant dense<0.000000e+00> : vector<256x128xf32>
    %40 = tpu.matmul %37, %39, %cst_56 {dimension_numbers = #tpu.dot_dimension_numbers<[1], [0], [0], [1], [0, 0, 1, 1], [], []>} : vector<256x128xbf16>, vector<128x128xbf16>, vector<256x128xf32> -> vector<256x128xf32>
    %41 = arith.addf %34, %40 : vector<256x128xf32>
    %c1_57 = arith.constant 1 : index
    %c1_58 = arith.constant 1 : index
    %c0_59 = arith.constant 0 : index
    %42 = vector.load %arg8[%c1_57, %c1_58, %c0_59] : memref<18x18x128xf32, #tpu.memory_space<vmem>>, vector<16x16x128xf32>
    %43 = vector.shape_cast %42 : vector<16x16x128xf32> to vector<256x128xf32>
    %44 = arith.truncf %43 : vector<256x128xf32> to vector<256x128xbf16>
    %c4 = arith.constant 4 : index
    %c0_60 = arith.constant 0 : index
    %c0_61 = arith.constant 0 : index
    %45 = vector.load %arg2[%c4, %c0_60, %c0_61] : memref<9x128x128xbf16, #tpu.memory_space<vmem>>, vector<1x128x128xbf16>
    %46 = vector.shape_cast %45 : vector<1x128x128xbf16> to vector<128x128xbf16>
    %cst_62 = arith.constant dense<0.000000e+00> : vector<256x128xf32>
    %47 = tpu.matmul %44, %46, %cst_62 {dimension_numbers = #tpu.dot_dimension_numbers<[1], [0], [0], [1], [0, 0, 1, 1], [], []>} : vector<256x128xbf16>, vector<128x128xbf16>, vector<256x128xf32> -> vector<256x128xf32>
    %48 = arith.addf %41, %47 : vector<256x128xf32>
    %c1_63 = arith.constant 1 : index
    %c2_64 = arith.constant 2 : index
    %c0_65 = arith.constant 0 : index
    %49 = vector.load %arg8[%c1_63, %c2_64, %c0_65] : memref<18x18x128xf32, #tpu.memory_space<vmem>>, vector<16x16x128xf32>
    %50 = vector.shape_cast %49 : vector<16x16x128xf32> to vector<256x128xf32>
    %51 = arith.truncf %50 : vector<256x128xf32> to vector<256x128xbf16>
    %c5 = arith.constant 5 : index
    %c0_66 = arith.constant 0 : index
    %c0_67 = arith.constant 0 : index
    %52 = vector.load %arg2[%c5, %c0_66, %c0_67] : memref<9x128x128xbf16, #tpu.memory_space<vmem>>, vector<1x128x128xbf16>
    %53 = vector.shape_cast %52 : vector<1x128x128xbf16> to vector<128x128xbf16>
    %cst_68 = arith.constant dense<0.000000e+00> : vector<256x128xf32>
    %54 = tpu.matmul %51, %53, %cst_68 {dimension_numbers = #tpu.dot_dimension_numbers<[1], [0], [0], [1], [0, 0, 1, 1], [], []>} : vector<256x128xbf16>, vector<128x128xbf16>, vector<256x128xf32> -> vector<256x128xf32>
    %55 = arith.addf %48, %54 : vector<256x128xf32>
    %c2_69 = arith.constant 2 : index
    %c0_70 = arith.constant 0 : index
    %c0_71 = arith.constant 0 : index
    %56 = vector.load %arg8[%c2_69, %c0_70, %c0_71] : memref<18x18x128xf32, #tpu.memory_space<vmem>>, vector<16x16x128xf32>
    %57 = vector.shape_cast %56 : vector<16x16x128xf32> to vector<256x128xf32>
    %58 = arith.truncf %57 : vector<256x128xf32> to vector<256x128xbf16>
    %c6 = arith.constant 6 : index
    %c0_72 = arith.constant 0 : index
    %c0_73 = arith.constant 0 : index
    %59 = vector.load %arg2[%c6, %c0_72, %c0_73] : memref<9x128x128xbf16, #tpu.memory_space<vmem>>, vector<1x128x128xbf16>
    %60 = vector.shape_cast %59 : vector<1x128x128xbf16> to vector<128x128xbf16>
    %cst_74 = arith.constant dense<0.000000e+00> : vector<256x128xf32>
    %61 = tpu.matmul %58, %60, %cst_74 {dimension_numbers = #tpu.dot_dimension_numbers<[1], [0], [0], [1], [0, 0, 1, 1], [], []>} : vector<256x128xbf16>, vector<128x128xbf16>, vector<256x128xf32> -> vector<256x128xf32>
    %62 = arith.addf %55, %61 : vector<256x128xf32>
    %c2_75 = arith.constant 2 : index
    %c1_76 = arith.constant 1 : index
    %c0_77 = arith.constant 0 : index
    %63 = vector.load %arg8[%c2_75, %c1_76, %c0_77] : memref<18x18x128xf32, #tpu.memory_space<vmem>>, vector<16x16x128xf32>
    %64 = vector.shape_cast %63 : vector<16x16x128xf32> to vector<256x128xf32>
    %65 = arith.truncf %64 : vector<256x128xf32> to vector<256x128xbf16>
    %c7 = arith.constant 7 : index
    %c0_78 = arith.constant 0 : index
    %c0_79 = arith.constant 0 : index
    %66 = vector.load %arg2[%c7, %c0_78, %c0_79] : memref<9x128x128xbf16, #tpu.memory_space<vmem>>, vector<1x128x128xbf16>
    %67 = vector.shape_cast %66 : vector<1x128x128xbf16> to vector<128x128xbf16>
    %cst_80 = arith.constant dense<0.000000e+00> : vector<256x128xf32>
    %68 = tpu.matmul %65, %67, %cst_80 {dimension_numbers = #tpu.dot_dimension_numbers<[1], [0], [0], [1], [0, 0, 1, 1], [], []>} : vector<256x128xbf16>, vector<128x128xbf16>, vector<256x128xf32> -> vector<256x128xf32>
    %69 = arith.addf %62, %68 : vector<256x128xf32>
    %c2_81 = arith.constant 2 : index
    %c2_82 = arith.constant 2 : index
    %c0_83 = arith.constant 0 : index
    %70 = vector.load %arg8[%c2_81, %c2_82, %c0_83] : memref<18x18x128xf32, #tpu.memory_space<vmem>>, vector<16x16x128xf32>
    %71 = vector.shape_cast %70 : vector<16x16x128xf32> to vector<256x128xf32>
    %72 = arith.truncf %71 : vector<256x128xf32> to vector<256x128xbf16>
    %c8 = arith.constant 8 : index
    %c0_84 = arith.constant 0 : index
    %c0_85 = arith.constant 0 : index
    %73 = vector.load %arg2[%c8, %c0_84, %c0_85] : memref<9x128x128xbf16, #tpu.memory_space<vmem>>, vector<1x128x128xbf16>
    %74 = vector.shape_cast %73 : vector<1x128x128xbf16> to vector<128x128xbf16>
    %cst_86 = arith.constant dense<0.000000e+00> : vector<256x128xf32>
    %75 = tpu.matmul %72, %74, %cst_86 {dimension_numbers = #tpu.dot_dimension_numbers<[1], [0], [0], [1], [0, 0, 1, 1], [], []>} : vector<256x128xbf16>, vector<128x128xbf16>, vector<256x128xf32> -> vector<256x128xf32>
    %76 = arith.addf %69, %75 : vector<256x128xf32>
    %c0_87 = arith.constant 0 : index
    %c0_88 = arith.constant 0 : index
    %77 = vector.load %arg3[%c0_87, %c0_88] : memref<1x128xf32, #tpu.memory_space<vmem>>, vector<1x128xf32>
    %78 = vector.broadcast %77 : vector<1x128xf32> to vector<256x128xf32>
    %79 = arith.addf %76, %78 : vector<256x128xf32>
    %cst_89 = arith.constant 0.000000e+00 : f32
    %80 = vector.broadcast %cst_89 : f32 to vector<256x128xf32>
    %81 = arith.maximumf %79, %80 : vector<256x128xf32>
    %82 = vector.shape_cast %81 : vector<256x128xf32> to vector<16x16x128xf32>
    %c1_90 = arith.constant 1 : index
    %c1_91 = arith.constant 1 : index
    %c0_92 = arith.constant 0 : index
    %83 = vector.load %arg9[%c1_90, %c1_91, %c0_92] : memref<18x18x128xf32, #tpu.memory_space<vmem>>, vector<16x16x128xf32>
    tpu.vector_store %arg9[%c1_90, %c1_91, %c0_92], %82 {strides = array<i32>} : memref<18x18x128xf32, #tpu.memory_space<vmem>>, vector<16x16x128xf32>,
    %c0_93 = arith.constant 0 : index
    %c0_94 = arith.constant 0 : index
    %c0_95 = arith.constant 0 : index
    %84 = vector.load %arg9[%c0_93, %c0_94, %c0_95] : memref<18x18x128xf32, #tpu.memory_space<vmem>>, vector<16x16x128xf32>
    %85 = vector.shape_cast %84 : vector<16x16x128xf32> to vector<256x128xf32>
    %86 = arith.truncf %85 : vector<256x128xf32> to vector<256x128xbf16>
    %c0_96 = arith.constant 0 : index
    %c0_97 = arith.constant 0 : index
    %c0_98 = arith.constant 0 : index
    %87 = vector.load %arg4[%c0_96, %c0_97, %c0_98] : memref<9x128x128xbf16, #tpu.memory_space<vmem>>, vector<1x128x128xbf16>
    %88 = vector.shape_cast %87 : vector<1x128x128xbf16> to vector<128x128xbf16>
    %cst_99 = arith.constant dense<0.000000e+00> : vector<256x128xf32>
    %89 = tpu.matmul %86, %88, %cst_99 {dimension_numbers = #tpu.dot_dimension_numbers<[1], [0], [0], [1], [0, 0, 1, 1], [], []>} : vector<256x128xbf16>, vector<128x128xbf16>, vector<256x128xf32> -> vector<256x128xf32>
    %c0_100 = arith.constant 0 : index
    %c1_101 = arith.constant 1 : index
    %c0_102 = arith.constant 0 : index
    %90 = vector.load %arg9[%c0_100, %c1_101, %c0_102] : memref<18x18x128xf32, #tpu.memory_space<vmem>>, vector<16x16x128xf32>
    %91 = vector.shape_cast %90 : vector<16x16x128xf32> to vector<256x128xf32>
    %92 = arith.truncf %91 : vector<256x128xf32> to vector<256x128xbf16>
    %c1_103 = arith.constant 1 : index
    %c0_104 = arith.constant 0 : index
    %c0_105 = arith.constant 0 : index
    %93 = vector.load %arg4[%c1_103, %c0_104, %c0_105] : memref<9x128x128xbf16, #tpu.memory_space<vmem>>, vector<1x128x128xbf16>
    %94 = vector.shape_cast %93 : vector<1x128x128xbf16> to vector<128x128xbf16>
    %cst_106 = arith.constant dense<0.000000e+00> : vector<256x128xf32>
    %95 = tpu.matmul %92, %94, %cst_106 {dimension_numbers = #tpu.dot_dimension_numbers<[1], [0], [0], [1], [0, 0, 1, 1], [], []>} : vector<256x128xbf16>, vector<128x128xbf16>, vector<256x128xf32> -> vector<256x128xf32>
    %96 = arith.addf %89, %95 : vector<256x128xf32>
    %c0_107 = arith.constant 0 : index
    %c2_108 = arith.constant 2 : index
    %c0_109 = arith.constant 0 : index
    %97 = vector.load %arg9[%c0_107, %c2_108, %c0_109] : memref<18x18x128xf32, #tpu.memory_space<vmem>>, vector<16x16x128xf32>
    %98 = vector.shape_cast %97 : vector<16x16x128xf32> to vector<256x128xf32>
    %99 = arith.truncf %98 : vector<256x128xf32> to vector<256x128xbf16>
    %c2_110 = arith.constant 2 : index
    %c0_111 = arith.constant 0 : index
    %c0_112 = arith.constant 0 : index
    %100 = vector.load %arg4[%c2_110, %c0_111, %c0_112] : memref<9x128x128xbf16, #tpu.memory_space<vmem>>, vector<1x128x128xbf16>
    %101 = vector.shape_cast %100 : vector<1x128x128xbf16> to vector<128x128xbf16>
    %cst_113 = arith.constant dense<0.000000e+00> : vector<256x128xf32>
    %102 = tpu.matmul %99, %101, %cst_113 {dimension_numbers = #tpu.dot_dimension_numbers<[1], [0], [0], [1], [0, 0, 1, 1], [], []>} : vector<256x128xbf16>, vector<128x128xbf16>, vector<256x128xf32> -> vector<256x128xf32>
    %103 = arith.addf %96, %102 : vector<256x128xf32>
    %c1_114 = arith.constant 1 : index
    %c0_115 = arith.constant 0 : index
    %c0_116 = arith.constant 0 : index
    %104 = vector.load %arg9[%c1_114, %c0_115, %c0_116] : memref<18x18x128xf32, #tpu.memory_space<vmem>>, vector<16x16x128xf32>
    %105 = vector.shape_cast %104 : vector<16x16x128xf32> to vector<256x128xf32>
    %106 = arith.truncf %105 : vector<256x128xf32> to vector<256x128xbf16>
    %c3_117 = arith.constant 3 : index
    %c0_118 = arith.constant 0 : index
    %c0_119 = arith.constant 0 : index
    %107 = vector.load %arg4[%c3_117, %c0_118, %c0_119] : memref<9x128x128xbf16, #tpu.memory_space<vmem>>, vector<1x128x128xbf16>
    %108 = vector.shape_cast %107 : vector<1x128x128xbf16> to vector<128x128xbf16>
    %cst_120 = arith.constant dense<0.000000e+00> : vector<256x128xf32>
    %109 = tpu.matmul %106, %108, %cst_120 {dimension_numbers = #tpu.dot_dimension_numbers<[1], [0], [0], [1], [0, 0, 1, 1], [], []>} : vector<256x128xbf16>, vector<128x128xbf16>, vector<256x128xf32> -> vector<256x128xf32>
    %110 = arith.addf %103, %109 : vector<256x128xf32>
    %c1_121 = arith.constant 1 : index
    %c1_122 = arith.constant 1 : index
    %c0_123 = arith.constant 0 : index
    %111 = vector.load %arg9[%c1_121, %c1_122, %c0_123] : memref<18x18x128xf32, #tpu.memory_space<vmem>>, vector<16x16x128xf32>
    %112 = vector.shape_cast %111 : vector<16x16x128xf32> to vector<256x128xf32>
    %113 = arith.truncf %112 : vector<256x128xf32> to vector<256x128xbf16>
    %c4_124 = arith.constant 4 : index
    %c0_125 = arith.constant 0 : index
    %c0_126 = arith.constant 0 : index
    %114 = vector.load %arg4[%c4_124, %c0_125, %c0_126] : memref<9x128x128xbf16, #tpu.memory_space<vmem>>, vector<1x128x128xbf16>
    %115 = vector.shape_cast %114 : vector<1x128x128xbf16> to vector<128x128xbf16>
    %cst_127 = arith.constant dense<0.000000e+00> : vector<256x128xf32>
    %116 = tpu.matmul %113, %115, %cst_127 {dimension_numbers = #tpu.dot_dimension_numbers<[1], [0], [0], [1], [0, 0, 1, 1], [], []>} : vector<256x128xbf16>, vector<128x128xbf16>, vector<256x128xf32> -> vector<256x128xf32>
    %117 = arith.addf %110, %116 : vector<256x128xf32>
    %c1_128 = arith.constant 1 : index
    %c2_129 = arith.constant 2 : index
    %c0_130 = arith.constant 0 : index
    %118 = vector.load %arg9[%c1_128, %c2_129, %c0_130] : memref<18x18x128xf32, #tpu.memory_space<vmem>>, vector<16x16x128xf32>
    %119 = vector.shape_cast %118 : vector<16x16x128xf32> to vector<256x128xf32>
    %120 = arith.truncf %119 : vector<256x128xf32> to vector<256x128xbf16>
    %c5_131 = arith.constant 5 : index
    %c0_132 = arith.constant 0 : index
    %c0_133 = arith.constant 0 : index
    %121 = vector.load %arg4[%c5_131, %c0_132, %c0_133] : memref<9x128x128xbf16, #tpu.memory_space<vmem>>, vector<1x128x128xbf16>
    %122 = vector.shape_cast %121 : vector<1x128x128xbf16> to vector<128x128xbf16>
    %cst_134 = arith.constant dense<0.000000e+00> : vector<256x128xf32>
    %123 = tpu.matmul %120, %122, %cst_134 {dimension_numbers = #tpu.dot_dimension_numbers<[1], [0], [0], [1], [0, 0, 1, 1], [], []>} : vector<256x128xbf16>, vector<128x128xbf16>, vector<256x128xf32> -> vector<256x128xf32>
    %124 = arith.addf %117, %123 : vector<256x128xf32>
    %c2_135 = arith.constant 2 : index
    %c0_136 = arith.constant 0 : index
    %c0_137 = arith.constant 0 : index
    %125 = vector.load %arg9[%c2_135, %c0_136, %c0_137] : memref<18x18x128xf32, #tpu.memory_space<vmem>>, vector<16x16x128xf32>
    %126 = vector.shape_cast %125 : vector<16x16x128xf32> to vector<256x128xf32>
    %127 = arith.truncf %126 : vector<256x128xf32> to vector<256x128xbf16>
    %c6_138 = arith.constant 6 : index
    %c0_139 = arith.constant 0 : index
    %c0_140 = arith.constant 0 : index
    %128 = vector.load %arg4[%c6_138, %c0_139, %c0_140] : memref<9x128x128xbf16, #tpu.memory_space<vmem>>, vector<1x128x128xbf16>
    %129 = vector.shape_cast %128 : vector<1x128x128xbf16> to vector<128x128xbf16>
    %cst_141 = arith.constant dense<0.000000e+00> : vector<256x128xf32>
    %130 = tpu.matmul %127, %129, %cst_141 {dimension_numbers = #tpu.dot_dimension_numbers<[1], [0], [0], [1], [0, 0, 1, 1], [], []>} : vector<256x128xbf16>, vector<128x128xbf16>, vector<256x128xf32> -> vector<256x128xf32>
    %131 = arith.addf %124, %130 : vector<256x128xf32>
    %c2_142 = arith.constant 2 : index
    %c1_143 = arith.constant 1 : index
    %c0_144 = arith.constant 0 : index
    %132 = vector.load %arg9[%c2_142, %c1_143, %c0_144] : memref<18x18x128xf32, #tpu.memory_space<vmem>>, vector<16x16x128xf32>
    %133 = vector.shape_cast %132 : vector<16x16x128xf32> to vector<256x128xf32>
    %134 = arith.truncf %133 : vector<256x128xf32> to vector<256x128xbf16>
    %c7_145 = arith.constant 7 : index
    %c0_146 = arith.constant 0 : index
    %c0_147 = arith.constant 0 : index
    %135 = vector.load %arg4[%c7_145, %c0_146, %c0_147] : memref<9x128x128xbf16, #tpu.memory_space<vmem>>, vector<1x128x128xbf16>
    %136 = vector.shape_cast %135 : vector<1x128x128xbf16> to vector<128x128xbf16>
    %cst_148 = arith.constant dense<0.000000e+00> : vector<256x128xf32>
    %137 = tpu.matmul %134, %136, %cst_148 {dimension_numbers = #tpu.dot_dimension_numbers<[1], [0], [0], [1], [0, 0, 1, 1], [], []>} : vector<256x128xbf16>, vector<128x128xbf16>, vector<256x128xf32> -> vector<256x128xf32>
    %138 = arith.addf %131, %137 : vector<256x128xf32>
    %c2_149 = arith.constant 2 : index
    %c2_150 = arith.constant 2 : index
    %c0_151 = arith.constant 0 : index
    %139 = vector.load %arg9[%c2_149, %c2_150, %c0_151] : memref<18x18x128xf32, #tpu.memory_space<vmem>>, vector<16x16x128xf32>
    %140 = vector.shape_cast %139 : vector<16x16x128xf32> to vector<256x128xf32>
    %141 = arith.truncf %140 : vector<256x128xf32> to vector<256x128xbf16>
    %c8_152 = arith.constant 8 : index
    %c0_153 = arith.constant 0 : index
    %c0_154 = arith.constant 0 : index
    %142 = vector.load %arg4[%c8_152, %c0_153, %c0_154] : memref<9x128x128xbf16, #tpu.memory_space<vmem>>, vector<1x128x128xbf16>
    %143 = vector.shape_cast %142 : vector<1x128x128xbf16> to vector<128x128xbf16>
    %cst_155 = arith.constant dense<0.000000e+00> : vector<256x128xf32>
    %144 = tpu.matmul %141, %143, %cst_155 {dimension_numbers = #tpu.dot_dimension_numbers<[1], [0], [0], [1], [0, 0, 1, 1], [], []>} : vector<256x128xbf16>, vector<128x128xbf16>, vector<256x128xf32> -> vector<256x128xf32>
    %145 = arith.addf %138, %144 : vector<256x128xf32>
    %c0_156 = arith.constant 0 : index
    %c0_157 = arith.constant 0 : index
    %146 = vector.load %arg5[%c0_156, %c0_157] : memref<1x128xf32, #tpu.memory_space<vmem>>, vector<1x128xf32>
    %147 = vector.broadcast %146 : vector<1x128xf32> to vector<256x128xf32>
    %148 = arith.mulf %145, %147 : vector<256x128xf32>
    %c0_158 = arith.constant 0 : index
    %c0_159 = arith.constant 0 : index
    %149 = vector.load %arg6[%c0_158, %c0_159] : memref<1x128xf32, #tpu.memory_space<vmem>>, vector<1x128xf32>
    %150 = vector.broadcast %149 : vector<1x128xf32> to vector<256x128xf32>
    %151 = arith.addf %148, %150 : vector<256x128xf32>
    %cst_160 = arith.constant 0.000000e+00 : f32
    %152 = vector.broadcast %cst_160 : f32 to vector<256x128xf32>
    %153 = arith.maximumf %151, %152 : vector<256x128xf32>
    %154 = vector.shape_cast %153 : vector<256x128xf32> to vector<1x16x16x128xf32>
    %c0_161 = arith.constant 0 : index
    %c0_162 = arith.constant 0 : index
    %c0_163 = arith.constant 0 : index
    %c0_164 = arith.constant 0 : index
    %155 = vector.load %arg7[%c0_161, %c0_162, %c0_163, %c0_164] : memref<1x16x16x128xf32, #tpu.memory_space<vmem>>, vector<1x16x16x128xf32>
    tpu.vector_store %arg7[%c0_161, %c0_162, %c0_163, %c0_164], %154 {strides = array<i32>} : memref<1x16x16x128xf32, #tpu.memory_space<vmem>>, vector<1x16x16x128xf32>,
    return
  }
  func.func @transform_0(%arg0: i32) -> (i32, i32, i32, i32) {
    %c0_i32 = arith.constant 0 : i32
    %c0_i32_0 = arith.constant 0 : i32
    %c0_i32_1 = arith.constant 0 : i32
    %c0_i32_2 = arith.constant 0 : i32
    return %arg0, %c0_i32, %c0_i32_0, %c0_i32_1 : i32, i32, i32, i32
  }
  func.func @transform_1(%arg0: i32) -> (i32, i32, i32) {
    %c0_i32 = arith.constant 0 : i32
    %c0_i32_0 = arith.constant 0 : i32
    %c0_i32_1 = arith.constant 0 : i32
    %c0_i32_2 = arith.constant 0 : i32
    return %c0_i32, %c0_i32_0, %c0_i32_1 : i32, i32, i32
  }
  func.func @transform_2(%arg0: i32) -> (i32, i32) {
    %c0_i32 = arith.constant 0 : i32
    %c0_i32_0 = arith.constant 0 : i32
    %c0_i32_1 = arith.constant 0 : i32
    return %c0_i32, %c0_i32_0 : i32, i32
  }
  func.func @transform_3(%arg0: i32) -> (i32, i32, i32) {
    %c0_i32 = arith.constant 0 : i32
    %c0_i32_0 = arith.constant 0 : i32
    %c0_i32_1 = arith.constant 0 : i32
    %c0_i32_2 = arith.constant 0 : i32
    return %c0_i32, %c0_i32_0, %c0_i32_1 : i32, i32, i32
  }
  func.func @transform_4(%arg0: i32) -> (i32, i32) {
    %c0_i32 = arith.constant 0 : i32
    %c0_i32_0 = arith.constant 0 : i32
    %c0_i32_1 = arith.constant 0 : i32
    return %c0_i32, %c0_i32_0 : i32, i32
  }
  func.func @transform_5(%arg0: i32) -> (i32, i32) {
    %c0_i32 = arith.constant 0 : i32
    %c0_i32_0 = arith.constant 0 : i32
    %c0_i32_1 = arith.constant 0 : i32
    return %c0_i32, %c0_i32_0 : i32, i32
  }
  func.func @transform_6(%arg0: i32) -> (i32, i32, i32, i32) {
    %c0_i32 = arith.constant 0 : i32
    %c0_i32_0 = arith.constant 0 : i32
    %c0_i32_1 = arith.constant 0 : i32
    %c0_i32_2 = arith.constant 0 : i32
    return %arg0, %c0_i32, %c0_i32_0, %c0_i32_1 : i32, i32, i32, i32
  }
}

</mosaic_0001>

<llo_original>
// kernel: convblock_forward.1
$region0: #{convblock_forward.1}
  #allocation0 [shape = 'u32[]', space=smem, size = 0x4, offset = 0x4, fixed_abs, tag = 'smem constant byte address 0x4 - core index']
  #allocation1 [shape = 'u32[144,128]{1,0:T(1,128)}', space=vmem, size = 0x12000, scoped, tag = 'internal scratch']
  #allocation2 [shape = 'f32[18,18,128]{2,1,0:T(8,128)}', space=vmem, size = 0x36000, scoped, tag = 'scratch operand']
  #allocation3 [shape = 'f32[18,18,128]{2,1,0:T(8,128)}', space=vmem, size = 0x36000, scoped, tag = 'scratch operand']
  %s0 = inlined_call_operand.vmem [shape: f32[2,16,16,128], index: 0, kind: input, shape index: {}]
  %s1 = inlined_call_operand.vmem [shape: bf16[9,128,128], index: 1, kind: input, shape index: {}]
  %s2 = inlined_call_operand.vmem [shape: f32[1,128], index: 2, kind: input, shape index: {}]
  %s3 = inlined_call_operand.vmem [shape: bf16[9,128,128], index: 3, kind: input, shape index: {}]
  %s4 = inlined_call_operand.vmem [shape: f32[1,128], index: 4, kind: input, shape index: {}]
  %s5 = inlined_call_operand.vmem [shape: f32[1,128], index: 5, kind: input, shape index: {}]
  %s6 = inlined_call_operand.vmem [shape: f32[2,16,16,128], index: 6, kind: output, shape index: {}]
  %s7 = sld [smem:[#allocation0]]
  $region57: #{convblock_forward.1} parent=0
    _
  %s9 = ssub.s32 1, %s7
  %s10 = scalar_select 0, %s9, %s7
  loop: start=0, step=1, limit=4
  $region2: #{convblock_forward.1} parent=0 // loop_pre_header
    _
  $region3: #{convblock_forward.1} parent=0 // loop_header
    %s12 = sphi 0, %s16
    %p13 = scmp.ge.s32.totalorder %s12, 4
    %s22 = sphi 0, %s24
    %s25 = sphi 0, %s22
    %s26 = sphi 0, %s25
    %s42 = sphi 0, %s26
    %s46 = sphi 0, %s46
    %s48 = sphi 0, %s46
    %s49 = sphi 0, %s48
    %s63 = sphi 0, %s49
    %s67 = sphi 0, %s67
    %s69 = sphi 0, %s67
    %s70 = sphi 0, %s69
    %s84 = sphi 0, %s70
    %s88 = sphi 0, %s88
    %s90 = sphi 0, %s88
    %s91 = sphi 0, %s90
    %s105 = sphi 0, %s91
    %s109 = sphi 0, %s109
    %s111 = sphi 0, %s109
    %s112 = sphi 0, %s111
    %s126 = sphi 0, %s112
    %s130 = sphi 0, %s130
    %s132 = sphi 0, %s130
    %s133 = sphi 0, %s132
    %s147 = sphi 0, %s133
    %s153 = sphi 0, %s155
    %s156 = sphi 0, %s153
    %s157 = sphi 0, %s156
    %s173 = sphi 0, %s157
  $region4: #{convblock_forward.1} parent=0 // loop_header_branch
    %15 = sbr.rel (%p13) target = $region8
  $region5: #{convblock_forward.1} parent=0 // loop_body
    %s17 = ssub.s32 %s12, 1
    %s18 = ssub.s32 %s12, 2
    %s19 = sadd.s32 %s12, 1
    %s20 = ssub.s32 %s12, %s19
    %p21 = scmp.eq.s32.totalorder %s20, 0
    %s23 = sadd.s32 %s22, 1
    %s24 = scalar_select %p21, %s22, %s23
    %p27 = pneg %p21
    %p28 = scmp.eq.s32.totalorder %s12, 1
    %p29 = por %p27, %p28
    %p30 = scmp.ne.s32.totalorder %s22, %s25
    %p31 = scmp.eq.s32.totalorder %s12, 0
    %p32 = por %p30, %p31
    %p33 = scmp.ne.s32.totalorder %s22, %s25
    %p34 = scmp.eq.s32.totalorder %s17, 1
    %p35 = por %p33, %p34
    %p36 = scmp.ne.s32.totalorder %s25, %s26
    %p37 = scmp.eq.s32.totalorder %s17, 0
    %p38 = por %p36, %p37
    %p39 = scmp.ne.s32.totalorder %s25, %s26
    %p40 = scmp.eq.s32.totalorder %s18, 1
    %p41 = por %p39, %p40
    %p43 = scmp.ne.s32.totalorder %s26, %s42
    %p44 = scmp.eq.s32.totalorder %s18, 0
    %p45 = por %p43, %p44
    %s47 = sadd.s32 %s46, 1
    %p50 = scmp.eq.s32.totalorder %s12, 1
    %p51 = scmp.ne.s32.totalorder %s46, %s48
    %p52 = scmp.eq.s32.totalorder %s12, 0
    %p53 = por %p51, %p52
    %p54 = scmp.ne.s32.totalorder %s46, %s48
    %p55 = scmp.eq.s32.totalorder %s17, 1
    %p56 = por %p54, %p55
    %p57 = scmp.ne.s32.totalorder %s48, %s49
    %p58 = scmp.eq.s32.totalorder %s17, 0
    %p59 = por %p57, %p58
    %p60 = scmp.ne.s32.totalorder %s48, %s49
    %p61 = scmp.eq.s32.totalorder %s18, 1
    %p62 = por %p60, %p61
    %p64 = scmp.ne.s32.totalorder %s49, %s63
    %p65 = scmp.eq.s32.totalorder %s18, 0
    %p66 = por %p64, %p65
    %s68 = sadd.s32 %s67, 1
    %p71 = scmp.eq.s32.totalorder %s12, 1
    %p72 = scmp.ne.s32.totalorder %s67, %s69
    %p73 = scmp.eq.s32.totalorder %s12, 0
    %p74 = por %p72, %p73
    %p75 = scmp.ne.s32.totalorder %s67, %s69
    %p76 = scmp.eq.s32.totalorder %s17, 1
    %p77 = por %p75, %p76
    %p78 = scmp.ne.s32.totalorder %s69, %s70
    %p79 = scmp.eq.s32.totalorder %s17, 0
    %p80 = por %p78, %p79
    %p81 = scmp.ne.s32.totalorder %s69, %s70
    %p82 = scmp.eq.s32.totalorder %s18, 1
    %p83 = por %p81, %p82
    %p85 = scmp.ne.s32.totalorder %s70, %s84
    %p86 = scmp.eq.s32.totalorder %s18, 0
    %p87 = por %p85, %p86
    %s89 = sadd.s32 %s88, 1
    %p92 = scmp.eq.s32.totalorder %s12, 1
    %p93 = scmp.ne.s32.totalorder %s88, %s90
    %p94 = scmp.eq.s32.totalorder %s12, 0
    %p95 = por %p93, %p94
    %p96 = scmp.ne.s32.totalorder %s88, %s90
    %p97 = scmp.eq.s32.totalorder %s17, 1
    %p98 = por %p96, %p97
    %p99 = scmp.ne.s32.totalorder %s90, %s91
    %p100 = scmp.eq.s32.totalorder %s17, 0
    %p101 = por %p99, %p100
    %p102 = scmp.ne.s32.totalorder %s90, %s91
    %p103 = scmp.eq.s32.totalorder %s18, 1
    %p104 = por %p102, %p103
    %p106 = scmp.ne.s32.totalorder %s91, %s105
    %p107 = scmp.eq.s32.totalorder %s18, 0
    %p108 = por %p106, %p107
    %s110 = sadd.s32 %s109, 1
    %p113 = scmp.eq.s32.totalorder %s12, 1
    %p114 = scmp.ne.s32.totalorder %s109, %s111
    %p115 = scmp.eq.s32.totalorder %s12, 0
    %p116 = por %p114, %p115
    %p117 = scmp.ne.s32.totalorder %s109, %s111
    %p118 = scmp.eq.s32.totalorder %s17, 1
    %p119 = por %p117, %p118
    %p120 = scmp.ne.s32.totalorder %s111, %s112
    %p121 = scmp.eq.s32.totalorder %s17, 0
    %p122 = por %p120, %p121
    %p123 = scmp.ne.s32.totalorder %s111, %s112
    %p124 = scmp.eq.s32.totalorder %s18, 1
    %p125 = por %p123, %p124
    %p127 = scmp.ne.s32.totalorder %s112, %s126
    %p128 = scmp.eq.s32.totalorder %s18, 0
    %p129 = por %p127, %p128
    %s131 = sadd.s32 %s130, 1
    %p134 = scmp.eq.s32.totalorder %s12, 1
    %p135 = scmp.ne.s32.totalorder %s130, %s132
    %p136 = scmp.eq.s32.totalorder %s12, 0
    %p137 = por %p135, %p136
    %p138 = scmp.ne.s32.totalorder %s130, %s132
    %p139 = scmp.eq.s32.totalorder %s17, 1
    %p140 = por %p138, %p139
    %p141 = scmp.ne.s32.totalorder %s132, %s133
    %p142 = scmp.eq.s32.totalorder %s17, 0
    %p143 = por %p141, %p142
    %p144 = scmp.ne.s32.totalorder %s132, %s133
    %p145 = scmp.eq.s32.totalorder %s18, 1
    %p146 = por %p144, %p145
    %p148 = scmp.ne.s32.totalorder %s133, %s147
    %p149 = scmp.eq.s32.totalorder %s18, 0
    %p150 = por %p148, %p149
    %s151 = ssub.s32 %s12, %s19
    %p152 = scmp.eq.s32.totalorder %s151, 0
    %s154 = sadd.s32 %s153, 1
    %s155 = scalar_select %p152, %s153, %s154
    %p158 = pneg %p152
    %p159 = scmp.eq.s32.totalorder %s12, 1
    %p160 = por %p158, %p159
    %p161 = scmp.ne.s32.totalorder %s153, %s156
    %p162 = scmp.eq.s32.totalorder %s12, 0
    %p163 = por %p161, %p162
    %p164 = scmp.ne.s32.totalorder %s153, %s156
    %p165 = scmp.eq.s32.totalorder %s17, 1
    %p166 = por %p164, %p165
    %p167 = scmp.ne.s32.totalorder %s156, %s157
    %p168 = scmp.eq.s32.totalorder %s17, 0
    %p169 = por %p167, %p168
    %p170 = scmp.ne.s32.totalorder %s156, %s157
    %p171 = scmp.eq.s32.totalorder %s18, 1
    %p172 = por %p170, %p171
    %p174 = scmp.ne.s32.totalorder %s157, %s173
    %p175 = scmp.eq.s32.totalorder %s18, 0
    %p176 = por %p174, %p175
    %p177 = scmp.le.s32.totalorder 1, %s12
    %p178 = scmp.lt.s32.totalorder %s12, 3
    %p179 = pnand %p177, %p178
    %p180 = pneg %p179
    // Predicated region
    $region9: #{convblock_forward.1} parent=5 // pred_check
      _
    $region10: #{convblock_forward.1} parent=5 // pred_check_branch
      %182 = sbr.rel (%p179) target = $region12
    $region11: #{convblock_forward.1} parent=5 // pred_region
      %s183 = ssub.s32 %s12, 1
      // Predicated region
      $region13: #{convblock_forward.1} parent=11 // pred_check
        %p184 = pneg %p59
      $region14: #{convblock_forward.1} parent=11 // pred_check_branch
        %186 = sbr.rel (%p184) target = $region16
      $region15: #{convblock_forward.1} parent=11 // pred_region
        _
      $region16: #{convblock_forward.1} parent=11 // pred_fallthru
        _
      // Predicated region
      $region17: #{convblock_forward.1} parent=11 // pred_check
        %p187 = pneg %p80
      $region18: #{convblock_forward.1} parent=11 // pred_check_branch
        %189 = sbr.rel (%p187) target = $region20
      $region19: #{convblock_forward.1} parent=11 // pred_region
        _
      $region20: #{convblock_forward.1} parent=11 // pred_fallthru
        _
      // Predicated region
      $region21: #{convblock_forward.1} parent=11 // pred_check
        %p190 = pneg %p101
      $region22: #{convblock_forward.1} parent=11 // pred_check_branch
        %192 = sbr.rel (%p190) target = $region24
      $region23: #{convblock_forward.1} parent=11 // pred_region
        _
      $region24: #{convblock_forward.1} parent=11 // pred_fallthru
        _
      // Predicated region
      $region25: #{convblock_forward.1} parent=11 // pred_check
        %p193 = pneg %p122
      $region26: #{convblock_forward.1} parent=11 // pred_check_branch
        %195 = sbr.rel (%p193) target = $region28
      $region27: #{convblock_forward.1} parent=11 // pred_region
        _
      $region28: #{convblock_forward.1} parent=11 // pred_fallthru
        _
      // Predicated region
      $region29: #{convblock_forward.1} parent=11 // pred_check
        %p196 = pneg %p143
      $region30: #{convblock_forward.1} parent=11 // pred_check_branch
        %198 = sbr.rel (%p196) target = $region32
      $region31: #{convblock_forward.1} parent=11 // pred_region
        _
      $region32: #{convblock_forward.1} parent=11 // pred_fallthru
        _
    $region12: #{convblock_forward.1} parent=5 // pred_fallthru
      _
    %p199 = scmp.lt.s32.totalorder %s12, 2
    // Predicated region
    $region33: #{convblock_forward.1} parent=5 // pred_check
      %p200 = pneg %p199
    $region34: #{convblock_forward.1} parent=5 // pred_check_branch
      %202 = sbr.rel (%p200) target = $region36
    $region35: #{convblock_forward.1} parent=5 // pred_region
      // Predicated region
      $region37: #{convblock_forward.1} parent=35 // pred_check
        %p203 = pneg %p32
      $region38: #{convblock_forward.1} parent=35 // pred_check_branch
        %205 = sbr.rel (%p203) target = $region40
      $region39: #{convblock_forward.1} parent=35 // pred_region
        %p206 = scmp.lt.s32.totalorder %s12, 1
        %s207 = scalar_select %p206, %s12, 1
        %s208 = smul.addr %s207, 32
        %s209 = smul.addr %s208, 8
        %s210 = scalar_lea.vmem %s0, %s209
      $region40: #{convblock_forward.1} parent=35 // pred_fallthru
        _
    $region36: #{convblock_forward.1} parent=5 // pred_fallthru
      _
    %p211 = scmp.le.s32.totalorder 1, %s12
    %p212 = scmp.lt.s32.totalorder %s12, 3
    %p213 = pnand %p211, %p212
    %p214 = pneg %p213
    // Predicated region
    $region41: #{convblock_forward.1} parent=5 // pred_check
      _
    $region42: #{convblock_forward.1} parent=5 // pred_check_branch
      %216 = sbr.rel (%p213) target = $region44
    $region43: #{convblock_forward.1} parent=5 // pred_region
      %s217 = ssub.s32 %s12, 1
      %p218 = scmp.lt.s32.totalorder %s17, 1
      %s219 = scalar_select %p218, %s17, 1
      %s220 = smul.addr %s219, 32
      %s221 = smul.addr %s220, 8
      %s222 = scalar_lea.vmem %s0, %s221
      %p223 = pneg %p38
      %p224 = pneg %p35
      %p225 = pneg %p59
      %p226 = pneg %p56
      %p227 = pneg %p80
      %p228 = pneg %p77
      %p229 = pneg %p101
      %p230 = pneg %p98
      %p231 = pneg %p122
      %p232 = pneg %p119
      %p233 = pneg %p143
      %p234 = pneg %p140
      %p235 = pneg %p169
      %p236 = pneg %p166
      %p237 = scmp.lt.s32.totalorder %s17, 1
      %s238 = scalar_select %p237, %s17, 1
      %s239 = smul.addr %s238, 32
      %s240 = smul.addr %s239, 8
      %s241 = scalar_lea.vmem %s6, %s240
      %p242 = scmp.lt.s32.totalorder %s17, 1
      %s243 = scalar_select %p242, %s17, 1
      %s244 = smul.addr %s243, 32
      %s245 = smul.addr %s244, 8
      %s246 = scalar_lea.vmem %s0, %s245
      %p247 = scmp.lt.s32.totalorder %s17, 1
      %s248 = scalar_select %p247, %s17, 1
      %s249 = smul.addr %s248, 32
      %s250 = smul.addr %s249, 8
      %s251 = scalar_lea.vmem %s6, %s250
      %253 = vst [vmem:[#allocation2] sm:$0xff] 0.0
      %254 = vst [vmem:[#allocation2 + $0x8] sm:$0xff] 0.0
      %255 = vst [vmem:[#allocation2 + $0x10] sm:$0x3] 0.0
      %s256 = scalar_lea.vmem [#allocation2], 408
      %257 = vst [vmem:[%s256] sm:$0xff] 0.0
      %258 = vst [vmem:[%s256 + $0x8] sm:$0xff] 0.0
      %259 = vst [vmem:[%s256 + $0x10] sm:$0x3] 0.0
      %260 = vst [vmem:[#allocation2] sm:$0x1] 0.0
      %261 = vst [vmem:[#allocation2 + $0x18] sm:$0x1] 0.0
      %262 = vst [vmem:[#allocation2 + $0x30] sm:$0x1] 0.0
      %263 = vst [vmem:[#allocation2 + $0x48] sm:$0x1] 0.0
      %264 = vst [vmem:[#allocation2 + $0x60] sm:$0x1] 0.0
      %265 = vst [vmem:[#allocation2 + $0x78] sm:$0x1] 0.0
      %266 = vst [vmem:[#allocation2 + $0x90] sm:$0x1] 0.0
      %267 = vst [vmem:[#allocation2 + $0xa8] sm:$0x1] 0.0
      %268 = vst [vmem:[#allocation2 + $0xc0] sm:$0x1] 0.0
      %269 = vst [vmem:[#allocation2 + $0xd8] sm:$0x1] 0.0
      %270 = vst [vmem:[#allocation2 + $0xf0] sm:$0x1] 0.0
      %271 = vst [vmem:[#allocation2 + $0x108] sm:$0x1] 0.0
      %272 = vst [vmem:[#allocation2 + $0x120] sm:$0x1] 0.0
      %273 = vst [vmem:[#allocation2 + $0x138] sm:$0x1] 0.0
      %274 = vst [vmem:[#allocation2 + $0x150] sm:$0x1] 0.0
      %275 = vst [vmem:[#allocation2 + $0x168] sm:$0x1] 0.0
      %276 = vst [vmem:[#allocation2 + $0x180] sm:$0x1] 0.0
      %277 = vst [vmem:[#allocation2 + $0x198] sm:$0x1] 0.0
      %278 = vst [vmem:[#allocation2 + $0x11] sm:$0x1] 0.0
      %279 = vst [vmem:[#allocation2 + $0x29] sm:$0x1] 0.0
      %280 = vst [vmem:[#allocation2 + $0x41] sm:$0x1] 0.0
      %281 = vst [vmem:[#allocation2 + $0x59] sm:$0x1] 0.0
      %282 = vst [vmem:[#allocation2 + $0x71] sm:$0x1] 0.0
      %283 = vst [vmem:[#allocation2 + $0x89] sm:$0x1] 0.0
      %284 = vst [vmem:[#allocation2 + $0xa1] sm:$0x1] 0.0
      %285 = vst [vmem:[#allocation2 + $0xb9] sm:$0x1] 0.0
      %286 = vst [vmem:[#allocation2 + $0xd1] sm:$0x1] 0.0
      %287 = vst [vmem:[#allocation2 + $0xe9] sm:$0x1] 0.0
      %288 = vst [vmem:[#allocation2 + $0x101] sm:$0x1] 0.0
      %289 = vst [vmem:[#allocation2 + $0x119] sm:$0x1] 0.0
      %290 = vst [vmem:[#allocation2 + $0x131] sm:$0x1] 0.0
      %291 = vst [vmem:[#allocation2 + $0x149] sm:$0x1] 0.0
      %292 = vst [vmem:[#allocation2 + $0x161] sm:$0x1] 0.0
      %293 = vst [vmem:[#allocation2 + $0x179] sm:$0x1] 0.0
      %294 = vst [vmem:[#allocation2 + $0x191] sm:$0x1] 0.0
      %295 = vst [vmem:[#allocation2 + $0x1a9] sm:$0x1] 0.0
      %296 = vst [vmem:[#allocation3] sm:$0xff] 0.0
      %297 = vst [vmem:[#allocation3 + $0x8] sm:$0xff] 0.0
      %298 = vst [vmem:[#allocation3 + $0x10] sm:$0x3] 0.0
      %s299 = scalar_lea.vmem [#allocation3], 408
      %300 = vst [vmem:[%s299] sm:$0xff] 0.0
      %301 = vst [vmem:[%s299 + $0x8] sm:$0xff] 0.0
      %302 = vst [vmem:[%s299 + $0x10] sm:$0x3] 0.0
      %303 = vst [vmem:[#allocation3] sm:$0x1] 0.0
      %304 = vst [vmem:[#allocation3 + $0x18] sm:$0x1] 0.0
      %305 = vst [vmem:[#allocation3 + $0x30] sm:$0x1] 0.0
      %306 = vst [vmem:[#allocation3 + $0x48] sm:$0x1] 0.0
      %307 = vst [vmem:[#allocation3 + $0x60] sm:$0x1] 0.0
      %308 = vst [vmem:[#allocation3 + $0x78] sm:$0x1] 0.0
      %309 = vst [vmem:[#allocation3 + $0x90] sm:$0x1] 0.0
      %310 = vst [vmem:[#allocation3 + $0xa8] sm:$0x1] 0.0
      %311 = vst [vmem:[#allocation3 + $0xc0] sm:$0x1] 0.0
      %312 = vst [vmem:[#allocation3 + $0xd8] sm:$0x1] 0.0
      %313 = vst [vmem:[#allocation3 + $0xf0] sm:$0x1] 0.0
      %314 = vst [vmem:[#allocation3 + $0x108] sm:$0x1] 0.0
      %315 = vst [vmem:[#allocation3 + $0x120] sm:$0x1] 0.0
      %316 = vst [vmem:[#allocation3 + $0x138] sm:$0x1] 0.0
      %317 = vst [vmem:[#allocation3 + $0x150] sm:$0x1] 0.0
      %318 = vst [vmem:[#allocation3 + $0x168] sm:$0x1] 0.0
      %319 = vst [vmem:[#allocation3 + $0x180] sm:$0x1] 0.0
      %320 = vst [vmem:[#allocation3 + $0x198] sm:$0x1] 0.0
      %321 = vst [vmem:[#allocation3 + $0x11] sm:$0x1] 0.0
      %322 = vst [vmem:[#allocation3 + $0x29] sm:$0x1] 0.0
      %323 = vst [vmem:[#allocation3 + $0x41] sm:$0x1] 0.0
      %324 = vst [vmem:[#allocation3 + $0x59] sm:$0x1] 0.0
      %325 = vst [vmem:[#allocation3 + $0x71] sm:$0x1] 0.0
      %326 = vst [vmem:[#allocation3 + $0x89] sm:$0x1] 0.0
      %327 = vst [vmem:[#allocation3 + $0xa1] sm:$0x1] 0.0
      %328 = vst [vmem:[#allocation3 + $0xb9] sm:$0x1] 0.0
      %329 = vst [vmem:[#allocation3 + $0xd1] sm:$0x1] 0.0
      %330 = vst [vmem:[#allocation3 + $0xe9] sm:$0x1] 0.0
      %331 = vst [vmem:[#allocation3 + $0x101] sm:$0x1] 0.0
      %332 = vst [vmem:[#allocation3 + $0x119] sm:$0x1] 0.0
      %333 = vst [vmem:[#allocation3 + $0x131] sm:$0x1] 0.0
      %334 = vst [vmem:[#allocation3 + $0x149] sm:$0x1] 0.0
      %335 = vst [vmem:[#allocation3 + $0x161] sm:$0x1] 0.0
      %336 = vst [vmem:[#allocation3 + $0x179] sm:$0x1] 0.0
      %337 = vst [vmem:[#allocation3 + $0x191] sm:$0x1] 0.0
      %338 = vst [vmem:[#allocation3 + $0x1a9] sm:$0x1] 0.0
      %v339 = vld [vmem:[%s246] sm:$0xff]
      %v340 = vld [vmem:[%s246 + $0x8] sm:$0xff]
      %v341 = vld [vmem:[%s246 + $0x10] sm:$0xff]
      %v342 = vld [vmem:[%s246 + $0x18] sm:$0xff]
      %v343 = vld [vmem:[%s246 + $0x20] sm:$0xff]
      %v344 = vld [vmem:[%s246 + $0x28] sm:$0xff]
      %v345 = vld [vmem:[%s246 + $0x30] sm:$0xff]
      %v346 = vld [vmem:[%s246 + $0x38] sm:$0xff]
      %v347 = vld [vmem:[%s246 + $0x40] sm:$0xff]
      %v348 = vld [vmem:[%s246 + $0x48] sm:$0xff]
      %v349 = vld [vmem:[%s246 + $0x50] sm:$0xff]
      %v350 = vld [vmem:[%s246 + $0x58] sm:$0xff]
      %v351 = vld [vmem:[%s246 + $0x60] sm:$0xff]
      %v352 = vld [vmem:[%s246 + $0x68] sm:$0xff]
      %v353 = vld [vmem:[%s246 + $0x70] sm:$0xff]
      %v354 = vld [vmem:[%s246 + $0x78] sm:$0xff]
      %v355 = vld [vmem:[%s246 + $0x80] sm:$0xff]
      %v356 = vld [vmem:[%s246 + $0x88] sm:$0xff]
      %v357 = vld [vmem:[%s246 + $0x90] sm:$0xff]
      %v358 = vld [vmem:[%s246 + $0x98] sm:$0xff]
      %v359 = vld [vmem:[%s246 + $0xa0] sm:$0xff]
      %v360 = vld [vmem:[%s246 + $0xa8] sm:$0xff]
      %v361 = vld [vmem:[%s246 + $0xb0] sm:$0xff]
      %v362 = vld [vmem:[%s246 + $0xb8] sm:$0xff]
      %v363 = vld [vmem:[%s246 + $0xc0] sm:$0xff]
      %v364 = vld [vmem:[%s246 + $0xc8] sm:$0xff]
      %v365 = vld [vmem:[%s246 + $0xd0] sm:$0xff]
      %v366 = vld [vmem:[%s246 + $0xd8] sm:$0xff]
      %v367 = vld [vmem:[%s246 + $0xe0] sm:$0xff]
      %v368 = vld [vmem:[%s246 + $0xe8] sm:$0xff]
      %v369 = vld [vmem:[%s246 + $0xf0] sm:$0xff]
      %v370 = vld [vmem:[%s246 + $0xf8] sm:$0xff]
      %s371 = scalar_lea.vmem [#allocation2], 24
      %372 = vst [vmem:[%s371 + $0x1] sm:$0xff] %v339
      %373 = vst [vmem:[%s371 + $0x9] sm:$0xff] %v340
      %374 = vst [vmem:[%s371 + $0x19] sm:$0xff] %v341
      %375 = vst [vmem:[%s371 + $0x21] sm:$0xff] %v342
      %376 = vst [vmem:[%s371 + $0x31] sm:$0xff] %v343
      %377 = vst [vmem:[%s371 + $0x39] sm:$0xff] %v344
      %378 = vst [vmem:[%s371 + $0x49] sm:$0xff] %v345
      %379 = vst [vmem:[%s371 + $0x51] sm:$0xff] %v346
      %380 = vst [vmem:[%s371 + $0x61] sm:$0xff] %v347
      %381 = vst [vmem:[%s371 + $0x69] sm:$0xff] %v348
      %382 = vst [vmem:[%s371 + $0x79] sm:$0xff] %v349
      %383 = vst [vmem:[%s371 + $0x81] sm:$0xff] %v350
      %384 = vst [vmem:[%s371 + $0x91] sm:$0xff] %v351
      %385 = vst [vmem:[%s371 + $0x99] sm:$0xff] %v352
      %386 = vst [vmem:[%s371 + $0xa9] sm:$0xff] %v353
      %387 = vst [vmem:[%s371 + $0xb1] sm:$0xff] %v354
      %388 = vst [vmem:[%s371 + $0xc1] sm:$0xff] %v355
      %389 = vst [vmem:[%s371 + $0xc9] sm:$0xff] %v356
      %390 = vst [vmem:[%s371 + $0xd9] sm:$0xff] %v357
      %391 = vst [vmem:[%s371 + $0xe1] sm:$0xff] %v358
      %392 = vst [vmem:[%s371 + $0xf1] sm:$0xff] %v359
      %393 = vst [vmem:[%s371 + $0xf9] sm:$0xff] %v360
      %394 = vst [vmem:[%s371 + $0x109] sm:$0xff] %v361
      %395 = vst [vmem:[%s371 + $0x111] sm:$0xff] %v362
      %396 = vst [vmem:[%s371 + $0x121] sm:$0xff] %v363
      %397 = vst [vmem:[%s371 + $0x129] sm:$0xff] %v364
      %398 = vst [vmem:[%s371 + $0x139] sm:$0xff] %v365
      %399 = vst [vmem:[%s371 + $0x141] sm:$0xff] %v366
      %400 = vst [vmem:[%s371 + $0x151] sm:$0xff] %v367
      %401 = vst [vmem:[%s371 + $0x159] sm:$0xff] %v368
      %402 = vst [vmem:[%s371 + $0x169] sm:$0xff] %v369
      %403 = vst [vmem:[%s371 + $0x171] sm:$0xff] %v370
      %v404 = vld [vmem:[#allocation2] sm:$0xff]
      %v405 = vld [vmem:[#allocation2 + $0x8] sm:$0xff]
      %v406 = vld [vmem:[#allocation2 + $0x18] sm:$0xff]
      %v407 = vld [vmem:[#allocation2 + $0x20] sm:$0xff]
      %v408 = vld [vmem:[#allocation2 + $0x30] sm:$0xff]
      %v409 = vld [vmem:[#allocation2 + $0x38] sm:$0xff]
      %v410 = vld [vmem:[#allocation2 + $0x48] sm:$0xff]
      %v411 = vld [vmem:[#allocation2 + $0x50] sm:$0xff]
      %v412 = vld [vmem:[#allocation2 + $0x60] sm:$0xff]
      %v413 = vld [vmem:[#allocation2 + $0x68] sm:$0xff]
      %v414 = vld [vmem:[#allocation2 + $0x78] sm:$0xff]
      %v415 = vld [vmem:[#allocation2 + $0x80] sm:$0xff]
      %v416 = vld [vmem:[#allocation2 + $0x90] sm:$0xff]
      %v417 = vld [vmem:[#allocation2 + $0x98] sm:$0xff]
      %v418 = vld [vmem:[#allocation2 + $0xa8] sm:$0xff]
      %v419 = vld [vmem:[#allocation2 + $0xb0] sm:$0xff]
      %v420 = vld [vmem:[#allocation2 + $0xc0] sm:$0xff]
      %v421 = vld [vmem:[#allocation2 + $0xc8] sm:$0xff]
      %v422 = vld [vmem:[#allocation2 + $0xd8] sm:$0xff]
      %v423 = vld [vmem:[#allocation2 + $0xe0] sm:$0xff]
      %v424 = vld [vmem:[#allocation2 + $0xf0] sm:$0xff]
      %v425 = vld [vmem:[#allocation2 + $0xf8] sm:$0xff]
      %v426 = vld [vmem:[#allocation2 + $0x108] sm:$0xff]
      %v427 = vld [vmem:[#allocation2 + $0x110] sm:$0xff]
      %v428 = vld [vmem:[#allocation2 + $0x120] sm:$0xff]
      %v429 = vld [vmem:[#allocation2 + $0x128] sm:$0xff]
      %v430 = vld [vmem:[#allocation2 + $0x138] sm:$0xff]
      %v431 = vld [vmem:[#allocation2 + $0x140] sm:$0xff]
      %v432 = vld [vmem:[#allocation2 + $0x150] sm:$0xff]
      %v433 = vld [vmem:[#allocation2 + $0x158] sm:$0xff]
      %v434 = vld [vmem:[#allocation2 + $0x168] sm:$0xff]
      %v435 = vld [vmem:[#allocation2 + $0x170] sm:$0xff]
      %v436 = vpack.c.bf16 %v405, %v404
      %v437 = vpack.c.bf16 %v407, %v406
      %v438 = vpack.c.bf16 %v409, %v408
      %v439 = vpack.c.bf16 %v411, %v410
      %v440 = vpack.c.bf16 %v413, %v412
      %v441 = vpack.c.bf16 %v415, %v414
      %v442 = vpack.c.bf16 %v417, %v416
      %v443 = vpack.c.bf16 %v419, %v418
      %v444 = vpack.c.bf16 %v421, %v420
      %v445 = vpack.c.bf16 %v423, %v422
      %v446 = vpack.c.bf16 %v425, %v424
      %v447 = vpack.c.bf16 %v427, %v426
      %v448 = vpack.c.bf16 %v429, %v428
      %v449 = vpack.c.bf16 %v431, %v430
      %v450 = vpack.c.bf16 %v433, %v432
      %v451 = vpack.c.bf16 %v435, %v434
      %v452 = vld [vmem:[%s1] sm:$0xf]
      %v453 = vld [vmem:[%s1 + $0x4] sm:$0xf]
      %v454 = vld [vmem:[%s1 + $0x8] sm:$0xf]
      %v455 = vld [vmem:[%s1 + $0xc] sm:$0xf]
      %v456 = vld [vmem:[%s1 + $0x10] sm:$0xf]
      %v457 = vld [vmem:[%s1 + $0x14] sm:$0xf]
      %v458 = vld [vmem:[%s1 + $0x18] sm:$0xf]
      %v459 = vld [vmem:[%s1 + $0x1c] sm:$0xf]
      %v460 = vld [vmem:[%s1 + $0x20] sm:$0xf]
      %v461 = vld [vmem:[%s1 + $0x24] sm:$0xf]
      %v462 = vld [vmem:[%s1 + $0x28] sm:$0xf]
      %v463 = vld [vmem:[%s1 + $0x2c] sm:$0xf]
      %v464 = vld [vmem:[%s1 + $0x30] sm:$0xf]
      %v465 = vld [vmem:[%s1 + $0x34] sm:$0xf]
      %v466 = vld [vmem:[%s1 + $0x38] sm:$0xf]
      %v467 = vld [vmem:[%s1 + $0x3c] sm:$0xf]
      %v468 = vld [vmem:[#allocation2 + $0x1] sm:$0xff]
      %v469 = vld [vmem:[#allocation2 + $0x9] sm:$0xff]
      %v470 = vld [vmem:[#allocation2 + $0x19] sm:$0xff]
      %v471 = vld [vmem:[#allocation2 + $0x21] sm:$0xff]
      %v472 = vld [vmem:[#allocation2 + $0x31] sm:$0xff]
      %v473 = vld [vmem:[#allocation2 + $0x39] sm:$0xff]
      %v474 = vld [vmem:[#allocation2 + $0x49] sm:$0xff]
      %v475 = vld [vmem:[#allocation2 + $0x51] sm:$0xff]
      %v476 = vld [vmem:[#allocation2 + $0x61] sm:$0xff]
      %v477 = vld [vmem:[#allocation2 + $0x69] sm:$0xff]
      %v478 = vld [vmem:[#allocation2 + $0x79] sm:$0xff]
      %v479 = vld [vmem:[#allocation2 + $0x81] sm:$0xff]
      %v480 = vld [vmem:[#allocation2 + $0x91] sm:$0xff]
      %v481 = vld [vmem:[#allocation2 + $0x99] sm:$0xff]
      %v482 = vld [vmem:[#allocation2 + $0xa9] sm:$0xff]
      %v483 = vld [vmem:[#allocation2 + $0xb1] sm:$0xff]
      %v484 = vld [vmem:[#allocation2 + $0xc1] sm:$0xff]
      %v485 = vld [vmem:[#allocation2 + $0xc9] sm:$0xff]
      %v486 = vld [vmem:[#allocation2 + $0xd9] sm:$0xff]
      %v487 = vld [vmem:[#allocation2 + $0xe1] sm:$0xff]
      %v488 = vld [vmem:[#allocation2 + $0xf1] sm:$0xff]
      %v489 = vld [vmem:[#allocation2 + $0xf9] sm:$0xff]
      %v490 = vld [vmem:[#allocation2 + $0x109] sm:$0xff]
      %v491 = vld [vmem:[#allocation2 + $0x111] sm:$0xff]
      %v492 = vld [vmem:[#allocation2 + $0x121] sm:$0xff]
      %v493 = vld [vmem:[#allocation2 + $0x129] sm:$0xff]
      %v494 = vld [vmem:[#allocation2 + $0x139] sm:$0xff]
      %v495 = vld [vmem:[#allocation2 + $0x141] sm:$0xff]
      %v496 = vld [vmem:[#allocation2 + $0x151] sm:$0xff]
      %v497 = vld [vmem:[#allocation2 + $0x159] sm:$0xff]
      %v498 = vld [vmem:[#allocation2 + $0x169] sm:$0xff]
      %v499 = vld [vmem:[#allocation2 + $0x171] sm:$0xff]
      %v500 = vpack.c.bf16 %v469, %v468
      %v501 = vpack.c.bf16 %v471, %v470
      %v502 = vpack.c.bf16 %v473, %v472
      %v503 = vpack.c.bf16 %v475, %v474
      %v504 = vpack.c.bf16 %v477, %v476
      %v505 = vpack.c.bf16 %v479, %v478
      %v506 = vpack.c.bf16 %v481, %v480
      %v507 = vpack.c.bf16 %v483, %v482
      %v508 = vpack.c.bf16 %v485, %v484
      %v509 = vpack.c.bf16 %v487, %v486
      %v510 = vpack.c.bf16 %v489, %v488
      %v511 = vpack.c.bf16 %v491, %v490
      %v512 = vpack.c.bf16 %v493, %v492
      %v513 = vpack.c.bf16 %v495, %v494
      %v514 = vpack.c.bf16 %v497, %v496
      %v515 = vpack.c.bf16 %v499, %v498
      %s516 = scalar_lea.vmem %s1, 64
      %v517 = vld [vmem:[%s516] sm:$0xf]
      %v518 = vld [vmem:[%s516 + $0x4] sm:$0xf]
      %v519 = vld [vmem:[%s516 + $0x8] sm:$0xf]
      %v520 = vld [vmem:[%s516 + $0xc] sm:$0xf]
      %v521 = vld [vmem:[%s516 + $0x10] sm:$0xf]
      %v522 = vld [vmem:[%s516 + $0x14] sm:$0xf]
      %v523 = vld [vmem:[%s516 + $0x18] sm:$0xf]
      %v524 = vld [vmem:[%s516 + $0x1c] sm:$0xf]
      %v525 = vld [vmem:[%s516 + $0x20] sm:$0xf]
      %v526 = vld [vmem:[%s516 + $0x24] sm:$0xf]
      %v527 = vld [vmem:[%s516 + $0x28] sm:$0xf]
      %v528 = vld [vmem:[%s516 + $0x2c] sm:$0xf]
      %v529 = vld [vmem:[%s516 + $0x30] sm:$0xf]
      %v530 = vld [vmem:[%s516 + $0x34] sm:$0xf]
      %v531 = vld [vmem:[%s516 + $0x38] sm:$0xf]
      %v532 = vld [vmem:[%s516 + $0x3c] sm:$0xf]
      %v549 = vunpack.c.l.b16 %v517
      %v550 = vunpack.c.l.b16 %v518
      %v551 = vunpack.c.l.b16 %v519
      %v552 = vunpack.c.l.b16 %v520
      %v553 = vunpack.c.l.b16 %v521
      %v554 = vunpack.c.l.b16 %v522
      %v555 = vunpack.c.l.b16 %v523
      %v556 = vunpack.c.l.b16 %v524
      %v557 = vunpack.c.l.b16 %v525
      %v558 = vunpack.c.l.b16 %v526
      %v559 = vunpack.c.l.b16 %v527
      %v560 = vunpack.c.l.b16 %v528
      %v561 = vunpack.c.l.b16 %v529
      %v562 = vunpack.c.l.b16 %v530
      %v563 = vunpack.c.l.b16 %v531
      %v564 = vunpack.c.l.b16 %v532
      %v565 = vpack.c.b16 %v550, %v549
      %v566 = vpack.c.b16 %v552, %v551
      %v567 = vpack.c.b16 %v554, %v553
      %v568 = vpack.c.b16 %v556, %v555
      %v569 = vpack.c.b16 %v558, %v557
      %v570 = vpack.c.b16 %v560, %v559
      %v571 = vpack.c.b16 %v562, %v561
      %v572 = vpack.c.b16 %v564, %v563
      %581 = vmatprep.subr.bf16.mxu0 0
      %582 = vmatpush1.bf16.msra.mxu0 %v572
      %583 = vmatprep.subr.bf16.mxu0 0
      %584 = vmatpush1.bf16.msra.mxu0 %v571
      %585 = vmatprep.subr.bf16.mxu0 0
      %586 = vmatpush1.bf16.msra.mxu0 %v570
      %587 = vmatprep.subr.bf16.mxu0 0
      %588 = vmatpush1.bf16.msra.mxu0 %v569
      %589 = vmatprep.subr.bf16.mxu0 0
      %590 = vmatpush1.bf16.msra.mxu0 %v568
      %591 = vmatprep.subr.bf16.mxu0 0
      %592 = vmatpush1.bf16.msra.mxu0 %v567
      %593 = vmatprep.subr.bf16.mxu0 0
      %594 = vmatpush1.bf16.msra.mxu0 %v566
      %595 = vmatprep.subr.bf16.mxu0 0
      %596 = vmatpush1.bf16.msra.mxu0 %v565
      %597 = vmatprep.subr.bf16.mxu0 0
      %598 = vmatpush2.bf16.msra.mxu0 0
      %599 = vmatprep.subr.bf16.mxu0 0
      %600 = vmatpush2.bf16.msra.mxu0 0
      %601 = vmatprep.subr.bf16.mxu0 0
      %602 = vmatpush2.bf16.msra.mxu0 0
      %603 = vmatprep.subr.bf16.mxu0 0
      %604 = vmatpush2.bf16.msra.mxu0 0
      %605 = vmatprep.subr.bf16.mxu0 0
      %606 = vmatpush2.bf16.msra.mxu0 0
      %607 = vmatprep.subr.bf16.mxu0 0
      %608 = vmatpush2.bf16.msra.mxu0 0
      %609 = vmatprep.subr.bf16.mxu0 0
      %610 = vmatpush2.bf16.msra.mxu0 0
      %611 = vmatprep.subr.bf16.mxu0 0
      %612 = vmatpush2.bf16.msra.mxu0 0
      %613 = vmatprep.mubr.bf16.mxu0 0
      %614 = vmatmul.mubr.bf16.gmra.mxu0 %v500
      %v615 = vpop.f32.mrf.mxu0
      %v616 = vadd.f32 0.0, %v615
      %v617 = vpop.f32.mrf.mxu0
      %v618 = vpop.f32.mrf.mxu0
      %v619 = vadd.f32 0.0, %v618
      %v620 = vpop.f32.mrf.mxu0
      %621 = vmatprep.mubr.bf16.mxu0 0
      %622 = vmatmul.mubr.bf16.gmra.mxu0 %v501
      %v623 = vpop.f32.mrf.mxu0
      %v624 = vadd.f32 0.0, %v623
      %v625 = vpop.f32.mrf.mxu0
      %v626 = vpop.f32.mrf.mxu0
      %v627 = vadd.f32 0.0, %v626
      %v628 = vpop.f32.mrf.mxu0
      %629 = vmatprep.mubr.bf16.mxu0 0
      %630 = vmatmul.mubr.bf16.gmra.mxu0 %v502
      %v631 = vpop.f32.mrf.mxu0
      %v632 = vadd.f32 0.0, %v631
      %v633 = vpop.f32.mrf.mxu0
      %v634 = vpop.f32.mrf.mxu0
      %v635 = vadd.f32 0.0, %v634
      %v636 = vpop.f32.mrf.mxu0
      %637 = vmatprep.mubr.bf16.mxu0 0
      %638 = vmatmul.mubr.bf16.gmra.mxu0 %v503
      %v639 = vpop.f32.mrf.mxu0
      %v640 = vadd.f32 0.0, %v639
      %v641 = vpop.f32.mrf.mxu0
      %v642 = vpop.f32.mrf.mxu0
      %v643 = vadd.f32 0.0, %v642
      %v644 = vpop.f32.mrf.mxu0
      %645 = vmatprep.mubr.bf16.mxu0 0
      %646 = vmatmul.mubr.bf16.gmra.mxu0 %v504
      %v647 = vpop.f32.mrf.mxu0
      %v648 = vadd.f32 0.0, %v647
      %v649 = vpop.f32.mrf.mxu0
      %v650 = vpop.f32.mrf.mxu0
      %v651 = vadd.f32 0.0, %v650
      %v652 = vpop.f32.mrf.mxu0
      %653 = vmatprep.mubr.bf16.mxu0 0
      %654 = vmatmul.mubr.bf16.gmra.mxu0 %v505
      %v655 = vpop.f32.mrf.mxu0
      %v656 = vadd.f32 0.0, %v655
      %v657 = vpop.f32.mrf.mxu0
      %v658 = vpop.f32.mrf.mxu0
      %v659 = vadd.f32 0.0, %v658
      %v660 = vpop.f32.mrf.mxu0
      %661 = vmatprep.mubr.bf16.mxu0 0
      %662 = vmatmul.mubr.bf16.gmra.mxu0 %v506
      %v663 = vpop.f32.mrf.mxu0
      %v664 = vadd.f32 0.0, %v663
      %v665 = vpop.f32.mrf.mxu0
      %v666 = vpop.f32.mrf.mxu0
      %v667 = vadd.f32 0.0, %v666
      %v668 = vpop.f32.mrf.mxu0
      %669 = vmatprep.mubr.bf16.mxu0 0
      %670 = vmatmul.mubr.bf16.gmra.mxu0 %v507
      %v671 = vpop.f32.mrf.mxu0
      %v672 = vadd.f32 0.0, %v671
      %v673 = vpop.f32.mrf.mxu0
      %v674 = vpop.f32.mrf.mxu0
      %v675 = vadd.f32 0.0, %v674
      %v676 = vpop.f32.mrf.mxu0
      %677 = vmatprep.mubr.bf16.mxu0 0
      %678 = vmatmul.mubr.bf16.gmra.mxu0 %v508
      %v679 = vpop.f32.mrf.mxu0
      %v680 = vadd.f32 0.0, %v679
      %v681 = vpop.f32.mrf.mxu0
      %v682 = vpop.f32.mrf.mxu0
      %v683 = vadd.f32 0.0, %v682
      %v684 = vpop.f32.mrf.mxu0
      %685 = vmatprep.mubr.bf16.mxu0 0
      %686 = vmatmul.mubr.bf16.gmra.mxu0 %v509
      %v687 = vpop.f32.mrf.mxu0
      %v688 = vadd.f32 0.0, %v687
      %v689 = vpop.f32.mrf.mxu0
      %v690 = vpop.f32.mrf.mxu0
      %v691 = vadd.f32 0.0, %v690
      %v692 = vpop.f32.mrf.mxu0
      %693 = vmatprep.mubr.bf16.mxu0 0
      %694 = vmatmul.mubr.bf16.gmra.mxu0 %v510
      %v695 = vpop.f32.mrf.mxu0
      %v696 = vadd.f32 0.0, %v695
      %v697 = vpop.f32.mrf.mxu0
      %v698 = vpop.f32.mrf.mxu0
      %v699 = vadd.f32 0.0, %v698
      %v700 = vpop.f32.mrf.mxu0
      %701 = vmatprep.mubr.bf16.mxu0 0
      %702 = vmatmul.mubr.bf16.gmra.mxu0 %v511
      %v703 = vpop.f32.mrf.mxu0
      %v704 = vadd.f32 0.0, %v703
      %v705 = vpop.f32.mrf.mxu0
      %v706 = vpop.f32.mrf.mxu0
      %v707 = vadd.f32 0.0, %v706
      %v708 = vpop.f32.mrf.mxu0
      %709 = vmatprep.mubr.bf16.mxu0 0
      %710 = vmatmul.mubr.bf16.gmra.mxu0 %v512
      %v711 = vpop.f32.mrf.mxu0
      %v712 = vadd.f32 0.0, %v711
      %v713 = vpop.f32.mrf.mxu0
      %v714 = vpop.f32.mrf.mxu0
      %v715 = vadd.f32 0.0, %v714
      %v716 = vpop.f32.mrf.mxu0
      %717 = vmatprep.mubr.bf16.mxu0 0
      %718 = vmatmul.mubr.bf16.gmra.mxu0 %v513
      %v719 = vpop.f32.mrf.mxu0
      %v720 = vadd.f32 0.0, %v719
      %v721 = vpop.f32.mrf.mxu0
      %v722 = vpop.f32.mrf.mxu0
      %v723 = vadd.f32 0.0, %v722
      %v724 = vpop.f32.mrf.mxu0
      %725 = vmatprep.mubr.bf16.mxu0 0
      %726 = vmatmul.mubr.bf16.gmra.mxu0 %v514
      %v727 = vpop.f32.mrf.mxu0
      %v728 = vadd.f32 0.0, %v727
      %v729 = vpop.f32.mrf.mxu0
      %v730 = vpop.f32.mrf.mxu0
      %v731 = vadd.f32 0.0, %v730
      %v732 = vpop.f32.mrf.mxu0
      %733 = vmatprep.mubr.bf16.mxu0 0
      %734 = vmatmul.mubr.bf16.gmra.mxu0 %v515
      %v735 = vpop.f32.mrf.mxu0
      %v736 = vadd.f32 0.0, %v735
      %v737 = vpop.f32.mrf.mxu0
      %v738 = vpop.f32.mrf.mxu0
      %v739 = vadd.f32 0.0, %v738
      %v740 = vpop.f32.mrf.mxu0
      %741 = vdwg.mxu0
      %v758 = vunpack.c.l.b16 %v452
      %v759 = vunpack.c.l.b16 %v453
      %v760 = vunpack.c.l.b16 %v454
      %v761 = vunpack.c.l.b16 %v455
      %v762 = vunpack.c.l.b16 %v456
      %v763 = vunpack.c.l.b16 %v457
      %v764 = vunpack.c.l.b16 %v458
      %v765 = vunpack.c.l.b16 %v459
      %v766 = vunpack.c.l.b16 %v460
      %v767 = vunpack.c.l.b16 %v461
      %v768 = vunpack.c.l.b16 %v462
      %v769 = vunpack.c.l.b16 %v463
      %v770 = vunpack.c.l.b16 %v464
      %v771 = vunpack.c.l.b16 %v465
      %v772 = vunpack.c.l.b16 %v466
      %v773 = vunpack.c.l.b16 %v467
      %v774 = vpack.c.b16 %v759, %v758
      %v775 = vpack.c.b16 %v761, %v760
      %v776 = vpack.c.b16 %v763, %v762
      %v777 = vpack.c.b16 %v765, %v764
      %v778 = vpack.c.b16 %v767, %v766
      %v779 = vpack.c.b16 %v769, %v768
      %v780 = vpack.c.b16 %v771, %v770
      %v781 = vpack.c.b16 %v773, %v772
      %790 = vmatprep.subr.bf16.mxu0 0
      %791 = vmatpush1.bf16.msra.mxu0 %v781
      %792 = vmatprep.subr.bf16.mxu0 0
      %793 = vmatpush1.bf16.msra.mxu0 %v780
      %794 = vmatprep.subr.bf16.mxu0 0
      %795 = vmatpush1.bf16.msra.mxu0 %v779
      %796 = vmatprep.subr.bf16.mxu0 0
      %797 = vmatpush1.bf16.msra.mxu0 %v778
      %798 = vmatprep.subr.bf16.mxu0 0
      %799 = vmatpush1.bf16.msra.mxu0 %v777
      %800 = vmatprep.subr.bf16.mxu0 0
      %801 = vmatpush1.bf16.msra.mxu0 %v776
      %802 = vmatprep.subr.bf16.mxu0 0
      %803 = vmatpush1.bf16.msra.mxu0 %v775
      %804 = vmatprep.subr.bf16.mxu0 0
      %805 = vmatpush1.bf16.msra.mxu0 %v774
      %806 = vmatprep.subr.bf16.mxu0 0
      %807 = vmatpush2.bf16.msra.mxu0 0
      %808 = vmatprep.subr.bf16.mxu0 0
      %809 = vmatpush2.bf16.msra.mxu0 0
      %810 = vmatprep.subr.bf16.mxu0 0
      %811 = vmatpush2.bf16.msra.mxu0 0
      %812 = vmatprep.subr.bf16.mxu0 0
      %813 = vmatpush2.bf16.msra.mxu0 0
      %814 = vmatprep.subr.bf16.mxu0 0
      %815 = vmatpush2.bf16.msra.mxu0 0
      %816 = vmatprep.subr.bf16.mxu0 0
      %817 = vmatpush2.bf16.msra.mxu0 0
      %818 = vmatprep.subr.bf16.mxu0 0
      %819 = vmatpush2.bf16.msra.mxu0 0
      %820 = vmatprep.subr.bf16.mxu0 0
      %821 = vmatpush2.bf16.msra.mxu0 0
      %822 = vmatprep.mubr.bf16.mxu0 0
      %823 = vmatmul.mubr.bf16.gmra.mxu0 %v436
      %v824 = vpop.f32.mrf.mxu0
      %v825 = vadd.f32 %v616, %v824
      %v826 = vpop.f32.mrf.mxu0
      %v827 = vpop.f32.mrf.mxu0
      %v828 = vadd.f32 %v619, %v827
      %v829 = vpop.f32.mrf.mxu0
      %830 = vmatprep.mubr.bf16.mxu0 0
      %831 = vmatmul.mubr.bf16.gmra.mxu0 %v437
      %v832 = vpop.f32.mrf.mxu0
      %v833 = vadd.f32 %v624, %v832
      %v834 = vpop.f32.mrf.mxu0
      %v835 = vpop.f32.mrf.mxu0
      %v836 = vadd.f32 %v627, %v835
      %v837 = vpop.f32.mrf.mxu0
      %838 = vmatprep.mubr.bf16.mxu0 0
      %839 = vmatmul.mubr.bf16.gmra.mxu0 %v438
      %v840 = vpop.f32.mrf.mxu0
      %v841 = vadd.f32 %v632, %v840
      %v842 = vpop.f32.mrf.mxu0
      %v843 = vpop.f32.mrf.mxu0
      %v844 = vadd.f32 %v635, %v843
      %v845 = vpop.f32.mrf.mxu0
      %846 = vmatprep.mubr.bf16.mxu0 0
      %847 = vmatmul.mubr.bf16.gmra.mxu0 %v439
      %v848 = vpop.f32.mrf.mxu0
      %v849 = vadd.f32 %v640, %v848
      %v850 = vpop.f32.mrf.mxu0
      %v851 = vpop.f32.mrf.mxu0
      %v852 = vadd.f32 %v643, %v851
      %v853 = vpop.f32.mrf.mxu0
      %854 = vmatprep.mubr.bf16.mxu0 0
      %855 = vmatmul.mubr.bf16.gmra.mxu0 %v440
      %v856 = vpop.f32.mrf.mxu0
      %v857 = vadd.f32 %v648, %v856
      %v858 = vpop.f32.mrf.mxu0
      %v859 = vpop.f32.mrf.mxu0
      %v860 = vadd.f32 %v651, %v859
      %v861 = vpop.f32.mrf.mxu0
      %862 = vmatprep.mubr.bf16.mxu0 0
      %863 = vmatmul.mubr.bf16.gmra.mxu0 %v441
      %v864 = vpop.f32.mrf.mxu0
      %v865 = vadd.f32 %v656, %v864
      %v866 = vpop.f32.mrf.mxu0
      %v867 = vpop.f32.mrf.mxu0
      %v868 = vadd.f32 %v659, %v867
      %v869 = vpop.f32.mrf.mxu0
      %870 = vmatprep.mubr.bf16.mxu0 0
      %871 = vmatmul.mubr.bf16.gmra.mxu0 %v442
      %v872 = vpop.f32.mrf.mxu0
      %v873 = vadd.f32 %v664, %v872
      %v874 = vpop.f32.mrf.mxu0
      %v875 = vpop.f32.mrf.mxu0
      %v876 = vadd.f32 %v667, %v875
      %v877 = vpop.f32.mrf.mxu0
      %878 = vmatprep.mubr.bf16.mxu0 0
      %879 = vmatmul.mubr.bf16.gmra.mxu0 %v443
      %v880 = vpop.f32.mrf.mxu0
      %v881 = vadd.f32 %v672, %v880
      %v882 = vpop.f32.mrf.mxu0
      %v883 = vpop.f32.mrf.mxu0
      %v884 = vadd.f32 %v675, %v883
      %v885 = vpop.f32.mrf.mxu0
      %886 = vmatprep.mubr.bf16.mxu0 0
      %887 = vmatmul.mubr.bf16.gmra.mxu0 %v444
      %v888 = vpop.f32.mrf.mxu0
      %v889 = vadd.f32 %v680, %v888
      %v890 = vpop.f32.mrf.mxu0
      %v891 = vpop.f32.mrf.mxu0
      %v892 = vadd.f32 %v683, %v891
      %v893 = vpop.f32.mrf.mxu0
      %894 = vmatprep.mubr.bf16.mxu0 0
      %895 = vmatmul.mubr.bf16.gmra.mxu0 %v445
      %v896 = vpop.f32.mrf.mxu0
      %v897 = vadd.f32 %v688, %v896
      %v898 = vpop.f32.mrf.mxu0
      %v899 = vpop.f32.mrf.mxu0
      %v900 = vadd.f32 %v691, %v899
      %v901 = vpop.f32.mrf.mxu0
      %902 = vmatprep.mubr.bf16.mxu0 0
      %903 = vmatmul.mubr.bf16.gmra.mxu0 %v446
      %v904 = vpop.f32.mrf.mxu0
      %v905 = vadd.f32 %v696, %v904
      %v906 = vpop.f32.mrf.mxu0
      %v907 = vpop.f32.mrf.mxu0
      %v908 = vadd.f32 %v699, %v907
      %v909 = vpop.f32.mrf.mxu0
      %910 = vmatprep.mubr.bf16.mxu0 0
      %911 = vmatmul.mubr.bf16.gmra.mxu0 %v447
      %v912 = vpop.f32.mrf.mxu0
      %v913 = vadd.f32 %v704, %v912
      %v914 = vpop.f32.mrf.mxu0
      %v915 = vpop.f32.mrf.mxu0
      %v916 = vadd.f32 %v707, %v915
      %v917 = vpop.f32.mrf.mxu0
      %918 = vmatprep.mubr.bf16.mxu0 0
      %919 = vmatmul.mubr.bf16.gmra.mxu0 %v448
      %v920 = vpop.f32.mrf.mxu0
      %v921 = vadd.f32 %v712, %v920
      %v922 = vpop.f32.mrf.mxu0
      %v923 = vpop.f32.mrf.mxu0
      %v924 = vadd.f32 %v715, %v923
      %v925 = vpop.f32.mrf.mxu0
      %926 = vmatprep.mubr.bf16.mxu0 0
      %927 = vmatmul.mubr.bf16.gmra.mxu0 %v449
      %v928 = vpop.f32.mrf.mxu0
      %v929 = vadd.f32 %v720, %v928
      %v930 = vpop.f32.mrf.mxu0
      %v931 = vpop.f32.mrf.mxu0
      %v932 = vadd.f32 %v723, %v931
      %v933 = vpop.f32.mrf.mxu0
      %934 = vmatprep.mubr.bf16.mxu0 0
      %935 = vmatmul.mubr.bf16.gmra.mxu0 %v450
      %v936 = vpop.f32.mrf.mxu0
      %v937 = vadd.f32 %v728, %v936
      %v938 = vpop.f32.mrf.mxu0
      %v939 = vpop.f32.mrf.mxu0
      %v940 = vadd.f32 %v731, %v939
      %v941 = vpop.f32.mrf.mxu0
      %942 = vmatprep.mubr.bf16.mxu0 0
      %943 = vmatmul.mubr.bf16.gmra.mxu0 %v451
      %v944 = vpop.f32.mrf.mxu0
      %v945 = vadd.f32 %v736, %v944
      %v946 = vpop.f32.mrf.mxu0
      %v947 = vpop.f32.mrf.mxu0
      %v948 = vadd.f32 %v739, %v947
      %v949 = vpop.f32.mrf.mxu0
      %950 = vdwg.mxu0
      %v951 = vld [vmem:[#allocation2 + $0x2] sm:$0xff]
      %v952 = vld [vmem:[#allocation2 + $0xa] sm:$0xff]
      %v953 = vld [vmem:[#allocation2 + $0x1a] sm:$0xff]
      %v954 = vld [vmem:[#allocation2 + $0x22] sm:$0xff]
      %v955 = vld [vmem:[#allocation2 + $0x32] sm:$0xff]
      %v956 = vld [vmem:[#allocation2 + $0x3a] sm:$0xff]
      %v957 = vld [vmem:[#allocation2 + $0x4a] sm:$0xff]
      %v958 = vld [vmem:[#allocation2 + $0x52] sm:$0xff]
      %v959 = vld [vmem:[#allocation2 + $0x62] sm:$0xff]
      %v960 = vld [vmem:[#allocation2 + $0x6a] sm:$0xff]
      %v961 = vld [vmem:[#allocation2 + $0x7a] sm:$0xff]
      %v962 = vld [vmem:[#allocation2 + $0x82] sm:$0xff]
      %v963 = vld [vmem:[#allocation2 + $0x92] sm:$0xff]
      %v964 = vld [vmem:[#allocation2 + $0x9a] sm:$0xff]
      %v965 = vld [vmem:[#allocation2 + $0xaa] sm:$0xff]
      %v966 = vld [vmem:[#allocation2 + $0xb2] sm:$0xff]
      %v967 = vld [vmem:[#allocation2 + $0xc2] sm:$0xff]
      %v968 = vld [vmem:[#allocation2 + $0xca] sm:$0xff]
      %v969 = vld [vmem:[#allocation2 + $0xda] sm:$0xff]
      %v970 = vld [vmem:[#allocation2 + $0xe2] sm:$0xff]
      %v971 = vld [vmem:[#allocation2 + $0xf2] sm:$0xff]
      %v972 = vld [vmem:[#allocation2 + $0xfa] sm:$0xff]
      %v973 = vld [vmem:[#allocation2 + $0x10a] sm:$0xff]
      %v974 = vld [vmem:[#allocation2 + $0x112] sm:$0xff]
      %v975 = vld [vmem:[#allocation2 + $0x122] sm:$0xff]
      %v976 = vld [vmem:[#allocation2 + $0x12a] sm:$0xff]
      %v977 = vld [vmem:[#allocation2 + $0x13a] sm:$0xff]
      %v978 = vld [vmem:[#allocation2 + $0x142] sm:$0xff]
      %v979 = vld [vmem:[#allocation2 + $0x152] sm:$0xff]
      %v980 = vld [vmem:[#allocation2 + $0x15a] sm:$0xff]
      %v981 = vld [vmem:[#allocation2 + $0x16a] sm:$0xff]
      %v982 = vld [vmem:[#allocation2 + $0x172] sm:$0xff]
      %v983 = vpack.c.bf16 %v952, %v951
      %v984 = vpack.c.bf16 %v954, %v953
      %v985 = vpack.c.bf16 %v956, %v955
      %v986 = vpack.c.bf16 %v958, %v957
      %v987 = vpack.c.bf16 %v960, %v959
      %v988 = vpack.c.bf16 %v962, %v961
      %v989 = vpack.c.bf16 %v964, %v963
      %v990 = vpack.c.bf16 %v966, %v965
      %v991 = vpack.c.bf16 %v968, %v967
      %v992 = vpack.c.bf16 %v970, %v969
      %v993 = vpack.c.bf16 %v972, %v971
      %v994 = vpack.c.bf16 %v974, %v973
      %v995 = vpack.c.bf16 %v976, %v975
      %v996 = vpack.c.bf16 %v978, %v977
      %v997 = vpack.c.bf16 %v980, %v979
      %v998 = vpack.c.bf16 %v982, %v981
      %s999 = scalar_lea.vmem %s1, 128
      %v1000 = vld [vmem:[%s999] sm:$0xf]
      %v1001 = vld [vmem:[%s999 + $0x4] sm:$0xf]
      %v1002 = vld [vmem:[%s999 + $0x8] sm:$0xf]
      %v1003 = vld [vmem:[%s999 + $0xc] sm:$0xf]
      %v1004 = vld [vmem:[%s999 + $0x10] sm:$0xf]
      %v1005 = vld [vmem:[%s999 + $0x14] sm:$0xf]
      %v1006 = vld [vmem:[%s999 + $0x18] sm:$0xf]
      %v1007 = vld [vmem:[%s999 + $0x1c] sm:$0xf]
      %v1008 = vld [vmem:[%s999 + $0x20] sm:$0xf]
      %v1009 = vld [vmem:[%s999 + $0x24] sm:$0xf]
      %v1010 = vld [vmem:[%s999 + $0x28] sm:$0xf]
      %v1011 = vld [vmem:[%s999 + $0x2c] sm:$0xf]
      %v1012 = vld [vmem:[%s999 + $0x30] sm:$0xf]
      %v1013 = vld [vmem:[%s999 + $0x34] sm:$0xf]
      %v1014 = vld [vmem:[%s999 + $0x38] sm:$0xf]
      %v1015 = vld [vmem:[%s999 + $0x3c] sm:$0xf]
      %v1032 = vunpack.c.l.b16 %v1000
      %v1033 = vunpack.c.l.b16 %v1001
      %v1034 = vunpack.c.l.b16 %v1002
      %v1035 = vunpack.c.l.b16 %v1003
      %v1036 = vunpack.c.l.b16 %v1004
      %v1037 = vunpack.c.l.b16 %v1005
      %v1038 = vunpack.c.l.b16 %v1006
      %v1039 = vunpack.c.l.b16 %v1007
      %v1040 = vunpack.c.l.b16 %v1008
      %v1041 = vunpack.c.l.b16 %v1009
      %v1042 = vunpack.c.l.b16 %v1010
      %v1043 = vunpack.c.l.b16 %v1011
      %v1044 = vunpack.c.l.b16 %v1012
      %v1045 = vunpack.c.l.b16 %v1013
      %v1046 = vunpack.c.l.b16 %v1014
      %v1047 = vunpack.c.l.b16 %v1015
      %v1048 = vpack.c.b16 %v1033, %v1032
      %v1049 = vpack.c.b16 %v1035, %v1034
      %v1050 = vpack.c.b16 %v1037, %v1036
      %v1051 = vpack.c.b16 %v1039, %v1038
      %v1052 = vpack.c.b16 %v1041, %v1040
      %v1053 = vpack.c.b16 %v1043, %v1042
      %v1054 = vpack.c.b16 %v1045, %v1044
      %v1055 = vpack.c.b16 %v1047, %v1046
      %1064 = vmatprep.subr.bf16.mxu0 0
      %1065 = vmatpush1.bf16.msra.mxu0 %v1055
      %1066 = vmatprep.subr.bf16.mxu0 0
      %1067 = vmatpush1.bf16.msra.mxu0 %v1054
      %1068 = vmatprep.subr.bf16.mxu0 0
      %1069 = vmatpush1.bf16.msra.mxu0 %v1053
      %1070 = vmatprep.subr.bf16.mxu0 0
      %1071 = vmatpush1.bf16.msra.mxu0 %v1052
      %1072 = vmatprep.subr.bf16.mxu0 0
      %1073 = vmatpush1.bf16.msra.mxu0 %v1051
      %1074 = vmatprep.subr.bf16.mxu0 0
      %1075 = vmatpush1.bf16.msra.mxu0 %v1050
      %1076 = vmatprep.subr.bf16.mxu0 0
      %1077 = vmatpush1.bf16.msra.mxu0 %v1049
      %1078 = vmatprep.subr.bf16.mxu0 0
      %1079 = vmatpush1.bf16.msra.mxu0 %v1048
      %1080 = vmatprep.subr.bf16.mxu0 0
      %1081 = vmatpush2.bf16.msra.mxu0 0
      %1082 = vmatprep.subr.bf16.mxu0 0
      %1083 = vmatpush2.bf16.msra.mxu0 0
      %1084 = vmatprep.subr.bf16.mxu0 0
      %1085 = vmatpush2.bf16.msra.mxu0 0
      %1086 = vmatprep.subr.bf16.mxu0 0
      %1087 = vmatpush2.bf16.msra.mxu0 0
      %1088 = vmatprep.subr.bf16.mxu0 0
      %1089 = vmatpush2.bf16.msra.mxu0 0
      %1090 = vmatprep.subr.bf16.mxu0 0
      %1091 = vmatpush2.bf16.msra.mxu0 0
      %1092 = vmatprep.subr.bf16.mxu0 0
      %1093 = vmatpush2.bf16.msra.mxu0 0
      %1094 = vmatprep.subr.bf16.mxu0 0
      %1095 = vmatpush2.bf16.msra.mxu0 0
      %1096 = vmatprep.mubr.bf16.mxu0 0
      %1097 = vmatmul.mubr.bf16.gmra.mxu0 %v983
      %v1098 = vpop.f32.mrf.mxu0
      %v1099 = vadd.f32 0.0, %v1098
      %v1100 = vpop.f32.mrf.mxu0
      %v1101 = vpop.f32.mrf.mxu0
      %v1102 = vadd.f32 0.0, %v1101
      %v1103 = vpop.f32.mrf.mxu0
      %1104 = vmatprep.mubr.bf16.mxu0 0
      %1105 = vmatmul.mubr.bf16.gmra.mxu0 %v984
      %v1106 = vpop.f32.mrf.mxu0
      %v1107 = vadd.f32 0.0, %v1106
      %v1108 = vpop.f32.mrf.mxu0
      %v1109 = vpop.f32.mrf.mxu0
      %v1110 = vadd.f32 0.0, %v1109
      %v1111 = vpop.f32.mrf.mxu0
      %1112 = vmatprep.mubr.bf16.mxu0 0
      %1113 = vmatmul.mubr.bf16.gmra.mxu0 %v985
      %v1114 = vpop.f32.mrf.mxu0
      %v1115 = vadd.f32 0.0, %v1114
      %v1116 = vpop.f32.mrf.mxu0
      %v1117 = vpop.f32.mrf.mxu0
      %v1118 = vadd.f32 0.0, %v1117
      %v1119 = vpop.f32.mrf.mxu0
      %1120 = vmatprep.mubr.bf16.mxu0 0
      %1121 = vmatmul.mubr.bf16.gmra.mxu0 %v986
      %v1122 = vpop.f32.mrf.mxu0
      %v1123 = vadd.f32 0.0, %v1122
      %v1124 = vpop.f32.mrf.mxu0
      %v1125 = vpop.f32.mrf.mxu0
      %v1126 = vadd.f32 0.0, %v1125
      %v1127 = vpop.f32.mrf.mxu0
      %1128 = vmatprep.mubr.bf16.mxu0 0
      %1129 = vmatmul.mubr.bf16.gmra.mxu0 %v987
      %v1130 = vpop.f32.mrf.mxu0
      %v1131 = vadd.f32 0.0, %v1130
      %v1132 = vpop.f32.mrf.mxu0
      %v1133 = vpop.f32.mrf.mxu0
      %v1134 = vadd.f32 0.0, %v1133
      %v1135 = vpop.f32.mrf.mxu0
      %1136 = vmatprep.mubr.bf16.mxu0 0
      %1137 = vmatmul.mubr.bf16.gmra.mxu0 %v988
      %v1138 = vpop.f32.mrf.mxu0
      %v1139 = vadd.f32 0.0, %v1138
      %v1140 = vpop.f32.mrf.mxu0
      %v1141 = vpop.f32.mrf.mxu0
      %v1142 = vadd.f32 0.0, %v1141
      %v1143 = vpop.f32.mrf.mxu0
      %1144 = vmatprep.mubr.bf16.mxu0 0
      %1145 = vmatmul.mubr.bf16.gmra.mxu0 %v989
      %v1146 = vpop.f32.mrf.mxu0
      %v1147 = vadd.f32 0.0, %v1146
      %v1148 = vpop.f32.mrf.mxu0
      %v1149 = vpop.f32.mrf.mxu0
      %v1150 = vadd.f32 0.0, %v1149
      %v1151 = vpop.f32.mrf.mxu0
      %1152 = vmatprep.mubr.bf16.mxu0 0
      %1153 = vmatmul.mubr.bf16.gmra.mxu0 %v990
      %v1154 = vpop.f32.mrf.mxu0
      %v1155 = vadd.f32 0.0, %v1154
      %v1156 = vpop.f32.mrf.mxu0
      %v1157 = vpop.f32.mrf.mxu0
      %v1158 = vadd.f32 0.0, %v1157
      %v1159 = vpop.f32.mrf.mxu0
      %1160 = vmatprep.mubr.bf16.mxu0 0
      %1161 = vmatmul.mubr.bf16.gmra.mxu0 %v991
      %v1162 = vpop.f32.mrf.mxu0
      %v1163 = vadd.f32 0.0, %v1162
      %v1164 = vpop.f32.mrf.mxu0
      %v1165 = vpop.f32.mrf.mxu0
      %v1166 = vadd.f32 0.0, %v1165
      %v1167 = vpop.f32.mrf.mxu0
      %1168 = vmatprep.mubr.bf16.mxu0 0
      %1169 = vmatmul.mubr.bf16.gmra.mxu0 %v992
      %v1170 = vpop.f32.mrf.mxu0
      %v1171 = vadd.f32 0.0, %v1170
      %v1172 = vpop.f32.mrf.mxu0
      %v1173 = vpop.f32.mrf.mxu0
      %v1174 = vadd.f32 0.0, %v1173
      %v1175 = vpop.f32.mrf.mxu0
      %1176 = vmatprep.mubr.bf16.mxu0 0
      %1177 = vmatmul.mubr.bf16.gmra.mxu0 %v993
      %v1178 = vpop.f32.mrf.mxu0
      %v1179 = vadd.f32 0.0, %v1178
      %v1180 = vpop.f32.mrf.mxu0
      %v1181 = vpop.f32.mrf.mxu0
      %v1182 = vadd.f32 0.0, %v1181
      %v1183 = vpop.f32.mrf.mxu0
      %1184 = vmatprep.mubr.bf16.mxu0 0
      %1185 = vmatmul.mubr.bf16.gmra.mxu0 %v994
      %v1186 = vpop.f32.mrf.mxu0
      %v1187 = vadd.f32 0.0, %v1186
      %v1188 = vpop.f32.mrf.mxu0
      %v1189 = vpop.f32.mrf.mxu0
      %v1190 = vadd.f32 0.0, %v1189
      %v1191 = vpop.f32.mrf.mxu0
      %1192 = vmatprep.mubr.bf16.mxu0 0
      %1193 = vmatmul.mubr.bf16.gmra.mxu0 %v995
      %v1194 = vpop.f32.mrf.mxu0
      %v1195 = vadd.f32 0.0, %v1194
      %v1196 = vpop.f32.mrf.mxu0
      %v1197 = vpop.f32.mrf.mxu0
      %v1198 = vadd.f32 0.0, %v1197
      %v1199 = vpop.f32.mrf.mxu0
      %1200 = vmatprep.mubr.bf16.mxu0 0
      %1201 = vmatmul.mubr.bf16.gmra.mxu0 %v996
      %v1202 = vpop.f32.mrf.mxu0
      %v1203 = vadd.f32 0.0, %v1202
      %v1204 = vpop.f32.mrf.mxu0
      %v1205 = vpop.f32.mrf.mxu0
      %v1206 = vadd.f32 0.0, %v1205
      %v1207 = vpop.f32.mrf.mxu0
      %1208 = vmatprep.mubr.bf16.mxu0 0
      %1209 = vmatmul.mubr.bf16.gmra.mxu0 %v997
      %v1210 = vpop.f32.mrf.mxu0
      %v1211 = vadd.f32 0.0, %v1210
      %v1212 = vpop.f32.mrf.mxu0
      %v1213 = vpop.f32.mrf.mxu0
      %v1214 = vadd.f32 0.0, %v1213
      %v1215 = vpop.f32.mrf.mxu0
      %1216 = vmatprep.mubr.bf16.mxu0 0
      %1217 = vmatmul.mubr.bf16.gmra.mxu0 %v998
      %v1218 = vpop.f32.mrf.mxu0
      %v1219 = vadd.f32 0.0, %v1218
      %v1220 = vpop.f32.mrf.mxu0
      %v1221 = vpop.f32.mrf.mxu0
      %v1222 = vadd.f32 0.0, %v1221
      %v1223 = vpop.f32.mrf.mxu0
      %1224 = vdwg.mxu0
      %v1225 = vadd.f32 %v825, %v1099
      %v1226 = vadd.f32 %v828, %v1102
      %v1227 = vadd.f32 %v833, %v1107
      %v1228 = vadd.f32 %v836, %v1110
      %v1229 = vadd.f32 %v841, %v1115
      %v1230 = vadd.f32 %v844, %v1118
      %v1231 = vadd.f32 %v849, %v1123
      %v1232 = vadd.f32 %v852, %v1126
      %v1233 = vadd.f32 %v857, %v1131
      %v1234 = vadd.f32 %v860, %v1134
      %v1235 = vadd.f32 %v865, %v1139
      %v1236 = vadd.f32 %v868, %v1142
      %v1237 = vadd.f32 %v873, %v1147
      %v1238 = vadd.f32 %v876, %v1150
      %v1239 = vadd.f32 %v881, %v1155
      %v1240 = vadd.f32 %v884, %v1158
      %v1241 = vadd.f32 %v889, %v1163
      %v1242 = vadd.f32 %v892, %v1166
      %v1243 = vadd.f32 %v897, %v1171
      %v1244 = vadd.f32 %v900, %v1174
      %v1245 = vadd.f32 %v905, %v1179
      %v1246 = vadd.f32 %v908, %v1182
      %v1247 = vadd.f32 %v913, %v1187
      %v1248 = vadd.f32 %v916, %v1190
      %v1249 = vadd.f32 %v921, %v1195
      %v1250 = vadd.f32 %v924, %v1198
      %v1251 = vadd.f32 %v929, %v1203
      %v1252 = vadd.f32 %v932, %v1206
      %v1253 = vadd.f32 %v937, %v1211
      %v1254 = vadd.f32 %v940, %v1214
      %v1255 = vadd.f32 %v945, %v1219
      %v1256 = vadd.f32 %v948, %v1222
      %v1257 = vld [vmem:[%s371] sm:$0xff]
      %v1258 = vld [vmem:[%s371 + $0x8] sm:$0xff]
      %v1259 = vld [vmem:[%s371 + $0x18] sm:$0xff]
      %v1260 = vld [vmem:[%s371 + $0x20] sm:$0xff]
      %v1261 = vld [vmem:[%s371 + $0x30] sm:$0xff]
      %v1262 = vld [vmem:[%s371 + $0x38] sm:$0xff]
      %v1263 = vld [vmem:[%s371 + $0x48] sm:$0xff]
      %v1264 = vld [vmem:[%s371 + $0x50] sm:$0xff]
      %v1265 = vld [vmem:[%s371 + $0x60] sm:$0xff]
      %v1266 = vld [vmem:[%s371 + $0x68] sm:$0xff]
      %v1267 = vld [vmem:[%s371 + $0x78] sm:$0xff]
      %v1268 = vld [vmem:[%s371 + $0x80] sm:$0xff]
      %v1269 = vld [vmem:[%s371 + $0x90] sm:$0xff]
      %v1270 = vld [vmem:[%s371 + $0x98] sm:$0xff]
      %v1271 = vld [vmem:[%s371 + $0xa8] sm:$0xff]
      %v1272 = vld [vmem:[%s371 + $0xb0] sm:$0xff]
      %v1273 = vld [vmem:[%s371 + $0xc0] sm:$0xff]
      %v1274 = vld [vmem:[%s371 + $0xc8] sm:$0xff]
      %v1275 = vld [vmem:[%s371 + $0xd8] sm:$0xff]
      %v1276 = vld [vmem:[%s371 + $0xe0] sm:$0xff]
      %v1277 = vld [vmem:[%s371 + $0xf0] sm:$0xff]
      %v1278 = vld [vmem:[%s371 + $0xf8] sm:$0xff]
      %v1279 = vld [vmem:[%s371 + $0x108] sm:$0xff]
      %v1280 = vld [vmem:[%s371 + $0x110] sm:$0xff]
      %v1281 = vld [vmem:[%s371 + $0x120] sm:$0xff]
      %v1282 = vld [vmem:[%s371 + $0x128] sm:$0xff]
      %v1283 = vld [vmem:[%s371 + $0x138] sm:$0xff]
      %v1284 = vld [vmem:[%s371 + $0x140] sm:$0xff]
      %v1285 = vld [vmem:[%s371 + $0x150] sm:$0xff]
      %v1286 = vld [vmem:[%s371 + $0x158] sm:$0xff]
      %v1287 = vld [vmem:[%s371 + $0x168] sm:$0xff]
      %v1288 = vld [vmem:[%s371 + $0x170] sm:$0xff]
      %v1289 = vpack.c.bf16 %v1258, %v1257
      %v1290 = vpack.c.bf16 %v1260, %v1259
      %v1291 = vpack.c.bf16 %v1262, %v1261
      %v1292 = vpack.c.bf16 %v1264, %v1263
      %v1293 = vpack.c.bf16 %v1266, %v1265
      %v1294 = vpack.c.bf16 %v1268, %v1267
      %v1295 = vpack.c.bf16 %v1270, %v1269
      %v1296 = vpack.c.bf16 %v1272, %v1271
      %v1297 = vpack.c.bf16 %v1274, %v1273
      %v1298 = vpack.c.bf16 %v1276, %v1275
      %v1299 = vpack.c.bf16 %v1278, %v1277
      %v1300 = vpack.c.bf16 %v1280, %v1279
      %v1301 = vpack.c.bf16 %v1282, %v1281
      %v1302 = vpack.c.bf16 %v1284, %v1283
      %v1303 = vpack.c.bf16 %v1286, %v1285
      %v1304 = vpack.c.bf16 %v1288, %v1287
      %s1305 = scalar_lea.vmem %s1, 192
      %v1306 = vld [vmem:[%s1305] sm:$0xf]
      %v1307 = vld [vmem:[%s1305 + $0x4] sm:$0xf]
      %v1308 = vld [vmem:[%s1305 + $0x8] sm:$0xf]
      %v1309 = vld [vmem:[%s1305 + $0xc] sm:$0xf]
      %v1310 = vld [vmem:[%s1305 + $0x10] sm:$0xf]
      %v1311 = vld [vmem:[%s1305 + $0x14] sm:$0xf]
      %v1312 = vld [vmem:[%s1305 + $0x18] sm:$0xf]
      %v1313 = vld [vmem:[%s1305 + $0x1c] sm:$0xf]
      %v1314 = vld [vmem:[%s1305 + $0x20] sm:$0xf]
      %v1315 = vld [vmem:[%s1305 + $0x24] sm:$0xf]
      %v1316 = vld [vmem:[%s1305 + $0x28] sm:$0xf]
      %v1317 = vld [vmem:[%s1305 + $0x2c] sm:$0xf]
      %v1318 = vld [vmem:[%s1305 + $0x30] sm:$0xf]
      %v1319 = vld [vmem:[%s1305 + $0x34] sm:$0xf]
      %v1320 = vld [vmem:[%s1305 + $0x38] sm:$0xf]
      %v1321 = vld [vmem:[%s1305 + $0x3c] sm:$0xf]
      %v1338 = vunpack.c.l.b16 %v1306
      %v1339 = vunpack.c.l.b16 %v1307
      %v1340 = vunpack.c.l.b16 %v1308
      %v1341 = vunpack.c.l.b16 %v1309
      %v1342 = vunpack.c.l.b16 %v1310
      %v1343 = vunpack.c.l.b16 %v1311
      %v1344 = vunpack.c.l.b16 %v1312
      %v1345 = vunpack.c.l.b16 %v1313
      %v1346 = vunpack.c.l.b16 %v1314
      %v1347 = vunpack.c.l.b16 %v1315
      %v1348 = vunpack.c.l.b16 %v1316
      %v1349 = vunpack.c.l.b16 %v1317
      %v1350 = vunpack.c.l.b16 %v1318
      %v1351 = vunpack.c.l.b16 %v1319
      %v1352 = vunpack.c.l.b16 %v1320
      %v1353 = vunpack.c.l.b16 %v1321
      %v1354 = vpack.c.b16 %v1339, %v1338
      %v1355 = vpack.c.b16 %v1341, %v1340
      %v1356 = vpack.c.b16 %v1343, %v1342
      %v1357 = vpack.c.b16 %v1345, %v1344
      %v1358 = vpack.c.b16 %v1347, %v1346
      %v1359 = vpack.c.b16 %v1349, %v1348
      %v1360 = vpack.c.b16 %v1351, %v1350
      %v1361 = vpack.c.b16 %v1353, %v1352
      %1370 = vmatprep.subr.bf16.mxu0 0
      %1371 = vmatpush1.bf16.msra.mxu0 %v1361
      %1372 = vmatprep.subr.bf16.mxu0 0
      %1373 = vmatpush1.bf16.msra.mxu0 %v1360
      %1374 = vmatprep.subr.bf16.mxu0 0
      %1375 = vmatpush1.bf16.msra.mxu0 %v1359
      %1376 = vmatprep.subr.bf16.mxu0 0
      %1377 = vmatpush1.bf16.msra.mxu0 %v1358
      %1378 = vmatprep.subr.bf16.mxu0 0
      %1379 = vmatpush1.bf16.msra.mxu0 %v1357
      %1380 = vmatprep.subr.bf16.mxu0 0
      %1381 = vmatpush1.bf16.msra.mxu0 %v1356
      %1382 = vmatprep.subr.bf16.mxu0 0
      %1383 = vmatpush1.bf16.msra.mxu0 %v1355
      %1384 = vmatprep.subr.bf16.mxu0 0
      %1385 = vmatpush1.bf16.msra.mxu0 %v1354
      %1386 = vmatprep.subr.bf16.mxu0 0
      %1387 = vmatpush2.bf16.msra.mxu0 0
      %1388 = vmatprep.subr.bf16.mxu0 0
      %1389 = vmatpush2.bf16.msra.mxu0 0
      %1390 = vmatprep.subr.bf16.mxu0 0
      %1391 = vmatpush2.bf16.msra.mxu0 0
      %1392 = vmatprep.subr.bf16.mxu0 0
      %1393 = vmatpush2.bf16.msra.mxu0 0
      %1394 = vmatprep.subr.bf16.mxu0 0
      %1395 = vmatpush2.bf16.msra.mxu0 0
      %1396 = vmatprep.subr.bf16.mxu0 0
      %1397 = vmatpush2.bf16.msra.mxu0 0
      %1398 = vmatprep.subr.bf16.mxu0 0
      %1399 = vmatpush2.bf16.msra.mxu0 0
      %1400 = vmatprep.subr.bf16.mxu0 0
      %1401 = vmatpush2.bf16.msra.mxu0 0
      %1402 = vmatprep.mubr.bf16.mxu0 0
      %1403 = vmatmul.mubr.bf16.gmra.mxu0 %v1289
      %v1404 = vpop.f32.mrf.mxu0
      %v1405 = vadd.f32 0.0, %v1404
      %v1406 = vpop.f32.mrf.mxu0
      %v1407 = vpop.f32.mrf.mxu0
      %v1408 = vadd.f32 0.0, %v1407
      %v1409 = vpop.f32.mrf.mxu0
      %1410 = vmatprep.mubr.bf16.mxu0 0
      %1411 = vmatmul.mubr.bf16.gmra.mxu0 %v1290
      %v1412 = vpop.f32.mrf.mxu0
      %v1413 = vadd.f32 0.0, %v1412
      %v1414 = vpop.f32.mrf.mxu0
      %v1415 = vpop.f32.mrf.mxu0
      %v1416 = vadd.f32 0.0, %v1415
      %v1417 = vpop.f32.mrf.mxu0
      %1418 = vmatprep.mubr.bf16.mxu0 0
      %1419 = vmatmul.mubr.bf16.gmra.mxu0 %v1291
      %v1420 = vpop.f32.mrf.mxu0
      %v1421 = vadd.f32 0.0, %v1420
      %v1422 = vpop.f32.mrf.mxu0
      %v1423 = vpop.f32.mrf.mxu0
      %v1424 = vadd.f32 0.0, %v1423
      %v1425 = vpop.f32.mrf.mxu0
      %1426 = vmatprep.mubr.bf16.mxu0 0
      %1427 = vmatmul.mubr.bf16.gmra.mxu0 %v1292
      %v1428 = vpop.f32.mrf.mxu0
      %v1429 = vadd.f32 0.0, %v1428
      %v1430 = vpop.f32.mrf.mxu0
      %v1431 = vpop.f32.mrf.mxu0
      %v1432 = vadd.f32 0.0, %v1431
      %v1433 = vpop.f32.mrf.mxu0
      %1434 = vmatprep.mubr.bf16.mxu0 0
      %1435 = vmatmul.mubr.bf16.gmra.mxu0 %v1293
      %v1436 = vpop.f32.mrf.mxu0
      %v1437 = vadd.f32 0.0, %v1436
      %v1438 = vpop.f32.mrf.mxu0
      %v1439 = vpop.f32.mrf.mxu0
      %v1440 = vadd.f32 0.0, %v1439
      %v1441 = vpop.f32.mrf.mxu0
      %1442 = vmatprep.mubr.bf16.mxu0 0
      %1443 = vmatmul.mubr.bf16.gmra.mxu0 %v1294
      %v1444 = vpop.f32.mrf.mxu0
      %v1445 = vadd.f32 0.0, %v1444
      %v1446 = vpop.f32.mrf.mxu0
      %v1447 = vpop.f32.mrf.mxu0
      %v1448 = vadd.f32 0.0, %v1447
      %v1449 = vpop.f32.mrf.mxu0
      %1450 = vmatprep.mubr.bf16.mxu0 0
      %1451 = vmatmul.mubr.bf16.gmra.mxu0 %v1295
      %v1452 = vpop.f32.mrf.mxu0
      %v1453 = vadd.f32 0.0, %v1452
      %v1454 = vpop.f32.mrf.mxu0
      %v1455 = vpop.f32.mrf.mxu0
      %v1456 = vadd.f32 0.0, %v1455
      %v1457 = vpop.f32.mrf.mxu0
      %1458 = vmatprep.mubr.bf16.mxu0 0
      %1459 = vmatmul.mubr.bf16.gmra.mxu0 %v1296
      %v1460 = vpop.f32.mrf.mxu0
      %v1461 = vadd.f32 0.0, %v1460
      %v1462 = vpop.f32.mrf.mxu0
      %v1463 = vpop.f32.mrf.mxu0
      %v1464 = vadd.f32 0.0, %v1463
      %v1465 = vpop.f32.mrf.mxu0
      %1466 = vmatprep.mubr.bf16.mxu0 0
      %1467 = vmatmul.mubr.bf16.gmra.mxu0 %v1297
      %v1468 = vpop.f32.mrf.mxu0
      %v1469 = vadd.f32 0.0, %v1468
      %v1470 = vpop.f32.mrf.mxu0
      %v1471 = vpop.f32.mrf.mxu0
      %v1472 = vadd.f32 0.0, %v1471
      %v1473 = vpop.f32.mrf.mxu0
      %1474 = vmatprep.mubr.bf16.mxu0 0
      %1475 = vmatmul.mubr.bf16.gmra.mxu0 %v1298
      %v1476 = vpop.f32.mrf.mxu0
      %v1477 = vadd.f32 0.0, %v1476
      %v1478 = vpop.f32.mrf.mxu0
      %v1479 = vpop.f32.mrf.mxu0
      %v1480 = vadd.f32 0.0, %v1479
      %v1481 = vpop.f32.mrf.mxu0
      %1482 = vmatprep.mubr.bf16.mxu0 0
      %1483 = vmatmul.mubr.bf16.gmra.mxu0 %v1299
      %v1484 = vpop.f32.mrf.mxu0
      %v1485 = vadd.f32 0.0, %v1484
      %v1486 = vpop.f32.mrf.mxu0
      %v1487 = vpop.f32.mrf.mxu0
      %v1488 = vadd.f32 0.0, %v1487
      %v1489 = vpop.f32.mrf.mxu0
      %1490 = vmatprep.mubr.bf16.mxu0 0
      %1491 = vmatmul.mubr.bf16.gmra.mxu0 %v1300
      %v1492 = vpop.f32.mrf.mxu0
      %v1493 = vadd.f32 0.0, %v1492
      %v1494 = vpop.f32.mrf.mxu0
      %v1495 = vpop.f32.mrf.mxu0
      %v1496 = vadd.f32 0.0, %v1495
      %v1497 = vpop.f32.mrf.mxu0
      %1498 = vmatprep.mubr.bf16.mxu0 0
      %1499 = vmatmul.mubr.bf16.gmra.mxu0 %v1301
      %v1500 = vpop.f32.mrf.mxu0
      %v1501 = vadd.f32 0.0, %v1500
      %v1502 = vpop.f32.mrf.mxu0
      %v1503 = vpop.f32.mrf.mxu0
      %v1504 = vadd.f32 0.0, %v1503
      %v1505 = vpop.f32.mrf.mxu0
      %1506 = vmatprep.mubr.bf16.mxu0 0
      %1507 = vmatmul.mubr.bf16.gmra.mxu0 %v1302
      %v1508 = vpop.f32.mrf.mxu0
      %v1509 = vadd.f32 0.0, %v1508
      %v1510 = vpop.f32.mrf.mxu0
      %v1511 = vpop.f32.mrf.mxu0
      %v1512 = vadd.f32 0.0, %v1511
      %v1513 = vpop.f32.mrf.mxu0
      %1514 = vmatprep.mubr.bf16.mxu0 0
      %1515 = vmatmul.mubr.bf16.gmra.mxu0 %v1303
      %v1516 = vpop.f32.mrf.mxu0
      %v1517 = vadd.f32 0.0, %v1516
      %v1518 = vpop.f32.mrf.mxu0
      %v1519 = vpop.f32.mrf.mxu0
      %v1520 = vadd.f32 0.0, %v1519
      %v1521 = vpop.f32.mrf.mxu0
      %1522 = vmatprep.mubr.bf16.mxu0 0
      %1523 = vmatmul.mubr.bf16.gmra.mxu0 %v1304
      %v1524 = vpop.f32.mrf.mxu0
      %v1525 = vadd.f32 0.0, %v1524
      %v1526 = vpop.f32.mrf.mxu0
      %v1527 = vpop.f32.mrf.mxu0
      %v1528 = vadd.f32 0.0, %v1527
      %v1529 = vpop.f32.mrf.mxu0
      %1530 = vdwg.mxu0
      %v1531 = vadd.f32 %v1225, %v1405
      %v1532 = vadd.f32 %v1226, %v1408
      %v1533 = vadd.f32 %v1227, %v1413
      %v1534 = vadd.f32 %v1228, %v1416
      %v1535 = vadd.f32 %v1229, %v1421
      %v1536 = vadd.f32 %v1230, %v1424
      %v1537 = vadd.f32 %v1231, %v1429
      %v1538 = vadd.f32 %v1232, %v1432
      %v1539 = vadd.f32 %v1233, %v1437
      %v1540 = vadd.f32 %v1234, %v1440
      %v1541 = vadd.f32 %v1235, %v1445
      %v1542 = vadd.f32 %v1236, %v1448
      %v1543 = vadd.f32 %v1237, %v1453
      %v1544 = vadd.f32 %v1238, %v1456
      %v1545 = vadd.f32 %v1239, %v1461
      %v1546 = vadd.f32 %v1240, %v1464
      %v1547 = vadd.f32 %v1241, %v1469
      %v1548 = vadd.f32 %v1242, %v1472
      %v1549 = vadd.f32 %v1243, %v1477
      %v1550 = vadd.f32 %v1244, %v1480
      %v1551 = vadd.f32 %v1245, %v1485
      %v1552 = vadd.f32 %v1246, %v1488
      %v1553 = vadd.f32 %v1247, %v1493
      %v1554 = vadd.f32 %v1248, %v1496
      %v1555 = vadd.f32 %v1249, %v1501
      %v1556 = vadd.f32 %v1250, %v1504
      %v1557 = vadd.f32 %v1251, %v1509
      %v1558 = vadd.f32 %v1252, %v1512
      %v1559 = vadd.f32 %v1253, %v1517
      %v1560 = vadd.f32 %v1254, %v1520
      %v1561 = vadd.f32 %v1255, %v1525
      %v1562 = vadd.f32 %v1256, %v1528
      %v1563 = vld [vmem:[%s371 + $0x1] sm:$0xff]
      %v1564 = vld [vmem:[%s371 + $0x9] sm:$0xff]
      %v1565 = vld [vmem:[%s371 + $0x19] sm:$0xff]
      %v1566 = vld [vmem:[%s371 + $0x21] sm:$0xff]
      %v1567 = vld [vmem:[%s371 + $0x31] sm:$0xff]
      %v1568 = vld [vmem:[%s371 + $0x39] sm:$0xff]
      %v1569 = vld [vmem:[%s371 + $0x49] sm:$0xff]
      %v1570 = vld [vmem:[%s371 + $0x51] sm:$0xff]
      %v1571 = vld [vmem:[%s371 + $0x61] sm:$0xff]
      %v1572 = vld [vmem:[%s371 + $0x69] sm:$0xff]
      %v1573 = vld [vmem:[%s371 + $0x79] sm:$0xff]
      %v1574 = vld [vmem:[%s371 + $0x81] sm:$0xff]
      %v1575 = vld [vmem:[%s371 + $0x91] sm:$0xff]
      %v1576 = vld [vmem:[%s371 + $0x99] sm:$0xff]
      %v1577 = vld [vmem:[%s371 + $0xa9] sm:$0xff]
      %v1578 = vld [vmem:[%s371 + $0xb1] sm:$0xff]
      %v1579 = vld [vmem:[%s371 + $0xc1] sm:$0xff]
      %v1580 = vld [vmem:[%s371 + $0xc9] sm:$0xff]
      %v1581 = vld [vmem:[%s371 + $0xd9] sm:$0xff]
      %v1582 = vld [vmem:[%s371 + $0xe1] sm:$0xff]
      %v1583 = vld [vmem:[%s371 + $0xf1] sm:$0xff]
      %v1584 = vld [vmem:[%s371 + $0xf9] sm:$0xff]
      %v1585 = vld [vmem:[%s371 + $0x109] sm:$0xff]
      %v1586 = vld [vmem:[%s371 + $0x111] sm:$0xff]
      %v1587 = vld [vmem:[%s371 + $0x121] sm:$0xff]
      %v1588 = vld [vmem:[%s371 + $0x129] sm:$0xff]
      %v1589 = vld [vmem:[%s371 + $0x139] sm:$0xff]
      %v1590 = vld [vmem:[%s371 + $0x141] sm:$0xff]
      %v1591 = vld [vmem:[%s371 + $0x151] sm:$0xff]
      %v1592 = vld [vmem:[%s371 + $0x159] sm:$0xff]
      %v1593 = vld [vmem:[%s371 + $0x169] sm:$0xff]
      %v1594 = vld [vmem:[%s371 + $0x171] sm:$0xff]
      %v1595 = vpack.c.bf16 %v1564, %v1563
      %v1596 = vpack.c.bf16 %v1566, %v1565
      %v1597 = vpack.c.bf16 %v1568, %v1567
      %v1598 = vpack.c.bf16 %v1570, %v1569
      %v1599 = vpack.c.bf16 %v1572, %v1571
      %v1600 = vpack.c.bf16 %v1574, %v1573
      %v1601 = vpack.c.bf16 %v1576, %v1575
      %v1602 = vpack.c.bf16 %v1578, %v1577
      %v1603 = vpack.c.bf16 %v1580, %v1579
      %v1604 = vpack.c.bf16 %v1582, %v1581
      %v1605 = vpack.c.bf16 %v1584, %v1583
      %v1606 = vpack.c.bf16 %v1586, %v1585
      %v1607 = vpack.c.bf16 %v1588, %v1587
      %v1608 = vpack.c.bf16 %v1590, %v1589
      %v1609 = vpack.c.bf16 %v1592, %v1591
      %v1610 = vpack.c.bf16 %v1594, %v1593
      %s1611 = scalar_lea.vmem %s1, 256
      %v1612 = vld [vmem:[%s1611] sm:$0xf]
      %v1613 = vld [vmem:[%s1611 + $0x4] sm:$0xf]
      %v1614 = vld [vmem:[%s1611 + $0x8] sm:$0xf]
      %v1615 = vld [vmem:[%s1611 + $0xc] sm:$0xf]
      %v1616 = vld [vmem:[%s1611 + $0x10] sm:$0xf]
      %v1617 = vld [vmem:[%s1611 + $0x14] sm:$0xf]
      %v1618 = vld [vmem:[%s1611 + $0x18] sm:$0xf]
      %v1619 = vld [vmem:[%s1611 + $0x1c] sm:$0xf]
      %v1620 = vld [vmem:[%s1611 + $0x20] sm:$0xf]
      %v1621 = vld [vmem:[%s1611 + $0x24] sm:$0xf]
      %v1622 = vld [vmem:[%s1611 + $0x28] sm:$0xf]
      %v1623 = vld [vmem:[%s1611 + $0x2c] sm:$0xf]
      %v1624 = vld [vmem:[%s1611 + $0x30] sm:$0xf]
      %v1625 = vld [vmem:[%s1611 + $0x34] sm:$0xf]
      %v1626 = vld [vmem:[%s1611 + $0x38] sm:$0xf]
      %v1627 = vld [vmem:[%s1611 + $0x3c] sm:$0xf]
      %v1644 = vunpack.c.l.b16 %v1612
      %v1645 = vunpack.c.l.b16 %v1613
      %v1646 = vunpack.c.l.b16 %v1614
      %v1647 = vunpack.c.l.b16 %v1615
      %v1648 = vunpack.c.l.b16 %v1616
      %v1649 = vunpack.c.l.b16 %v1617
      %v1650 = vunpack.c.l.b16 %v1618
      %v1651 = vunpack.c.l.b16 %v1619
      %v1652 = vunpack.c.l.b16 %v1620
      %v1653 = vunpack.c.l.b16 %v1621
      %v1654 = vunpack.c.l.b16 %v1622
      %v1655 = vunpack.c.l.b16 %v1623
      %v1656 = vunpack.c.l.b16 %v1624
      %v1657 = vunpack.c.l.b16 %v1625
      %v1658 = vunpack.c.l.b16 %v1626
      %v1659 = vunpack.c.l.b16 %v1627
      %v1660 = vpack.c.b16 %v1645, %v1644
      %v1661 = vpack.c.b16 %v1647, %v1646
      %v1662 = vpack.c.b16 %v1649, %v1648
      %v1663 = vpack.c.b16 %v1651, %v1650
      %v1664 = vpack.c.b16 %v1653, %v1652
      %v1665 = vpack.c.b16 %v1655, %v1654
      %v1666 = vpack.c.b16 %v1657, %v1656
      %v1667 = vpack.c.b16 %v1659, %v1658
      %1676 = vmatprep.subr.bf16.mxu0 0
      %1677 = vmatpush1.bf16.msra.mxu0 %v1667
      %1678 = vmatprep.subr.bf16.mxu0 0
      %1679 = vmatpush1.bf16.msra.mxu0 %v1666
      %1680 = vmatprep.subr.bf16.mxu0 0
      %1681 = vmatpush1.bf16.msra.mxu0 %v1665
      %1682 = vmatprep.subr.bf16.mxu0 0
      %1683 = vmatpush1.bf16.msra.mxu0 %v1664
      %1684 = vmatprep.subr.bf16.mxu0 0
      %1685 = vmatpush1.bf16.msra.mxu0 %v1663
      %1686 = vmatprep.subr.bf16.mxu0 0
      %1687 = vmatpush1.bf16.msra.mxu0 %v1662
      %1688 = vmatprep.subr.bf16.mxu0 0
      %1689 = vmatpush1.bf16.msra.mxu0 %v1661
      %1690 = vmatprep.subr.bf16.mxu0 0
      %1691 = vmatpush1.bf16.msra.mxu0 %v1660
      %1692 = vmatprep.subr.bf16.mxu0 0
      %1693 = vmatpush2.bf16.msra.mxu0 0
      %1694 = vmatprep.subr.bf16.mxu0 0
      %1695 = vmatpush2.bf16.msra.mxu0 0
      %1696 = vmatprep.subr.bf16.mxu0 0
      %1697 = vmatpush2.bf16.msra.mxu0 0
      %1698 = vmatprep.subr.bf16.mxu0 0
      %1699 = vmatpush2.bf16.msra.mxu0 0
      %1700 = vmatprep.subr.bf16.mxu0 0
      %1701 = vmatpush2.bf16.msra.mxu0 0
      %1702 = vmatprep.subr.bf16.mxu0 0
      %1703 = vmatpush2.bf16.msra.mxu0 0
      %1704 = vmatprep.subr.bf16.mxu0 0
      %1705 = vmatpush2.bf16.msra.mxu0 0
      %1706 = vmatprep.subr.bf16.mxu0 0
      %1707 = vmatpush2.bf16.msra.mxu0 0
      %1708 = vmatprep.mubr.bf16.mxu0 0
      %1709 = vmatmul.mubr.bf16.gmra.mxu0 %v1595
      %v1710 = vpop.f32.mrf.mxu0
      %v1711 = vadd.f32 0.0, %v1710
      %v1712 = vpop.f32.mrf.mxu0
      %v1713 = vpop.f32.mrf.mxu0
      %v1714 = vadd.f32 0.0, %v1713
      %v1715 = vpop.f32.mrf.mxu0
      %1716 = vmatprep.mubr.bf16.mxu0 0
      %1717 = vmatmul.mubr.bf16.gmra.mxu0 %v1596
      %v1718 = vpop.f32.mrf.mxu0
      %v1719 = vadd.f32 0.0, %v1718
      %v1720 = vpop.f32.mrf.mxu0
      %v1721 = vpop.f32.mrf.mxu0
      %v1722 = vadd.f32 0.0, %v1721
      %v1723 = vpop.f32.mrf.mxu0
      %1724 = vmatprep.mubr.bf16.mxu0 0
      %1725 = vmatmul.mubr.bf16.gmra.mxu0 %v1597
      %v1726 = vpop.f32.mrf.mxu0
      %v1727 = vadd.f32 0.0, %v1726
      %v1728 = vpop.f32.mrf.mxu0
      %v1729 = vpop.f32.mrf.mxu0
      %v1730 = vadd.f32 0.0, %v1729
      %v1731 = vpop.f32.mrf.mxu0
      %1732 = vmatprep.mubr.bf16.mxu0 0
      %1733 = vmatmul.mubr.bf16.gmra.mxu0 %v1598
      %v1734 = vpop.f32.mrf.mxu0
      %v1735 = vadd.f32 0.0, %v1734
      %v1736 = vpop.f32.mrf.mxu0
      %v1737 = vpop.f32.mrf.mxu0
      %v1738 = vadd.f32 0.0, %v1737
      %v1739 = vpop.f32.mrf.mxu0
      %1740 = vmatprep.mubr.bf16.mxu0 0
      %1741 = vmatmul.mubr.bf16.gmra.mxu0 %v1599
      %v1742 = vpop.f32.mrf.mxu0
      %v1743 = vadd.f32 0.0, %v1742
      %v1744 = vpop.f32.mrf.mxu0
      %v1745 = vpop.f32.mrf.mxu0
      %v1746 = vadd.f32 0.0, %v1745
      %v1747 = vpop.f32.mrf.mxu0
      %1748 = vmatprep.mubr.bf16.mxu0 0
      %1749 = vmatmul.mubr.bf16.gmra.mxu0 %v1600
      %v1750 = vpop.f32.mrf.mxu0
      %v1751 = vadd.f32 0.0, %v1750
      %v1752 = vpop.f32.mrf.mxu0
      %v1753 = vpop.f32.mrf.mxu0
      %v1754 = vadd.f32 0.0, %v1753
      %v1755 = vpop.f32.mrf.mxu0
      %1756 = vmatprep.mubr.bf16.mxu0 0
      %1757 = vmatmul.mubr.bf16.gmra.mxu0 %v1601
      %v1758 = vpop.f32.mrf.mxu0
      %v1759 = vadd.f32 0.0, %v1758
      %v1760 = vpop.f32.mrf.mxu0
      %v1761 = vpop.f32.mrf.mxu0
      %v1762 = vadd.f32 0.0, %v1761
      %v1763 = vpop.f32.mrf.mxu0
      %1764 = vmatprep.mubr.bf16.mxu0 0
      %1765 = vmatmul.mubr.bf16.gmra.mxu0 %v1602
      %v1766 = vpop.f32.mrf.mxu0
      %v1767 = vadd.f32 0.0, %v1766
      %v1768 = vpop.f32.mrf.mxu0
      %v1769 = vpop.f32.mrf.mxu0
      %v1770 = vadd.f32 0.0, %v1769
      %v1771 = vpop.f32.mrf.mxu0
      %1772 = vmatprep.mubr.bf16.mxu0 0
      %1773 = vmatmul.mubr.bf16.gmra.mxu0 %v1603
      %v1774 = vpop.f32.mrf.mxu0
      %v1775 = vadd.f32 0.0, %v1774
      %v1776 = vpop.f32.mrf.mxu0
      %v1777 = vpop.f32.mrf.mxu0
      %v1778 = vadd.f32 0.0, %v1777
      %v1779 = vpop.f32.mrf.mxu0
      %1780 = vmatprep.mubr.bf16.mxu0 0
      %1781 = vmatmul.mubr.bf16.gmra.mxu0 %v1604
      %v1782 = vpop.f32.mrf.mxu0
      %v1783 = vadd.f32 0.0, %v1782
      %v1784 = vpop.f32.mrf.mxu0
      %v1785 = vpop.f32.mrf.mxu0
      %v1786 = vadd.f32 0.0, %v1785
      %v1787 = vpop.f32.mrf.mxu0
      %1788 = vmatprep.mubr.bf16.mxu0 0
      %1789 = vmatmul.mubr.bf16.gmra.mxu0 %v1605
      %v1790 = vpop.f32.mrf.mxu0
      %v1791 = vadd.f32 0.0, %v1790
      %v1792 = vpop.f32.mrf.mxu0
      %v1793 = vpop.f32.mrf.mxu0
      %v1794 = vadd.f32 0.0, %v1793
      %v1795 = vpop.f32.mrf.mxu0
      %1796 = vmatprep.mubr.bf16.mxu0 0
      %1797 = vmatmul.mubr.bf16.gmra.mxu0 %v1606
      %v1798 = vpop.f32.mrf.mxu0
      %v1799 = vadd.f32 0.0, %v1798
      %v1800 = vpop.f32.mrf.mxu0
      %v1801 = vpop.f32.mrf.mxu0
      %v1802 = vadd.f32 0.0, %v1801
      %v1803 = vpop.f32.mrf.mxu0
      %1804 = vmatprep.mubr.bf16.mxu0 0
      %1805 = vmatmul.mubr.bf16.gmra.mxu0 %v1607
      %v1806 = vpop.f32.mrf.mxu0
      %v1807 = vadd.f32 0.0, %v1806
      %v1808 = vpop.f32.mrf.mxu0
      %v1809 = vpop.f32.mrf.mxu0
      %v1810 = vadd.f32 0.0, %v1809
      %v1811 = vpop.f32.mrf.mxu0
      %1812 = vmatprep.mubr.bf16.mxu0 0
      %1813 = vmatmul.mubr.bf16.gmra.mxu0 %v1608
      %v1814 = vpop.f32.mrf.mxu0
      %v1815 = vadd.f32 0.0, %v1814
      %v1816 = vpop.f32.mrf.mxu0
      %v1817 = vpop.f32.mrf.mxu0
      %v1818 = vadd.f32 0.0, %v1817
      %v1819 = vpop.f32.mrf.mxu0
      %1820 = vmatprep.mubr.bf16.mxu0 0
      %1821 = vmatmul.mubr.bf16.gmra.mxu0 %v1609
      %v1822 = vpop.f32.mrf.mxu0
      %v1823 = vadd.f32 0.0, %v1822
      %v1824 = vpop.f32.mrf.mxu0
      %v1825 = vpop.f32.mrf.mxu0
      %v1826 = vadd.f32 0.0, %v1825
      %v1827 = vpop.f32.mrf.mxu0
      %1828 = vmatprep.mubr.bf16.mxu0 0
      %1829 = vmatmul.mubr.bf16.gmra.mxu0 %v1610
      %v1830 = vpop.f32.mrf.mxu0
      %v1831 = vadd.f32 0.0, %v1830
      %v1832 = vpop.f32.mrf.mxu0
      %v1833 = vpop.f32.mrf.mxu0
      %v1834 = vadd.f32 0.0, %v1833
      %v1835 = vpop.f32.mrf.mxu0
      %1836 = vdwg.mxu0
      %v1837 = vadd.f32 %v1531, %v1711
      %v1838 = vadd.f32 %v1532, %v1714
      %v1839 = vadd.f32 %v1533, %v1719
      %v1840 = vadd.f32 %v1534, %v1722
      %v1841 = vadd.f32 %v1535, %v1727
      %v1842 = vadd.f32 %v1536, %v1730
      %v1843 = vadd.f32 %v1537, %v1735
      %v1844 = vadd.f32 %v1538, %v1738
      %v1845 = vadd.f32 %v1539, %v1743
      %v1846 = vadd.f32 %v1540, %v1746
      %v1847 = vadd.f32 %v1541, %v1751
      %v1848 = vadd.f32 %v1542, %v1754
      %v1849 = vadd.f32 %v1543, %v1759
      %v1850 = vadd.f32 %v1544, %v1762
      %v1851 = vadd.f32 %v1545, %v1767
      %v1852 = vadd.f32 %v1546, %v1770
      %v1853 = vadd.f32 %v1547, %v1775
      %v1854 = vadd.f32 %v1548, %v1778
      %v1855 = vadd.f32 %v1549, %v1783
      %v1856 = vadd.f32 %v1550, %v1786
      %v1857 = vadd.f32 %v1551, %v1791
      %v1858 = vadd.f32 %v1552, %v1794
      %v1859 = vadd.f32 %v1553, %v1799
      %v1860 = vadd.f32 %v1554, %v1802
      %v1861 = vadd.f32 %v1555, %v1807
      %v1862 = vadd.f32 %v1556, %v1810
      %v1863 = vadd.f32 %v1557, %v1815
      %v1864 = vadd.f32 %v1558, %v1818
      %v1865 = vadd.f32 %v1559, %v1823
      %v1866 = vadd.f32 %v1560, %v1826
      %v1867 = vadd.f32 %v1561, %v1831
      %v1868 = vadd.f32 %v1562, %v1834
      %v1869 = vld [vmem:[%s371 + $0x2] sm:$0xff]
      %v1870 = vld [vmem:[%s371 + $0xa] sm:$0xff]
      %v1871 = vld [vmem:[%s371 + $0x1a] sm:$0xff]
      %v1872 = vld [vmem:[%s371 + $0x22] sm:$0xff]
      %v1873 = vld [vmem:[%s371 + $0x32] sm:$0xff]
      %v1874 = vld [vmem:[%s371 + $0x3a] sm:$0xff]
      %v1875 = vld [vmem:[%s371 + $0x4a] sm:$0xff]
      %v1876 = vld [vmem:[%s371 + $0x52] sm:$0xff]
      %v1877 = vld [vmem:[%s371 + $0x62] sm:$0xff]
      %v1878 = vld [vmem:[%s371 + $0x6a] sm:$0xff]
      %v1879 = vld [vmem:[%s371 + $0x7a] sm:$0xff]
      %v1880 = vld [vmem:[%s371 + $0x82] sm:$0xff]
      %v1881 = vld [vmem:[%s371 + $0x92] sm:$0xff]
      %v1882 = vld [vmem:[%s371 + $0x9a] sm:$0xff]
      %v1883 = vld [vmem:[%s371 + $0xaa] sm:$0xff]
      %v1884 = vld [vmem:[%s371 + $0xb2] sm:$0xff]
      %v1885 = vld [vmem:[%s371 + $0xc2] sm:$0xff]
      %v1886 = vld [vmem:[%s371 + $0xca] sm:$0xff]
      %v1887 = vld [vmem:[%s371 + $0xda] sm:$0xff]
      %v1888 = vld [vmem:[%s371 + $0xe2] sm:$0xff]
      %v1889 = vld [vmem:[%s371 + $0xf2] sm:$0xff]
      %v1890 = vld [vmem:[%s371 + $0xfa] sm:$0xff]
      %v1891 = vld [vmem:[%s371 + $0x10a] sm:$0xff]
      %v1892 = vld [vmem:[%s371 + $0x112] sm:$0xff]
      %v1893 = vld [vmem:[%s371 + $0x122] sm:$0xff]
      %v1894 = vld [vmem:[%s371 + $0x12a] sm:$0xff]
      %v1895 = vld [vmem:[%s371 + $0x13a] sm:$0xff]
      %v1896 = vld [vmem:[%s371 + $0x142] sm:$0xff]
      %v1897 = vld [vmem:[%s371 + $0x152] sm:$0xff]
      %v1898 = vld [vmem:[%s371 + $0x15a] sm:$0xff]
      %v1899 = vld [vmem:[%s371 + $0x16a] sm:$0xff]
      %v1900 = vld [vmem:[%s371 + $0x172] sm:$0xff]
      %v1901 = vpack.c.bf16 %v1870, %v1869
      %v1902 = vpack.c.bf16 %v1872, %v1871
      %v1903 = vpack.c.bf16 %v1874, %v1873
      %v1904 = vpack.c.bf16 %v1876, %v1875
      %v1905 = vpack.c.bf16 %v1878, %v1877
      %v1906 = vpack.c.bf16 %v1880, %v1879
      %v1907 = vpack.c.bf16 %v1882, %v1881
      %v1908 = vpack.c.bf16 %v1884, %v1883
      %v1909 = vpack.c.bf16 %v1886, %v1885
      %v1910 = vpack.c.bf16 %v1888, %v1887
      %v1911 = vpack.c.bf16 %v1890, %v1889
      %v1912 = vpack.c.bf16 %v1892, %v1891
      %v1913 = vpack.c.bf16 %v1894, %v1893
      %v1914 = vpack.c.bf16 %v1896, %v1895
      %v1915 = vpack.c.bf16 %v1898, %v1897
      %v1916 = vpack.c.bf16 %v1900, %v1899
      %s1917 = scalar_lea.vmem %s1, 320
      %v1918 = vld [vmem:[%s1917] sm:$0xf]
      %v1919 = vld [vmem:[%s1917 + $0x4] sm:$0xf]
      %v1920 = vld [vmem:[%s1917 + $0x8] sm:$0xf]
      %v1921 = vld [vmem:[%s1917 + $0xc] sm:$0xf]
      %v1922 = vld [vmem:[%s1917 + $0x10] sm:$0xf]
      %v1923 = vld [vmem:[%s1917 + $0x14] sm:$0xf]
      %v1924 = vld [vmem:[%s1917 + $0x18] sm:$0xf]
      %v1925 = vld [vmem:[%s1917 + $0x1c] sm:$0xf]
      %v1926 = vld [vmem:[%s1917 + $0x20] sm:$0xf]
      %v1927 = vld [vmem:[%s1917 + $0x24] sm:$0xf]
      %v1928 = vld [vmem:[%s1917 + $0x28] sm:$0xf]
      %v1929 = vld [vmem:[%s1917 + $0x2c] sm:$0xf]
      %v1930 = vld [vmem:[%s1917 + $0x30] sm:$0xf]
      %v1931 = vld [vmem:[%s1917 + $0x34] sm:$0xf]
      %v1932 = vld [vmem:[%s1917 + $0x38] sm:$0xf]
      %v1933 = vld [vmem:[%s1917 + $0x3c] sm:$0xf]
      %v1950 = vunpack.c.l.b16 %v1918
      %v1951 = vunpack.c.l.b16 %v1919
      %v1952 = vunpack.c.l.b16 %v1920
      %v1953 = vunpack.c.l.b16 %v1921
      %v1954 = vunpack.c.l.b16 %v1922
      %v1955 = vunpack.c.l.b16 %v1923
      %v1956 = vunpack.c.l.b16 %v1924
      %v1957 = vunpack.c.l.b16 %v1925
      %v1958 = vunpack.c.l.b16 %v1926
      %v1959 = vunpack.c.l.b16 %v1927
      %v1960 = vunpack.c.l.b16 %v1928
      %v1961 = vunpack.c.l.b16 %v1929
      %v1962 = vunpack.c.l.b16 %v1930
      %v1963 = vunpack.c.l.b16 %v1931
      %v1964 = vunpack.c.l.b16 %v1932
      %v1965 = vunpack.c.l.b16 %v1933
      %v1966 = vpack.c.b16 %v1951, %v1950
      %v1967 = vpack.c.b16 %v1953, %v1952
      %v1968 = vpack.c.b16 %v1955, %v1954
      %v1969 = vpack.c.b16 %v1957, %v1956
      %v1970 = vpack.c.b16 %v1959, %v1958
      %v1971 = vpack.c.b16 %v1961, %v1960
      %v1972 = vpack.c.b16 %v1963, %v1962
      %v1973 = vpack.c.b16 %v1965, %v1964
      %1982 = vmatprep.subr.bf16.mxu0 0
      %1983 = vmatpush1.bf16.msra.mxu0 %v1973
      %1984 = vmatprep.subr.bf16.mxu0 0
      %1985 = vmatpush1.bf16.msra.mxu0 %v1972
      %1986 = vmatprep.subr.bf16.mxu0 0
      %1987 = vmatpush1.bf16.msra.mxu0 %v1971
      %1988 = vmatprep.subr.bf16.mxu0 0
      %1989 = vmatpush1.bf16.msra.mxu0 %v1970
      %1990 = vmatprep.subr.bf16.mxu0 0
      %1991 = vmatpush1.bf16.msra.mxu0 %v1969
      %1992 = vmatprep.subr.bf16.mxu0 0
      %1993 = vmatpush1.bf16.msra.mxu0 %v1968
      %1994 = vmatprep.subr.bf16.mxu0 0
      %1995 = vmatpush1.bf16.msra.mxu0 %v1967
      %1996 = vmatprep.subr.bf16.mxu0 0
      %1997 = vmatpush1.bf16.msra.mxu0 %v1966
      %1998 = vmatprep.subr.bf16.mxu0 0
      %1999 = vmatpush2.bf16.msra.mxu0 0
      %2000 = vmatprep.subr.bf16.mxu0 0
      %2001 = vmatpush2.bf16.msra.mxu0 0
      %2002 = vmatprep.subr.bf16.mxu0 0
      %2003 = vmatpush2.bf16.msra.mxu0 0
      %2004 = vmatprep.subr.bf16.mxu0 0
      %2005 = vmatpush2.bf16.msra.mxu0 0
      %2006 = vmatprep.subr.bf16.mxu0 0
      %2007 = vmatpush2.bf16.msra.mxu0 0
      %2008 = vmatprep.subr.bf16.mxu0 0
      %2009 = vmatpush2.bf16.msra.mxu0 0
      %2010 = vmatprep.subr.bf16.mxu0 0
      %2011 = vmatpush2.bf16.msra.mxu0 0
      %2012 = vmatprep.subr.bf16.mxu0 0
      %2013 = vmatpush2.bf16.msra.mxu0 0
      %2014 = vmatprep.mubr.bf16.mxu0 0
      %2015 = vmatmul.mubr.bf16.gmra.mxu0 %v1901
      %v2016 = vpop.f32.mrf.mxu0
      %v2017 = vadd.f32 0.0, %v2016
      %v2018 = vpop.f32.mrf.mxu0
      %v2019 = vpop.f32.mrf.mxu0
      %v2020 = vadd.f32 0.0, %v2019
      %v2021 = vpop.f32.mrf.mxu0
      %2022 = vmatprep.mubr.bf16.mxu0 0
      %2023 = vmatmul.mubr.bf16.gmra.mxu0 %v1902
      %v2024 = vpop.f32.mrf.mxu0
      %v2025 = vadd.f32 0.0, %v2024
      %v2026 = vpop.f32.mrf.mxu0
      %v2027 = vpop.f32.mrf.mxu0
      %v2028 = vadd.f32 0.0, %v2027
      %v2029 = vpop.f32.mrf.mxu0
      %2030 = vmatprep.mubr.bf16.mxu0 0
      %2031 = vmatmul.mubr.bf16.gmra.mxu0 %v1903
      %v2032 = vpop.f32.mrf.mxu0
      %v2033 = vadd.f32 0.0, %v2032
      %v2034 = vpop.f32.mrf.mxu0
      %v2035 = vpop.f32.mrf.mxu0
      %v2036 = vadd.f32 0.0, %v2035
      %v2037 = vpop.f32.mrf.mxu0
      %2038 = vmatprep.mubr.bf16.mxu0 0
      %2039 = vmatmul.mubr.bf16.gmra.mxu0 %v1904
      %v2040 = vpop.f32.mrf.mxu0
      %v2041 = vadd.f32 0.0, %v2040
      %v2042 = vpop.f32.mrf.mxu0
      %v2043 = vpop.f32.mrf.mxu0
      %v2044 = vadd.f32 0.0, %v2043
      %v2045 = vpop.f32.mrf.mxu0
      %2046 = vmatprep.mubr.bf16.mxu0 0
      %2047 = vmatmul.mubr.bf16.gmra.mxu0 %v1905
      %v2048 = vpop.f32.mrf.mxu0
      %v2049 = vadd.f32 0.0, %v2048
      %v2050 = vpop.f32.mrf.mxu0
      %v2051 = vpop.f32.mrf.mxu0
      %v2052 = vadd.f32 0.0, %v2051
      %v2053 = vpop.f32.mrf.mxu0
      %2054 = vmatprep.mubr.bf16.mxu0 0
      %2055 = vmatmul.mubr.bf16.gmra.mxu0 %v1906
      %v2056 = vpop.f32.mrf.mxu0
      %v2057 = vadd.f32 0.0, %v2056
      %v2058 = vpop.f32.mrf.mxu0
      %v2059 = vpop.f32.mrf.mxu0
      %v2060 = vadd.f32 0.0, %v2059
      %v2061 = vpop.f32.mrf.mxu0
      %2062 = vmatprep.mubr.bf16.mxu0 0
      %2063 = vmatmul.mubr.bf16.gmra.mxu0 %v1907
      %v2064 = vpop.f32.mrf.mxu0
      %v2065 = vadd.f32 0.0, %v2064
      %v2066 = vpop.f32.mrf.mxu0
      %v2067 = vpop.f32.mrf.mxu0
      %v2068 = vadd.f32 0.0, %v2067
      %v2069 = vpop.f32.mrf.mxu0
      %2070 = vmatprep.mubr.bf16.mxu0 0
      %2071 = vmatmul.mubr.bf16.gmra.mxu0 %v1908
      %v2072 = vpop.f32.mrf.mxu0
      %v2073 = vadd.f32 0.0, %v2072
      %v2074 = vpop.f32.mrf.mxu0
      %v2075 = vpop.f32.mrf.mxu0
      %v2076 = vadd.f32 0.0, %v2075
      %v2077 = vpop.f32.mrf.mxu0
      %2078 = vmatprep.mubr.bf16.mxu0 0
      %2079 = vmatmul.mubr.bf16.gmra.mxu0 %v1909
      %v2080 = vpop.f32.mrf.mxu0
      %v2081 = vadd.f32 0.0, %v2080
      %v2082 = vpop.f32.mrf.mxu0
      %v2083 = vpop.f32.mrf.mxu0
      %v2084 = vadd.f32 0.0, %v2083
      %v2085 = vpop.f32.mrf.mxu0
      %2086 = vmatprep.mubr.bf16.mxu0 0
      %2087 = vmatmul.mubr.bf16.gmra.mxu0 %v1910
      %v2088 = vpop.f32.mrf.mxu0
      %v2089 = vadd.f32 0.0, %v2088
      %v2090 = vpop.f32.mrf.mxu0
      %v2091 = vpop.f32.mrf.mxu0
      %v2092 = vadd.f32 0.0, %v2091
      %v2093 = vpop.f32.mrf.mxu0
      %2094 = vmatprep.mubr.bf16.mxu0 0
      %2095 = vmatmul.mubr.bf16.gmra.mxu0 %v1911
      %v2096 = vpop.f32.mrf.mxu0
      %v2097 = vadd.f32 0.0, %v2096
      %v2098 = vpop.f32.mrf.mxu0
      %v2099 = vpop.f32.mrf.mxu0
      %v2100 = vadd.f32 0.0, %v2099
      %v2101 = vpop.f32.mrf.mxu0
      %2102 = vmatprep.mubr.bf16.mxu0 0
      %2103 = vmatmul.mubr.bf16.gmra.mxu0 %v1912
      %v2104 = vpop.f32.mrf.mxu0
      %v2105 = vadd.f32 0.0, %v2104
      %v2106 = vpop.f32.mrf.mxu0
      %v2107 = vpop.f32.mrf.mxu0
      %v2108 = vadd.f32 0.0, %v2107
      %v2109 = vpop.f32.mrf.mxu0
      %2110 = vmatprep.mubr.bf16.mxu0 0
      %2111 = vmatmul.mubr.bf16.gmra.mxu0 %v1913
      %v2112 = vpop.f32.mrf.mxu0
      %v2113 = vadd.f32 0.0, %v2112
      %v2114 = vpop.f32.mrf.mxu0
      %v2115 = vpop.f32.mrf.mxu0
      %v2116 = vadd.f32 0.0, %v2115
      %v2117 = vpop.f32.mrf.mxu0
      %2118 = vmatprep.mubr.bf16.mxu0 0
      %2119 = vmatmul.mubr.bf16.gmra.mxu0 %v1914
      %v2120 = vpop.f32.mrf.mxu0
      %v2121 = vadd.f32 0.0, %v2120
      %v2122 = vpop.f32.mrf.mxu0
      %v2123 = vpop.f32.mrf.mxu0
      %v2124 = vadd.f32 0.0, %v2123
      %v2125 = vpop.f32.mrf.mxu0
      %2126 = vmatprep.mubr.bf16.mxu0 0
      %2127 = vmatmul.mubr.bf16.gmra.mxu0 %v1915
      %v2128 = vpop.f32.mrf.mxu0
      %v2129 = vadd.f32 0.0, %v2128
      %v2130 = vpop.f32.mrf.mxu0
      %v2131 = vpop.f32.mrf.mxu0
      %v2132 = vadd.f32 0.0, %v2131
      %v2133 = vpop.f32.mrf.mxu0
      %2134 = vmatprep.mubr.bf16.mxu0 0
      %2135 = vmatmul.mubr.bf16.gmra.mxu0 %v1916
      %v2136 = vpop.f32.mrf.mxu0
      %v2137 = vadd.f32 0.0, %v2136
      %v2138 = vpop.f32.mrf.mxu0
      %v2139 = vpop.f32.mrf.mxu0
      %v2140 = vadd.f32 0.0, %v2139
      %v2141 = vpop.f32.mrf.mxu0
      %2142 = vdwg.mxu0
      %v2143 = vadd.f32 %v1837, %v2017
      %v2144 = vadd.f32 %v1838, %v2020
      %v2145 = vadd.f32 %v1839, %v2025
      %v2146 = vadd.f32 %v1840, %v2028
      %v2147 = vadd.f32 %v1841, %v2033
      %v2148 = vadd.f32 %v1842, %v2036
      %v2149 = vadd.f32 %v1843, %v2041
      %v2150 = vadd.f32 %v1844, %v2044
      %v2151 = vadd.f32 %v1845, %v2049
      %v2152 = vadd.f32 %v1846, %v2052
      %v2153 = vadd.f32 %v1847, %v2057
      %v2154 = vadd.f32 %v1848, %v2060
      %v2155 = vadd.f32 %v1849, %v2065
      %v2156 = vadd.f32 %v1850, %v2068
      %v2157 = vadd.f32 %v1851, %v2073
      %v2158 = vadd.f32 %v1852, %v2076
      %v2159 = vadd.f32 %v1853, %v2081
      %v2160 = vadd.f32 %v1854, %v2084
      %v2161 = vadd.f32 %v1855, %v2089
      %v2162 = vadd.f32 %v1856, %v2092
      %v2163 = vadd.f32 %v1857, %v2097
      %v2164 = vadd.f32 %v1858, %v2100
      %v2165 = vadd.f32 %v1859, %v2105
      %v2166 = vadd.f32 %v1860, %v2108
      %v2167 = vadd.f32 %v1861, %v2113
      %v2168 = vadd.f32 %v1862, %v2116
      %v2169 = vadd.f32 %v1863, %v2121
      %v2170 = vadd.f32 %v1864, %v2124
      %v2171 = vadd.f32 %v1865, %v2129
      %v2172 = vadd.f32 %v1866, %v2132
      %v2173 = vadd.f32 %v1867, %v2137
      %v2174 = vadd.f32 %v1868, %v2140
      %s2175 = scalar_lea.vmem [#allocation2], 48
      %v2176 = vld [vmem:[%s2175] sm:$0xff]
      %v2177 = vld [vmem:[%s2175 + $0x8] sm:$0xff]
      %v2178 = vld [vmem:[%s2175 + $0x18] sm:$0xff]
      %v2179 = vld [vmem:[%s2175 + $0x20] sm:$0xff]
      %v2180 = vld [vmem:[%s2175 + $0x30] sm:$0xff]
      %v2181 = vld [vmem:[%s2175 + $0x38] sm:$0xff]
      %v2182 = vld [vmem:[%s2175 + $0x48] sm:$0xff]
      %v2183 = vld [vmem:[%s2175 + $0x50] sm:$0xff]
      %v2184 = vld [vmem:[%s2175 + $0x60] sm:$0xff]
      %v2185 = vld [vmem:[%s2175 + $0x68] sm:$0xff]
      %v2186 = vld [vmem:[%s2175 + $0x78] sm:$0xff]
      %v2187 = vld [vmem:[%s2175 + $0x80] sm:$0xff]
      %v2188 = vld [vmem:[%s2175 + $0x90] sm:$0xff]
      %v2189 = vld [vmem:[%s2175 + $0x98] sm:$0xff]
      %v2190 = vld [vmem:[%s2175 + $0xa8] sm:$0xff]
      %v2191 = vld [vmem:[%s2175 + $0xb0] sm:$0xff]
      %v2192 = vld [vmem:[%s2175 + $0xc0] sm:$0xff]
      %v2193 = vld [vmem:[%s2175 + $0xc8] sm:$0xff]
      %v2194 = vld [vmem:[%s2175 + $0xd8] sm:$0xff]
      %v2195 = vld [vmem:[%s2175 + $0xe0] sm:$0xff]
      %v2196 = vld [vmem:[%s2175 + $0xf0] sm:$0xff]
      %v2197 = vld [vmem:[%s2175 + $0xf8] sm:$0xff]
      %v2198 = vld [vmem:[%s2175 + $0x108] sm:$0xff]
      %v2199 = vld [vmem:[%s2175 + $0x110] sm:$0xff]
      %v2200 = vld [vmem:[%s2175 + $0x120] sm:$0xff]
      %v2201 = vld [vmem:[%s2175 + $0x128] sm:$0xff]
      %v2202 = vld [vmem:[%s2175 + $0x138] sm:$0xff]
      %v2203 = vld [vmem:[%s2175 + $0x140] sm:$0xff]
      %v2204 = vld [vmem:[%s2175 + $0x150] sm:$0xff]
      %v2205 = vld [vmem:[%s2175 + $0x158] sm:$0xff]
      %v2206 = vld [vmem:[%s2175 + $0x168] sm:$0xff]
      %v2207 = vld [vmem:[%s2175 + $0x170] sm:$0xff]
      %v2208 = vpack.c.bf16 %v2177, %v2176
      %v2209 = vpack.c.bf16 %v2179, %v2178
      %v2210 = vpack.c.bf16 %v2181, %v2180
      %v2211 = vpack.c.bf16 %v2183, %v2182
      %v2212 = vpack.c.bf16 %v2185, %v2184
      %v2213 = vpack.c.bf16 %v2187, %v2186
      %v2214 = vpack.c.bf16 %v2189, %v2188
      %v2215 = vpack.c.bf16 %v2191, %v2190
      %v2216 = vpack.c.bf16 %v2193, %v2192
      %v2217 = vpack.c.bf16 %v2195, %v2194
      %v2218 = vpack.c.bf16 %v2197, %v2196
      %v2219 = vpack.c.bf16 %v2199, %v2198
      %v2220 = vpack.c.bf16 %v2201, %v2200
      %v2221 = vpack.c.bf16 %v2203, %v2202
      %v2222 = vpack.c.bf16 %v2205, %v2204
      %v2223 = vpack.c.bf16 %v2207, %v2206
      %s2224 = scalar_lea.vmem %s1, 384
      %v2225 = vld [vmem:[%s2224] sm:$0xf]
      %v2226 = vld [vmem:[%s2224 + $0x4] sm:$0xf]
      %v2227 = vld [vmem:[%s2224 + $0x8] sm:$0xf]
      %v2228 = vld [vmem:[%s2224 + $0xc] sm:$0xf]
      %v2229 = vld [vmem:[%s2224 + $0x10] sm:$0xf]
      %v2230 = vld [vmem:[%s2224 + $0x14] sm:$0xf]
      %v2231 = vld [vmem:[%s2224 + $0x18] sm:$0xf]
      %v2232 = vld [vmem:[%s2224 + $0x1c] sm:$0xf]
      %v2233 = vld [vmem:[%s2224 + $0x20] sm:$0xf]
      %v2234 = vld [vmem:[%s2224 + $0x24] sm:$0xf]
      %v2235 = vld [vmem:[%s2224 + $0x28] sm:$0xf]
      %v2236 = vld [vmem:[%s2224 + $0x2c] sm:$0xf]
      %v2237 = vld [vmem:[%s2224 + $0x30] sm:$0xf]
      %v2238 = vld [vmem:[%s2224 + $0x34] sm:$0xf]
      %v2239 = vld [vmem:[%s2224 + $0x38] sm:$0xf]
      %v2240 = vld [vmem:[%s2224 + $0x3c] sm:$0xf]
      %v2257 = vunpack.c.l.b16 %v2225
      %v2258 = vunpack.c.l.b16 %v2226
      %v2259 = vunpack.c.l.b16 %v2227
      %v2260 = vunpack.c.l.b16 %v2228
      %v2261 = vunpack.c.l.b16 %v2229
      %v2262 = vunpack.c.l.b16 %v2230
      %v2263 = vunpack.c.l.b16 %v2231
      %v2264 = vunpack.c.l.b16 %v2232
      %v2265 = vunpack.c.l.b16 %v2233
      %v2266 = vunpack.c.l.b16 %v2234
      %v2267 = vunpack.c.l.b16 %v2235
      %v2268 = vunpack.c.l.b16 %v2236
      %v2269 = vunpack.c.l.b16 %v2237
      %v2270 = vunpack.c.l.b16 %v2238
      %v2271 = vunpack.c.l.b16 %v2239
      %v2272 = vunpack.c.l.b16 %v2240
      %v2273 = vpack.c.b16 %v2258, %v2257
      %v2274 = vpack.c.b16 %v2260, %v2259
      %v2275 = vpack.c.b16 %v2262, %v2261
      %v2276 = vpack.c.b16 %v2264, %v2263
      %v2277 = vpack.c.b16 %v2266, %v2265
      %v2278 = vpack.c.b16 %v2268, %v2267
      %v2279 = vpack.c.b16 %v2270, %v2269
      %v2280 = vpack.c.b16 %v2272, %v2271
      %2289 = vmatprep.subr.bf16.mxu0 0
      %2290 = vmatpush1.bf16.msra.mxu0 %v2280
      %2291 = vmatprep.subr.bf16.mxu0 0
      %2292 = vmatpush1.bf16.msra.mxu0 %v2279
      %2293 = vmatprep.subr.bf16.mxu0 0
      %2294 = vmatpush1.bf16.msra.mxu0 %v2278
      %2295 = vmatprep.subr.bf16.mxu0 0
      %2296 = vmatpush1.bf16.msra.mxu0 %v2277
      %2297 = vmatprep.subr.bf16.mxu0 0
      %2298 = vmatpush1.bf16.msra.mxu0 %v2276
      %2299 = vmatprep.subr.bf16.mxu0 0
      %2300 = vmatpush1.bf16.msra.mxu0 %v2275
      %2301 = vmatprep.subr.bf16.mxu0 0
      %2302 = vmatpush1.bf16.msra.mxu0 %v2274
      %2303 = vmatprep.subr.bf16.mxu0 0
      %2304 = vmatpush1.bf16.msra.mxu0 %v2273
      %2305 = vmatprep.subr.bf16.mxu0 0
      %2306 = vmatpush2.bf16.msra.mxu0 0
      %2307 = vmatprep.subr.bf16.mxu0 0
      %2308 = vmatpush2.bf16.msra.mxu0 0
      %2309 = vmatprep.subr.bf16.mxu0 0
      %2310 = vmatpush2.bf16.msra.mxu0 0
      %2311 = vmatprep.subr.bf16.mxu0 0
      %2312 = vmatpush2.bf16.msra.mxu0 0
      %2313 = vmatprep.subr.bf16.mxu0 0
      %2314 = vmatpush2.bf16.msra.mxu0 0
      %2315 = vmatprep.subr.bf16.mxu0 0
      %2316 = vmatpush2.bf16.msra.mxu0 0
      %2317 = vmatprep.subr.bf16.mxu0 0
      %2318 = vmatpush2.bf16.msra.mxu0 0
      %2319 = vmatprep.subr.bf16.mxu0 0
      %2320 = vmatpush2.bf16.msra.mxu0 0
      %2321 = vmatprep.mubr.bf16.mxu0 0
      %2322 = vmatmul.mubr.bf16.gmra.mxu0 %v2208
      %v2323 = vpop.f32.mrf.mxu0
      %v2324 = vadd.f32 0.0, %v2323
      %v2325 = vpop.f32.mrf.mxu0
      %v2326 = vpop.f32.mrf.mxu0
      %v2327 = vadd.f32 0.0, %v2326
      %v2328 = vpop.f32.mrf.mxu0
      %2329 = vmatprep.mubr.bf16.mxu0 0
      %2330 = vmatmul.mubr.bf16.gmra.mxu0 %v2209
      %v2331 = vpop.f32.mrf.mxu0
      %v2332 = vadd.f32 0.0, %v2331
      %v2333 = vpop.f32.mrf.mxu0
      %v2334 = vpop.f32.mrf.mxu0
      %v2335 = vadd.f32 0.0, %v2334
      %v2336 = vpop.f32.mrf.mxu0
      %2337 = vmatprep.mubr.bf16.mxu0 0
      %2338 = vmatmul.mubr.bf16.gmra.mxu0 %v2210
      %v2339 = vpop.f32.mrf.mxu0
      %v2340 = vadd.f32 0.0, %v2339
      %v2341 = vpop.f32.mrf.mxu0
      %v2342 = vpop.f32.mrf.mxu0
      %v2343 = vadd.f32 0.0, %v2342
      %v2344 = vpop.f32.mrf.mxu0
      %2345 = vmatprep.mubr.bf16.mxu0 0
      %2346 = vmatmul.mubr.bf16.gmra.mxu0 %v2211
      %v2347 = vpop.f32.mrf.mxu0
      %v2348 = vadd.f32 0.0, %v2347
      %v2349 = vpop.f32.mrf.mxu0
      %v2350 = vpop.f32.mrf.mxu0
      %v2351 = vadd.f32 0.0, %v2350
      %v2352 = vpop.f32.mrf.mxu0
      %2353 = vmatprep.mubr.bf16.mxu0 0
      %2354 = vmatmul.mubr.bf16.gmra.mxu0 %v2212
      %v2355 = vpop.f32.mrf.mxu0
      %v2356 = vadd.f32 0.0, %v2355
      %v2357 = vpop.f32.mrf.mxu0
      %v2358 = vpop.f32.mrf.mxu0
      %v2359 = vadd.f32 0.0, %v2358
      %v2360 = vpop.f32.mrf.mxu0
      %2361 = vmatprep.mubr.bf16.mxu0 0
      %2362 = vmatmul.mubr.bf16.gmra.mxu0 %v2213
      %v2363 = vpop.f32.mrf.mxu0
      %v2364 = vadd.f32 0.0, %v2363
      %v2365 = vpop.f32.mrf.mxu0
      %v2366 = vpop.f32.mrf.mxu0
      %v2367 = vadd.f32 0.0, %v2366
      %v2368 = vpop.f32.mrf.mxu0
      %2369 = vmatprep.mubr.bf16.mxu0 0
      %2370 = vmatmul.mubr.bf16.gmra.mxu0 %v2214
      %v2371 = vpop.f32.mrf.mxu0
      %v2372 = vadd.f32 0.0, %v2371
      %v2373 = vpop.f32.mrf.mxu0
      %v2374 = vpop.f32.mrf.mxu0
      %v2375 = vadd.f32 0.0, %v2374
      %v2376 = vpop.f32.mrf.mxu0
      %2377 = vmatprep.mubr.bf16.mxu0 0
      %2378 = vmatmul.mubr.bf16.gmra.mxu0 %v2215
      %v2379 = vpop.f32.mrf.mxu0
      %v2380 = vadd.f32 0.0, %v2379
      %v2381 = vpop.f32.mrf.mxu0
      %v2382 = vpop.f32.mrf.mxu0
      %v2383 = vadd.f32 0.0, %v2382
      %v2384 = vpop.f32.mrf.mxu0
      %2385 = vmatprep.mubr.bf16.mxu0 0
      %2386 = vmatmul.mubr.bf16.gmra.mxu0 %v2216
      %v2387 = vpop.f32.mrf.mxu0
      %v2388 = vadd.f32 0.0, %v2387
      %v2389 = vpop.f32.mrf.mxu0
      %v2390 = vpop.f32.mrf.mxu0
      %v2391 = vadd.f32 0.0, %v2390
      %v2392 = vpop.f32.mrf.mxu0
      %2393 = vmatprep.mubr.bf16.mxu0 0
      %2394 = vmatmul.mubr.bf16.gmra.mxu0 %v2217
      %v2395 = vpop.f32.mrf.mxu0
      %v2396 = vadd.f32 0.0, %v2395
      %v2397 = vpop.f32.mrf.mxu0
      %v2398 = vpop.f32.mrf.mxu0
      %v2399 = vadd.f32 0.0, %v2398
      %v2400 = vpop.f32.mrf.mxu0
      %2401 = vmatprep.mubr.bf16.mxu0 0
      %2402 = vmatmul.mubr.bf16.gmra.mxu0 %v2218
      %v2403 = vpop.f32.mrf.mxu0
      %v2404 = vadd.f32 0.0, %v2403
      %v2405 = vpop.f32.mrf.mxu0
      %v2406 = vpop.f32.mrf.mxu0
      %v2407 = vadd.f32 0.0, %v2406
      %v2408 = vpop.f32.mrf.mxu0
      %2409 = vmatprep.mubr.bf16.mxu0 0
      %2410 = vmatmul.mubr.bf16.gmra.mxu0 %v2219
      %v2411 = vpop.f32.mrf.mxu0
      %v2412 = vadd.f32 0.0, %v2411
      %v2413 = vpop.f32.mrf.mxu0
      %v2414 = vpop.f32.mrf.mxu0
      %v2415 = vadd.f32 0.0, %v2414
      %v2416 = vpop.f32.mrf.mxu0
      %2417 = vmatprep.mubr.bf16.mxu0 0
      %2418 = vmatmul.mubr.bf16.gmra.mxu0 %v2220
      %v2419 = vpop.f32.mrf.mxu0
      %v2420 = vadd.f32 0.0, %v2419
      %v2421 = vpop.f32.mrf.mxu0
      %v2422 = vpop.f32.mrf.mxu0
      %v2423 = vadd.f32 0.0, %v2422
      %v2424 = vpop.f32.mrf.mxu0
      %2425 = vmatprep.mubr.bf16.mxu0 0
      %2426 = vmatmul.mubr.bf16.gmra.mxu0 %v2221
      %v2427 = vpop.f32.mrf.mxu0
      %v2428 = vadd.f32 0.0, %v2427
      %v2429 = vpop.f32.mrf.mxu0
      %v2430 = vpop.f32.mrf.mxu0
      %v2431 = vadd.f32 0.0, %v2430
      %v2432 = vpop.f32.mrf.mxu0
      %2433 = vmatprep.mubr.bf16.mxu0 0
      %2434 = vmatmul.mubr.bf16.gmra.mxu0 %v2222
      %v2435 = vpop.f32.mrf.mxu0
      %v2436 = vadd.f32 0.0, %v2435
      %v2437 = vpop.f32.mrf.mxu0
      %v2438 = vpop.f32.mrf.mxu0
      %v2439 = vadd.f32 0.0, %v2438
      %v2440 = vpop.f32.mrf.mxu0
      %2441 = vmatprep.mubr.bf16.mxu0 0
      %2442 = vmatmul.mubr.bf16.gmra.mxu0 %v2223
      %v2443 = vpop.f32.mrf.mxu0
      %v2444 = vadd.f32 0.0, %v2443
      %v2445 = vpop.f32.mrf.mxu0
      %v2446 = vpop.f32.mrf.mxu0
      %v2447 = vadd.f32 0.0, %v2446
      %v2448 = vpop.f32.mrf.mxu0
      %2449 = vdwg.mxu0
      %v2450 = vadd.f32 %v2143, %v2324
      %v2451 = vadd.f32 %v2144, %v2327
      %v2452 = vadd.f32 %v2145, %v2332
      %v2453 = vadd.f32 %v2146, %v2335
      %v2454 = vadd.f32 %v2147, %v2340
      %v2455 = vadd.f32 %v2148, %v2343
      %v2456 = vadd.f32 %v2149, %v2348
      %v2457 = vadd.f32 %v2150, %v2351
      %v2458 = vadd.f32 %v2151, %v2356
      %v2459 = vadd.f32 %v2152, %v2359
      %v2460 = vadd.f32 %v2153, %v2364
      %v2461 = vadd.f32 %v2154, %v2367
      %v2462 = vadd.f32 %v2155, %v2372
      %v2463 = vadd.f32 %v2156, %v2375
      %v2464 = vadd.f32 %v2157, %v2380
      %v2465 = vadd.f32 %v2158, %v2383
      %v2466 = vadd.f32 %v2159, %v2388
      %v2467 = vadd.f32 %v2160, %v2391
      %v2468 = vadd.f32 %v2161, %v2396
      %v2469 = vadd.f32 %v2162, %v2399
      %v2470 = vadd.f32 %v2163, %v2404
      %v2471 = vadd.f32 %v2164, %v2407
      %v2472 = vadd.f32 %v2165, %v2412
      %v2473 = vadd.f32 %v2166, %v2415
      %v2474 = vadd.f32 %v2167, %v2420
      %v2475 = vadd.f32 %v2168, %v2423
      %v2476 = vadd.f32 %v2169, %v2428
      %v2477 = vadd.f32 %v2170, %v2431
      %v2478 = vadd.f32 %v2171, %v2436
      %v2479 = vadd.f32 %v2172, %v2439
      %v2480 = vadd.f32 %v2173, %v2444
      %v2481 = vadd.f32 %v2174, %v2447
      %v2482 = vld [vmem:[%s2175 + $0x1] sm:$0xff]
      %v2483 = vld [vmem:[%s2175 + $0x9] sm:$0xff]
      %v2484 = vld [vmem:[%s2175 + $0x19] sm:$0xff]
      %v2485 = vld [vmem:[%s2175 + $0x21] sm:$0xff]
      %v2486 = vld [vmem:[%s2175 + $0x31] sm:$0xff]
      %v2487 = vld [vmem:[%s2175 + $0x39] sm:$0xff]
      %v2488 = vld [vmem:[%s2175 + $0x49] sm:$0xff]
      %v2489 = vld [vmem:[%s2175 + $0x51] sm:$0xff]
      %v2490 = vld [vmem:[%s2175 + $0x61] sm:$0xff]
      %v2491 = vld [vmem:[%s2175 + $0x69] sm:$0xff]
      %v2492 = vld [vmem:[%s2175 + $0x79] sm:$0xff]
      %v2493 = vld [vmem:[%s2175 + $0x81] sm:$0xff]
      %v2494 = vld [vmem:[%s2175 + $0x91] sm:$0xff]
      %v2495 = vld [vmem:[%s2175 + $0x99] sm:$0xff]
      %v2496 = vld [vmem:[%s2175 + $0xa9] sm:$0xff]
      %v2497 = vld [vmem:[%s2175 + $0xb1] sm:$0xff]
      %v2498 = vld [vmem:[%s2175 + $0xc1] sm:$0xff]
      %v2499 = vld [vmem:[%s2175 + $0xc9] sm:$0xff]
      %v2500 = vld [vmem:[%s2175 + $0xd9] sm:$0xff]
      %v2501 = vld [vmem:[%s2175 + $0xe1] sm:$0xff]
      %v2502 = vld [vmem:[%s2175 + $0xf1] sm:$0xff]
      %v2503 = vld [vmem:[%s2175 + $0xf9] sm:$0xff]
      %v2504 = vld [vmem:[%s2175 + $0x109] sm:$0xff]
      %v2505 = vld [vmem:[%s2175 + $0x111] sm:$0xff]
      %v2506 = vld [vmem:[%s2175 + $0x121] sm:$0xff]
      %v2507 = vld [vmem:[%s2175 + $0x129] sm:$0xff]
      %v2508 = vld [vmem:[%s2175 + $0x139] sm:$0xff]
      %v2509 = vld [vmem:[%s2175 + $0x141] sm:$0xff]
      %v2510 = vld [vmem:[%s2175 + $0x151] sm:$0xff]
      %v2511 = vld [vmem:[%s2175 + $0x159] sm:$0xff]
      %v2512 = vld [vmem:[%s2175 + $0x169] sm:$0xff]
      %v2513 = vld [vmem:[%s2175 + $0x171] sm:$0xff]
      %v2514 = vpack.c.bf16 %v2483, %v2482
      %v2515 = vpack.c.bf16 %v2485, %v2484
      %v2516 = vpack.c.bf16 %v2487, %v2486
      %v2517 = vpack.c.bf16 %v2489, %v2488
      %v2518 = vpack.c.bf16 %v2491, %v2490
      %v2519 = vpack.c.bf16 %v2493, %v2492
      %v2520 = vpack.c.bf16 %v2495, %v2494
      %v2521 = vpack.c.bf16 %v2497, %v2496
      %v2522 = vpack.c.bf16 %v2499, %v2498
      %v2523 = vpack.c.bf16 %v2501, %v2500
      %v2524 = vpack.c.bf16 %v2503, %v2502
      %v2525 = vpack.c.bf16 %v2505, %v2504
      %v2526 = vpack.c.bf16 %v2507, %v2506
      %v2527 = vpack.c.bf16 %v2509, %v2508
      %v2528 = vpack.c.bf16 %v2511, %v2510
      %v2529 = vpack.c.bf16 %v2513, %v2512
      %s2530 = scalar_lea.vmem %s1, 448
      %v2531 = vld [vmem:[%s2530] sm:$0xf]
      %v2532 = vld [vmem:[%s2530 + $0x4] sm:$0xf]
      %v2533 = vld [vmem:[%s2530 + $0x8] sm:$0xf]
      %v2534 = vld [vmem:[%s2530 + $0xc] sm:$0xf]
      %v2535 = vld [vmem:[%s2530 + $0x10] sm:$0xf]
      %v2536 = vld [vmem:[%s2530 + $0x14] sm:$0xf]
      %v2537 = vld [vmem:[%s2530 + $0x18] sm:$0xf]
      %v2538 = vld [vmem:[%s2530 + $0x1c] sm:$0xf]
      %v2539 = vld [vmem:[%s2530 + $0x20] sm:$0xf]
      %v2540 = vld [vmem:[%s2530 + $0x24] sm:$0xf]
      %v2541 = vld [vmem:[%s2530 + $0x28] sm:$0xf]
      %v2542 = vld [vmem:[%s2530 + $0x2c] sm:$0xf]
      %v2543 = vld [vmem:[%s2530 + $0x30] sm:$0xf]
      %v2544 = vld [vmem:[%s2530 + $0x34] sm:$0xf]
      %v2545 = vld [vmem:[%s2530 + $0x38] sm:$0xf]
      %v2546 = vld [vmem:[%s2530 + $0x3c] sm:$0xf]
      %v2563 = vunpack.c.l.b16 %v2531
      %v2564 = vunpack.c.l.b16 %v2532
      %v2565 = vunpack.c.l.b16 %v2533
      %v2566 = vunpack.c.l.b16 %v2534
      %v2567 = vunpack.c.l.b16 %v2535
      %v2568 = vunpack.c.l.b16 %v2536
      %v2569 = vunpack.c.l.b16 %v2537
      %v2570 = vunpack.c.l.b16 %v2538
      %v2571 = vunpack.c.l.b16 %v2539
      %v2572 = vunpack.c.l.b16 %v2540
      %v2573 = vunpack.c.l.b16 %v2541
      %v2574 = vunpack.c.l.b16 %v2542
      %v2575 = vunpack.c.l.b16 %v2543
      %v2576 = vunpack.c.l.b16 %v2544
      %v2577 = vunpack.c.l.b16 %v2545
      %v2578 = vunpack.c.l.b16 %v2546
      %v2579 = vpack.c.b16 %v2564, %v2563
      %v2580 = vpack.c.b16 %v2566, %v2565
      %v2581 = vpack.c.b16 %v2568, %v2567
      %v2582 = vpack.c.b16 %v2570, %v2569
      %v2583 = vpack.c.b16 %v2572, %v2571
      %v2584 = vpack.c.b16 %v2574, %v2573
      %v2585 = vpack.c.b16 %v2576, %v2575
      %v2586 = vpack.c.b16 %v2578, %v2577
      %2595 = vmatprep.subr.bf16.mxu0 0
      %2596 = vmatpush1.bf16.msra.mxu0 %v2586
      %2597 = vmatprep.subr.bf16.mxu0 0
      %2598 = vmatpush1.bf16.msra.mxu0 %v2585
      %2599 = vmatprep.subr.bf16.mxu0 0
      %2600 = vmatpush1.bf16.msra.mxu0 %v2584
      %2601 = vmatprep.subr.bf16.mxu0 0
      %2602 = vmatpush1.bf16.msra.mxu0 %v2583
      %2603 = vmatprep.subr.bf16.mxu0 0
      %2604 = vmatpush1.bf16.msra.mxu0 %v2582
      %2605 = vmatprep.subr.bf16.mxu0 0
      %2606 = vmatpush1.bf16.msra.mxu0 %v2581
      %2607 = vmatprep.subr.bf16.mxu0 0
      %2608 = vmatpush1.bf16.msra.mxu0 %v2580
      %2609 = vmatprep.subr.bf16.mxu0 0
      %2610 = vmatpush1.bf16.msra.mxu0 %v2579
      %2611 = vmatprep.subr.bf16.mxu0 0
      %2612 = vmatpush2.bf16.msra.mxu0 0
      %2613 = vmatprep.subr.bf16.mxu0 0
      %2614 = vmatpush2.bf16.msra.mxu0 0
      %2615 = vmatprep.subr.bf16.mxu0 0
      %2616 = vmatpush2.bf16.msra.mxu0 0
      %2617 = vmatprep.subr.bf16.mxu0 0
      %2618 = vmatpush2.bf16.msra.mxu0 0
      %2619 = vmatprep.subr.bf16.mxu0 0
      %2620 = vmatpush2.bf16.msra.mxu0 0
      %2621 = vmatprep.subr.bf16.mxu0 0
      %2622 = vmatpush2.bf16.msra.mxu0 0
      %2623 = vmatprep.subr.bf16.mxu0 0
      %2624 = vmatpush2.bf16.msra.mxu0 0
      %2625 = vmatprep.subr.bf16.mxu0 0
      %2626 = vmatpush2.bf16.msra.mxu0 0
      %2627 = vmatprep.mubr.bf16.mxu0 0
      %2628 = vmatmul.mubr.bf16.gmra.mxu0 %v2514
      %v2629 = vpop.f32.mrf.mxu0
      %v2630 = vadd.f32 0.0, %v2629
      %v2631 = vpop.f32.mrf.mxu0
      %v2632 = vpop.f32.mrf.mxu0
      %v2633 = vadd.f32 0.0, %v2632
      %v2634 = vpop.f32.mrf.mxu0
      %2635 = vmatprep.mubr.bf16.mxu0 0
      %2636 = vmatmul.mubr.bf16.gmra.mxu0 %v2515
      %v2637 = vpop.f32.mrf.mxu0
      %v2638 = vadd.f32 0.0, %v2637
      %v2639 = vpop.f32.mrf.mxu0
      %v2640 = vpop.f32.mrf.mxu0
      %v2641 = vadd.f32 0.0, %v2640
      %v2642 = vpop.f32.mrf.mxu0
      %2643 = vmatprep.mubr.bf16.mxu0 0
      %2644 = vmatmul.mubr.bf16.gmra.mxu0 %v2516
      %v2645 = vpop.f32.mrf.mxu0
      %v2646 = vadd.f32 0.0, %v2645
      %v2647 = vpop.f32.mrf.mxu0
      %v2648 = vpop.f32.mrf.mxu0
      %v2649 = vadd.f32 0.0, %v2648
      %v2650 = vpop.f32.mrf.mxu0
      %2651 = vmatprep.mubr.bf16.mxu0 0
      %2652 = vmatmul.mubr.bf16.gmra.mxu0 %v2517
      %v2653 = vpop.f32.mrf.mxu0
      %v2654 = vadd.f32 0.0, %v2653
      %v2655 = vpop.f32.mrf.mxu0
      %v2656 = vpop.f32.mrf.mxu0
      %v2657 = vadd.f32 0.0, %v2656
      %v2658 = vpop.f32.mrf.mxu0
      %2659 = vmatprep.mubr.bf16.mxu0 0
      %2660 = vmatmul.mubr.bf16.gmra.mxu0 %v2518
      %v2661 = vpop.f32.mrf.mxu0
      %v2662 = vadd.f32 0.0, %v2661
      %v2663 = vpop.f32.mrf.mxu0
      %v2664 = vpop.f32.mrf.mxu0
      %v2665 = vadd.f32 0.0, %v2664
      %v2666 = vpop.f32.mrf.mxu0
      %2667 = vmatprep.mubr.bf16.mxu0 0
      %2668 = vmatmul.mubr.bf16.gmra.mxu0 %v2519
      %v2669 = vpop.f32.mrf.mxu0
      %v2670 = vadd.f32 0.0, %v2669
      %v2671 = vpop.f32.mrf.mxu0
      %v2672 = vpop.f32.mrf.mxu0
      %v2673 = vadd.f32 0.0, %v2672
      %v2674 = vpop.f32.mrf.mxu0
      %2675 = vmatprep.mubr.bf16.mxu0 0
      %2676 = vmatmul.mubr.bf16.gmra.mxu0 %v2520
      %v2677 = vpop.f32.mrf.mxu0
      %v2678 = vadd.f32 0.0, %v2677
      %v2679 = vpop.f32.mrf.mxu0
      %v2680 = vpop.f32.mrf.mxu0
      %v2681 = vadd.f32 0.0, %v2680
      %v2682 = vpop.f32.mrf.mxu0
      %2683 = vmatprep.mubr.bf16.mxu0 0
      %2684 = vmatmul.mubr.bf16.gmra.mxu0 %v2521
      %v2685 = vpop.f32.mrf.mxu0
      %v2686 = vadd.f32 0.0, %v2685
      %v2687 = vpop.f32.mrf.mxu0
      %v2688 = vpop.f32.mrf.mxu0
      %v2689 = vadd.f32 0.0, %v2688
      %v2690 = vpop.f32.mrf.mxu0
      %2691 = vmatprep.mubr.bf16.mxu0 0
      %2692 = vmatmul.mubr.bf16.gmra.mxu0 %v2522
      %v2693 = vpop.f32.mrf.mxu0
      %v2694 = vadd.f32 0.0, %v2693
      %v2695 = vpop.f32.mrf.mxu0
      %v2696 = vpop.f32.mrf.mxu0
      %v2697 = vadd.f32 0.0, %v2696
      %v2698 = vpop.f32.mrf.mxu0
      %2699 = vmatprep.mubr.bf16.mxu0 0
      %2700 = vmatmul.mubr.bf16.gmra.mxu0 %v2523
      %v2701 = vpop.f32.mrf.mxu0
      %v2702 = vadd.f32 0.0, %v2701
      %v2703 = vpop.f32.mrf.mxu0
      %v2704 = vpop.f32.mrf.mxu0
      %v2705 = vadd.f32 0.0, %v2704
      %v2706 = vpop.f32.mrf.mxu0
      %2707 = vmatprep.mubr.bf16.mxu0 0
      %2708 = vmatmul.mubr.bf16.gmra.mxu0 %v2524
      %v2709 = vpop.f32.mrf.mxu0
      %v2710 = vadd.f32 0.0, %v2709
      %v2711 = vpop.f32.mrf.mxu0
      %v2712 = vpop.f32.mrf.mxu0
      %v2713 = vadd.f32 0.0, %v2712
      %v2714 = vpop.f32.mrf.mxu0
      %2715 = vmatprep.mubr.bf16.mxu0 0
      %2716 = vmatmul.mubr.bf16.gmra.mxu0 %v2525
      %v2717 = vpop.f32.mrf.mxu0
      %v2718 = vadd.f32 0.0, %v2717
      %v2719 = vpop.f32.mrf.mxu0
      %v2720 = vpop.f32.mrf.mxu0
      %v2721 = vadd.f32 0.0, %v2720
      %v2722 = vpop.f32.mrf.mxu0
      %2723 = vmatprep.mubr.bf16.mxu0 0
      %2724 = vmatmul.mubr.bf16.gmra.mxu0 %v2526
      %v2725 = vpop.f32.mrf.mxu0
      %v2726 = vadd.f32 0.0, %v2725
      %v2727 = vpop.f32.mrf.mxu0
      %v2728 = vpop.f32.mrf.mxu0
      %v2729 = vadd.f32 0.0, %v2728
      %v2730 = vpop.f32.mrf.mxu0
      %2731 = vmatprep.mubr.bf16.mxu0 0
      %2732 = vmatmul.mubr.bf16.gmra.mxu0 %v2527
      %v2733 = vpop.f32.mrf.mxu0
      %v2734 = vadd.f32 0.0, %v2733
      %v2735 = vpop.f32.mrf.mxu0
      %v2736 = vpop.f32.mrf.mxu0
      %v2737 = vadd.f32 0.0, %v2736
      %v2738 = vpop.f32.mrf.mxu0
      %2739 = vmatprep.mubr.bf16.mxu0 0
      %2740 = vmatmul.mubr.bf16.gmra.mxu0 %v2528
      %v2741 = vpop.f32.mrf.mxu0
      %v2742 = vadd.f32 0.0, %v2741
      %v2743 = vpop.f32.mrf.mxu0
      %v2744 = vpop.f32.mrf.mxu0
      %v2745 = vadd.f32 0.0, %v2744
      %v2746 = vpop.f32.mrf.mxu0
      %2747 = vmatprep.mubr.bf16.mxu0 0
      %2748 = vmatmul.mubr.bf16.gmra.mxu0 %v2529
      %v2749 = vpop.f32.mrf.mxu0
      %v2750 = vadd.f32 0.0, %v2749
      %v2751 = vpop.f32.mrf.mxu0
      %v2752 = vpop.f32.mrf.mxu0
      %v2753 = vadd.f32 0.0, %v2752
      %v2754 = vpop.f32.mrf.mxu0
      %2755 = vdwg.mxu0
      %v2756 = vadd.f32 %v2450, %v2630
      %v2757 = vadd.f32 %v2451, %v2633
      %v2758 = vadd.f32 %v2452, %v2638
      %v2759 = vadd.f32 %v2453, %v2641
      %v2760 = vadd.f32 %v2454, %v2646
      %v2761 = vadd.f32 %v2455, %v2649
      %v2762 = vadd.f32 %v2456, %v2654
      %v2763 = vadd.f32 %v2457, %v2657
      %v2764 = vadd.f32 %v2458, %v2662
      %v2765 = vadd.f32 %v2459, %v2665
      %v2766 = vadd.f32 %v2460, %v2670
      %v2767 = vadd.f32 %v2461, %v2673
      %v2768 = vadd.f32 %v2462, %v2678
      %v2769 = vadd.f32 %v2463, %v2681
      %v2770 = vadd.f32 %v2464, %v2686
      %v2771 = vadd.f32 %v2465, %v2689
      %v2772 = vadd.f32 %v2466, %v2694
      %v2773 = vadd.f32 %v2467, %v2697
      %v2774 = vadd.f32 %v2468, %v2702
      %v2775 = vadd.f32 %v2469, %v2705
      %v2776 = vadd.f32 %v2470, %v2710
      %v2777 = vadd.f32 %v2471, %v2713
      %v2778 = vadd.f32 %v2472, %v2718
      %v2779 = vadd.f32 %v2473, %v2721
      %v2780 = vadd.f32 %v2474, %v2726
      %v2781 = vadd.f32 %v2475, %v2729
      %v2782 = vadd.f32 %v2476, %v2734
      %v2783 = vadd.f32 %v2477, %v2737
      %v2784 = vadd.f32 %v2478, %v2742
      %v2785 = vadd.f32 %v2479, %v2745
      %v2786 = vadd.f32 %v2480, %v2750
      %v2787 = vadd.f32 %v2481, %v2753
      %v2788 = vld [vmem:[%s2175 + $0x2] sm:$0xff]
      %v2789 = vld [vmem:[%s2175 + $0xa] sm:$0xff]
      %v2790 = vld [vmem:[%s2175 + $0x1a] sm:$0xff]
      %v2791 = vld [vmem:[%s2175 + $0x22] sm:$0xff]
      %v2792 = vld [vmem:[%s2175 + $0x32] sm:$0xff]
      %v2793 = vld [vmem:[%s2175 + $0x3a] sm:$0xff]
      %v2794 = vld [vmem:[%s2175 + $0x4a] sm:$0xff]
      %v2795 = vld [vmem:[%s2175 + $0x52] sm:$0xff]
      %v2796 = vld [vmem:[%s2175 + $0x62] sm:$0xff]
      %v2797 = vld [vmem:[%s2175 + $0x6a] sm:$0xff]
      %v2798 = vld [vmem:[%s2175 + $0x7a] sm:$0xff]
      %v2799 = vld [vmem:[%s2175 + $0x82] sm:$0xff]
      %v2800 = vld [vmem:[%s2175 + $0x92] sm:$0xff]
      %v2801 = vld [vmem:[%s2175 + $0x9a] sm:$0xff]
      %v2802 = vld [vmem:[%s2175 + $0xaa] sm:$0xff]
      %v2803 = vld [vmem:[%s2175 + $0xb2] sm:$0xff]
      %v2804 = vld [vmem:[%s2175 + $0xc2] sm:$0xff]
      %v2805 = vld [vmem:[%s2175 + $0xca] sm:$0xff]
      %v2806 = vld [vmem:[%s2175 + $0xda] sm:$0xff]
      %v2807 = vld [vmem:[%s2175 + $0xe2] sm:$0xff]
      %v2808 = vld [vmem:[%s2175 + $0xf2] sm:$0xff]
      %v2809 = vld [vmem:[%s2175 + $0xfa] sm:$0xff]
      %v2810 = vld [vmem:[%s2175 + $0x10a] sm:$0xff]
      %v2811 = vld [vmem:[%s2175 + $0x112] sm:$0xff]
      %v2812 = vld [vmem:[%s2175 + $0x122] sm:$0xff]
      %v2813 = vld [vmem:[%s2175 + $0x12a] sm:$0xff]
      %v2814 = vld [vmem:[%s2175 + $0x13a] sm:$0xff]
      %v2815 = vld [vmem:[%s2175 + $0x142] sm:$0xff]
      %v2816 = vld [vmem:[%s2175 + $0x152] sm:$0xff]
      %v2817 = vld [vmem:[%s2175 + $0x15a] sm:$0xff]
      %v2818 = vld [vmem:[%s2175 + $0x16a] sm:$0xff]
      %v2819 = vld [vmem:[%s2175 + $0x172] sm:$0xff]
      %v2820 = vpack.c.bf16 %v2789, %v2788
      %v2821 = vpack.c.bf16 %v2791, %v2790
      %v2822 = vpack.c.bf16 %v2793, %v2792
      %v2823 = vpack.c.bf16 %v2795, %v2794
      %v2824 = vpack.c.bf16 %v2797, %v2796
      %v2825 = vpack.c.bf16 %v2799, %v2798
      %v2826 = vpack.c.bf16 %v2801, %v2800
      %v2827 = vpack.c.bf16 %v2803, %v2802
      %v2828 = vpack.c.bf16 %v2805, %v2804
      %v2829 = vpack.c.bf16 %v2807, %v2806
      %v2830 = vpack.c.bf16 %v2809, %v2808
      %v2831 = vpack.c.bf16 %v2811, %v2810
      %v2832 = vpack.c.bf16 %v2813, %v2812
      %v2833 = vpack.c.bf16 %v2815, %v2814
      %v2834 = vpack.c.bf16 %v2817, %v2816
      %v2835 = vpack.c.bf16 %v2819, %v2818
      %s2836 = scalar_lea.vmem %s1, 512
      %v2837 = vld [vmem:[%s2836] sm:$0xf]
      %v2838 = vld [vmem:[%s2836 + $0x4] sm:$0xf]
      %v2839 = vld [vmem:[%s2836 + $0x8] sm:$0xf]
      %v2840 = vld [vmem:[%s2836 + $0xc] sm:$0xf]
      %v2841 = vld [vmem:[%s2836 + $0x10] sm:$0xf]
      %v2842 = vld [vmem:[%s2836 + $0x14] sm:$0xf]
      %v2843 = vld [vmem:[%s2836 + $0x18] sm:$0xf]
      %v2844 = vld [vmem:[%s2836 + $0x1c] sm:$0xf]
      %v2845 = vld [vmem:[%s2836 + $0x20] sm:$0xf]
      %v2846 = vld [vmem:[%s2836 + $0x24] sm:$0xf]
      %v2847 = vld [vmem:[%s2836 + $0x28] sm:$0xf]
      %v2848 = vld [vmem:[%s2836 + $0x2c] sm:$0xf]
      %v2849 = vld [vmem:[%s2836 + $0x30] sm:$0xf]
      %v2850 = vld [vmem:[%s2836 + $0x34] sm:$0xf]
      %v2851 = vld [vmem:[%s2836 + $0x38] sm:$0xf]
      %v2852 = vld [vmem:[%s2836 + $0x3c] sm:$0xf]
      %v2869 = vunpack.c.l.b16 %v2837
      %v2870 = vunpack.c.l.b16 %v2838
      %v2871 = vunpack.c.l.b16 %v2839
      %v2872 = vunpack.c.l.b16 %v2840
      %v2873 = vunpack.c.l.b16 %v2841
      %v2874 = vunpack.c.l.b16 %v2842
      %v2875 = vunpack.c.l.b16 %v2843
      %v2876 = vunpack.c.l.b16 %v2844
      %v2877 = vunpack.c.l.b16 %v2845
      %v2878 = vunpack.c.l.b16 %v2846
      %v2879 = vunpack.c.l.b16 %v2847
      %v2880 = vunpack.c.l.b16 %v2848
      %v2881 = vunpack.c.l.b16 %v2849
      %v2882 = vunpack.c.l.b16 %v2850
      %v2883 = vunpack.c.l.b16 %v2851
      %v2884 = vunpack.c.l.b16 %v2852
      %v2885 = vpack.c.b16 %v2870, %v2869
      %v2886 = vpack.c.b16 %v2872, %v2871
      %v2887 = vpack.c.b16 %v2874, %v2873
      %v2888 = vpack.c.b16 %v2876, %v2875
      %v2889 = vpack.c.b16 %v2878, %v2877
      %v2890 = vpack.c.b16 %v2880, %v2879
      %v2891 = vpack.c.b16 %v2882, %v2881
      %v2892 = vpack.c.b16 %v2884, %v2883
      %2901 = vmatprep.subr.bf16.mxu0 0
      %2902 = vmatpush1.bf16.msra.mxu0 %v2892
      %2903 = vmatprep.subr.bf16.mxu0 0
      %2904 = vmatpush1.bf16.msra.mxu0 %v2891
      %2905 = vmatprep.subr.bf16.mxu0 0
      %2906 = vmatpush1.bf16.msra.mxu0 %v2890
      %2907 = vmatprep.subr.bf16.mxu0 0
      %2908 = vmatpush1.bf16.msra.mxu0 %v2889
      %2909 = vmatprep.subr.bf16.mxu0 0
      %2910 = vmatpush1.bf16.msra.mxu0 %v2888
      %2911 = vmatprep.subr.bf16.mxu0 0
      %2912 = vmatpush1.bf16.msra.mxu0 %v2887
      %2913 = vmatprep.subr.bf16.mxu0 0
      %2914 = vmatpush1.bf16.msra.mxu0 %v2886
      %2915 = vmatprep.subr.bf16.mxu0 0
      %2916 = vmatpush1.bf16.msra.mxu0 %v2885
      %2917 = vmatprep.subr.bf16.mxu0 0
      %2918 = vmatpush2.bf16.msra.mxu0 0
      %2919 = vmatprep.subr.bf16.mxu0 0
      %2920 = vmatpush2.bf16.msra.mxu0 0
      %2921 = vmatprep.subr.bf16.mxu0 0
      %2922 = vmatpush2.bf16.msra.mxu0 0
      %2923 = vmatprep.subr.bf16.mxu0 0
      %2924 = vmatpush2.bf16.msra.mxu0 0
      %2925 = vmatprep.subr.bf16.mxu0 0
      %2926 = vmatpush2.bf16.msra.mxu0 0
      %2927 = vmatprep.subr.bf16.mxu0 0
      %2928 = vmatpush2.bf16.msra.mxu0 0
      %2929 = vmatprep.subr.bf16.mxu0 0
      %2930 = vmatpush2.bf16.msra.mxu0 0
      %2931 = vmatprep.subr.bf16.mxu0 0
      %2932 = vmatpush2.bf16.msra.mxu0 0
      %2933 = vmatprep.mubr.bf16.mxu0 0
      %2934 = vmatmul.mubr.bf16.gmra.mxu0 %v2820
      %v2935 = vpop.f32.mrf.mxu0
      %v2936 = vadd.f32 0.0, %v2935
      %v2937 = vpop.f32.mrf.mxu0
      %v2938 = vpop.f32.mrf.mxu0
      %v2939 = vadd.f32 0.0, %v2938
      %v2940 = vpop.f32.mrf.mxu0
      %2941 = vmatprep.mubr.bf16.mxu0 0
      %2942 = vmatmul.mubr.bf16.gmra.mxu0 %v2821
      %v2943 = vpop.f32.mrf.mxu0
      %v2944 = vadd.f32 0.0, %v2943
      %v2945 = vpop.f32.mrf.mxu0
      %v2946 = vpop.f32.mrf.mxu0
      %v2947 = vadd.f32 0.0, %v2946
      %v2948 = vpop.f32.mrf.mxu0
      %2949 = vmatprep.mubr.bf16.mxu0 0
      %2950 = vmatmul.mubr.bf16.gmra.mxu0 %v2822
      %v2951 = vpop.f32.mrf.mxu0
      %v2952 = vadd.f32 0.0, %v2951
      %v2953 = vpop.f32.mrf.mxu0
      %v2954 = vpop.f32.mrf.mxu0
      %v2955 = vadd.f32 0.0, %v2954
      %v2956 = vpop.f32.mrf.mxu0
      %2957 = vmatprep.mubr.bf16.mxu0 0
      %2958 = vmatmul.mubr.bf16.gmra.mxu0 %v2823
      %v2959 = vpop.f32.mrf.mxu0
      %v2960 = vadd.f32 0.0, %v2959
      %v2961 = vpop.f32.mrf.mxu0
      %v2962 = vpop.f32.mrf.mxu0
      %v2963 = vadd.f32 0.0, %v2962
      %v2964 = vpop.f32.mrf.mxu0
      %2965 = vmatprep.mubr.bf16.mxu0 0
      %2966 = vmatmul.mubr.bf16.gmra.mxu0 %v2824
      %v2967 = vpop.f32.mrf.mxu0
      %v2968 = vadd.f32 0.0, %v2967
      %v2969 = vpop.f32.mrf.mxu0
      %v2970 = vpop.f32.mrf.mxu0
      %v2971 = vadd.f32 0.0, %v2970
      %v2972 = vpop.f32.mrf.mxu0
      %2973 = vmatprep.mubr.bf16.mxu0 0
      %2974 = vmatmul.mubr.bf16.gmra.mxu0 %v2825
      %v2975 = vpop.f32.mrf.mxu0
      %v2976 = vadd.f32 0.0, %v2975
      %v2977 = vpop.f32.mrf.mxu0
      %v2978 = vpop.f32.mrf.mxu0
      %v2979 = vadd.f32 0.0, %v2978
      %v2980 = vpop.f32.mrf.mxu0
      %2981 = vmatprep.mubr.bf16.mxu0 0
      %2982 = vmatmul.mubr.bf16.gmra.mxu0 %v2826
      %v2983 = vpop.f32.mrf.mxu0
      %v2984 = vadd.f32 0.0, %v2983
      %v2985 = vpop.f32.mrf.mxu0
      %v2986 = vpop.f32.mrf.mxu0
      %v2987 = vadd.f32 0.0, %v2986
      %v2988 = vpop.f32.mrf.mxu0
      %2989 = vmatprep.mubr.bf16.mxu0 0
      %2990 = vmatmul.mubr.bf16.gmra.mxu0 %v2827
      %v2991 = vpop.f32.mrf.mxu0
      %v2992 = vadd.f32 0.0, %v2991
      %v2993 = vpop.f32.mrf.mxu0
      %v2994 = vpop.f32.mrf.mxu0
      %v2995 = vadd.f32 0.0, %v2994
      %v2996 = vpop.f32.mrf.mxu0
      %2997 = vmatprep.mubr.bf16.mxu0 0
      %2998 = vmatmul.mubr.bf16.gmra.mxu0 %v2828
      %v2999 = vpop.f32.mrf.mxu0
      %v3000 = vadd.f32 0.0, %v2999
      %v3001 = vpop.f32.mrf.mxu0
      %v3002 = vpop.f32.mrf.mxu0
      %v3003 = vadd.f32 0.0, %v3002
      %v3004 = vpop.f32.mrf.mxu0
      %3005 = vmatprep.mubr.bf16.mxu0 0
      %3006 = vmatmul.mubr.bf16.gmra.mxu0 %v2829
      %v3007 = vpop.f32.mrf.mxu0
      %v3008 = vadd.f32 0.0, %v3007
      %v3009 = vpop.f32.mrf.mxu0
      %v3010 = vpop.f32.mrf.mxu0
      %v3011 = vadd.f32 0.0, %v3010
      %v3012 = vpop.f32.mrf.mxu0
      %3013 = vmatprep.mubr.bf16.mxu0 0
      %3014 = vmatmul.mubr.bf16.gmra.mxu0 %v2830
      %v3015 = vpop.f32.mrf.mxu0
      %v3016 = vadd.f32 0.0, %v3015
      %v3017 = vpop.f32.mrf.mxu0
      %v3018 = vpop.f32.mrf.mxu0
      %v3019 = vadd.f32 0.0, %v3018
      %v3020 = vpop.f32.mrf.mxu0
      %3021 = vmatprep.mubr.bf16.mxu0 0
      %3022 = vmatmul.mubr.bf16.gmra.mxu0 %v2831
      %v3023 = vpop.f32.mrf.mxu0
      %v3024 = vadd.f32 0.0, %v3023
      %v3025 = vpop.f32.mrf.mxu0
      %v3026 = vpop.f32.mrf.mxu0
      %v3027 = vadd.f32 0.0, %v3026
      %v3028 = vpop.f32.mrf.mxu0
      %3029 = vmatprep.mubr.bf16.mxu0 0
      %3030 = vmatmul.mubr.bf16.gmra.mxu0 %v2832
      %v3031 = vpop.f32.mrf.mxu0
      %v3032 = vadd.f32 0.0, %v3031
      %v3033 = vpop.f32.mrf.mxu0
      %v3034 = vpop.f32.mrf.mxu0
      %v3035 = vadd.f32 0.0, %v3034
      %v3036 = vpop.f32.mrf.mxu0
      %3037 = vmatprep.mubr.bf16.mxu0 0
      %3038 = vmatmul.mubr.bf16.gmra.mxu0 %v2833
      %v3039 = vpop.f32.mrf.mxu0
      %v3040 = vadd.f32 0.0, %v3039
      %v3041 = vpop.f32.mrf.mxu0
      %v3042 = vpop.f32.mrf.mxu0
      %v3043 = vadd.f32 0.0, %v3042
      %v3044 = vpop.f32.mrf.mxu0
      %3045 = vmatprep.mubr.bf16.mxu0 0
      %3046 = vmatmul.mubr.bf16.gmra.mxu0 %v2834
      %v3047 = vpop.f32.mrf.mxu0
      %v3048 = vadd.f32 0.0, %v3047
      %v3049 = vpop.f32.mrf.mxu0
      %v3050 = vpop.f32.mrf.mxu0
      %v3051 = vadd.f32 0.0, %v3050
      %v3052 = vpop.f32.mrf.mxu0
      %3053 = vmatprep.mubr.bf16.mxu0 0
      %3054 = vmatmul.mubr.bf16.gmra.mxu0 %v2835
      %v3055 = vpop.f32.mrf.mxu0
      %v3056 = vadd.f32 0.0, %v3055
      %v3057 = vpop.f32.mrf.mxu0
      %v3058 = vpop.f32.mrf.mxu0
      %v3059 = vadd.f32 0.0, %v3058
      %v3060 = vpop.f32.mrf.mxu0
      %3061 = vdwg.mxu0
      %v3062 = vadd.f32 %v2756, %v2936
      %v3063 = vadd.f32 %v2757, %v2939
      %v3064 = vadd.f32 %v2758, %v2944
      %v3065 = vadd.f32 %v2759, %v2947
      %v3066 = vadd.f32 %v2760, %v2952
      %v3067 = vadd.f32 %v2761, %v2955
      %v3068 = vadd.f32 %v2762, %v2960
      %v3069 = vadd.f32 %v2763, %v2963
      %v3070 = vadd.f32 %v2764, %v2968
      %v3071 = vadd.f32 %v2765, %v2971
      %v3072 = vadd.f32 %v2766, %v2976
      %v3073 = vadd.f32 %v2767, %v2979
      %v3074 = vadd.f32 %v2768, %v2984
      %v3075 = vadd.f32 %v2769, %v2987
      %v3076 = vadd.f32 %v2770, %v2992
      %v3077 = vadd.f32 %v2771, %v2995
      %v3078 = vadd.f32 %v2772, %v3000
      %v3079 = vadd.f32 %v2773, %v3003
      %v3080 = vadd.f32 %v2774, %v3008
      %v3081 = vadd.f32 %v2775, %v3011
      %v3082 = vadd.f32 %v2776, %v3016
      %v3083 = vadd.f32 %v2777, %v3019
      %v3084 = vadd.f32 %v2778, %v3024
      %v3085 = vadd.f32 %v2779, %v3027
      %v3086 = vadd.f32 %v2780, %v3032
      %v3087 = vadd.f32 %v2781, %v3035
      %v3088 = vadd.f32 %v2782, %v3040
      %v3089 = vadd.f32 %v2783, %v3043
      %v3090 = vadd.f32 %v2784, %v3048
      %v3091 = vadd.f32 %v2785, %v3051
      %v3092 = vadd.f32 %v2786, %v3056
      %v3093 = vadd.f32 %v2787, %v3059
      %v3094 = vld [vmem:[%s2] sm:$0x1]
      %v3096 = vlaneseq
      %v3097 = vshrl.u32 %v3096, 7
      %v3098 = vsub.s32 0, %v3097
      %v3099 = vrot.slane %v3094, %v3098
      %v3101 = vadd.f32 %v3062, %v3099
      %v3102 = vadd.f32 %v3063, %v3099
      %v3103 = vadd.f32 %v3064, %v3099
      %v3104 = vadd.f32 %v3065, %v3099
      %v3105 = vadd.f32 %v3066, %v3099
      %v3106 = vadd.f32 %v3067, %v3099
      %v3107 = vadd.f32 %v3068, %v3099
      %v3108 = vadd.f32 %v3069, %v3099
      %v3109 = vadd.f32 %v3070, %v3099
      %v3110 = vadd.f32 %v3071, %v3099
      %v3111 = vadd.f32 %v3072, %v3099
      %v3112 = vadd.f32 %v3073, %v3099
      %v3113 = vadd.f32 %v3074, %v3099
      %v3114 = vadd.f32 %v3075, %v3099
      %v3115 = vadd.f32 %v3076, %v3099
      %v3116 = vadd.f32 %v3077, %v3099
      %v3117 = vadd.f32 %v3078, %v3099
      %v3118 = vadd.f32 %v3079, %v3099
      %v3119 = vadd.f32 %v3080, %v3099
      %v3120 = vadd.f32 %v3081, %v3099
      %v3121 = vadd.f32 %v3082, %v3099
      %v3122 = vadd.f32 %v3083, %v3099
      %v3123 = vadd.f32 %v3084, %v3099
      %v3124 = vadd.f32 %v3085, %v3099
      %v3125 = vadd.f32 %v3086, %v3099
      %v3126 = vadd.f32 %v3087, %v3099
      %v3127 = vadd.f32 %v3088, %v3099
      %v3128 = vadd.f32 %v3089, %v3099
      %v3129 = vadd.f32 %v3090, %v3099
      %v3130 = vadd.f32 %v3091, %v3099
      %v3131 = vadd.f32 %v3092, %v3099
      %v3132 = vadd.f32 %v3093, %v3099
      %v3133 = vmax.f32 %v3101, 0.0
      %v3134 = vmax.f32 %v3102, 0.0
      %v3135 = vmax.f32 %v3103, 0.0
      %v3136 = vmax.f32 %v3104, 0.0
      %v3137 = vmax.f32 %v3105, 0.0
      %v3138 = vmax.f32 %v3106, 0.0
      %v3139 = vmax.f32 %v3107, 0.0
      %v3140 = vmax.f32 %v3108, 0.0
      %v3141 = vmax.f32 %v3109, 0.0
      %v3142 = vmax.f32 %v3110, 0.0
      %v3143 = vmax.f32 %v3111, 0.0
      %v3144 = vmax.f32 %v3112, 0.0
      %v3145 = vmax.f32 %v3113, 0.0
      %v3146 = vmax.f32 %v3114, 0.0
      %v3147 = vmax.f32 %v3115, 0.0
      %v3148 = vmax.f32 %v3116, 0.0
      %v3149 = vmax.f32 %v3117, 0.0
      %v3150 = vmax.f32 %v3118, 0.0
      %v3151 = vmax.f32 %v3119, 0.0
      %v3152 = vmax.f32 %v3120, 0.0
      %v3153 = vmax.f32 %v3121, 0.0
      %v3154 = vmax.f32 %v3122, 0.0
      %v3155 = vmax.f32 %v3123, 0.0
      %v3156 = vmax.f32 %v3124, 0.0
      %v3157 = vmax.f32 %v3125, 0.0
      %v3158 = vmax.f32 %v3126, 0.0
      %v3159 = vmax.f32 %v3127, 0.0
      %v3160 = vmax.f32 %v3128, 0.0
      %v3161 = vmax.f32 %v3129, 0.0
      %v3162 = vmax.f32 %v3130, 0.0
      %v3163 = vmax.f32 %v3131, 0.0
      %v3164 = vmax.f32 %v3132, 0.0
      %s3165 = scalar_lea.vmem [#allocation3], 24
      %3166 = vst [vmem:[%s3165 + $0x1] sm:$0xff] %v3133
      %3167 = vst [vmem:[%s3165 + $0x9] sm:$0xff] %v3134
      %3168 = vst [vmem:[%s3165 + $0x19] sm:$0xff] %v3135
      %3169 = vst [vmem:[%s3165 + $0x21] sm:$0xff] %v3136
      %3170 = vst [vmem:[%s3165 + $0x31] sm:$0xff] %v3137
      %3171 = vst [vmem:[%s3165 + $0x39] sm:$0xff] %v3138
      %3172 = vst [vmem:[%s3165 + $0x49] sm:$0xff] %v3139
      %3173 = vst [vmem:[%s3165 + $0x51] sm:$0xff] %v3140
      %3174 = vst [vmem:[%s3165 + $0x61] sm:$0xff] %v3141
      %3175 = vst [vmem:[%s3165 + $0x69] sm:$0xff] %v3142
      %3176 = vst [vmem:[%s3165 + $0x79] sm:$0xff] %v3143
      %3177 = vst [vmem:[%s3165 + $0x81] sm:$0xff] %v3144
      %3178 = vst [vmem:[%s3165 + $0x91] sm:$0xff] %v3145
      %3179 = vst [vmem:[%s3165 + $0x99] sm:$0xff] %v3146
      %3180 = vst [vmem:[%s3165 + $0xa9] sm:$0xff] %v3147
      %3181 = vst [vmem:[%s3165 + $0xb1] sm:$0xff] %v3148
      %3182 = vst [vmem:[%s3165 + $0xc1] sm:$0xff] %v3149
      %3183 = vst [vmem:[%s3165 + $0xc9] sm:$0xff] %v3150
      %3184 = vst [vmem:[%s3165 + $0xd9] sm:$0xff] %v3151
      %3185 = vst [vmem:[%s3165 + $0xe1] sm:$0xff] %v3152
      %3186 = vst [vmem:[%s3165 + $0xf1] sm:$0xff] %v3153
      %3187 = vst [vmem:[%s3165 + $0xf9] sm:$0xff] %v3154
      %3188 = vst [vmem:[%s3165 + $0x109] sm:$0xff] %v3155
      %3189 = vst [vmem:[%s3165 + $0x111] sm:$0xff] %v3156
      %3190 = vst [vmem:[%s3165 + $0x121] sm:$0xff] %v3157
      %3191 = vst [vmem:[%s3165 + $0x129] sm:$0xff] %v3158
      %3192 = vst [vmem:[%s3165 + $0x139] sm:$0xff] %v3159
      %3193 = vst [vmem:[%s3165 + $0x141] sm:$0xff] %v3160
      %3194 = vst [vmem:[%s3165 + $0x151] sm:$0xff] %v3161
      %3195 = vst [vmem:[%s3165 + $0x159] sm:$0xff] %v3162
      %3196 = vst [vmem:[%s3165 + $0x169] sm:$0xff] %v3163
      %3197 = vst [vmem:[%s3165 + $0x171] sm:$0xff] %v3164
      %v3198 = vld [vmem:[#allocation3] sm:$0xff]
      %v3199 = vld [vmem:[#allocation3 + $0x8] sm:$0xff]
      %v3200 = vld [vmem:[#allocation3 + $0x18] sm:$0xff]
      %v3201 = vld [vmem:[#allocation3 + $0x20] sm:$0xff]
      %v3202 = vld [vmem:[#allocation3 + $0x30] sm:$0xff]
      %v3203 = vld [vmem:[#allocation3 + $0x38] sm:$0xff]
      %v3204 = vld [vmem:[#allocation3 + $0x48] sm:$0xff]
      %v3205 = vld [vmem:[#allocation3 + $0x50] sm:$0xff]
      %v3206 = vld [vmem:[#allocation3 + $0x60] sm:$0xff]
      %v3207 = vld [vmem:[#allocation3 + $0x68] sm:$0xff]
      %v3208 = vld [vmem:[#allocation3 + $0x78] sm:$0xff]
      %v3209 = vld [vmem:[#allocation3 + $0x80] sm:$0xff]
      %v3210 = vld [vmem:[#allocation3 + $0x90] sm:$0xff]
      %v3211 = vld [vmem:[#allocation3 + $0x98] sm:$0xff]
      %v3212 = vld [vmem:[#allocation3 + $0xa8] sm:$0xff]
      %v3213 = vld [vmem:[#allocation3 + $0xb0] sm:$0xff]
      %v3214 = vld [vmem:[#allocation3 + $0xc0] sm:$0xff]
      %v3215 = vld [vmem:[#allocation3 + $0xc8] sm:$0xff]
      %v3216 = vld [vmem:[#allocation3 + $0xd8] sm:$0xff]
      %v3217 = vld [vmem:[#allocation3 + $0xe0] sm:$0xff]
      %v3218 = vld [vmem:[#allocation3 + $0xf0] sm:$0xff]
      %v3219 = vld [vmem:[#allocation3 + $0xf8] sm:$0xff]
      %v3220 = vld [vmem:[#allocation3 + $0x108] sm:$0xff]
      %v3221 = vld [vmem:[#allocation3 + $0x110] sm:$0xff]
      %v3222 = vld [vmem:[#allocation3 + $0x120] sm:$0xff]
      %v3223 = vld [vmem:[#allocation3 + $0x128] sm:$0xff]
      %v3224 = vld [vmem:[#allocation3 + $0x138] sm:$0xff]
      %v3225 = vld [vmem:[#allocation3 + $0x140] sm:$0xff]
      %v3226 = vld [vmem:[#allocation3 + $0x150] sm:$0xff]
      %v3227 = vld [vmem:[#allocation3 + $0x158] sm:$0xff]
      %v3228 = vld [vmem:[#allocation3 + $0x168] sm:$0xff]
      %v3229 = vld [vmem:[#allocation3 + $0x170] sm:$0xff]
      %v3230 = vpack.c.bf16 %v3199, %v3198
      %v3231 = vpack.c.bf16 %v3201, %v3200
      %v3232 = vpack.c.bf16 %v3203, %v3202
      %v3233 = vpack.c.bf16 %v3205, %v3204
      %v3234 = vpack.c.bf16 %v3207, %v3206
      %v3235 = vpack.c.bf16 %v3209, %v3208
      %v3236 = vpack.c.bf16 %v3211, %v3210
      %v3237 = vpack.c.bf16 %v3213, %v3212
      %v3238 = vpack.c.bf16 %v3215, %v3214
      %v3239 = vpack.c.bf16 %v3217, %v3216
      %v3240 = vpack.c.bf16 %v3219, %v3218
      %v3241 = vpack.c.bf16 %v3221, %v3220
      %v3242 = vpack.c.bf16 %v3223, %v3222
      %v3243 = vpack.c.bf16 %v3225, %v3224
      %v3244 = vpack.c.bf16 %v3227, %v3226
      %v3245 = vpack.c.bf16 %v3229, %v3228
      %v3246 = vld [vmem:[%s3] sm:$0xf]
      %v3247 = vld [vmem:[%s3 + $0x4] sm:$0xf]
      %v3248 = vld [vmem:[%s3 + $0x8] sm:$0xf]
      %v3249 = vld [vmem:[%s3 + $0xc] sm:$0xf]
      %v3250 = vld [vmem:[%s3 + $0x10] sm:$0xf]
      %v3251 = vld [vmem:[%s3 + $0x14] sm:$0xf]
      %v3252 = vld [vmem:[%s3 + $0x18] sm:$0xf]
      %v3253 = vld [vmem:[%s3 + $0x1c] sm:$0xf]
      %v3254 = vld [vmem:[%s3 + $0x20] sm:$0xf]
      %v3255 = vld [vmem:[%s3 + $0x24] sm:$0xf]
      %v3256 = vld [vmem:[%s3 + $0x28] sm:$0xf]
      %v3257 = vld [vmem:[%s3 + $0x2c] sm:$0xf]
      %v3258 = vld [vmem:[%s3 + $0x30] sm:$0xf]
      %v3259 = vld [vmem:[%s3 + $0x34] sm:$0xf]
      %v3260 = vld [vmem:[%s3 + $0x38] sm:$0xf]
      %v3261 = vld [vmem:[%s3 + $0x3c] sm:$0xf]
      %v3262 = vld [vmem:[#allocation3 + $0x1] sm:$0xff]
      %v3263 = vld [vmem:[#allocation3 + $0x9] sm:$0xff]
      %v3264 = vld [vmem:[#allocation3 + $0x19] sm:$0xff]
      %v3265 = vld [vmem:[#allocation3 + $0x21] sm:$0xff]
      %v3266 = vld [vmem:[#allocation3 + $0x31] sm:$0xff]
      %v3267 = vld [vmem:[#allocation3 + $0x39] sm:$0xff]
      %v3268 = vld [vmem:[#allocation3 + $0x49] sm:$0xff]
      %v3269 = vld [vmem:[#allocation3 + $0x51] sm:$0xff]
      %v3270 = vld [vmem:[#allocation3 + $0x61] sm:$0xff]
      %v3271 = vld [vmem:[#allocation3 + $0x69] sm:$0xff]
      %v3272 = vld [vmem:[#allocation3 + $0x79] sm:$0xff]
      %v3273 = vld [vmem:[#allocation3 + $0x81] sm:$0xff]
      %v3274 = vld [vmem:[#allocation3 + $0x91] sm:$0xff]
      %v3275 = vld [vmem:[#allocation3 + $0x99] sm:$0xff]
      %v3276 = vld [vmem:[#allocation3 + $0xa9] sm:$0xff]
      %v3277 = vld [vmem:[#allocation3 + $0xb1] sm:$0xff]
      %v3278 = vld [vmem:[#allocation3 + $0xc1] sm:$0xff]
      %v3279 = vld [vmem:[#allocation3 + $0xc9] sm:$0xff]
      %v3280 = vld [vmem:[#allocation3 + $0xd9] sm:$0xff]
      %v3281 = vld [vmem:[#allocation3 + $0xe1] sm:$0xff]
      %v3282 = vld [vmem:[#allocation3 + $0xf1] sm:$0xff]
      %v3283 = vld [vmem:[#allocation3 + $0xf9] sm:$0xff]
      %v3284 = vld [vmem:[#allocation3 + $0x109] sm:$0xff]
      %v3285 = vld [vmem:[#allocation3 + $0x111] sm:$0xff]
      %v3286 = vld [vmem:[#allocation3 + $0x121] sm:$0xff]
      %v3287 = vld [vmem:[#allocation3 + $0x129] sm:$0xff]
      %v3288 = vld [vmem:[#allocation3 + $0x139] sm:$0xff]
      %v3289 = vld [vmem:[#allocation3 + $0x141] sm:$0xff]
      %v3290 = vld [vmem:[#allocation3 + $0x151] sm:$0xff]
      %v3291 = vld [vmem:[#allocation3 + $0x159] sm:$0xff]
      %v3292 = vld [vmem:[#allocation3 + $0x169] sm:$0xff]
      %v3293 = vld [vmem:[#allocation3 + $0x171] sm:$0xff]
      %v3294 = vpack.c.bf16 %v3263, %v3262
      %v3295 = vpack.c.bf16 %v3265, %v3264
      %v3296 = vpack.c.bf16 %v3267, %v3266
      %v3297 = vpack.c.bf16 %v3269, %v3268
      %v3298 = vpack.c.bf16 %v3271, %v3270
      %v3299 = vpack.c.bf16 %v3273, %v3272
      %v3300 = vpack.c.bf16 %v3275, %v3274
      %v3301 = vpack.c.bf16 %v3277, %v3276
      %v3302 = vpack.c.bf16 %v3279, %v3278
      %v3303 = vpack.c.bf16 %v3281, %v3280
      %v3304 = vpack.c.bf16 %v3283, %v3282
      %v3305 = vpack.c.bf16 %v3285, %v3284
      %v3306 = vpack.c.bf16 %v3287, %v3286
      %v3307 = vpack.c.bf16 %v3289, %v3288
      %v3308 = vpack.c.bf16 %v3291, %v3290
      %v3309 = vpack.c.bf16 %v3293, %v3292
      %s3310 = scalar_lea.vmem %s3, 64
      %v3311 = vld [vmem:[%s3310] sm:$0xf]
      %v3312 = vld [vmem:[%s3310 + $0x4] sm:$0xf]
      %v3313 = vld [vmem:[%s3310 + $0x8] sm:$0xf]
      %v3314 = vld [vmem:[%s3310 + $0xc] sm:$0xf]
      %v3315 = vld [vmem:[%s3310 + $0x10] sm:$0xf]
      %v3316 = vld [vmem:[%s3310 + $0x14] sm:$0xf]
      %v3317 = vld [vmem:[%s3310 + $0x18] sm:$0xf]
      %v3318 = vld [vmem:[%s3310 + $0x1c] sm:$0xf]
      %v3319 = vld [vmem:[%s3310 + $0x20] sm:$0xf]
      %v3320 = vld [vmem:[%s3310 + $0x24] sm:$0xf]
      %v3321 = vld [vmem:[%s3310 + $0x28] sm:$0xf]
      %v3322 = vld [vmem:[%s3310 + $0x2c] sm:$0xf]
      %v3323 = vld [vmem:[%s3310 + $0x30] sm:$0xf]
      %v3324 = vld [vmem:[%s3310 + $0x34] sm:$0xf]
      %v3325 = vld [vmem:[%s3310 + $0x38] sm:$0xf]
      %v3326 = vld [vmem:[%s3310 + $0x3c] sm:$0xf]
      %v3343 = vunpack.c.l.b16 %v3311
      %v3344 = vunpack.c.l.b16 %v3312
      %v3345 = vunpack.c.l.b16 %v3313
      %v3346 = vunpack.c.l.b16 %v3314
      %v3347 = vunpack.c.l.b16 %v3315
      %v3348 = vunpack.c.l.b16 %v3316
      %v3349 = vunpack.c.l.b16 %v3317
      %v3350 = vunpack.c.l.b16 %v3318
      %v3351 = vunpack.c.l.b16 %v3319
      %v3352 = vunpack.c.l.b16 %v3320
      %v3353 = vunpack.c.l.b16 %v3321
      %v3354 = vunpack.c.l.b16 %v3322
      %v3355 = vunpack.c.l.b16 %v3323
      %v3356 = vunpack.c.l.b16 %v3324
      %v3357 = vunpack.c.l.b16 %v3325
      %v3358 = vunpack.c.l.b16 %v3326
      %v3359 = vpack.c.b16 %v3344, %v3343
      %v3360 = vpack.c.b16 %v3346, %v3345
      %v3361 = vpack.c.b16 %v3348, %v3347
      %v3362 = vpack.c.b16 %v3350, %v3349
      %v3363 = vpack.c.b16 %v3352, %v3351
      %v3364 = vpack.c.b16 %v3354, %v3353
      %v3365 = vpack.c.b16 %v3356, %v3355
      %v3366 = vpack.c.b16 %v3358, %v3357
      %3375 = vmatprep.subr.bf16.mxu0 0
      %3376 = vmatpush1.bf16.msra.mxu0 %v3366
      %3377 = vmatprep.subr.bf16.mxu0 0
      %3378 = vmatpush1.bf16.msra.mxu0 %v3365
      %3379 = vmatprep.subr.bf16.mxu0 0
      %3380 = vmatpush1.bf16.msra.mxu0 %v3364
      %3381 = vmatprep.subr.bf16.mxu0 0
      %3382 = vmatpush1.bf16.msra.mxu0 %v3363
      %3383 = vmatprep.subr.bf16.mxu0 0
      %3384 = vmatpush1.bf16.msra.mxu0 %v3362
      %3385 = vmatprep.subr.bf16.mxu0 0
      %3386 = vmatpush1.bf16.msra.mxu0 %v3361
      %3387 = vmatprep.subr.bf16.mxu0 0
      %3388 = vmatpush1.bf16.msra.mxu0 %v3360
      %3389 = vmatprep.subr.bf16.mxu0 0
      %3390 = vmatpush1.bf16.msra.mxu0 %v3359
      %3391 = vmatprep.subr.bf16.mxu0 0
      %3392 = vmatpush2.bf16.msra.mxu0 0
      %3393 = vmatprep.subr.bf16.mxu0 0
      %3394 = vmatpush2.bf16.msra.mxu0 0
      %3395 = vmatprep.subr.bf16.mxu0 0
      %3396 = vmatpush2.bf16.msra.mxu0 0
      %3397 = vmatprep.subr.bf16.mxu0 0
      %3398 = vmatpush2.bf16.msra.mxu0 0
      %3399 = vmatprep.subr.bf16.mxu0 0
      %3400 = vmatpush2.bf16.msra.mxu0 0
      %3401 = vmatprep.subr.bf16.mxu0 0
      %3402 = vmatpush2.bf16.msra.mxu0 0
      %3403 = vmatprep.subr.bf16.mxu0 0
      %3404 = vmatpush2.bf16.msra.mxu0 0
      %3405 = vmatprep.subr.bf16.mxu0 0
      %3406 = vmatpush2.bf16.msra.mxu0 0
      %3407 = vmatprep.mubr.bf16.mxu0 0
      %3408 = vmatmul.mubr.bf16.gmra.mxu0 %v3294
      %v3409 = vpop.f32.mrf.mxu0
      %v3410 = vadd.f32 0.0, %v3409
      %v3411 = vpop.f32.mrf.mxu0
      %v3412 = vpop.f32.mrf.mxu0
      %v3413 = vadd.f32 0.0, %v3412
      %v3414 = vpop.f32.mrf.mxu0
      %3415 = vmatprep.mubr.bf16.mxu0 0
      %3416 = vmatmul.mubr.bf16.gmra.mxu0 %v3295
      %v3417 = vpop.f32.mrf.mxu0
      %v3418 = vadd.f32 0.0, %v3417
      %v3419 = vpop.f32.mrf.mxu0
      %v3420 = vpop.f32.mrf.mxu0
      %v3421 = vadd.f32 0.0, %v3420
      %v3422 = vpop.f32.mrf.mxu0
      %3423 = vmatprep.mubr.bf16.mxu0 0
      %3424 = vmatmul.mubr.bf16.gmra.mxu0 %v3296
      %v3425 = vpop.f32.mrf.mxu0
      %v3426 = vadd.f32 0.0, %v3425
      %v3427 = vpop.f32.mrf.mxu0
      %v3428 = vpop.f32.mrf.mxu0
      %v3429 = vadd.f32 0.0, %v3428
      %v3430 = vpop.f32.mrf.mxu0
      %3431 = vmatprep.mubr.bf16.mxu0 0
      %3432 = vmatmul.mubr.bf16.gmra.mxu0 %v3297
      %v3433 = vpop.f32.mrf.mxu0
      %v3434 = vadd.f32 0.0, %v3433
      %v3435 = vpop.f32.mrf.mxu0
      %v3436 = vpop.f32.mrf.mxu0
      %v3437 = vadd.f32 0.0, %v3436
      %v3438 = vpop.f32.mrf.mxu0
      %3439 = vmatprep.mubr.bf16.mxu0 0
      %3440 = vmatmul.mubr.bf16.gmra.mxu0 %v3298
      %v3441 = vpop.f32.mrf.mxu0
      %v3442 = vadd.f32 0.0, %v3441
      %v3443 = vpop.f32.mrf.mxu0
      %v3444 = vpop.f32.mrf.mxu0
      %v3445 = vadd.f32 0.0, %v3444
      %v3446 = vpop.f32.mrf.mxu0
      %3447 = vmatprep.mubr.bf16.mxu0 0
      %3448 = vmatmul.mubr.bf16.gmra.mxu0 %v3299
      %v3449 = vpop.f32.mrf.mxu0
      %v3450 = vadd.f32 0.0, %v3449
      %v3451 = vpop.f32.mrf.mxu0
      %v3452 = vpop.f32.mrf.mxu0
      %v3453 = vadd.f32 0.0, %v3452
      %v3454 = vpop.f32.mrf.mxu0
      %3455 = vmatprep.mubr.bf16.mxu0 0
      %3456 = vmatmul.mubr.bf16.gmra.mxu0 %v3300
      %v3457 = vpop.f32.mrf.mxu0
      %v3458 = vadd.f32 0.0, %v3457
      %v3459 = vpop.f32.mrf.mxu0
      %v3460 = vpop.f32.mrf.mxu0
      %v3461 = vadd.f32 0.0, %v3460
      %v3462 = vpop.f32.mrf.mxu0
      %3463 = vmatprep.mubr.bf16.mxu0 0
      %3464 = vmatmul.mubr.bf16.gmra.mxu0 %v3301
      %v3465 = vpop.f32.mrf.mxu0
      %v3466 = vadd.f32 0.0, %v3465
      %v3467 = vpop.f32.mrf.mxu0
      %v3468 = vpop.f32.mrf.mxu0
      %v3469 = vadd.f32 0.0, %v3468
      %v3470 = vpop.f32.mrf.mxu0
      %3471 = vmatprep.mubr.bf16.mxu0 0
      %3472 = vmatmul.mubr.bf16.gmra.mxu0 %v3302
      %v3473 = vpop.f32.mrf.mxu0
      %v3474 = vadd.f32 0.0, %v3473
      %v3475 = vpop.f32.mrf.mxu0
      %v3476 = vpop.f32.mrf.mxu0
      %v3477 = vadd.f32 0.0, %v3476
      %v3478 = vpop.f32.mrf.mxu0
      %3479 = vmatprep.mubr.bf16.mxu0 0
      %3480 = vmatmul.mubr.bf16.gmra.mxu0 %v3303
      %v3481 = vpop.f32.mrf.mxu0
      %v3482 = vadd.f32 0.0, %v3481
      %v3483 = vpop.f32.mrf.mxu0
      %v3484 = vpop.f32.mrf.mxu0
      %v3485 = vadd.f32 0.0, %v3484
      %v3486 = vpop.f32.mrf.mxu0
      %3487 = vmatprep.mubr.bf16.mxu0 0
      %3488 = vmatmul.mubr.bf16.gmra.mxu0 %v3304
      %v3489 = vpop.f32.mrf.mxu0
      %v3490 = vadd.f32 0.0, %v3489
      %v3491 = vpop.f32.mrf.mxu0
      %v3492 = vpop.f32.mrf.mxu0
      %v3493 = vadd.f32 0.0, %v3492
      %v3494 = vpop.f32.mrf.mxu0
      %3495 = vmatprep.mubr.bf16.mxu0 0
      %3496 = vmatmul.mubr.bf16.gmra.mxu0 %v3305
      %v3497 = vpop.f32.mrf.mxu0
      %v3498 = vadd.f32 0.0, %v3497
      %v3499 = vpop.f32.mrf.mxu0
      %v3500 = vpop.f32.mrf.mxu0
      %v3501 = vadd.f32 0.0, %v3500
      %v3502 = vpop.f32.mrf.mxu0
      %3503 = vmatprep.mubr.bf16.mxu0 0
      %3504 = vmatmul.mubr.bf16.gmra.mxu0 %v3306
      %v3505 = vpop.f32.mrf.mxu0
      %v3506 = vadd.f32 0.0, %v3505
      %v3507 = vpop.f32.mrf.mxu0
      %v3508 = vpop.f32.mrf.mxu0
      %v3509 = vadd.f32 0.0, %v3508
      %v3510 = vpop.f32.mrf.mxu0
      %3511 = vmatprep.mubr.bf16.mxu0 0
      %3512 = vmatmul.mubr.bf16.gmra.mxu0 %v3307
      %v3513 = vpop.f32.mrf.mxu0
      %v3514 = vadd.f32 0.0, %v3513
      %v3515 = vpop.f32.mrf.mxu0
      %v3516 = vpop.f32.mrf.mxu0
      %v3517 = vadd.f32 0.0, %v3516
      %v3518 = vpop.f32.mrf.mxu0
      %3519 = vmatprep.mubr.bf16.mxu0 0
      %3520 = vmatmul.mubr.bf16.gmra.mxu0 %v3308
      %v3521 = vpop.f32.mrf.mxu0
      %v3522 = vadd.f32 0.0, %v3521
      %v3523 = vpop.f32.mrf.mxu0
      %v3524 = vpop.f32.mrf.mxu0
      %v3525 = vadd.f32 0.0, %v3524
      %v3526 = vpop.f32.mrf.mxu0
      %3527 = vmatprep.mubr.bf16.mxu0 0
      %3528 = vmatmul.mubr.bf16.gmra.mxu0 %v3309
      %v3529 = vpop.f32.mrf.mxu0
      %v3530 = vadd.f32 0.0, %v3529
      %v3531 = vpop.f32.mrf.mxu0
      %v3532 = vpop.f32.mrf.mxu0
      %v3533 = vadd.f32 0.0, %v3532
      %v3534 = vpop.f32.mrf.mxu0
      %3535 = vdwg.mxu0
      %v3552 = vunpack.c.l.b16 %v3246
      %v3553 = vunpack.c.l.b16 %v3247
      %v3554 = vunpack.c.l.b16 %v3248
      %v3555 = vunpack.c.l.b16 %v3249
      %v3556 = vunpack.c.l.b16 %v3250
      %v3557 = vunpack.c.l.b16 %v3251
      %v3558 = vunpack.c.l.b16 %v3252
      %v3559 = vunpack.c.l.b16 %v3253
      %v3560 = vunpack.c.l.b16 %v3254
      %v3561 = vunpack.c.l.b16 %v3255
      %v3562 = vunpack.c.l.b16 %v3256
      %v3563 = vunpack.c.l.b16 %v3257
      %v3564 = vunpack.c.l.b16 %v3258
      %v3565 = vunpack.c.l.b16 %v3259
      %v3566 = vunpack.c.l.b16 %v3260
      %v3567 = vunpack.c.l.b16 %v3261
      %v3568 = vpack.c.b16 %v3553, %v3552
      %v3569 = vpack.c.b16 %v3555, %v3554
      %v3570 = vpack.c.b16 %v3557, %v3556
      %v3571 = vpack.c.b16 %v3559, %v3558
      %v3572 = vpack.c.b16 %v3561, %v3560
      %v3573 = vpack.c.b16 %v3563, %v3562
      %v3574 = vpack.c.b16 %v3565, %v3564
      %v3575 = vpack.c.b16 %v3567, %v3566
      %3584 = vmatprep.subr.bf16.mxu0 0
      %3585 = vmatpush1.bf16.msra.mxu0 %v3575
      %3586 = vmatprep.subr.bf16.mxu0 0
      %3587 = vmatpush1.bf16.msra.mxu0 %v3574
      %3588 = vmatprep.subr.bf16.mxu0 0
      %3589 = vmatpush1.bf16.msra.mxu0 %v3573
      %3590 = vmatprep.subr.bf16.mxu0 0
      %3591 = vmatpush1.bf16.msra.mxu0 %v3572
      %3592 = vmatprep.subr.bf16.mxu0 0
      %3593 = vmatpush1.bf16.msra.mxu0 %v3571
      %3594 = vmatprep.subr.bf16.mxu0 0
      %3595 = vmatpush1.bf16.msra.mxu0 %v3570
      %3596 = vmatprep.subr.bf16.mxu0 0
      %3597 = vmatpush1.bf16.msra.mxu0 %v3569
      %3598 = vmatprep.subr.bf16.mxu0 0
      %3599 = vmatpush1.bf16.msra.mxu0 %v3568
      %3600 = vmatprep.subr.bf16.mxu0 0
      %3601 = vmatpush2.bf16.msra.mxu0 0
      %3602 = vmatprep.subr.bf16.mxu0 0
      %3603 = vmatpush2.bf16.msra.mxu0 0
      %3604 = vmatprep.subr.bf16.mxu0 0
      %3605 = vmatpush2.bf16.msra.mxu0 0
      %3606 = vmatprep.subr.bf16.mxu0 0
      %3607 = vmatpush2.bf16.msra.mxu0 0
      %3608 = vmatprep.subr.bf16.mxu0 0
      %3609 = vmatpush2.bf16.msra.mxu0 0
      %3610 = vmatprep.subr.bf16.mxu0 0
      %3611 = vmatpush2.bf16.msra.mxu0 0
      %3612 = vmatprep.subr.bf16.mxu0 0
      %3613 = vmatpush2.bf16.msra.mxu0 0
      %3614 = vmatprep.subr.bf16.mxu0 0
      %3615 = vmatpush2.bf16.msra.mxu0 0
      %3616 = vmatprep.mubr.bf16.mxu0 0
      %3617 = vmatmul.mubr.bf16.gmra.mxu0 %v3230
      %v3618 = vpop.f32.mrf.mxu0
      %v3619 = vadd.f32 %v3410, %v3618
      %v3620 = vpop.f32.mrf.mxu0
      %v3621 = vpop.f32.mrf.mxu0
      %v3622 = vadd.f32 %v3413, %v3621
      %v3623 = vpop.f32.mrf.mxu0
      %3624 = vmatprep.mubr.bf16.mxu0 0
      %3625 = vmatmul.mubr.bf16.gmra.mxu0 %v3231
      %v3626 = vpop.f32.mrf.mxu0
      %v3627 = vadd.f32 %v3418, %v3626
      %v3628 = vpop.f32.mrf.mxu0
      %v3629 = vpop.f32.mrf.mxu0
      %v3630 = vadd.f32 %v3421, %v3629
      %v3631 = vpop.f32.mrf.mxu0
      %3632 = vmatprep.mubr.bf16.mxu0 0
      %3633 = vmatmul.mubr.bf16.gmra.mxu0 %v3232
      %v3634 = vpop.f32.mrf.mxu0
      %v3635 = vadd.f32 %v3426, %v3634
      %v3636 = vpop.f32.mrf.mxu0
      %v3637 = vpop.f32.mrf.mxu0
      %v3638 = vadd.f32 %v3429, %v3637
      %v3639 = vpop.f32.mrf.mxu0
      %3640 = vmatprep.mubr.bf16.mxu0 0
      %3641 = vmatmul.mubr.bf16.gmra.mxu0 %v3233
      %v3642 = vpop.f32.mrf.mxu0
      %v3643 = vadd.f32 %v3434, %v3642
      %v3644 = vpop.f32.mrf.mxu0
      %v3645 = vpop.f32.mrf.mxu0
      %v3646 = vadd.f32 %v3437, %v3645
      %v3647 = vpop.f32.mrf.mxu0
      %3648 = vmatprep.mubr.bf16.mxu0 0
      %3649 = vmatmul.mubr.bf16.gmra.mxu0 %v3234
      %v3650 = vpop.f32.mrf.mxu0
      %v3651 = vadd.f32 %v3442, %v3650
      %v3652 = vpop.f32.mrf.mxu0
      %v3653 = vpop.f32.mrf.mxu0
      %v3654 = vadd.f32 %v3445, %v3653
      %v3655 = vpop.f32.mrf.mxu0
      %3656 = vmatprep.mubr.bf16.mxu0 0
      %3657 = vmatmul.mubr.bf16.gmra.mxu0 %v3235
      %v3658 = vpop.f32.mrf.mxu0
      %v3659 = vadd.f32 %v3450, %v3658
      %v3660 = vpop.f32.mrf.mxu0
      %v3661 = vpop.f32.mrf.mxu0
      %v3662 = vadd.f32 %v3453, %v3661
      %v3663 = vpop.f32.mrf.mxu0
      %3664 = vmatprep.mubr.bf16.mxu0 0
      %3665 = vmatmul.mubr.bf16.gmra.mxu0 %v3236
      %v3666 = vpop.f32.mrf.mxu0
      %v3667 = vadd.f32 %v3458, %v3666
      %v3668 = vpop.f32.mrf.mxu0
      %v3669 = vpop.f32.mrf.mxu0
      %v3670 = vadd.f32 %v3461, %v3669
      %v3671 = vpop.f32.mrf.mxu0
      %3672 = vmatprep.mubr.bf16.mxu0 0
      %3673 = vmatmul.mubr.bf16.gmra.mxu0 %v3237
      %v3674 = vpop.f32.mrf.mxu0
      %v3675 = vadd.f32 %v3466, %v3674
      %v3676 = vpop.f32.mrf.mxu0
      %v3677 = vpop.f32.mrf.mxu0
      %v3678 = vadd.f32 %v3469, %v3677
      %v3679 = vpop.f32.mrf.mxu0
      %3680 = vmatprep.mubr.bf16.mxu0 0
      %3681 = vmatmul.mubr.bf16.gmra.mxu0 %v3238
      %v3682 = vpop.f32.mrf.mxu0
      %v3683 = vadd.f32 %v3474, %v3682
      %v3684 = vpop.f32.mrf.mxu0
      %v3685 = vpop.f32.mrf.mxu0
      %v3686 = vadd.f32 %v3477, %v3685
      %v3687 = vpop.f32.mrf.mxu0
      %3688 = vmatprep.mubr.bf16.mxu0 0
      %3689 = vmatmul.mubr.bf16.gmra.mxu0 %v3239
      %v3690 = vpop.f32.mrf.mxu0
      %v3691 = vadd.f32 %v3482, %v3690
      %v3692 = vpop.f32.mrf.mxu0
      %v3693 = vpop.f32.mrf.mxu0
      %v3694 = vadd.f32 %v3485, %v3693
      %v3695 = vpop.f32.mrf.mxu0
      %3696 = vmatprep.mubr.bf16.mxu0 0
      %3697 = vmatmul.mubr.bf16.gmra.mxu0 %v3240
      %v3698 = vpop.f32.mrf.mxu0
      %v3699 = vadd.f32 %v3490, %v3698
      %v3700 = vpop.f32.mrf.mxu0
      %v3701 = vpop.f32.mrf.mxu0
      %v3702 = vadd.f32 %v3493, %v3701
      %v3703 = vpop.f32.mrf.mxu0
      %3704 = vmatprep.mubr.bf16.mxu0 0
      %3705 = vmatmul.mubr.bf16.gmra.mxu0 %v3241
      %v3706 = vpop.f32.mrf.mxu0
      %v3707 = vadd.f32 %v3498, %v3706
      %v3708 = vpop.f32.mrf.mxu0
      %v3709 = vpop.f32.mrf.mxu0
      %v3710 = vadd.f32 %v3501, %v3709
      %v3711 = vpop.f32.mrf.mxu0
      %3712 = vmatprep.mubr.bf16.mxu0 0
      %3713 = vmatmul.mubr.bf16.gmra.mxu0 %v3242
      %v3714 = vpop.f32.mrf.mxu0
      %v3715 = vadd.f32 %v3506, %v3714
      %v3716 = vpop.f32.mrf.mxu0
      %v3717 = vpop.f32.mrf.mxu0
      %v3718 = vadd.f32 %v3509, %v3717
      %v3719 = vpop.f32.mrf.mxu0
      %3720 = vmatprep.mubr.bf16.mxu0 0
      %3721 = vmatmul.mubr.bf16.gmra.mxu0 %v3243
      %v3722 = vpop.f32.mrf.mxu0
      %v3723 = vadd.f32 %v3514, %v3722
      %v3724 = vpop.f32.mrf.mxu0
      %v3725 = vpop.f32.mrf.mxu0
      %v3726 = vadd.f32 %v3517, %v3725
      %v3727 = vpop.f32.mrf.mxu0
      %3728 = vmatprep.mubr.bf16.mxu0 0
      %3729 = vmatmul.mubr.bf16.gmra.mxu0 %v3244
      %v3730 = vpop.f32.mrf.mxu0
      %v3731 = vadd.f32 %v3522, %v3730
      %v3732 = vpop.f32.mrf.mxu0
      %v3733 = vpop.f32.mrf.mxu0
      %v3734 = vadd.f32 %v3525, %v3733
      %v3735 = vpop.f32.mrf.mxu0
      %3736 = vmatprep.mubr.bf16.mxu0 0
      %3737 = vmatmul.mubr.bf16.gmra.mxu0 %v3245
      %v3738 = vpop.f32.mrf.mxu0
      %v3739 = vadd.f32 %v3530, %v3738
      %v3740 = vpop.f32.mrf.mxu0
      %v3741 = vpop.f32.mrf.mxu0
      %v3742 = vadd.f32 %v3533, %v3741
      %v3743 = vpop.f32.mrf.mxu0
      %3744 = vdwg.mxu0
      %v3745 = vld [vmem:[#allocation3 + $0x2] sm:$0xff]
      %v3746 = vld [vmem:[#allocation3 + $0xa] sm:$0xff]
      %v3747 = vld [vmem:[#allocation3 + $0x1a] sm:$0xff]
      %v3748 = vld [vmem:[#allocation3 + $0x22] sm:$0xff]
      %v3749 = vld [vmem:[#allocation3 + $0x32] sm:$0xff]
      %v3750 = vld [vmem:[#allocation3 + $0x3a] sm:$0xff]
      %v3751 = vld [vmem:[#allocation3 + $0x4a] sm:$0xff]
      %v3752 = vld [vmem:[#allocation3 + $0x52] sm:$0xff]
      %v3753 = vld [vmem:[#allocation3 + $0x62] sm:$0xff]
      %v3754 = vld [vmem:[#allocation3 + $0x6a] sm:$0xff]
      %v3755 = vld [vmem:[#allocation3 + $0x7a] sm:$0xff]
      %v3756 = vld [vmem:[#allocation3 + $0x82] sm:$0xff]
      %v3757 = vld [vmem:[#allocation3 + $0x92] sm:$0xff]
      %v3758 = vld [vmem:[#allocation3 + $0x9a] sm:$0xff]
      %v3759 = vld [vmem:[#allocation3 + $0xaa] sm:$0xff]
      %v3760 = vld [vmem:[#allocation3 + $0xb2] sm:$0xff]
      %v3761 = vld [vmem:[#allocation3 + $0xc2] sm:$0xff]
      %v3762 = vld [vmem:[#allocation3 + $0xca] sm:$0xff]
      %v3763 = vld [vmem:[#allocation3 + $0xda] sm:$0xff]
      %v3764 = vld [vmem:[#allocation3 + $0xe2] sm:$0xff]
      %v3765 = vld [vmem:[#allocation3 + $0xf2] sm:$0xff]
      %v3766 = vld [vmem:[#allocation3 + $0xfa] sm:$0xff]
      %v3767 = vld [vmem:[#allocation3 + $0x10a] sm:$0xff]
      %v3768 = vld [vmem:[#allocation3 + $0x112] sm:$0xff]
      %v3769 = vld [vmem:[#allocation3 + $0x122] sm:$0xff]
      %v3770 = vld [vmem:[#allocation3 + $0x12a] sm:$0xff]
      %v3771 = vld [vmem:[#allocation3 + $0x13a] sm:$0xff]
      %v3772 = vld [vmem:[#allocation3 + $0x142] sm:$0xff]
      %v3773 = vld [vmem:[#allocation3 + $0x152] sm:$0xff]
      %v3774 = vld [vmem:[#allocation3 + $0x15a] sm:$0xff]
      %v3775 = vld [vmem:[#allocation3 + $0x16a] sm:$0xff]
      %v3776 = vld [vmem:[#allocation3 + $0x172] sm:$0xff]
      %v3777 = vpack.c.bf16 %v3746, %v3745
      %v3778 = vpack.c.bf16 %v3748, %v3747
      %v3779 = vpack.c.bf16 %v3750, %v3749
      %v3780 = vpack.c.bf16 %v3752, %v3751
      %v3781 = vpack.c.bf16 %v3754, %v3753
      %v3782 = vpack.c.bf16 %v3756, %v3755
      %v3783 = vpack.c.bf16 %v3758, %v3757
      %v3784 = vpack.c.bf16 %v3760, %v3759
      %v3785 = vpack.c.bf16 %v3762, %v3761
      %v3786 = vpack.c.bf16 %v3764, %v3763
      %v3787 = vpack.c.bf16 %v3766, %v3765
      %v3788 = vpack.c.bf16 %v3768, %v3767
      %v3789 = vpack.c.bf16 %v3770, %v3769
      %v3790 = vpack.c.bf16 %v3772, %v3771
      %v3791 = vpack.c.bf16 %v3774, %v3773
      %v3792 = vpack.c.bf16 %v3776, %v3775
      %s3793 = scalar_lea.vmem %s3, 128
      %v3794 = vld [vmem:[%s3793] sm:$0xf]
      %v3795 = vld [vmem:[%s3793 + $0x4] sm:$0xf]
      %v3796 = vld [vmem:[%s3793 + $0x8] sm:$0xf]
      %v3797 = vld [vmem:[%s3793 + $0xc] sm:$0xf]
      %v3798 = vld [vmem:[%s3793 + $0x10] sm:$0xf]
      %v3799 = vld [vmem:[%s3793 + $0x14] sm:$0xf]
      %v3800 = vld [vmem:[%s3793 + $0x18] sm:$0xf]
      %v3801 = vld [vmem:[%s3793 + $0x1c] sm:$0xf]
      %v3802 = vld [vmem:[%s3793 + $0x20] sm:$0xf]
      %v3803 = vld [vmem:[%s3793 + $0x24] sm:$0xf]
      %v3804 = vld [vmem:[%s3793 + $0x28] sm:$0xf]
      %v3805 = vld [vmem:[%s3793 + $0x2c] sm:$0xf]
      %v3806 = vld [vmem:[%s3793 + $0x30] sm:$0xf]
      %v3807 = vld [vmem:[%s3793 + $0x34] sm:$0xf]
      %v3808 = vld [vmem:[%s3793 + $0x38] sm:$0xf]
      %v3809 = vld [vmem:[%s3793 + $0x3c] sm:$0xf]
      %v3826 = vunpack.c.l.b16 %v3794
      %v3827 = vunpack.c.l.b16 %v3795
      %v3828 = vunpack.c.l.b16 %v3796
      %v3829 = vunpack.c.l.b16 %v3797
      %v3830 = vunpack.c.l.b16 %v3798
      %v3831 = vunpack.c.l.b16 %v3799
      %v3832 = vunpack.c.l.b16 %v3800
      %v3833 = vunpack.c.l.b16 %v3801
      %v3834 = vunpack.c.l.b16 %v3802
      %v3835 = vunpack.c.l.b16 %v3803
      %v3836 = vunpack.c.l.b16 %v3804
      %v3837 = vunpack.c.l.b16 %v3805
      %v3838 = vunpack.c.l.b16 %v3806
      %v3839 = vunpack.c.l.b16 %v3807
      %v3840 = vunpack.c.l.b16 %v3808
      %v3841 = vunpack.c.l.b16 %v3809
      %v3842 = vpack.c.b16 %v3827, %v3826
      %v3843 = vpack.c.b16 %v3829, %v3828
      %v3844 = vpack.c.b16 %v3831, %v3830
      %v3845 = vpack.c.b16 %v3833, %v3832
      %v3846 = vpack.c.b16 %v3835, %v3834
      %v3847 = vpack.c.b16 %v3837, %v3836
      %v3848 = vpack.c.b16 %v3839, %v3838
      %v3849 = vpack.c.b16 %v3841, %v3840
      %3858 = vmatprep.subr.bf16.mxu0 0
      %3859 = vmatpush1.bf16.msra.mxu0 %v3849
      %3860 = vmatprep.subr.bf16.mxu0 0
      %3861 = vmatpush1.bf16.msra.mxu0 %v3848
      %3862 = vmatprep.subr.bf16.mxu0 0
      %3863 = vmatpush1.bf16.msra.mxu0 %v3847
      %3864 = vmatprep.subr.bf16.mxu0 0
      %3865 = vmatpush1.bf16.msra.mxu0 %v3846
      %3866 = vmatprep.subr.bf16.mxu0 0
      %3867 = vmatpush1.bf16.msra.mxu0 %v3845
      %3868 = vmatprep.subr.bf16.mxu0 0
      %3869 = vmatpush1.bf16.msra.mxu0 %v3844
      %3870 = vmatprep.subr.bf16.mxu0 0
      %3871 = vmatpush1.bf16.msra.mxu0 %v3843
      %3872 = vmatprep.subr.bf16.mxu0 0
      %3873 = vmatpush1.bf16.msra.mxu0 %v3842
      %3874 = vmatprep.subr.bf16.mxu0 0
      %3875 = vmatpush2.bf16.msra.mxu0 0
      %3876 = vmatprep.subr.bf16.mxu0 0
      %3877 = vmatpush2.bf16.msra.mxu0 0
      %3878 = vmatprep.subr.bf16.mxu0 0
      %3879 = vmatpush2.bf16.msra.mxu0 0
      %3880 = vmatprep.subr.bf16.mxu0 0
      %3881 = vmatpush2.bf16.msra.mxu0 0
      %3882 = vmatprep.subr.bf16.mxu0 0
      %3883 = vmatpush2.bf16.msra.mxu0 0
      %3884 = vmatprep.subr.bf16.mxu0 0
      %3885 = vmatpush2.bf16.msra.mxu0 0
      %3886 = vmatprep.subr.bf16.mxu0 0
      %3887 = vmatpush2.bf16.msra.mxu0 0
      %3888 = vmatprep.subr.bf16.mxu0 0
      %3889 = vmatpush2.bf16.msra.mxu0 0
      %3890 = vmatprep.mubr.bf16.mxu0 0
      %3891 = vmatmul.mubr.bf16.gmra.mxu0 %v3777
      %v3892 = vpop.f32.mrf.mxu0
      %v3893 = vadd.f32 0.0, %v3892
      %v3894 = vpop.f32.mrf.mxu0
      %v3895 = vpop.f32.mrf.mxu0
      %v3896 = vadd.f32 0.0, %v3895
      %v3897 = vpop.f32.mrf.mxu0
      %3898 = vmatprep.mubr.bf16.mxu0 0
      %3899 = vmatmul.mubr.bf16.gmra.mxu0 %v3778
      %v3900 = vpop.f32.mrf.mxu0
      %v3901 = vadd.f32 0.0, %v3900
      %v3902 = vpop.f32.mrf.mxu0
      %v3903 = vpop.f32.mrf.mxu0
      %v3904 = vadd.f32 0.0, %v3903
      %v3905 = vpop.f32.mrf.mxu0
      %3906 = vmatprep.mubr.bf16.mxu0 0
      %3907 = vmatmul.mubr.bf16.gmra.mxu0 %v3779
      %v3908 = vpop.f32.mrf.mxu0
      %v3909 = vadd.f32 0.0, %v3908
      %v3910 = vpop.f32.mrf.mxu0
      %v3911 = vpop.f32.mrf.mxu0
      %v3912 = vadd.f32 0.0, %v3911
      %v3913 = vpop.f32.mrf.mxu0
      %3914 = vmatprep.mubr.bf16.mxu0 0
      %3915 = vmatmul.mubr.bf16.gmra.mxu0 %v3780
      %v3916 = vpop.f32.mrf.mxu0
      %v3917 = vadd.f32 0.0, %v3916
      %v3918 = vpop.f32.mrf.mxu0
      %v3919 = vpop.f32.mrf.mxu0
      %v3920 = vadd.f32 0.0, %v3919
      %v3921 = vpop.f32.mrf.mxu0
      %3922 = vmatprep.mubr.bf16.mxu0 0
      %3923 = vmatmul.mubr.bf16.gmra.mxu0 %v3781
      %v3924 = vpop.f32.mrf.mxu0
      %v3925 = vadd.f32 0.0, %v3924
      %v3926 = vpop.f32.mrf.mxu0
      %v3927 = vpop.f32.mrf.mxu0
      %v3928 = vadd.f32 0.0, %v3927
      %v3929 = vpop.f32.mrf.mxu0
      %3930 = vmatprep.mubr.bf16.mxu0 0
      %3931 = vmatmul.mubr.bf16.gmra.mxu0 %v3782
      %v3932 = vpop.f32.mrf.mxu0
      %v3933 = vadd.f32 0.0, %v3932
      %v3934 = vpop.f32.mrf.mxu0
      %v3935 = vpop.f32.mrf.mxu0
      %v3936 = vadd.f32 0.0, %v3935
      %v3937 = vpop.f32.mrf.mxu0
      %3938 = vmatprep.mubr.bf16.mxu0 0
      %3939 = vmatmul.mubr.bf16.gmra.mxu0 %v3783
      %v3940 = vpop.f32.mrf.mxu0
      %v3941 = vadd.f32 0.0, %v3940
      %v3942 = vpop.f32.mrf.mxu0
      %v3943 = vpop.f32.mrf.mxu0
      %v3944 = vadd.f32 0.0, %v3943
      %v3945 = vpop.f32.mrf.mxu0
      %3946 = vmatprep.mubr.bf16.mxu0 0
      %3947 = vmatmul.mubr.bf16.gmra.mxu0 %v3784
      %v3948 = vpop.f32.mrf.mxu0
      %v3949 = vadd.f32 0.0, %v3948
      %v3950 = vpop.f32.mrf.mxu0
      %v3951 = vpop.f32.mrf.mxu0
      %v3952 = vadd.f32 0.0, %v3951
      %v3953 = vpop.f32.mrf.mxu0
      %3954 = vmatprep.mubr.bf16.mxu0 0
      %3955 = vmatmul.mubr.bf16.gmra.mxu0 %v3785
      %v3956 = vpop.f32.mrf.mxu0
      %v3957 = vadd.f32 0.0, %v3956
      %v3958 = vpop.f32.mrf.mxu0
      %v3959 = vpop.f32.mrf.mxu0
      %v3960 = vadd.f32 0.0, %v3959
      %v3961 = vpop.f32.mrf.mxu0
      %3962 = vmatprep.mubr.bf16.mxu0 0
      %3963 = vmatmul.mubr.bf16.gmra.mxu0 %v3786
      %v3964 = vpop.f32.mrf.mxu0
      %v3965 = vadd.f32 0.0, %v3964
      %v3966 = vpop.f32.mrf.mxu0
      %v3967 = vpop.f32.mrf.mxu0
      %v3968 = vadd.f32 0.0, %v3967
      %v3969 = vpop.f32.mrf.mxu0
      %3970 = vmatprep.mubr.bf16.mxu0 0
      %3971 = vmatmul.mubr.bf16.gmra.mxu0 %v3787
      %v3972 = vpop.f32.mrf.mxu0
      %v3973 = vadd.f32 0.0, %v3972
      %v3974 = vpop.f32.mrf.mxu0
      %v3975 = vpop.f32.mrf.mxu0
      %v3976 = vadd.f32 0.0, %v3975
      %v3977 = vpop.f32.mrf.mxu0
      %3978 = vmatprep.mubr.bf16.mxu0 0
      %3979 = vmatmul.mubr.bf16.gmra.mxu0 %v3788
      %v3980 = vpop.f32.mrf.mxu0
      %v3981 = vadd.f32 0.0, %v3980
      %v3982 = vpop.f32.mrf.mxu0
      %v3983 = vpop.f32.mrf.mxu0
      %v3984 = vadd.f32 0.0, %v3983
      %v3985 = vpop.f32.mrf.mxu0
      %3986 = vmatprep.mubr.bf16.mxu0 0
      %3987 = vmatmul.mubr.bf16.gmra.mxu0 %v3789
      %v3988 = vpop.f32.mrf.mxu0
      %v3989 = vadd.f32 0.0, %v3988
      %v3990 = vpop.f32.mrf.mxu0
      %v3991 = vpop.f32.mrf.mxu0
      %v3992 = vadd.f32 0.0, %v3991
      %v3993 = vpop.f32.mrf.mxu0
      %3994 = vmatprep.mubr.bf16.mxu0 0
      %3995 = vmatmul.mubr.bf16.gmra.mxu0 %v3790
      %v3996 = vpop.f32.mrf.mxu0
      %v3997 = vadd.f32 0.0, %v3996
      %v3998 = vpop.f32.mrf.mxu0
      %v3999 = vpop.f32.mrf.mxu0
      %v4000 = vadd.f32 0.0, %v3999
      %v4001 = vpop.f32.mrf.mxu0
      %4002 = vmatprep.mubr.bf16.mxu0 0
      %4003 = vmatmul.mubr.bf16.gmra.mxu0 %v3791
      %v4004 = vpop.f32.mrf.mxu0
      %v4005 = vadd.f32 0.0, %v4004
      %v4006 = vpop.f32.mrf.mxu0
      %v4007 = vpop.f32.mrf.mxu0
      %v4008 = vadd.f32 0.0, %v4007
      %v4009 = vpop.f32.mrf.mxu0
      %4010 = vmatprep.mubr.bf16.mxu0 0
      %4011 = vmatmul.mubr.bf16.gmra.mxu0 %v3792
      %v4012 = vpop.f32.mrf.mxu0
      %v4013 = vadd.f32 0.0, %v4012
      %v4014 = vpop.f32.mrf.mxu0
      %v4015 = vpop.f32.mrf.mxu0
      %v4016 = vadd.f32 0.0, %v4015
      %v4017 = vpop.f32.mrf.mxu0
      %4018 = vdwg.mxu0
      %v4019 = vadd.f32 %v3619, %v3893
      %v4020 = vadd.f32 %v3622, %v3896
      %v4021 = vadd.f32 %v3627, %v3901
      %v4022 = vadd.f32 %v3630, %v3904
      %v4023 = vadd.f32 %v3635, %v3909
      %v4024 = vadd.f32 %v3638, %v3912
      %v4025 = vadd.f32 %v3643, %v3917
      %v4026 = vadd.f32 %v3646, %v3920
      %v4027 = vadd.f32 %v3651, %v3925
      %v4028 = vadd.f32 %v3654, %v3928
      %v4029 = vadd.f32 %v3659, %v3933
      %v4030 = vadd.f32 %v3662, %v3936
      %v4031 = vadd.f32 %v3667, %v3941
      %v4032 = vadd.f32 %v3670, %v3944
      %v4033 = vadd.f32 %v3675, %v3949
      %v4034 = vadd.f32 %v3678, %v3952
      %v4035 = vadd.f32 %v3683, %v3957
      %v4036 = vadd.f32 %v3686, %v3960
      %v4037 = vadd.f32 %v3691, %v3965
      %v4038 = vadd.f32 %v3694, %v3968
      %v4039 = vadd.f32 %v3699, %v3973
      %v4040 = vadd.f32 %v3702, %v3976
      %v4041 = vadd.f32 %v3707, %v3981
      %v4042 = vadd.f32 %v3710, %v3984
      %v4043 = vadd.f32 %v3715, %v3989
      %v4044 = vadd.f32 %v3718, %v3992
      %v4045 = vadd.f32 %v3723, %v3997
      %v4046 = vadd.f32 %v3726, %v4000
      %v4047 = vadd.f32 %v3731, %v4005
      %v4048 = vadd.f32 %v3734, %v4008
      %v4049 = vadd.f32 %v3739, %v4013
      %v4050 = vadd.f32 %v3742, %v4016
      %v4051 = vld [vmem:[%s3165] sm:$0xff]
      %v4052 = vld [vmem:[%s3165 + $0x8] sm:$0xff]
      %v4053 = vld [vmem:[%s3165 + $0x18] sm:$0xff]
      %v4054 = vld [vmem:[%s3165 + $0x20] sm:$0xff]
      %v4055 = vld [vmem:[%s3165 + $0x30] sm:$0xff]
      %v4056 = vld [vmem:[%s3165 + $0x38] sm:$0xff]
      %v4057 = vld [vmem:[%s3165 + $0x48] sm:$0xff]
      %v4058 = vld [vmem:[%s3165 + $0x50] sm:$0xff]
      %v4059 = vld [vmem:[%s3165 + $0x60] sm:$0xff]
      %v4060 = vld [vmem:[%s3165 + $0x68] sm:$0xff]
      %v4061 = vld [vmem:[%s3165 + $0x78] sm:$0xff]
      %v4062 = vld [vmem:[%s3165 + $0x80] sm:$0xff]
      %v4063 = vld [vmem:[%s3165 + $0x90] sm:$0xff]
      %v4064 = vld [vmem:[%s3165 + $0x98] sm:$0xff]
      %v4065 = vld [vmem:[%s3165 + $0xa8] sm:$0xff]
      %v4066 = vld [vmem:[%s3165 + $0xb0] sm:$0xff]
      %v4067 = vld [vmem:[%s3165 + $0xc0] sm:$0xff]
      %v4068 = vld [vmem:[%s3165 + $0xc8] sm:$0xff]
      %v4069 = vld [vmem:[%s3165 + $0xd8] sm:$0xff]
      %v4070 = vld [vmem:[%s3165 + $0xe0] sm:$0xff]
      %v4071 = vld [vmem:[%s3165 + $0xf0] sm:$0xff]
      %v4072 = vld [vmem:[%s3165 + $0xf8] sm:$0xff]
      %v4073 = vld [vmem:[%s3165 + $0x108] sm:$0xff]
      %v4074 = vld [vmem:[%s3165 + $0x110] sm:$0xff]
      %v4075 = vld [vmem:[%s3165 + $0x120] sm:$0xff]
      %v4076 = vld [vmem:[%s3165 + $0x128] sm:$0xff]
      %v4077 = vld [vmem:[%s3165 + $0x138] sm:$0xff]
      %v4078 = vld [vmem:[%s3165 + $0x140] sm:$0xff]
      %v4079 = vld [vmem:[%s3165 + $0x150] sm:$0xff]
      %v4080 = vld [vmem:[%s3165 + $0x158] sm:$0xff]
      %v4081 = vld [vmem:[%s3165 + $0x168] sm:$0xff]
      %v4082 = vld [vmem:[%s3165 + $0x170] sm:$0xff]
      %v4083 = vpack.c.bf16 %v4052, %v4051
      %v4084 = vpack.c.bf16 %v4054, %v4053
      %v4085 = vpack.c.bf16 %v4056, %v4055
      %v4086 = vpack.c.bf16 %v4058, %v4057
      %v4087 = vpack.c.bf16 %v4060, %v4059
      %v4088 = vpack.c.bf16 %v4062, %v4061
      %v4089 = vpack.c.bf16 %v4064, %v4063
      %v4090 = vpack.c.bf16 %v4066, %v4065
      %v4091 = vpack.c.bf16 %v4068, %v4067
      %v4092 = vpack.c.bf16 %v4070, %v4069
      %v4093 = vpack.c.bf16 %v4072, %v4071
      %v4094 = vpack.c.bf16 %v4074, %v4073
      %v4095 = vpack.c.bf16 %v4076, %v4075
      %v4096 = vpack.c.bf16 %v4078, %v4077
      %v4097 = vpack.c.bf16 %v4080, %v4079
      %v4098 = vpack.c.bf16 %v4082, %v4081
      %s4099 = scalar_lea.vmem %s3, 192
      %v4100 = vld [vmem:[%s4099] sm:$0xf]
      %v4101 = vld [vmem:[%s4099 + $0x4] sm:$0xf]
      %v4102 = vld [vmem:[%s4099 + $0x8] sm:$0xf]
      %v4103 = vld [vmem:[%s4099 + $0xc] sm:$0xf]
      %v4104 = vld [vmem:[%s4099 + $0x10] sm:$0xf]
      %v4105 = vld [vmem:[%s4099 + $0x14] sm:$0xf]
      %v4106 = vld [vmem:[%s4099 + $0x18] sm:$0xf]
      %v4107 = vld [vmem:[%s4099 + $0x1c] sm:$0xf]
      %v4108 = vld [vmem:[%s4099 + $0x20] sm:$0xf]
      %v4109 = vld [vmem:[%s4099 + $0x24] sm:$0xf]
      %v4110 = vld [vmem:[%s4099 + $0x28] sm:$0xf]
      %v4111 = vld [vmem:[%s4099 + $0x2c] sm:$0xf]
      %v4112 = vld [vmem:[%s4099 + $0x30] sm:$0xf]
      %v4113 = vld [vmem:[%s4099 + $0x34] sm:$0xf]
      %v4114 = vld [vmem:[%s4099 + $0x38] sm:$0xf]
      %v4115 = vld [vmem:[%s4099 + $0x3c] sm:$0xf]
      %v4132 = vunpack.c.l.b16 %v4100
      %v4133 = vunpack.c.l.b16 %v4101
      %v4134 = vunpack.c.l.b16 %v4102
      %v4135 = vunpack.c.l.b16 %v4103
      %v4136 = vunpack.c.l.b16 %v4104
      %v4137 = vunpack.c.l.b16 %v4105
      %v4138 = vunpack.c.l.b16 %v4106
      %v4139 = vunpack.c.l.b16 %v4107
      %v4140 = vunpack.c.l.b16 %v4108
      %v4141 = vunpack.c.l.b16 %v4109
      %v4142 = vunpack.c.l.b16 %v4110
      %v4143 = vunpack.c.l.b16 %v4111
      %v4144 = vunpack.c.l.b16 %v4112
      %v4145 = vunpack.c.l.b16 %v4113
      %v4146 = vunpack.c.l.b16 %v4114
      %v4147 = vunpack.c.l.b16 %v4115
      %v4148 = vpack.c.b16 %v4133, %v4132
      %v4149 = vpack.c.b16 %v4135, %v4134
      %v4150 = vpack.c.b16 %v4137, %v4136
      %v4151 = vpack.c.b16 %v4139, %v4138
      %v4152 = vpack.c.b16 %v4141, %v4140
      %v4153 = vpack.c.b16 %v4143, %v4142
      %v4154 = vpack.c.b16 %v4145, %v4144
      %v4155 = vpack.c.b16 %v4147, %v4146
      %4164 = vmatprep.subr.bf16.mxu0 0
      %4165 = vmatpush1.bf16.msra.mxu0 %v4155
      %4166 = vmatprep.subr.bf16.mxu0 0
      %4167 = vmatpush1.bf16.msra.mxu0 %v4154
      %4168 = vmatprep.subr.bf16.mxu0 0
      %4169 = vmatpush1.bf16.msra.mxu0 %v4153
      %4170 = vmatprep.subr.bf16.mxu0 0
      %4171 = vmatpush1.bf16.msra.mxu0 %v4152
      %4172 = vmatprep.subr.bf16.mxu0 0
      %4173 = vmatpush1.bf16.msra.mxu0 %v4151
      %4174 = vmatprep.subr.bf16.mxu0 0
      %4175 = vmatpush1.bf16.msra.mxu0 %v4150
      %4176 = vmatprep.subr.bf16.mxu0 0
      %4177 = vmatpush1.bf16.msra.mxu0 %v4149
      %4178 = vmatprep.subr.bf16.mxu0 0
      %4179 = vmatpush1.bf16.msra.mxu0 %v4148
      %4180 = vmatprep.subr.bf16.mxu0 0
      %4181 = vmatpush2.bf16.msra.mxu0 0
      %4182 = vmatprep.subr.bf16.mxu0 0
      %4183 = vmatpush2.bf16.msra.mxu0 0
      %4184 = vmatprep.subr.bf16.mxu0 0
      %4185 = vmatpush2.bf16.msra.mxu0 0
      %4186 = vmatprep.subr.bf16.mxu0 0
      %4187 = vmatpush2.bf16.msra.mxu0 0
      %4188 = vmatprep.subr.bf16.mxu0 0
      %4189 = vmatpush2.bf16.msra.mxu0 0
      %4190 = vmatprep.subr.bf16.mxu0 0
      %4191 = vmatpush2.bf16.msra.mxu0 0
      %4192 = vmatprep.subr.bf16.mxu0 0
      %4193 = vmatpush2.bf16.msra.mxu0 0
      %4194 = vmatprep.subr.bf16.mxu0 0
      %4195 = vmatpush2.bf16.msra.mxu0 0
      %4196 = vmatprep.mubr.bf16.mxu0 0
      %4197 = vmatmul.mubr.bf16.gmra.mxu0 %v4083
      %v4198 = vpop.f32.mrf.mxu0
      %v4199 = vadd.f32 0.0, %v4198
      %v4200 = vpop.f32.mrf.mxu0
      %v4201 = vpop.f32.mrf.mxu0
      %v4202 = vadd.f32 0.0, %v4201
      %v4203 = vpop.f32.mrf.mxu0
      %4204 = vmatprep.mubr.bf16.mxu0 0
      %4205 = vmatmul.mubr.bf16.gmra.mxu0 %v4084
      %v4206 = vpop.f32.mrf.mxu0
      %v4207 = vadd.f32 0.0, %v4206
      %v4208 = vpop.f32.mrf.mxu0
      %v4209 = vpop.f32.mrf.mxu0
      %v4210 = vadd.f32 0.0, %v4209
      %v4211 = vpop.f32.mrf.mxu0
      %4212 = vmatprep.mubr.bf16.mxu0 0
      %4213 = vmatmul.mubr.bf16.gmra.mxu0 %v4085
      %v4214 = vpop.f32.mrf.mxu0
      %v4215 = vadd.f32 0.0, %v4214
      %v4216 = vpop.f32.mrf.mxu0
      %v4217 = vpop.f32.mrf.mxu0
      %v4218 = vadd.f32 0.0, %v4217
      %v4219 = vpop.f32.mrf.mxu0
      %4220 = vmatprep.mubr.bf16.mxu0 0
      %4221 = vmatmul.mubr.bf16.gmra.mxu0 %v4086
      %v4222 = vpop.f32.mrf.mxu0
      %v4223 = vadd.f32 0.0, %v4222
      %v4224 = vpop.f32.mrf.mxu0
      %v4225 = vpop.f32.mrf.mxu0
      %v4226 = vadd.f32 0.0, %v4225
      %v4227 = vpop.f32.mrf.mxu0
      %4228 = vmatprep.mubr.bf16.mxu0 0
      %4229 = vmatmul.mubr.bf16.gmra.mxu0 %v4087
      %v4230 = vpop.f32.mrf.mxu0
      %v4231 = vadd.f32 0.0, %v4230
      %v4232 = vpop.f32.mrf.mxu0
      %v4233 = vpop.f32.mrf.mxu0
      %v4234 = vadd.f32 0.0, %v4233
      %v4235 = vpop.f32.mrf.mxu0
      %4236 = vmatprep.mubr.bf16.mxu0 0
      %4237 = vmatmul.mubr.bf16.gmra.mxu0 %v4088
      %v4238 = vpop.f32.mrf.mxu0
      %v4239 = vadd.f32 0.0, %v4238
      %v4240 = vpop.f32.mrf.mxu0
      %v4241 = vpop.f32.mrf.mxu0
      %v4242 = vadd.f32 0.0, %v4241
      %v4243 = vpop.f32.mrf.mxu0
      %4244 = vmatprep.mubr.bf16.mxu0 0
      %4245 = vmatmul.mubr.bf16.gmra.mxu0 %v4089
      %v4246 = vpop.f32.mrf.mxu0
      %v4247 = vadd.f32 0.0, %v4246
      %v4248 = vpop.f32.mrf.mxu0
      %v4249 = vpop.f32.mrf.mxu0
      %v4250 = vadd.f32 0.0, %v4249
      %v4251 = vpop.f32.mrf.mxu0
      %4252 = vmatprep.mubr.bf16.mxu0 0
      %4253 = vmatmul.mubr.bf16.gmra.mxu0 %v4090
      %v4254 = vpop.f32.mrf.mxu0
      %v4255 = vadd.f32 0.0, %v4254
      %v4256 = vpop.f32.mrf.mxu0
      %v4257 = vpop.f32.mrf.mxu0
      %v4258 = vadd.f32 0.0, %v4257
      %v4259 = vpop.f32.mrf.mxu0
      %4260 = vmatprep.mubr.bf16.mxu0 0
      %4261 = vmatmul.mubr.bf16.gmra.mxu0 %v4091
      %v4262 = vpop.f32.mrf.mxu0
      %v4263 = vadd.f32 0.0, %v4262
      %v4264 = vpop.f32.mrf.mxu0
      %v4265 = vpop.f32.mrf.mxu0
      %v4266 = vadd.f32 0.0, %v4265
      %v4267 = vpop.f32.mrf.mxu0
      %4268 = vmatprep.mubr.bf16.mxu0 0
      %4269 = vmatmul.mubr.bf16.gmra.mxu0 %v4092
      %v4270 = vpop.f32.mrf.mxu0
      %v4271 = vadd.f32 0.0, %v4270
      %v4272 = vpop.f32.mrf.mxu0
      %v4273 = vpop.f32.mrf.mxu0
      %v4274 = vadd.f32 0.0, %v4273
      %v4275 = vpop.f32.mrf.mxu0
      %4276 = vmatprep.mubr.bf16.mxu0 0
      %4277 = vmatmul.mubr.bf16.gmra.mxu0 %v4093
      %v4278 = vpop.f32.mrf.mxu0
      %v4279 = vadd.f32 0.0, %v4278
      %v4280 = vpop.f32.mrf.mxu0
      %v4281 = vpop.f32.mrf.mxu0
      %v4282 = vadd.f32 0.0, %v4281
      %v4283 = vpop.f32.mrf.mxu0
      %4284 = vmatprep.mubr.bf16.mxu0 0
      %4285 = vmatmul.mubr.bf16.gmra.mxu0 %v4094
      %v4286 = vpop.f32.mrf.mxu0
      %v4287 = vadd.f32 0.0, %v4286
      %v4288 = vpop.f32.mrf.mxu0
      %v4289 = vpop.f32.mrf.mxu0
      %v4290 = vadd.f32 0.0, %v4289
      %v4291 = vpop.f32.mrf.mxu0
      %4292 = vmatprep.mubr.bf16.mxu0 0
      %4293 = vmatmul.mubr.bf16.gmra.mxu0 %v4095
      %v4294 = vpop.f32.mrf.mxu0
      %v4295 = vadd.f32 0.0, %v4294
      %v4296 = vpop.f32.mrf.mxu0
      %v4297 = vpop.f32.mrf.mxu0
      %v4298 = vadd.f32 0.0, %v4297
      %v4299 = vpop.f32.mrf.mxu0
      %4300 = vmatprep.mubr.bf16.mxu0 0
      %4301 = vmatmul.mubr.bf16.gmra.mxu0 %v4096
      %v4302 = vpop.f32.mrf.mxu0
      %v4303 = vadd.f32 0.0, %v4302
      %v4304 = vpop.f32.mrf.mxu0
      %v4305 = vpop.f32.mrf.mxu0
      %v4306 = vadd.f32 0.0, %v4305
      %v4307 = vpop.f32.mrf.mxu0
      %4308 = vmatprep.mubr.bf16.mxu0 0
      %4309 = vmatmul.mubr.bf16.gmra.mxu0 %v4097
      %v4310 = vpop.f32.mrf.mxu0
      %v4311 = vadd.f32 0.0, %v4310
      %v4312 = vpop.f32.mrf.mxu0
      %v4313 = vpop.f32.mrf.mxu0
      %v4314 = vadd.f32 0.0, %v4313
      %v4315 = vpop.f32.mrf.mxu0
      %4316 = vmatprep.mubr.bf16.mxu0 0
      %4317 = vmatmul.mubr.bf16.gmra.mxu0 %v4098
      %v4318 = vpop.f32.mrf.mxu0
      %v4319 = vadd.f32 0.0, %v4318
      %v4320 = vpop.f32.mrf.mxu0
      %v4321 = vpop.f32.mrf.mxu0
      %v4322 = vadd.f32 0.0, %v4321
      %v4323 = vpop.f32.mrf.mxu0
      %4324 = vdwg.mxu0
      %v4325 = vadd.f32 %v4019, %v4199
      %v4326 = vadd.f32 %v4020, %v4202
      %v4327 = vadd.f32 %v4021, %v4207
      %v4328 = vadd.f32 %v4022, %v4210
      %v4329 = vadd.f32 %v4023, %v4215
      %v4330 = vadd.f32 %v4024, %v4218
      %v4331 = vadd.f32 %v4025, %v4223
      %v4332 = vadd.f32 %v4026, %v4226
      %v4333 = vadd.f32 %v4027, %v4231
      %v4334 = vadd.f32 %v4028, %v4234
      %v4335 = vadd.f32 %v4029, %v4239
      %v4336 = vadd.f32 %v4030, %v4242
      %v4337 = vadd.f32 %v4031, %v4247
      %v4338 = vadd.f32 %v4032, %v4250
      %v4339 = vadd.f32 %v4033, %v4255
      %v4340 = vadd.f32 %v4034, %v4258
      %v4341 = vadd.f32 %v4035, %v4263
      %v4342 = vadd.f32 %v4036, %v4266
      %v4343 = vadd.f32 %v4037, %v4271
      %v4344 = vadd.f32 %v4038, %v4274
      %v4345 = vadd.f32 %v4039, %v4279
      %v4346 = vadd.f32 %v4040, %v4282
      %v4347 = vadd.f32 %v4041, %v4287
      %v4348 = vadd.f32 %v4042, %v4290
      %v4349 = vadd.f32 %v4043, %v4295
      %v4350 = vadd.f32 %v4044, %v4298
      %v4351 = vadd.f32 %v4045, %v4303
      %v4352 = vadd.f32 %v4046, %v4306
      %v4353 = vadd.f32 %v4047, %v4311
      %v4354 = vadd.f32 %v4048, %v4314
      %v4355 = vadd.f32 %v4049, %v4319
      %v4356 = vadd.f32 %v4050, %v4322
      %v4357 = vld [vmem:[%s3165 + $0x1] sm:$0xff]
      %v4358 = vld [vmem:[%s3165 + $0x9] sm:$0xff]
      %v4359 = vld [vmem:[%s3165 + $0x19] sm:$0xff]
      %v4360 = vld [vmem:[%s3165 + $0x21] sm:$0xff]
      %v4361 = vld [vmem:[%s3165 + $0x31] sm:$0xff]
      %v4362 = vld [vmem:[%s3165 + $0x39] sm:$0xff]
      %v4363 = vld [vmem:[%s3165 + $0x49] sm:$0xff]
      %v4364 = vld [vmem:[%s3165 + $0x51] sm:$0xff]
      %v4365 = vld [vmem:[%s3165 + $0x61] sm:$0xff]
      %v4366 = vld [vmem:[%s3165 + $0x69] sm:$0xff]
      %v4367 = vld [vmem:[%s3165 + $0x79] sm:$0xff]
      %v4368 = vld [vmem:[%s3165 + $0x81] sm:$0xff]
      %v4369 = vld [vmem:[%s3165 + $0x91] sm:$0xff]
      %v4370 = vld [vmem:[%s3165 + $0x99] sm:$0xff]
      %v4371 = vld [vmem:[%s3165 + $0xa9] sm:$0xff]
      %v4372 = vld [vmem:[%s3165 + $0xb1] sm:$0xff]
      %v4373 = vld [vmem:[%s3165 + $0xc1] sm:$0xff]
      %v4374 = vld [vmem:[%s3165 + $0xc9] sm:$0xff]
      %v4375 = vld [vmem:[%s3165 + $0xd9] sm:$0xff]
      %v4376 = vld [vmem:[%s3165 + $0xe1] sm:$0xff]
      %v4377 = vld [vmem:[%s3165 + $0xf1] sm:$0xff]
      %v4378 = vld [vmem:[%s3165 + $0xf9] sm:$0xff]
      %v4379 = vld [vmem:[%s3165 + $0x109] sm:$0xff]
      %v4380 = vld [vmem:[%s3165 + $0x111] sm:$0xff]
      %v4381 = vld [vmem:[%s3165 + $0x121] sm:$0xff]
      %v4382 = vld [vmem:[%s3165 + $0x129] sm:$0xff]
      %v4383 = vld [vmem:[%s3165 + $0x139] sm:$0xff]
      %v4384 = vld [vmem:[%s3165 + $0x141] sm:$0xff]
      %v4385 = vld [vmem:[%s3165 + $0x151] sm:$0xff]
      %v4386 = vld [vmem:[%s3165 + $0x159] sm:$0xff]
      %v4387 = vld [vmem:[%s3165 + $0x169] sm:$0xff]
      %v4388 = vld [vmem:[%s3165 + $0x171] sm:$0xff]
      %v4389 = vpack.c.bf16 %v4358, %v4357
      %v4390 = vpack.c.bf16 %v4360, %v4359
      %v4391 = vpack.c.bf16 %v4362, %v4361
      %v4392 = vpack.c.bf16 %v4364, %v4363
      %v4393 = vpack.c.bf16 %v4366, %v4365
      %v4394 = vpack.c.bf16 %v4368, %v4367
      %v4395 = vpack.c.bf16 %v4370, %v4369
      %v4396 = vpack.c.bf16 %v4372, %v4371
      %v4397 = vpack.c.bf16 %v4374, %v4373
      %v4398 = vpack.c.bf16 %v4376, %v4375
      %v4399 = vpack.c.bf16 %v4378, %v4377
      %v4400 = vpack.c.bf16 %v4380, %v4379
      %v4401 = vpack.c.bf16 %v4382, %v4381
      %v4402 = vpack.c.bf16 %v4384, %v4383
      %v4403 = vpack.c.bf16 %v4386, %v4385
      %v4404 = vpack.c.bf16 %v4388, %v4387
      %s4405 = scalar_lea.vmem %s3, 256
      %v4406 = vld [vmem:[%s4405] sm:$0xf]
      %v4407 = vld [vmem:[%s4405 + $0x4] sm:$0xf]
      %v4408 = vld [vmem:[%s4405 + $0x8] sm:$0xf]
      %v4409 = vld [vmem:[%s4405 + $0xc] sm:$0xf]
      %v4410 = vld [vmem:[%s4405 + $0x10] sm:$0xf]
      %v4411 = vld [vmem:[%s4405 + $0x14] sm:$0xf]
      %v4412 = vld [vmem:[%s4405 + $0x18] sm:$0xf]
      %v4413 = vld [vmem:[%s4405 + $0x1c] sm:$0xf]
      %v4414 = vld [vmem:[%s4405 + $0x20] sm:$0xf]
      %v4415 = vld [vmem:[%s4405 + $0x24] sm:$0xf]
      %v4416 = vld [vmem:[%s4405 + $0x28] sm:$0xf]
      %v4417 = vld [vmem:[%s4405 + $0x2c] sm:$0xf]
      %v4418 = vld [vmem:[%s4405 + $0x30] sm:$0xf]
      %v4419 = vld [vmem:[%s4405 + $0x34] sm:$0xf]
      %v4420 = vld [vmem:[%s4405 + $0x38] sm:$0xf]
      %v4421 = vld [vmem:[%s4405 + $0x3c] sm:$0xf]
      %v4438 = vunpack.c.l.b16 %v4406
      %v4439 = vunpack.c.l.b16 %v4407
      %v4440 = vunpack.c.l.b16 %v4408
      %v4441 = vunpack.c.l.b16 %v4409
      %v4442 = vunpack.c.l.b16 %v4410
      %v4443 = vunpack.c.l.b16 %v4411
      %v4444 = vunpack.c.l.b16 %v4412
      %v4445 = vunpack.c.l.b16 %v4413
      %v4446 = vunpack.c.l.b16 %v4414
      %v4447 = vunpack.c.l.b16 %v4415
      %v4448 = vunpack.c.l.b16 %v4416
      %v4449 = vunpack.c.l.b16 %v4417
      %v4450 = vunpack.c.l.b16 %v4418
      %v4451 = vunpack.c.l.b16 %v4419
      %v4452 = vunpack.c.l.b16 %v4420
      %v4453 = vunpack.c.l.b16 %v4421
      %v4454 = vpack.c.b16 %v4439, %v4438
      %v4455 = vpack.c.b16 %v4441, %v4440
      %v4456 = vpack.c.b16 %v4443, %v4442
      %v4457 = vpack.c.b16 %v4445, %v4444
      %v4458 = vpack.c.b16 %v4447, %v4446
      %v4459 = vpack.c.b16 %v4449, %v4448
      %v4460 = vpack.c.b16 %v4451, %v4450
      %v4461 = vpack.c.b16 %v4453, %v4452
      %4470 = vmatprep.subr.bf16.mxu0 0
      %4471 = vmatpush1.bf16.msra.mxu0 %v4461
      %4472 = vmatprep.subr.bf16.mxu0 0
      %4473 = vmatpush1.bf16.msra.mxu0 %v4460
      %4474 = vmatprep.subr.bf16.mxu0 0
      %4475 = vmatpush1.bf16.msra.mxu0 %v4459
      %4476 = vmatprep.subr.bf16.mxu0 0
      %4477 = vmatpush1.bf16.msra.mxu0 %v4458
      %4478 = vmatprep.subr.bf16.mxu0 0
      %4479 = vmatpush1.bf16.msra.mxu0 %v4457
      %4480 = vmatprep.subr.bf16.mxu0 0
      %4481 = vmatpush1.bf16.msra.mxu0 %v4456
      %4482 = vmatprep.subr.bf16.mxu0 0
      %4483 = vmatpush1.bf16.msra.mxu0 %v4455
      %4484 = vmatprep.subr.bf16.mxu0 0
      %4485 = vmatpush1.bf16.msra.mxu0 %v4454
      %4486 = vmatprep.subr.bf16.mxu0 0
      %4487 = vmatpush2.bf16.msra.mxu0 0
      %4488 = vmatprep.subr.bf16.mxu0 0
      %4489 = vmatpush2.bf16.msra.mxu0 0
      %4490 = vmatprep.subr.bf16.mxu0 0
      %4491 = vmatpush2.bf16.msra.mxu0 0
      %4492 = vmatprep.subr.bf16.mxu0 0
      %4493 = vmatpush2.bf16.msra.mxu0 0
      %4494 = vmatprep.subr.bf16.mxu0 0
      %4495 = vmatpush2.bf16.msra.mxu0 0
      %4496 = vmatprep.subr.bf16.mxu0 0
      %4497 = vmatpush2.bf16.msra.mxu0 0
      %4498 = vmatprep.subr.bf16.mxu0 0
      %4499 = vmatpush2.bf16.msra.mxu0 0
      %4500 = vmatprep.subr.bf16.mxu0 0
      %4501 = vmatpush2.bf16.msra.mxu0 0
      %4502 = vmatprep.mubr.bf16.mxu0 0
      %4503 = vmatmul.mubr.bf16.gmra.mxu0 %v4389
      %v4504 = vpop.f32.mrf.mxu0
      %v4505 = vadd.f32 0.0, %v4504
      %v4506 = vpop.f32.mrf.mxu0
      %v4507 = vpop.f32.mrf.mxu0
      %v4508 = vadd.f32 0.0, %v4507
      %v4509 = vpop.f32.mrf.mxu0
      %4510 = vmatprep.mubr.bf16.mxu0 0
      %4511 = vmatmul.mubr.bf16.gmra.mxu0 %v4390
      %v4512 = vpop.f32.mrf.mxu0
      %v4513 = vadd.f32 0.0, %v4512
      %v4514 = vpop.f32.mrf.mxu0
      %v4515 = vpop.f32.mrf.mxu0
      %v4516 = vadd.f32 0.0, %v4515
      %v4517 = vpop.f32.mrf.mxu0
      %4518 = vmatprep.mubr.bf16.mxu0 0
      %4519 = vmatmul.mubr.bf16.gmra.mxu0 %v4391
      %v4520 = vpop.f32.mrf.mxu0
      %v4521 = vadd.f32 0.0, %v4520
      %v4522 = vpop.f32.mrf.mxu0
      %v4523 = vpop.f32.mrf.mxu0
      %v4524 = vadd.f32 0.0, %v4523
      %v4525 = vpop.f32.mrf.mxu0
      %4526 = vmatprep.mubr.bf16.mxu0 0
      %4527 = vmatmul.mubr.bf16.gmra.mxu0 %v4392
      %v4528 = vpop.f32.mrf.mxu0
      %v4529 = vadd.f32 0.0, %v4528
      %v4530 = vpop.f32.mrf.mxu0
      %v4531 = vpop.f32.mrf.mxu0
      %v4532 = vadd.f32 0.0, %v4531
      %v4533 = vpop.f32.mrf.mxu0
      %4534 = vmatprep.mubr.bf16.mxu0 0
      %4535 = vmatmul.mubr.bf16.gmra.mxu0 %v4393
      %v4536 = vpop.f32.mrf.mxu0
      %v4537 = vadd.f32 0.0, %v4536
      %v4538 = vpop.f32.mrf.mxu0
      %v4539 = vpop.f32.mrf.mxu0
      %v4540 = vadd.f32 0.0, %v4539
      %v4541 = vpop.f32.mrf.mxu0
      %4542 = vmatprep.mubr.bf16.mxu0 0
      %4543 = vmatmul.mubr.bf16.gmra.mxu0 %v4394
      %v4544 = vpop.f32.mrf.mxu0
      %v4545 = vadd.f32 0.0, %v4544
      %v4546 = vpop.f32.mrf.mxu0
      %v4547 = vpop.f32.mrf.mxu0
      %v4548 = vadd.f32 0.0, %v4547
      %v4549 = vpop.f32.mrf.mxu0
      %4550 = vmatprep.mubr.bf16.mxu0 0
      %4551 = vmatmul.mubr.bf16.gmra.mxu0 %v4395
      %v4552 = vpop.f32.mrf.mxu0
      %v4553 = vadd.f32 0.0, %v4552
      %v4554 = vpop.f32.mrf.mxu0
      %v4555 = vpop.f32.mrf.mxu0
      %v4556 = vadd.f32 0.0, %v4555
      %v4557 = vpop.f32.mrf.mxu0
      %4558 = vmatprep.mubr.bf16.mxu0 0
      %4559 = vmatmul.mubr.bf16.gmra.mxu0 %v4396
      %v4560 = vpop.f32.mrf.mxu0
      %v4561 = vadd.f32 0.0, %v4560
      %v4562 = vpop.f32.mrf.mxu0
      %v4563 = vpop.f32.mrf.mxu0
      %v4564 = vadd.f32 0.0, %v4563
      %v4565 = vpop.f32.mrf.mxu0
      %4566 = vmatprep.mubr.bf16.mxu0 0
      %4567 = vmatmul.mubr.bf16.gmra.mxu0 %v4397
      %v4568 = vpop.f32.mrf.mxu0
      %v4569 = vadd.f32 0.0, %v4568
      %v4570 = vpop.f32.mrf.mxu0
      %v4571 = vpop.f32.mrf.mxu0
      %v4572 = vadd.f32 0.0, %v4571
      %v4573 = vpop.f32.mrf.mxu0
      %4574 = vmatprep.mubr.bf16.mxu0 0
      %4575 = vmatmul.mubr.bf16.gmra.mxu0 %v4398
      %v4576 = vpop.f32.mrf.mxu0
      %v4577 = vadd.f32 0.0, %v4576
      %v4578 = vpop.f32.mrf.mxu0
      %v4579 = vpop.f32.mrf.mxu0
      %v4580 = vadd.f32 0.0, %v4579
      %v4581 = vpop.f32.mrf.mxu0
      %4582 = vmatprep.mubr.bf16.mxu0 0
      %4583 = vmatmul.mubr.bf16.gmra.mxu0 %v4399
      %v4584 = vpop.f32.mrf.mxu0
      %v4585 = vadd.f32 0.0, %v4584
      %v4586 = vpop.f32.mrf.mxu0
      %v4587 = vpop.f32.mrf.mxu0
      %v4588 = vadd.f32 0.0, %v4587
      %v4589 = vpop.f32.mrf.mxu0
      %4590 = vmatprep.mubr.bf16.mxu0 0
      %4591 = vmatmul.mubr.bf16.gmra.mxu0 %v4400
      %v4592 = vpop.f32.mrf.mxu0
      %v4593 = vadd.f32 0.0, %v4592
      %v4594 = vpop.f32.mrf.mxu0
      %v4595 = vpop.f32.mrf.mxu0
      %v4596 = vadd.f32 0.0, %v4595
      %v4597 = vpop.f32.mrf.mxu0
      %4598 = vmatprep.mubr.bf16.mxu0 0
      %4599 = vmatmul.mubr.bf16.gmra.mxu0 %v4401
      %v4600 = vpop.f32.mrf.mxu0
      %v4601 = vadd.f32 0.0, %v4600
      %v4602 = vpop.f32.mrf.mxu0
      %v4603 = vpop.f32.mrf.mxu0
      %v4604 = vadd.f32 0.0, %v4603
      %v4605 = vpop.f32.mrf.mxu0
      %4606 = vmatprep.mubr.bf16.mxu0 0
      %4607 = vmatmul.mubr.bf16.gmra.mxu0 %v4402
      %v4608 = vpop.f32.mrf.mxu0
      %v4609 = vadd.f32 0.0, %v4608
      %v4610 = vpop.f32.mrf.mxu0
      %v4611 = vpop.f32.mrf.mxu0
      %v4612 = vadd.f32 0.0, %v4611
      %v4613 = vpop.f32.mrf.mxu0
      %4614 = vmatprep.mubr.bf16.mxu0 0
      %4615 = vmatmul.mubr.bf16.gmra.mxu0 %v4403
      %v4616 = vpop.f32.mrf.mxu0
      %v4617 = vadd.f32 0.0, %v4616
      %v4618 = vpop.f32.mrf.mxu0
      %v4619 = vpop.f32.mrf.mxu0
      %v4620 = vadd.f32 0.0, %v4619
      %v4621 = vpop.f32.mrf.mxu0
      %4622 = vmatprep.mubr.bf16.mxu0 0
      %4623 = vmatmul.mubr.bf16.gmra.mxu0 %v4404
      %v4624 = vpop.f32.mrf.mxu0
      %v4625 = vadd.f32 0.0, %v4624
      %v4626 = vpop.f32.mrf.mxu0
      %v4627 = vpop.f32.mrf.mxu0
      %v4628 = vadd.f32 0.0, %v4627
      %v4629 = vpop.f32.mrf.mxu0
      %4630 = vdwg.mxu0
      %v4631 = vadd.f32 %v4325, %v4505
      %v4632 = vadd.f32 %v4326, %v4508
      %v4633 = vadd.f32 %v4327, %v4513
      %v4634 = vadd.f32 %v4328, %v4516
      %v4635 = vadd.f32 %v4329, %v4521
      %v4636 = vadd.f32 %v4330, %v4524
      %v4637 = vadd.f32 %v4331, %v4529
      %v4638 = vadd.f32 %v4332, %v4532
      %v4639 = vadd.f32 %v4333, %v4537
      %v4640 = vadd.f32 %v4334, %v4540
      %v4641 = vadd.f32 %v4335, %v4545
      %v4642 = vadd.f32 %v4336, %v4548
      %v4643 = vadd.f32 %v4337, %v4553
      %v4644 = vadd.f32 %v4338, %v4556
      %v4645 = vadd.f32 %v4339, %v4561
      %v4646 = vadd.f32 %v4340, %v4564
      %v4647 = vadd.f32 %v4341, %v4569
      %v4648 = vadd.f32 %v4342, %v4572
      %v4649 = vadd.f32 %v4343, %v4577
      %v4650 = vadd.f32 %v4344, %v4580
      %v4651 = vadd.f32 %v4345, %v4585
      %v4652 = vadd.f32 %v4346, %v4588
      %v4653 = vadd.f32 %v4347, %v4593
      %v4654 = vadd.f32 %v4348, %v4596
      %v4655 = vadd.f32 %v4349, %v4601
      %v4656 = vadd.f32 %v4350, %v4604
      %v4657 = vadd.f32 %v4351, %v4609
      %v4658 = vadd.f32 %v4352, %v4612
      %v4659 = vadd.f32 %v4353, %v4617
      %v4660 = vadd.f32 %v4354, %v4620
      %v4661 = vadd.f32 %v4355, %v4625
      %v4662 = vadd.f32 %v4356, %v4628
      %v4663 = vld [vmem:[%s3165 + $0x2] sm:$0xff]
      %v4664 = vld [vmem:[%s3165 + $0xa] sm:$0xff]
      %v4665 = vld [vmem:[%s3165 + $0x1a] sm:$0xff]
      %v4666 = vld [vmem:[%s3165 + $0x22] sm:$0xff]
      %v4667 = vld [vmem:[%s3165 + $0x32] sm:$0xff]
      %v4668 = vld [vmem:[%s3165 + $0x3a] sm:$0xff]
      %v4669 = vld [vmem:[%s3165 + $0x4a] sm:$0xff]
      %v4670 = vld [vmem:[%s3165 + $0x52] sm:$0xff]
      %v4671 = vld [vmem:[%s3165 + $0x62] sm:$0xff]
      %v4672 = vld [vmem:[%s3165 + $0x6a] sm:$0xff]
      %v4673 = vld [vmem:[%s3165 + $0x7a] sm:$0xff]
      %v4674 = vld [vmem:[%s3165 + $0x82] sm:$0xff]
      %v4675 = vld [vmem:[%s3165 + $0x92] sm:$0xff]
      %v4676 = vld [vmem:[%s3165 + $0x9a] sm:$0xff]
      %v4677 = vld [vmem:[%s3165 + $0xaa] sm:$0xff]
      %v4678 = vld [vmem:[%s3165 + $0xb2] sm:$0xff]
      %v4679 = vld [vmem:[%s3165 + $0xc2] sm:$0xff]
      %v4680 = vld [vmem:[%s3165 + $0xca] sm:$0xff]
      %v4681 = vld [vmem:[%s3165 + $0xda] sm:$0xff]
      %v4682 = vld [vmem:[%s3165 + $0xe2] sm:$0xff]
      %v4683 = vld [vmem:[%s3165 + $0xf2] sm:$0xff]
      %v4684 = vld [vmem:[%s3165 + $0xfa] sm:$0xff]
      %v4685 = vld [vmem:[%s3165 + $0x10a] sm:$0xff]
      %v4686 = vld [vmem:[%s3165 + $0x112] sm:$0xff]
      %v4687 = vld [vmem:[%s3165 + $0x122] sm:$0xff]
      %v4688 = vld [vmem:[%s3165 + $0x12a] sm:$0xff]
      %v4689 = vld [vmem:[%s3165 + $0x13a] sm:$0xff]
      %v4690 = vld [vmem:[%s3165 + $0x142] sm:$0xff]
      %v4691 = vld [vmem:[%s3165 + $0x152] sm:$0xff]
      %v4692 = vld [vmem:[%s3165 + $0x15a] sm:$0xff]
      %v4693 = vld [vmem:[%s3165 + $0x16a] sm:$0xff]
      %v4694 = vld [vmem:[%s3165 + $0x172] sm:$0xff]
      %v4695 = vpack.c.bf16 %v4664, %v4663
      %v4696 = vpack.c.bf16 %v4666, %v4665
      %v4697 = vpack.c.bf16 %v4668, %v4667
      %v4698 = vpack.c.bf16 %v4670, %v4669
      %v4699 = vpack.c.bf16 %v4672, %v4671
      %v4700 = vpack.c.bf16 %v4674, %v4673
      %v4701 = vpack.c.bf16 %v4676, %v4675
      %v4702 = vpack.c.bf16 %v4678, %v4677
      %v4703 = vpack.c.bf16 %v4680, %v4679
      %v4704 = vpack.c.bf16 %v4682, %v4681
      %v4705 = vpack.c.bf16 %v4684, %v4683
      %v4706 = vpack.c.bf16 %v4686, %v4685
      %v4707 = vpack.c.bf16 %v4688, %v4687
      %v4708 = vpack.c.bf16 %v4690, %v4689
      %v4709 = vpack.c.bf16 %v4692, %v4691
      %v4710 = vpack.c.bf16 %v4694, %v4693
      %s4711 = scalar_lea.vmem %s3, 320
      %v4712 = vld [vmem:[%s4711] sm:$0xf]
      %v4713 = vld [vmem:[%s4711 + $0x4] sm:$0xf]
      %v4714 = vld [vmem:[%s4711 + $0x8] sm:$0xf]
      %v4715 = vld [vmem:[%s4711 + $0xc] sm:$0xf]
      %v4716 = vld [vmem:[%s4711 + $0x10] sm:$0xf]
      %v4717 = vld [vmem:[%s4711 + $0x14] sm:$0xf]
      %v4718 = vld [vmem:[%s4711 + $0x18] sm:$0xf]
      %v4719 = vld [vmem:[%s4711 + $0x1c] sm:$0xf]
      %v4720 = vld [vmem:[%s4711 + $0x20] sm:$0xf]
      %v4721 = vld [vmem:[%s4711 + $0x24] sm:$0xf]
      %v4722 = vld [vmem:[%s4711 + $0x28] sm:$0xf]
      %v4723 = vld [vmem:[%s4711 + $0x2c] sm:$0xf]
      %v4724 = vld [vmem:[%s4711 + $0x30] sm:$0xf]
      %v4725 = vld [vmem:[%s4711 + $0x34] sm:$0xf]
      %v4726 = vld [vmem:[%s4711 + $0x38] sm:$0xf]
      %v4727 = vld [vmem:[%s4711 + $0x3c] sm:$0xf]
      %v4744 = vunpack.c.l.b16 %v4712
      %v4745 = vunpack.c.l.b16 %v4713
      %v4746 = vunpack.c.l.b16 %v4714
      %v4747 = vunpack.c.l.b16 %v4715
      %v4748 = vunpack.c.l.b16 %v4716
      %v4749 = vunpack.c.l.b16 %v4717
      %v4750 = vunpack.c.l.b16 %v4718
      %v4751 = vunpack.c.l.b16 %v4719
      %v4752 = vunpack.c.l.b16 %v4720
      %v4753 = vunpack.c.l.b16 %v4721
      %v4754 = vunpack.c.l.b16 %v4722
      %v4755 = vunpack.c.l.b16 %v4723
      %v4756 = vunpack.c.l.b16 %v4724
      %v4757 = vunpack.c.l.b16 %v4725
      %v4758 = vunpack.c.l.b16 %v4726
      %v4759 = vunpack.c.l.b16 %v4727
      %v4760 = vpack.c.b16 %v4745, %v4744
      %v4761 = vpack.c.b16 %v4747, %v4746
      %v4762 = vpack.c.b16 %v4749, %v4748
      %v4763 = vpack.c.b16 %v4751, %v4750
      %v4764 = vpack.c.b16 %v4753, %v4752
      %v4765 = vpack.c.b16 %v4755, %v4754
      %v4766 = vpack.c.b16 %v4757, %v4756
      %v4767 = vpack.c.b16 %v4759, %v4758
      %4776 = vmatprep.subr.bf16.mxu0 0
      %4777 = vmatpush1.bf16.msra.mxu0 %v4767
      %4778 = vmatprep.subr.bf16.mxu0 0
      %4779 = vmatpush1.bf16.msra.mxu0 %v4766
      %4780 = vmatprep.subr.bf16.mxu0 0
      %4781 = vmatpush1.bf16.msra.mxu0 %v4765
      %4782 = vmatprep.subr.bf16.mxu0 0
      %4783 = vmatpush1.bf16.msra.mxu0 %v4764
      %4784 = vmatprep.subr.bf16.mxu0 0
      %4785 = vmatpush1.bf16.msra.mxu0 %v4763
      %4786 = vmatprep.subr.bf16.mxu0 0
      %4787 = vmatpush1.bf16.msra.mxu0 %v4762
      %4788 = vmatprep.subr.bf16.mxu0 0
      %4789 = vmatpush1.bf16.msra.mxu0 %v4761
      %4790 = vmatprep.subr.bf16.mxu0 0
      %4791 = vmatpush1.bf16.msra.mxu0 %v4760
      %4792 = vmatprep.subr.bf16.mxu0 0
      %4793 = vmatpush2.bf16.msra.mxu0 0
      %4794 = vmatprep.subr.bf16.mxu0 0
      %4795 = vmatpush2.bf16.msra.mxu0 0
      %4796 = vmatprep.subr.bf16.mxu0 0
      %4797 = vmatpush2.bf16.msra.mxu0 0
      %4798 = vmatprep.subr.bf16.mxu0 0
      %4799 = vmatpush2.bf16.msra.mxu0 0
      %4800 = vmatprep.subr.bf16.mxu0 0
      %4801 = vmatpush2.bf16.msra.mxu0 0
      %4802 = vmatprep.subr.bf16.mxu0 0
      %4803 = vmatpush2.bf16.msra.mxu0 0
      %4804 = vmatprep.subr.bf16.mxu0 0
      %4805 = vmatpush2.bf16.msra.mxu0 0
      %4806 = vmatprep.subr.bf16.mxu0 0
      %4807 = vmatpush2.bf16.msra.mxu0 0
      %4808 = vmatprep.mubr.bf16.mxu0 0
      %4809 = vmatmul.mubr.bf16.gmra.mxu0 %v4695
      %v4810 = vpop.f32.mrf.mxu0
      %v4811 = vadd.f32 0.0, %v4810
      %v4812 = vpop.f32.mrf.mxu0
      %v4813 = vpop.f32.mrf.mxu0
      %v4814 = vadd.f32 0.0, %v4813
      %v4815 = vpop.f32.mrf.mxu0
      %4816 = vmatprep.mubr.bf16.mxu0 0
      %4817 = vmatmul.mubr.bf16.gmra.mxu0 %v4696
      %v4818 = vpop.f32.mrf.mxu0
      %v4819 = vadd.f32 0.0, %v4818
      %v4820 = vpop.f32.mrf.mxu0
      %v4821 = vpop.f32.mrf.mxu0
      %v4822 = vadd.f32 0.0, %v4821
      %v4823 = vpop.f32.mrf.mxu0
      %4824 = vmatprep.mubr.bf16.mxu0 0
      %4825 = vmatmul.mubr.bf16.gmra.mxu0 %v4697
      %v4826 = vpop.f32.mrf.mxu0
      %v4827 = vadd.f32 0.0, %v4826
      %v4828 = vpop.f32.mrf.mxu0
      %v4829 = vpop.f32.mrf.mxu0
      %v4830 = vadd.f32 0.0, %v4829
      %v4831 = vpop.f32.mrf.mxu0
      %4832 = vmatprep.mubr.bf16.mxu0 0
      %4833 = vmatmul.mubr.bf16.gmra.mxu0 %v4698
      %v4834 = vpop.f32.mrf.mxu0
      %v4835 = vadd.f32 0.0, %v4834
      %v4836 = vpop.f32.mrf.mxu0
      %v4837 = vpop.f32.mrf.mxu0
      %v4838 = vadd.f32 0.0, %v4837
      %v4839 = vpop.f32.mrf.mxu0
      %4840 = vmatprep.mubr.bf16.mxu0 0
      %4841 = vmatmul.mubr.bf16.gmra.mxu0 %v4699
      %v4842 = vpop.f32.mrf.mxu0
      %v4843 = vadd.f32 0.0, %v4842
      %v4844 = vpop.f32.mrf.mxu0
      %v4845 = vpop.f32.mrf.mxu0
      %v4846 = vadd.f32 0.0, %v4845
      %v4847 = vpop.f32.mrf.mxu0
      %4848 = vmatprep.mubr.bf16.mxu0 0
      %4849 = vmatmul.mubr.bf16.gmra.mxu0 %v4700
      %v4850 = vpop.f32.mrf.mxu0
      %v4851 = vadd.f32 0.0, %v4850
      %v4852 = vpop.f32.mrf.mxu0
      %v4853 = vpop.f32.mrf.mxu0
      %v4854 = vadd.f32 0.0, %v4853
      %v4855 = vpop.f32.mrf.mxu0
      %4856 = vmatprep.mubr.bf16.mxu0 0
      %4857 = vmatmul.mubr.bf16.gmra.mxu0 %v4701
      %v4858 = vpop.f32.mrf.mxu0
      %v4859 = vadd.f32 0.0, %v4858
      %v4860 = vpop.f32.mrf.mxu0
      %v4861 = vpop.f32.mrf.mxu0
      %v4862 = vadd.f32 0.0, %v4861
      %v4863 = vpop.f32.mrf.mxu0
      %4864 = vmatprep.mubr.bf16.mxu0 0
      %4865 = vmatmul.mubr.bf16.gmra.mxu0 %v4702
      %v4866 = vpop.f32.mrf.mxu0
      %v4867 = vadd.f32 0.0, %v4866
      %v4868 = vpop.f32.mrf.mxu0
      %v4869 = vpop.f32.mrf.mxu0
      %v4870 = vadd.f32 0.0, %v4869
      %v4871 = vpop.f32.mrf.mxu0
      %4872 = vmatprep.mubr.bf16.mxu0 0
      %4873 = vmatmul.mubr.bf16.gmra.mxu0 %v4703
      %v4874 = vpop.f32.mrf.mxu0
      %v4875 = vadd.f32 0.0, %v4874
      %v4876 = vpop.f32.mrf.mxu0
      %v4877 = vpop.f32.mrf.mxu0
      %v4878 = vadd.f32 0.0, %v4877
      %v4879 = vpop.f32.mrf.mxu0
      %4880 = vmatprep.mubr.bf16.mxu0 0
      %4881 = vmatmul.mubr.bf16.gmra.mxu0 %v4704
      %v4882 = vpop.f32.mrf.mxu0
      %v4883 = vadd.f32 0.0, %v4882
      %v4884 = vpop.f32.mrf.mxu0
      %v4885 = vpop.f32.mrf.mxu0
      %v4886 = vadd.f32 0.0, %v4885
      %v4887 = vpop.f32.mrf.mxu0
      %4888 = vmatprep.mubr.bf16.mxu0 0
      %4889 = vmatmul.mubr.bf16.gmra.mxu0 %v4705
      %v4890 = vpop.f32.mrf.mxu0
      %v4891 = vadd.f32 0.0, %v4890
      %v4892 = vpop.f32.mrf.mxu0
      %v4893 = vpop.f32.mrf.mxu0
      %v4894 = vadd.f32 0.0, %v4893
      %v4895 = vpop.f32.mrf.mxu0
      %4896 = vmatprep.mubr.bf16.mxu0 0
      %4897 = vmatmul.mubr.bf16.gmra.mxu0 %v4706
      %v4898 = vpop.f32.mrf.mxu0
      %v4899 = vadd.f32 0.0, %v4898
      %v4900 = vpop.f32.mrf.mxu0
      %v4901 = vpop.f32.mrf.mxu0
      %v4902 = vadd.f32 0.0, %v4901
      %v4903 = vpop.f32.mrf.mxu0
      %4904 = vmatprep.mubr.bf16.mxu0 0
      %4905 = vmatmul.mubr.bf16.gmra.mxu0 %v4707
      %v4906 = vpop.f32.mrf.mxu0
      %v4907 = vadd.f32 0.0, %v4906
      %v4908 = vpop.f32.mrf.mxu0
      %v4909 = vpop.f32.mrf.mxu0
      %v4910 = vadd.f32 0.0, %v4909
      %v4911 = vpop.f32.mrf.mxu0
      %4912 = vmatprep.mubr.bf16.mxu0 0
      %4913 = vmatmul.mubr.bf16.gmra.mxu0 %v4708
      %v4914 = vpop.f32.mrf.mxu0
      %v4915 = vadd.f32 0.0, %v4914
      %v4916 = vpop.f32.mrf.mxu0
      %v4917 = vpop.f32.mrf.mxu0
      %v4918 = vadd.f32 0.0, %v4917
      %v4919 = vpop.f32.mrf.mxu0
      %4920 = vmatprep.mubr.bf16.mxu0 0
      %4921 = vmatmul.mubr.bf16.gmra.mxu0 %v4709
      %v4922 = vpop.f32.mrf.mxu0
      %v4923 = vadd.f32 0.0, %v4922
      %v4924 = vpop.f32.mrf.mxu0
      %v4925 = vpop.f32.mrf.mxu0
      %v4926 = vadd.f32 0.0, %v4925
      %v4927 = vpop.f32.mrf.mxu0
      %4928 = vmatprep.mubr.bf16.mxu0 0
      %4929 = vmatmul.mubr.bf16.gmra.mxu0 %v4710
      %v4930 = vpop.f32.mrf.mxu0
      %v4931 = vadd.f32 0.0, %v4930
      %v4932 = vpop.f32.mrf.mxu0
      %v4933 = vpop.f32.mrf.mxu0
      %v4934 = vadd.f32 0.0, %v4933
      %v4935 = vpop.f32.mrf.mxu0
      %4936 = vdwg.mxu0
      %v4937 = vadd.f32 %v4631, %v4811
      %v4938 = vadd.f32 %v4632, %v4814
      %v4939 = vadd.f32 %v4633, %v4819
      %v4940 = vadd.f32 %v4634, %v4822
      %v4941 = vadd.f32 %v4635, %v4827
      %v4942 = vadd.f32 %v4636, %v4830
      %v4943 = vadd.f32 %v4637, %v4835
      %v4944 = vadd.f32 %v4638, %v4838
      %v4945 = vadd.f32 %v4639, %v4843
      %v4946 = vadd.f32 %v4640, %v4846
      %v4947 = vadd.f32 %v4641, %v4851
      %v4948 = vadd.f32 %v4642, %v4854
      %v4949 = vadd.f32 %v4643, %v4859
      %v4950 = vadd.f32 %v4644, %v4862
      %v4951 = vadd.f32 %v4645, %v4867
      %v4952 = vadd.f32 %v4646, %v4870
      %v4953 = vadd.f32 %v4647, %v4875
      %v4954 = vadd.f32 %v4648, %v4878
      %v4955 = vadd.f32 %v4649, %v4883
      %v4956 = vadd.f32 %v4650, %v4886
      %v4957 = vadd.f32 %v4651, %v4891
      %v4958 = vadd.f32 %v4652, %v4894
      %v4959 = vadd.f32 %v4653, %v4899
      %v4960 = vadd.f32 %v4654, %v4902
      %v4961 = vadd.f32 %v4655, %v4907
      %v4962 = vadd.f32 %v4656, %v4910
      %v4963 = vadd.f32 %v4657, %v4915
      %v4964 = vadd.f32 %v4658, %v4918
      %v4965 = vadd.f32 %v4659, %v4923
      %v4966 = vadd.f32 %v4660, %v4926
      %v4967 = vadd.f32 %v4661, %v4931
      %v4968 = vadd.f32 %v4662, %v4934
      %s4969 = scalar_lea.vmem [#allocation3], 48
      %v4970 = vld [vmem:[%s4969] sm:$0xff]
      %v4971 = vld [vmem:[%s4969 + $0x8] sm:$0xff]
      %v4972 = vld [vmem:[%s4969 + $0x18] sm:$0xff]
      %v4973 = vld [vmem:[%s4969 + $0x20] sm:$0xff]
      %v4974 = vld [vmem:[%s4969 + $0x30] sm:$0xff]
      %v4975 = vld [vmem:[%s4969 + $0x38] sm:$0xff]
      %v4976 = vld [vmem:[%s4969 + $0x48] sm:$0xff]
      %v4977 = vld [vmem:[%s4969 + $0x50] sm:$0xff]
      %v4978 = vld [vmem:[%s4969 + $0x60] sm:$0xff]
      %v4979 = vld [vmem:[%s4969 + $0x68] sm:$0xff]
      %v4980 = vld [vmem:[%s4969 + $0x78] sm:$0xff]
      %v4981 = vld [vmem:[%s4969 + $0x80] sm:$0xff]
      %v4982 = vld [vmem:[%s4969 + $0x90] sm:$0xff]
      %v4983 = vld [vmem:[%s4969 + $0x98] sm:$0xff]
      %v4984 = vld [vmem:[%s4969 + $0xa8] sm:$0xff]
      %v4985 = vld [vmem:[%s4969 + $0xb0] sm:$0xff]
      %v4986 = vld [vmem:[%s4969 + $0xc0] sm:$0xff]
      %v4987 = vld [vmem:[%s4969 + $0xc8] sm:$0xff]
      %v4988 = vld [vmem:[%s4969 + $0xd8] sm:$0xff]
      %v4989 = vld [vmem:[%s4969 + $0xe0] sm:$0xff]
      %v4990 = vld [vmem:[%s4969 + $0xf0] sm:$0xff]
      %v4991 = vld [vmem:[%s4969 + $0xf8] sm:$0xff]
      %v4992 = vld [vmem:[%s4969 + $0x108] sm:$0xff]
      %v4993 = vld [vmem:[%s4969 + $0x110] sm:$0xff]
      %v4994 = vld [vmem:[%s4969 + $0x120] sm:$0xff]
      %v4995 = vld [vmem:[%s4969 + $0x128] sm:$0xff]
      %v4996 = vld [vmem:[%s4969 + $0x138] sm:$0xff]
      %v4997 = vld [vmem:[%s4969 + $0x140] sm:$0xff]
      %v4998 = vld [vmem:[%s4969 + $0x150] sm:$0xff]
      %v4999 = vld [vmem:[%s4969 + $0x158] sm:$0xff]
      %v5000 = vld [vmem:[%s4969 + $0x168] sm:$0xff]
      %v5001 = vld [vmem:[%s4969 + $0x170] sm:$0xff]
      %v5002 = vpack.c.bf16 %v4971, %v4970
      %v5003 = vpack.c.bf16 %v4973, %v4972
      %v5004 = vpack.c.bf16 %v4975, %v4974
      %v5005 = vpack.c.bf16 %v4977, %v4976
      %v5006 = vpack.c.bf16 %v4979, %v4978
      %v5007 = vpack.c.bf16 %v4981, %v4980
      %v5008 = vpack.c.bf16 %v4983, %v4982
      %v5009 = vpack.c.bf16 %v4985, %v4984
      %v5010 = vpack.c.bf16 %v4987, %v4986
      %v5011 = vpack.c.bf16 %v4989, %v4988
      %v5012 = vpack.c.bf16 %v4991, %v4990
      %v5013 = vpack.c.bf16 %v4993, %v4992
      %v5014 = vpack.c.bf16 %v4995, %v4994
      %v5015 = vpack.c.bf16 %v4997, %v4996
      %v5016 = vpack.c.bf16 %v4999, %v4998
      %v5017 = vpack.c.bf16 %v5001, %v5000
      %s5018 = scalar_lea.vmem %s3, 384
      %v5019 = vld [vmem:[%s5018] sm:$0xf]
      %v5020 = vld [vmem:[%s5018 + $0x4] sm:$0xf]
      %v5021 = vld [vmem:[%s5018 + $0x8] sm:$0xf]
      %v5022 = vld [vmem:[%s5018 + $0xc] sm:$0xf]
      %v5023 = vld [vmem:[%s5018 + $0x10] sm:$0xf]
      %v5024 = vld [vmem:[%s5018 + $0x14] sm:$0xf]
      %v5025 = vld [vmem:[%s5018 + $0x18] sm:$0xf]
      %v5026 = vld [vmem:[%s5018 + $0x1c] sm:$0xf]
      %v5027 = vld [vmem:[%s5018 + $0x20] sm:$0xf]
      %v5028 = vld [vmem:[%s5018 + $0x24] sm:$0xf]
      %v5029 = vld [vmem:[%s5018 + $0x28] sm:$0xf]
      %v5030 = vld [vmem:[%s5018 + $0x2c] sm:$0xf]
      %v5031 = vld [vmem:[%s5018 + $0x30] sm:$0xf]
      %v5032 = vld [vmem:[%s5018 + $0x34] sm:$0xf]
      %v5033 = vld [vmem:[%s5018 + $0x38] sm:$0xf]
      %v5034 = vld [vmem:[%s5018 + $0x3c] sm:$0xf]
      %v5051 = vunpack.c.l.b16 %v5019
      %v5052 = vunpack.c.l.b16 %v5020
      %v5053 = vunpack.c.l.b16 %v5021
      %v5054 = vunpack.c.l.b16 %v5022
      %v5055 = vunpack.c.l.b16 %v5023
      %v5056 = vunpack.c.l.b16 %v5024
      %v5057 = vunpack.c.l.b16 %v5025
      %v5058 = vunpack.c.l.b16 %v5026
      %v5059 = vunpack.c.l.b16 %v5027
      %v5060 = vunpack.c.l.b16 %v5028
      %v5061 = vunpack.c.l.b16 %v5029
      %v5062 = vunpack.c.l.b16 %v5030
      %v5063 = vunpack.c.l.b16 %v5031
      %v5064 = vunpack.c.l.b16 %v5032
      %v5065 = vunpack.c.l.b16 %v5033
      %v5066 = vunpack.c.l.b16 %v5034
      %v5067 = vpack.c.b16 %v5052, %v5051
      %v5068 = vpack.c.b16 %v5054, %v5053
      %v5069 = vpack.c.b16 %v5056, %v5055
      %v5070 = vpack.c.b16 %v5058, %v5057
      %v5071 = vpack.c.b16 %v5060, %v5059
      %v5072 = vpack.c.b16 %v5062, %v5061
      %v5073 = vpack.c.b16 %v5064, %v5063
      %v5074 = vpack.c.b16 %v5066, %v5065
      %5083 = vmatprep.subr.bf16.mxu0 0
      %5084 = vmatpush1.bf16.msra.mxu0 %v5074
      %5085 = vmatprep.subr.bf16.mxu0 0
      %5086 = vmatpush1.bf16.msra.mxu0 %v5073
      %5087 = vmatprep.subr.bf16.mxu0 0
      %5088 = vmatpush1.bf16.msra.mxu0 %v5072
      %5089 = vmatprep.subr.bf16.mxu0 0
      %5090 = vmatpush1.bf16.msra.mxu0 %v5071
      %5091 = vmatprep.subr.bf16.mxu0 0
      %5092 = vmatpush1.bf16.msra.mxu0 %v5070
      %5093 = vmatprep.subr.bf16.mxu0 0
      %5094 = vmatpush1.bf16.msra.mxu0 %v5069
      %5095 = vmatprep.subr.bf16.mxu0 0
      %5096 = vmatpush1.bf16.msra.mxu0 %v5068
      %5097 = vmatprep.subr.bf16.mxu0 0
      %5098 = vmatpush1.bf16.msra.mxu0 %v5067
      %5099 = vmatprep.subr.bf16.mxu0 0
      %5100 = vmatpush2.bf16.msra.mxu0 0
      %5101 = vmatprep.subr.bf16.mxu0 0
      %5102 = vmatpush2.bf16.msra.mxu0 0
      %5103 = vmatprep.subr.bf16.mxu0 0
      %5104 = vmatpush2.bf16.msra.mxu0 0
      %5105 = vmatprep.subr.bf16.mxu0 0
      %5106 = vmatpush2.bf16.msra.mxu0 0
      %5107 = vmatprep.subr.bf16.mxu0 0
      %5108 = vmatpush2.bf16.msra.mxu0 0
      %5109 = vmatprep.subr.bf16.mxu0 0
      %5110 = vmatpush2.bf16.msra.mxu0 0
      %5111 = vmatprep.subr.bf16.mxu0 0
      %5112 = vmatpush2.bf16.msra.mxu0 0
      %5113 = vmatprep.subr.bf16.mxu0 0
      %5114 = vmatpush2.bf16.msra.mxu0 0
      %5115 = vmatprep.mubr.bf16.mxu0 0
      %5116 = vmatmul.mubr.bf16.gmra.mxu0 %v5002
      %v5117 = vpop.f32.mrf.mxu0
      %v5118 = vadd.f32 0.0, %v5117
      %v5119 = vpop.f32.mrf.mxu0
      %v5120 = vpop.f32.mrf.mxu0
      %v5121 = vadd.f32 0.0, %v5120
      %v5122 = vpop.f32.mrf.mxu0
      %5123 = vmatprep.mubr.bf16.mxu0 0
      %5124 = vmatmul.mubr.bf16.gmra.mxu0 %v5003
      %v5125 = vpop.f32.mrf.mxu0
      %v5126 = vadd.f32 0.0, %v5125
      %v5127 = vpop.f32.mrf.mxu0
      %v5128 = vpop.f32.mrf.mxu0
      %v5129 = vadd.f32 0.0, %v5128
      %v5130 = vpop.f32.mrf.mxu0
      %5131 = vmatprep.mubr.bf16.mxu0 0
      %5132 = vmatmul.mubr.bf16.gmra.mxu0 %v5004
      %v5133 = vpop.f32.mrf.mxu0
      %v5134 = vadd.f32 0.0, %v5133
      %v5135 = vpop.f32.mrf.mxu0
      %v5136 = vpop.f32.mrf.mxu0
      %v5137 = vadd.f32 0.0, %v5136
      %v5138 = vpop.f32.mrf.mxu0
      %5139 = vmatprep.mubr.bf16.mxu0 0
      %5140 = vmatmul.mubr.bf16.gmra.mxu0 %v5005
      %v5141 = vpop.f32.mrf.mxu0
      %v5142 = vadd.f32 0.0, %v5141
      %v5143 = vpop.f32.mrf.mxu0
      %v5144 = vpop.f32.mrf.mxu0
      %v5145 = vadd.f32 0.0, %v5144
      %v5146 = vpop.f32.mrf.mxu0
      %5147 = vmatprep.mubr.bf16.mxu0 0
      %5148 = vmatmul.mubr.bf16.gmra.mxu0 %v5006
      %v5149 = vpop.f32.mrf.mxu0
      %v5150 = vadd.f32 0.0, %v5149
      %v5151 = vpop.f32.mrf.mxu0
      %v5152 = vpop.f32.mrf.mxu0
      %v5153 = vadd.f32 0.0, %v5152
      %v5154 = vpop.f32.mrf.mxu0
      %5155 = vmatprep.mubr.bf16.mxu0 0
      %5156 = vmatmul.mubr.bf16.gmra.mxu0 %v5007
      %v5157 = vpop.f32.mrf.mxu0
      %v5158 = vadd.f32 0.0, %v5157
      %v5159 = vpop.f32.mrf.mxu0
      %v5160 = vpop.f32.mrf.mxu0
      %v5161 = vadd.f32 0.0, %v5160
      %v5162 = vpop.f32.mrf.mxu0
      %5163 = vmatprep.mubr.bf16.mxu0 0
      %5164 = vmatmul.mubr.bf16.gmra.mxu0 %v5008
      %v5165 = vpop.f32.mrf.mxu0
      %v5166 = vadd.f32 0.0, %v5165
      %v5167 = vpop.f32.mrf.mxu0
      %v5168 = vpop.f32.mrf.mxu0
      %v5169 = vadd.f32 0.0, %v5168
      %v5170 = vpop.f32.mrf.mxu0
      %5171 = vmatprep.mubr.bf16.mxu0 0
      %5172 = vmatmul.mubr.bf16.gmra.mxu0 %v5009
      %v5173 = vpop.f32.mrf.mxu0
      %v5174 = vadd.f32 0.0, %v5173
      %v5175 = vpop.f32.mrf.mxu0
      %v5176 = vpop.f32.mrf.mxu0
      %v5177 = vadd.f32 0.0, %v5176
      %v5178 = vpop.f32.mrf.mxu0
      %5179 = vmatprep.mubr.bf16.mxu0 0
      %5180 = vmatmul.mubr.bf16.gmra.mxu0 %v5010
      %v5181 = vpop.f32.mrf.mxu0
      %v5182 = vadd.f32 0.0, %v5181
      %v5183 = vpop.f32.mrf.mxu0
      %v5184 = vpop.f32.mrf.mxu0
      %v5185 = vadd.f32 0.0, %v5184
      %v5186 = vpop.f32.mrf.mxu0
      %5187 = vmatprep.mubr.bf16.mxu0 0
      %5188 = vmatmul.mubr.bf16.gmra.mxu0 %v5011
      %v5189 = vpop.f32.mrf.mxu0
      %v5190 = vadd.f32 0.0, %v5189
      %v5191 = vpop.f32.mrf.mxu0
      %v5192 = vpop.f32.mrf.mxu0
      %v5193 = vadd.f32 0.0, %v5192
      %v5194 = vpop.f32.mrf.mxu0
      %5195 = vmatprep.mubr.bf16.mxu0 0
      %5196 = vmatmul.mubr.bf16.gmra.mxu0 %v5012
      %v5197 = vpop.f32.mrf.mxu0
      %v5198 = vadd.f32 0.0, %v5197
      %v5199 = vpop.f32.mrf.mxu0
      %v5200 = vpop.f32.mrf.mxu0
      %v5201 = vadd.f32 0.0, %v5200
      %v5202 = vpop.f32.mrf.mxu0
      %5203 = vmatprep.mubr.bf16.mxu0 0
      %5204 = vmatmul.mubr.bf16.gmra.mxu0 %v5013
      %v5205 = vpop.f32.mrf.mxu0
      %v5206 = vadd.f32 0.0, %v5205
      %v5207 = vpop.f32.mrf.mxu0
      %v5208 = vpop.f32.mrf.mxu0
      %v5209 = vadd.f32 0.0, %v5208
      %v5210 = vpop.f32.mrf.mxu0
      %5211 = vmatprep.mubr.bf16.mxu0 0
      %5212 = vmatmul.mubr.bf16.gmra.mxu0 %v5014
      %v5213 = vpop.f32.mrf.mxu0
      %v5214 = vadd.f32 0.0, %v5213
      %v5215 = vpop.f32.mrf.mxu0
      %v5216 = vpop.f32.mrf.mxu0
      %v5217 = vadd.f32 0.0, %v5216
      %v5218 = vpop.f32.mrf.mxu0
      %5219 = vmatprep.mubr.bf16.mxu0 0
      %5220 = vmatmul.mubr.bf16.gmra.mxu0 %v5015
      %v5221 = vpop.f32.mrf.mxu0
      %v5222 = vadd.f32 0.0, %v5221
      %v5223 = vpop.f32.mrf.mxu0
      %v5224 = vpop.f32.mrf.mxu0
      %v5225 = vadd.f32 0.0, %v5224
      %v5226 = vpop.f32.mrf.mxu0
      %5227 = vmatprep.mubr.bf16.mxu0 0
      %5228 = vmatmul.mubr.bf16.gmra.mxu0 %v5016
      %v5229 = vpop.f32.mrf.mxu0
      %v5230 = vadd.f32 0.0, %v5229
      %v5231 = vpop.f32.mrf.mxu0
      %v5232 = vpop.f32.mrf.mxu0
      %v5233 = vadd.f32 0.0, %v5232
      %v5234 = vpop.f32.mrf.mxu0
      %5235 = vmatprep.mubr.bf16.mxu0 0
      %5236 = vmatmul.mubr.bf16.gmra.mxu0 %v5017
      %v5237 = vpop.f32.mrf.mxu0
      %v5238 = vadd.f32 0.0, %v5237
      %v5239 = vpop.f32.mrf.mxu0
      %v5240 = vpop.f32.mrf.mxu0
      %v5241 = vadd.f32 0.0, %v5240
      %v5242 = vpop.f32.mrf.mxu0
      %5243 = vdwg.mxu0
      %v5244 = vadd.f32 %v4937, %v5118
      %v5245 = vadd.f32 %v4938, %v5121
      %v5246 = vadd.f32 %v4939, %v5126
      %v5247 = vadd.f32 %v4940, %v5129
      %v5248 = vadd.f32 %v4941, %v5134
      %v5249 = vadd.f32 %v4942, %v5137
      %v5250 = vadd.f32 %v4943, %v5142
      %v5251 = vadd.f32 %v4944, %v5145
      %v5252 = vadd.f32 %v4945, %v5150
      %v5253 = vadd.f32 %v4946, %v5153
      %v5254 = vadd.f32 %v4947, %v5158
      %v5255 = vadd.f32 %v4948, %v5161
      %v5256 = vadd.f32 %v4949, %v5166
      %v5257 = vadd.f32 %v4950, %v5169
      %v5258 = vadd.f32 %v4951, %v5174
      %v5259 = vadd.f32 %v4952, %v5177
      %v5260 = vadd.f32 %v4953, %v5182
      %v5261 = vadd.f32 %v4954, %v5185
      %v5262 = vadd.f32 %v4955, %v5190
      %v5263 = vadd.f32 %v4956, %v5193
      %v5264 = vadd.f32 %v4957, %v5198
      %v5265 = vadd.f32 %v4958, %v5201
      %v5266 = vadd.f32 %v4959, %v5206
      %v5267 = vadd.f32 %v4960, %v5209
      %v5268 = vadd.f32 %v4961, %v5214
      %v5269 = vadd.f32 %v4962, %v5217
      %v5270 = vadd.f32 %v4963, %v5222
      %v5271 = vadd.f32 %v4964, %v5225
      %v5272 = vadd.f32 %v4965, %v5230
      %v5273 = vadd.f32 %v4966, %v5233
      %v5274 = vadd.f32 %v4967, %v5238
      %v5275 = vadd.f32 %v4968, %v5241
      %v5276 = vld [vmem:[%s4969 + $0x1] sm:$0xff]
      %v5277 = vld [vmem:[%s4969 + $0x9] sm:$0xff]
      %v5278 = vld [vmem:[%s4969 + $0x19] sm:$0xff]
      %v5279 = vld [vmem:[%s4969 + $0x21] sm:$0xff]
      %v5280 = vld [vmem:[%s4969 + $0x31] sm:$0xff]
      %v5281 = vld [vmem:[%s4969 + $0x39] sm:$0xff]
      %v5282 = vld [vmem:[%s4969 + $0x49] sm:$0xff]
      %v5283 = vld [vmem:[%s4969 + $0x51] sm:$0xff]
      %v5284 = vld [vmem:[%s4969 + $0x61] sm:$0xff]
      %v5285 = vld [vmem:[%s4969 + $0x69] sm:$0xff]
      %v5286 = vld [vmem:[%s4969 + $0x79] sm:$0xff]
      %v5287 = vld [vmem:[%s4969 + $0x81] sm:$0xff]
      %v5288 = vld [vmem:[%s4969 + $0x91] sm:$0xff]
      %v5289 = vld [vmem:[%s4969 + $0x99] sm:$0xff]
      %v5290 = vld [vmem:[%s4969 + $0xa9] sm:$0xff]
      %v5291 = vld [vmem:[%s4969 + $0xb1] sm:$0xff]
      %v5292 = vld [vmem:[%s4969 + $0xc1] sm:$0xff]
      %v5293 = vld [vmem:[%s4969 + $0xc9] sm:$0xff]
      %v5294 = vld [vmem:[%s4969 + $0xd9] sm:$0xff]
      %v5295 = vld [vmem:[%s4969 + $0xe1] sm:$0xff]
      %v5296 = vld [vmem:[%s4969 + $0xf1] sm:$0xff]
      %v5297 = vld [vmem:[%s4969 + $0xf9] sm:$0xff]
      %v5298 = vld [vmem:[%s4969 + $0x109] sm:$0xff]
      %v5299 = vld [vmem:[%s4969 + $0x111] sm:$0xff]
      %v5300 = vld [vmem:[%s4969 + $0x121] sm:$0xff]
      %v5301 = vld [vmem:[%s4969 + $0x129] sm:$0xff]
      %v5302 = vld [vmem:[%s4969 + $0x139] sm:$0xff]
      %v5303 = vld [vmem:[%s4969 + $0x141] sm:$0xff]
      %v5304 = vld [vmem:[%s4969 + $0x151] sm:$0xff]
      %v5305 = vld [vmem:[%s4969 + $0x159] sm:$0xff]
      %v5306 = vld [vmem:[%s4969 + $0x169] sm:$0xff]
      %v5307 = vld [vmem:[%s4969 + $0x171] sm:$0xff]
      %v5308 = vpack.c.bf16 %v5277, %v5276
      %v5309 = vpack.c.bf16 %v5279, %v5278
      %v5310 = vpack.c.bf16 %v5281, %v5280
      %v5311 = vpack.c.bf16 %v5283, %v5282
      %v5312 = vpack.c.bf16 %v5285, %v5284
      %v5313 = vpack.c.bf16 %v5287, %v5286
      %v5314 = vpack.c.bf16 %v5289, %v5288
      %v5315 = vpack.c.bf16 %v5291, %v5290
      %v5316 = vpack.c.bf16 %v5293, %v5292
      %v5317 = vpack.c.bf16 %v5295, %v5294
      %v5318 = vpack.c.bf16 %v5297, %v5296
      %v5319 = vpack.c.bf16 %v5299, %v5298
      %v5320 = vpack.c.bf16 %v5301, %v5300
      %v5321 = vpack.c.bf16 %v5303, %v5302
      %v5322 = vpack.c.bf16 %v5305, %v5304
      %v5323 = vpack.c.bf16 %v5307, %v5306
      %s5324 = scalar_lea.vmem %s3, 448
      %v5325 = vld [vmem:[%s5324] sm:$0xf]
      %v5326 = vld [vmem:[%s5324 + $0x4] sm:$0xf]
      %v5327 = vld [vmem:[%s5324 + $0x8] sm:$0xf]
      %v5328 = vld [vmem:[%s5324 + $0xc] sm:$0xf]
      %v5329 = vld [vmem:[%s5324 + $0x10] sm:$0xf]
      %v5330 = vld [vmem:[%s5324 + $0x14] sm:$0xf]
      %v5331 = vld [vmem:[%s5324 + $0x18] sm:$0xf]
      %v5332 = vld [vmem:[%s5324 + $0x1c] sm:$0xf]
      %v5333 = vld [vmem:[%s5324 + $0x20] sm:$0xf]
      %v5334 = vld [vmem:[%s5324 + $0x24] sm:$0xf]
      %v5335 = vld [vmem:[%s5324 + $0x28] sm:$0xf]
      %v5336 = vld [vmem:[%s5324 + $0x2c] sm:$0xf]
      %v5337 = vld [vmem:[%s5324 + $0x30] sm:$0xf]
      %v5338 = vld [vmem:[%s5324 + $0x34] sm:$0xf]
      %v5339 = vld [vmem:[%s5324 + $0x38] sm:$0xf]
      %v5340 = vld [vmem:[%s5324 + $0x3c] sm:$0xf]
      %v5357 = vunpack.c.l.b16 %v5325
      %v5358 = vunpack.c.l.b16 %v5326
      %v5359 = vunpack.c.l.b16 %v5327
      %v5360 = vunpack.c.l.b16 %v5328
      %v5361 = vunpack.c.l.b16 %v5329
      %v5362 = vunpack.c.l.b16 %v5330
      %v5363 = vunpack.c.l.b16 %v5331
      %v5364 = vunpack.c.l.b16 %v5332
      %v5365 = vunpack.c.l.b16 %v5333
      %v5366 = vunpack.c.l.b16 %v5334
      %v5367 = vunpack.c.l.b16 %v5335
      %v5368 = vunpack.c.l.b16 %v5336
      %v5369 = vunpack.c.l.b16 %v5337
      %v5370 = vunpack.c.l.b16 %v5338
      %v5371 = vunpack.c.l.b16 %v5339
      %v5372 = vunpack.c.l.b16 %v5340
      %v5373 = vpack.c.b16 %v5358, %v5357
      %v5374 = vpack.c.b16 %v5360, %v5359
      %v5375 = vpack.c.b16 %v5362, %v5361
      %v5376 = vpack.c.b16 %v5364, %v5363
      %v5377 = vpack.c.b16 %v5366, %v5365
      %v5378 = vpack.c.b16 %v5368, %v5367
      %v5379 = vpack.c.b16 %v5370, %v5369
      %v5380 = vpack.c.b16 %v5372, %v5371
      %5389 = vmatprep.subr.bf16.mxu0 0
      %5390 = vmatpush1.bf16.msra.mxu0 %v5380
      %5391 = vmatprep.subr.bf16.mxu0 0
      %5392 = vmatpush1.bf16.msra.mxu0 %v5379
      %5393 = vmatprep.subr.bf16.mxu0 0
      %5394 = vmatpush1.bf16.msra.mxu0 %v5378
      %5395 = vmatprep.subr.bf16.mxu0 0
      %5396 = vmatpush1.bf16.msra.mxu0 %v5377
      %5397 = vmatprep.subr.bf16.mxu0 0
      %5398 = vmatpush1.bf16.msra.mxu0 %v5376
      %5399 = vmatprep.subr.bf16.mxu0 0
      %5400 = vmatpush1.bf16.msra.mxu0 %v5375
      %5401 = vmatprep.subr.bf16.mxu0 0
      %5402 = vmatpush1.bf16.msra.mxu0 %v5374
      %5403 = vmatprep.subr.bf16.mxu0 0
      %5404 = vmatpush1.bf16.msra.mxu0 %v5373
      %5405 = vmatprep.subr.bf16.mxu0 0
      %5406 = vmatpush2.bf16.msra.mxu0 0
      %5407 = vmatprep.subr.bf16.mxu0 0
      %5408 = vmatpush2.bf16.msra.mxu0 0
      %5409 = vmatprep.subr.bf16.mxu0 0
      %5410 = vmatpush2.bf16.msra.mxu0 0
      %5411 = vmatprep.subr.bf16.mxu0 0
      %5412 = vmatpush2.bf16.msra.mxu0 0
      %5413 = vmatprep.subr.bf16.mxu0 0
      %5414 = vmatpush2.bf16.msra.mxu0 0
      %5415 = vmatprep.subr.bf16.mxu0 0
      %5416 = vmatpush2.bf16.msra.mxu0 0
      %5417 = vmatprep.subr.bf16.mxu0 0
      %5418 = vmatpush2.bf16.msra.mxu0 0
      %5419 = vmatprep.subr.bf16.mxu0 0
      %5420 = vmatpush2.bf16.msra.mxu0 0
      %5421 = vmatprep.mubr.bf16.mxu0 0
      %5422 = vmatmul.mubr.bf16.gmra.mxu0 %v5308
      %v5423 = vpop.f32.mrf.mxu0
      %v5424 = vadd.f32 0.0, %v5423
      %v5425 = vpop.f32.mrf.mxu0
      %v5426 = vpop.f32.mrf.mxu0
      %v5427 = vadd.f32 0.0, %v5426
      %v5428 = vpop.f32.mrf.mxu0
      %5429 = vmatprep.mubr.bf16.mxu0 0
      %5430 = vmatmul.mubr.bf16.gmra.mxu0 %v5309
      %v5431 = vpop.f32.mrf.mxu0
      %v5432 = vadd.f32 0.0, %v5431
      %v5433 = vpop.f32.mrf.mxu0
      %v5434 = vpop.f32.mrf.mxu0
      %v5435 = vadd.f32 0.0, %v5434
      %v5436 = vpop.f32.mrf.mxu0
      %5437 = vmatprep.mubr.bf16.mxu0 0
      %5438 = vmatmul.mubr.bf16.gmra.mxu0 %v5310
      %v5439 = vpop.f32.mrf.mxu0
      %v5440 = vadd.f32 0.0, %v5439
      %v5441 = vpop.f32.mrf.mxu0
      %v5442 = vpop.f32.mrf.mxu0
      %v5443 = vadd.f32 0.0, %v5442
      %v5444 = vpop.f32.mrf.mxu0
      %5445 = vmatprep.mubr.bf16.mxu0 0
      %5446 = vmatmul.mubr.bf16.gmra.mxu0 %v5311
      %v5447 = vpop.f32.mrf.mxu0
      %v5448 = vadd.f32 0.0, %v5447
      %v5449 = vpop.f32.mrf.mxu0
      %v5450 = vpop.f32.mrf.mxu0
      %v5451 = vadd.f32 0.0, %v5450
      %v5452 = vpop.f32.mrf.mxu0
      %5453 = vmatprep.mubr.bf16.mxu0 0
      %5454 = vmatmul.mubr.bf16.gmra.mxu0 %v5312
      %v5455 = vpop.f32.mrf.mxu0
      %v5456 = vadd.f32 0.0, %v5455
      %v5457 = vpop.f32.mrf.mxu0
      %v5458 = vpop.f32.mrf.mxu0
      %v5459 = vadd.f32 0.0, %v5458
      %v5460 = vpop.f32.mrf.mxu0
      %5461 = vmatprep.mubr.bf16.mxu0 0
      %5462 = vmatmul.mubr.bf16.gmra.mxu0 %v5313
      %v5463 = vpop.f32.mrf.mxu0
      %v5464 = vadd.f32 0.0, %v5463
      %v5465 = vpop.f32.mrf.mxu0
      %v5466 = vpop.f32.mrf.mxu0
      %v5467 = vadd.f32 0.0, %v5466
      %v5468 = vpop.f32.mrf.mxu0
      %5469 = vmatprep.mubr.bf16.mxu0 0
      %5470 = vmatmul.mubr.bf16.gmra.mxu0 %v5314
      %v5471 = vpop.f32.mrf.mxu0
      %v5472 = vadd.f32 0.0, %v5471
      %v5473 = vpop.f32.mrf.mxu0
      %v5474 = vpop.f32.mrf.mxu0
      %v5475 = vadd.f32 0.0, %v5474
      %v5476 = vpop.f32.mrf.mxu0
      %5477 = vmatprep.mubr.bf16.mxu0 0
      %5478 = vmatmul.mubr.bf16.gmra.mxu0 %v5315
      %v5479 = vpop.f32.mrf.mxu0
      %v5480 = vadd.f32 0.0, %v5479
      %v5481 = vpop.f32.mrf.mxu0
      %v5482 = vpop.f32.mrf.mxu0
      %v5483 = vadd.f32 0.0, %v5482
      %v5484 = vpop.f32.mrf.mxu0
      %5485 = vmatprep.mubr.bf16.mxu0 0
      %5486 = vmatmul.mubr.bf16.gmra.mxu0 %v5316
      %v5487 = vpop.f32.mrf.mxu0
      %v5488 = vadd.f32 0.0, %v5487
      %v5489 = vpop.f32.mrf.mxu0
      %v5490 = vpop.f32.mrf.mxu0
      %v5491 = vadd.f32 0.0, %v5490
      %v5492 = vpop.f32.mrf.mxu0
      %5493 = vmatprep.mubr.bf16.mxu0 0
      %5494 = vmatmul.mubr.bf16.gmra.mxu0 %v5317
      %v5495 = vpop.f32.mrf.mxu0
      %v5496 = vadd.f32 0.0, %v5495
      %v5497 = vpop.f32.mrf.mxu0
      %v5498 = vpop.f32.mrf.mxu0
      %v5499 = vadd.f32 0.0, %v5498
      %v5500 = vpop.f32.mrf.mxu0
      %5501 = vmatprep.mubr.bf16.mxu0 0
      %5502 = vmatmul.mubr.bf16.gmra.mxu0 %v5318
      %v5503 = vpop.f32.mrf.mxu0
      %v5504 = vadd.f32 0.0, %v5503
      %v5505 = vpop.f32.mrf.mxu0
      %v5506 = vpop.f32.mrf.mxu0
      %v5507 = vadd.f32 0.0, %v5506
      %v5508 = vpop.f32.mrf.mxu0
      %5509 = vmatprep.mubr.bf16.mxu0 0
      %5510 = vmatmul.mubr.bf16.gmra.mxu0 %v5319
      %v5511 = vpop.f32.mrf.mxu0
      %v5512 = vadd.f32 0.0, %v5511
      %v5513 = vpop.f32.mrf.mxu0
      %v5514 = vpop.f32.mrf.mxu0
      %v5515 = vadd.f32 0.0, %v5514
      %v5516 = vpop.f32.mrf.mxu0
      %5517 = vmatprep.mubr.bf16.mxu0 0
      %5518 = vmatmul.mubr.bf16.gmra.mxu0 %v5320
      %v5519 = vpop.f32.mrf.mxu0
      %v5520 = vadd.f32 0.0, %v5519
      %v5521 = vpop.f32.mrf.mxu0
      %v5522 = vpop.f32.mrf.mxu0
      %v5523 = vadd.f32 0.0, %v5522
      %v5524 = vpop.f32.mrf.mxu0
      %5525 = vmatprep.mubr.bf16.mxu0 0
      %5526 = vmatmul.mubr.bf16.gmra.mxu0 %v5321
      %v5527 = vpop.f32.mrf.mxu0
      %v5528 = vadd.f32 0.0, %v5527
      %v5529 = vpop.f32.mrf.mxu0
      %v5530 = vpop.f32.mrf.mxu0
      %v5531 = vadd.f32 0.0, %v5530
      %v5532 = vpop.f32.mrf.mxu0
      %5533 = vmatprep.mubr.bf16.mxu0 0
      %5534 = vmatmul.mubr.bf16.gmra.mxu0 %v5322
      %v5535 = vpop.f32.mrf.mxu0
      %v5536 = vadd.f32 0.0, %v5535
      %v5537 = vpop.f32.mrf.mxu0
      %v5538 = vpop.f32.mrf.mxu0
      %v5539 = vadd.f32 0.0, %v5538
      %v5540 = vpop.f32.mrf.mxu0
      %5541 = vmatprep.mubr.bf16.mxu0 0
      %5542 = vmatmul.mubr.bf16.gmra.mxu0 %v5323
      %v5543 = vpop.f32.mrf.mxu0
      %v5544 = vadd.f32 0.0, %v5543
      %v5545 = vpop.f32.mrf.mxu0
      %v5546 = vpop.f32.mrf.mxu0
      %v5547 = vadd.f32 0.0, %v5546
      %v5548 = vpop.f32.mrf.mxu0
      %5549 = vdwg.mxu0
      %v5550 = vadd.f32 %v5244, %v5424
      %v5551 = vadd.f32 %v5245, %v5427
      %v5552 = vadd.f32 %v5246, %v5432
      %v5553 = vadd.f32 %v5247, %v5435
      %v5554 = vadd.f32 %v5248, %v5440
      %v5555 = vadd.f32 %v5249, %v5443
      %v5556 = vadd.f32 %v5250, %v5448
      %v5557 = vadd.f32 %v5251, %v5451
      %v5558 = vadd.f32 %v5252, %v5456
      %v5559 = vadd.f32 %v5253, %v5459
      %v5560 = vadd.f32 %v5254, %v5464
      %v5561 = vadd.f32 %v5255, %v5467
      %v5562 = vadd.f32 %v5256, %v5472
      %v5563 = vadd.f32 %v5257, %v5475
      %v5564 = vadd.f32 %v5258, %v5480
      %v5565 = vadd.f32 %v5259, %v5483
      %v5566 = vadd.f32 %v5260, %v5488
      %v5567 = vadd.f32 %v5261, %v5491
      %v5568 = vadd.f32 %v5262, %v5496
      %v5569 = vadd.f32 %v5263, %v5499
      %v5570 = vadd.f32 %v5264, %v5504
      %v5571 = vadd.f32 %v5265, %v5507
      %v5572 = vadd.f32 %v5266, %v5512
      %v5573 = vadd.f32 %v5267, %v5515
      %v5574 = vadd.f32 %v5268, %v5520
      %v5575 = vadd.f32 %v5269, %v5523
      %v5576 = vadd.f32 %v5270, %v5528
      %v5577 = vadd.f32 %v5271, %v5531
      %v5578 = vadd.f32 %v5272, %v5536
      %v5579 = vadd.f32 %v5273, %v5539
      %v5580 = vadd.f32 %v5274, %v5544
      %v5581 = vadd.f32 %v5275, %v5547
      %v5582 = vld [vmem:[%s4969 + $0x2] sm:$0xff]
      %v5583 = vld [vmem:[%s4969 + $0xa] sm:$0xff]
      %v5584 = vld [vmem:[%s4969 + $0x1a] sm:$0xff]
      %v5585 = vld [vmem:[%s4969 + $0x22] sm:$0xff]
      %v5586 = vld [vmem:[%s4969 + $0x32] sm:$0xff]
      %v5587 = vld [vmem:[%s4969 + $0x3a] sm:$0xff]
      %v5588 = vld [vmem:[%s4969 + $0x4a] sm:$0xff]
      %v5589 = vld [vmem:[%s4969 + $0x52] sm:$0xff]
      %v5590 = vld [vmem:[%s4969 + $0x62] sm:$0xff]
      %v5591 = vld [vmem:[%s4969 + $0x6a] sm:$0xff]
      %v5592 = vld [vmem:[%s4969 + $0x7a] sm:$0xff]
      %v5593 = vld [vmem:[%s4969 + $0x82] sm:$0xff]
      %v5594 = vld [vmem:[%s4969 + $0x92] sm:$0xff]
      %v5595 = vld [vmem:[%s4969 + $0x9a] sm:$0xff]
      %v5596 = vld [vmem:[%s4969 + $0xaa] sm:$0xff]
      %v5597 = vld [vmem:[%s4969 + $0xb2] sm:$0xff]
      %v5598 = vld [vmem:[%s4969 + $0xc2] sm:$0xff]
      %v5599 = vld [vmem:[%s4969 + $0xca] sm:$0xff]
      %v5600 = vld [vmem:[%s4969 + $0xda] sm:$0xff]
      %v5601 = vld [vmem:[%s4969 + $0xe2] sm:$0xff]
      %v5602 = vld [vmem:[%s4969 + $0xf2] sm:$0xff]
      %v5603 = vld [vmem:[%s4969 + $0xfa] sm:$0xff]
      %v5604 = vld [vmem:[%s4969 + $0x10a] sm:$0xff]
      %v5605 = vld [vmem:[%s4969 + $0x112] sm:$0xff]
      %v5606 = vld [vmem:[%s4969 + $0x122] sm:$0xff]
      %v5607 = vld [vmem:[%s4969 + $0x12a] sm:$0xff]
      %v5608 = vld [vmem:[%s4969 + $0x13a] sm:$0xff]
      %v5609 = vld [vmem:[%s4969 + $0x142] sm:$0xff]
      %v5610 = vld [vmem:[%s4969 + $0x152] sm:$0xff]
      %v5611 = vld [vmem:[%s4969 + $0x15a] sm:$0xff]
      %v5612 = vld [vmem:[%s4969 + $0x16a] sm:$0xff]
      %v5613 = vld [vmem:[%s4969 + $0x172] sm:$0xff]
      %v5614 = vpack.c.bf16 %v5583, %v5582
      %v5615 = vpack.c.bf16 %v5585, %v5584
      %v5616 = vpack.c.bf16 %v5587, %v5586
      %v5617 = vpack.c.bf16 %v5589, %v5588
      %v5618 = vpack.c.bf16 %v5591, %v5590
      %v5619 = vpack.c.bf16 %v5593, %v5592
      %v5620 = vpack.c.bf16 %v5595, %v5594
      %v5621 = vpack.c.bf16 %v5597, %v5596
      %v5622 = vpack.c.bf16 %v5599, %v5598
      %v5623 = vpack.c.bf16 %v5601, %v5600
      %v5624 = vpack.c.bf16 %v5603, %v5602
      %v5625 = vpack.c.bf16 %v5605, %v5604
      %v5626 = vpack.c.bf16 %v5607, %v5606
      %v5627 = vpack.c.bf16 %v5609, %v5608
      %v5628 = vpack.c.bf16 %v5611, %v5610
      %v5629 = vpack.c.bf16 %v5613, %v5612
      %s5630 = scalar_lea.vmem %s3, 512
      %v5631 = vld [vmem:[%s5630] sm:$0xf]
      %v5632 = vld [vmem:[%s5630 + $0x4] sm:$0xf]
      %v5633 = vld [vmem:[%s5630 + $0x8] sm:$0xf]
      %v5634 = vld [vmem:[%s5630 + $0xc] sm:$0xf]
      %v5635 = vld [vmem:[%s5630 + $0x10] sm:$0xf]
      %v5636 = vld [vmem:[%s5630 + $0x14] sm:$0xf]
      %v5637 = vld [vmem:[%s5630 + $0x18] sm:$0xf]
      %v5638 = vld [vmem:[%s5630 + $0x1c] sm:$0xf]
      %v5639 = vld [vmem:[%s5630 + $0x20] sm:$0xf]
      %v5640 = vld [vmem:[%s5630 + $0x24] sm:$0xf]
      %v5641 = vld [vmem:[%s5630 + $0x28] sm:$0xf]
      %v5642 = vld [vmem:[%s5630 + $0x2c] sm:$0xf]
      %v5643 = vld [vmem:[%s5630 + $0x30] sm:$0xf]
      %v5644 = vld [vmem:[%s5630 + $0x34] sm:$0xf]
      %v5645 = vld [vmem:[%s5630 + $0x38] sm:$0xf]
      %v5646 = vld [vmem:[%s5630 + $0x3c] sm:$0xf]
      %v5663 = vunpack.c.l.b16 %v5631
      %v5664 = vunpack.c.l.b16 %v5632
      %v5665 = vunpack.c.l.b16 %v5633
      %v5666 = vunpack.c.l.b16 %v5634
      %v5667 = vunpack.c.l.b16 %v5635
      %v5668 = vunpack.c.l.b16 %v5636
      %v5669 = vunpack.c.l.b16 %v5637
      %v5670 = vunpack.c.l.b16 %v5638
      %v5671 = vunpack.c.l.b16 %v5639
      %v5672 = vunpack.c.l.b16 %v5640
      %v5673 = vunpack.c.l.b16 %v5641
      %v5674 = vunpack.c.l.b16 %v5642
      %v5675 = vunpack.c.l.b16 %v5643
      %v5676 = vunpack.c.l.b16 %v5644
      %v5677 = vunpack.c.l.b16 %v5645
      %v5678 = vunpack.c.l.b16 %v5646
      %v5679 = vpack.c.b16 %v5664, %v5663
      %v5680 = vpack.c.b16 %v5666, %v5665
      %v5681 = vpack.c.b16 %v5668, %v5667
      %v5682 = vpack.c.b16 %v5670, %v5669
      %v5683 = vpack.c.b16 %v5672, %v5671
      %v5684 = vpack.c.b16 %v5674, %v5673
      %v5685 = vpack.c.b16 %v5676, %v5675
      %v5686 = vpack.c.b16 %v5678, %v5677
      %5695 = vmatprep.subr.bf16.mxu0 0
      %5696 = vmatpush1.bf16.msra.mxu0 %v5686
      %5697 = vmatprep.subr.bf16.mxu0 0
      %5698 = vmatpush1.bf16.msra.mxu0 %v5685
      %5699 = vmatprep.subr.bf16.mxu0 0
      %5700 = vmatpush1.bf16.msra.mxu0 %v5684
      %5701 = vmatprep.subr.bf16.mxu0 0
      %5702 = vmatpush1.bf16.msra.mxu0 %v5683
      %5703 = vmatprep.subr.bf16.mxu0 0
      %5704 = vmatpush1.bf16.msra.mxu0 %v5682
      %5705 = vmatprep.subr.bf16.mxu0 0
      %5706 = vmatpush1.bf16.msra.mxu0 %v5681
      %5707 = vmatprep.subr.bf16.mxu0 0
      %5708 = vmatpush1.bf16.msra.mxu0 %v5680
      %5709 = vmatprep.subr.bf16.mxu0 0
      %5710 = vmatpush1.bf16.msra.mxu0 %v5679
      %5711 = vmatprep.subr.bf16.mxu0 0
      %5712 = vmatpush2.bf16.msra.mxu0 0
      %5713 = vmatprep.subr.bf16.mxu0 0
      %5714 = vmatpush2.bf16.msra.mxu0 0
      %5715 = vmatprep.subr.bf16.mxu0 0
      %5716 = vmatpush2.bf16.msra.mxu0 0
      %5717 = vmatprep.subr.bf16.mxu0 0
      %5718 = vmatpush2.bf16.msra.mxu0 0
      %5719 = vmatprep.subr.bf16.mxu0 0
      %5720 = vmatpush2.bf16.msra.mxu0 0
      %5721 = vmatprep.subr.bf16.mxu0 0
      %5722 = vmatpush2.bf16.msra.mxu0 0
      %5723 = vmatprep.subr.bf16.mxu0 0
      %5724 = vmatpush2.bf16.msra.mxu0 0
      %5725 = vmatprep.subr.bf16.mxu0 0
      %5726 = vmatpush2.bf16.msra.mxu0 0
      %5727 = vmatprep.mubr.bf16.mxu0 0
      %5728 = vmatmul.mubr.bf16.gmra.mxu0 %v5614
      %v5729 = vpop.f32.mrf.mxu0
      %v5730 = vadd.f32 0.0, %v5729
      %v5731 = vpop.f32.mrf.mxu0
      %v5732 = vpop.f32.mrf.mxu0
      %v5733 = vadd.f32 0.0, %v5732
      %v5734 = vpop.f32.mrf.mxu0
      %5735 = vmatprep.mubr.bf16.mxu0 0
      %5736 = vmatmul.mubr.bf16.gmra.mxu0 %v5615
      %v5737 = vpop.f32.mrf.mxu0
      %v5738 = vadd.f32 0.0, %v5737
      %v5739 = vpop.f32.mrf.mxu0
      %v5740 = vpop.f32.mrf.mxu0
      %v5741 = vadd.f32 0.0, %v5740
      %v5742 = vpop.f32.mrf.mxu0
      %5743 = vmatprep.mubr.bf16.mxu0 0
      %5744 = vmatmul.mubr.bf16.gmra.mxu0 %v5616
      %v5745 = vpop.f32.mrf.mxu0
      %v5746 = vadd.f32 0.0, %v5745
      %v5747 = vpop.f32.mrf.mxu0
      %v5748 = vpop.f32.mrf.mxu0
      %v5749 = vadd.f32 0.0, %v5748
      %v5750 = vpop.f32.mrf.mxu0
      %5751 = vmatprep.mubr.bf16.mxu0 0
      %5752 = vmatmul.mubr.bf16.gmra.mxu0 %v5617
      %v5753 = vpop.f32.mrf.mxu0
      %v5754 = vadd.f32 0.0, %v5753
      %v5755 = vpop.f32.mrf.mxu0
      %v5756 = vpop.f32.mrf.mxu0
      %v5757 = vadd.f32 0.0, %v5756
      %v5758 = vpop.f32.mrf.mxu0
      %5759 = vmatprep.mubr.bf16.mxu0 0
      %5760 = vmatmul.mubr.bf16.gmra.mxu0 %v5618
      %v5761 = vpop.f32.mrf.mxu0
      %v5762 = vadd.f32 0.0, %v5761
      %v5763 = vpop.f32.mrf.mxu0
      %v5764 = vpop.f32.mrf.mxu0
      %v5765 = vadd.f32 0.0, %v5764
      %v5766 = vpop.f32.mrf.mxu0
      %5767 = vmatprep.mubr.bf16.mxu0 0
      %5768 = vmatmul.mubr.bf16.gmra.mxu0 %v5619
      %v5769 = vpop.f32.mrf.mxu0
      %v5770 = vadd.f32 0.0, %v5769
      %v5771 = vpop.f32.mrf.mxu0
      %v5772 = vpop.f32.mrf.mxu0
      %v5773 = vadd.f32 0.0, %v5772
      %v5774 = vpop.f32.mrf.mxu0
      %5775 = vmatprep.mubr.bf16.mxu0 0
      %5776 = vmatmul.mubr.bf16.gmra.mxu0 %v5620
      %v5777 = vpop.f32.mrf.mxu0
      %v5778 = vadd.f32 0.0, %v5777
      %v5779 = vpop.f32.mrf.mxu0
      %v5780 = vpop.f32.mrf.mxu0
      %v5781 = vadd.f32 0.0, %v5780
      %v5782 = vpop.f32.mrf.mxu0
      %5783 = vmatprep.mubr.bf16.mxu0 0
      %5784 = vmatmul.mubr.bf16.gmra.mxu0 %v5621
      %v5785 = vpop.f32.mrf.mxu0
      %v5786 = vadd.f32 0.0, %v5785
      %v5787 = vpop.f32.mrf.mxu0
      %v5788 = vpop.f32.mrf.mxu0
      %v5789 = vadd.f32 0.0, %v5788
      %v5790 = vpop.f32.mrf.mxu0
      %5791 = vmatprep.mubr.bf16.mxu0 0
      %5792 = vmatmul.mubr.bf16.gmra.mxu0 %v5622
      %v5793 = vpop.f32.mrf.mxu0
      %v5794 = vadd.f32 0.0, %v5793
      %v5795 = vpop.f32.mrf.mxu0
      %v5796 = vpop.f32.mrf.mxu0
      %v5797 = vadd.f32 0.0, %v5796
      %v5798 = vpop.f32.mrf.mxu0
      %5799 = vmatprep.mubr.bf16.mxu0 0
      %5800 = vmatmul.mubr.bf16.gmra.mxu0 %v5623
      %v5801 = vpop.f32.mrf.mxu0
      %v5802 = vadd.f32 0.0, %v5801
      %v5803 = vpop.f32.mrf.mxu0
      %v5804 = vpop.f32.mrf.mxu0
      %v5805 = vadd.f32 0.0, %v5804
      %v5806 = vpop.f32.mrf.mxu0
      %5807 = vmatprep.mubr.bf16.mxu0 0
      %5808 = vmatmul.mubr.bf16.gmra.mxu0 %v5624
      %v5809 = vpop.f32.mrf.mxu0
      %v5810 = vadd.f32 0.0, %v5809
      %v5811 = vpop.f32.mrf.mxu0
      %v5812 = vpop.f32.mrf.mxu0
      %v5813 = vadd.f32 0.0, %v5812
      %v5814 = vpop.f32.mrf.mxu0
      %5815 = vmatprep.mubr.bf16.mxu0 0
      %5816 = vmatmul.mubr.bf16.gmra.mxu0 %v5625
      %v5817 = vpop.f32.mrf.mxu0
      %v5818 = vadd.f32 0.0, %v5817
      %v5819 = vpop.f32.mrf.mxu0
      %v5820 = vpop.f32.mrf.mxu0
      %v5821 = vadd.f32 0.0, %v5820
      %v5822 = vpop.f32.mrf.mxu0
      %5823 = vmatprep.mubr.bf16.mxu0 0
      %5824 = vmatmul.mubr.bf16.gmra.mxu0 %v5626
      %v5825 = vpop.f32.mrf.mxu0
      %v5826 = vadd.f32 0.0, %v5825
      %v5827 = vpop.f32.mrf.mxu0
      %v5828 = vpop.f32.mrf.mxu0
      %v5829 = vadd.f32 0.0, %v5828
      %v5830 = vpop.f32.mrf.mxu0
      %5831 = vmatprep.mubr.bf16.mxu0 0
      %5832 = vmatmul.mubr.bf16.gmra.mxu0 %v5627
      %v5833 = vpop.f32.mrf.mxu0
      %v5834 = vadd.f32 0.0, %v5833
      %v5835 = vpop.f32.mrf.mxu0
      %v5836 = vpop.f32.mrf.mxu0
      %v5837 = vadd.f32 0.0, %v5836
      %v5838 = vpop.f32.mrf.mxu0
      %5839 = vmatprep.mubr.bf16.mxu0 0
      %5840 = vmatmul.mubr.bf16.gmra.mxu0 %v5628
      %v5841 = vpop.f32.mrf.mxu0
      %v5842 = vadd.f32 0.0, %v5841
      %v5843 = vpop.f32.mrf.mxu0
      %v5844 = vpop.f32.mrf.mxu0
      %v5845 = vadd.f32 0.0, %v5844
      %v5846 = vpop.f32.mrf.mxu0
      %5847 = vmatprep.mubr.bf16.mxu0 0
      %5848 = vmatmul.mubr.bf16.gmra.mxu0 %v5629
      %v5849 = vpop.f32.mrf.mxu0
      %v5850 = vadd.f32 0.0, %v5849
      %v5851 = vpop.f32.mrf.mxu0
      %v5852 = vpop.f32.mrf.mxu0
      %v5853 = vadd.f32 0.0, %v5852
      %v5854 = vpop.f32.mrf.mxu0
      %5855 = vdwg.mxu0
      %v5856 = vadd.f32 %v5550, %v5730
      %v5857 = vadd.f32 %v5551, %v5733
      %v5858 = vadd.f32 %v5552, %v5738
      %v5859 = vadd.f32 %v5553, %v5741
      %v5860 = vadd.f32 %v5554, %v5746
      %v5861 = vadd.f32 %v5555, %v5749
      %v5862 = vadd.f32 %v5556, %v5754
      %v5863 = vadd.f32 %v5557, %v5757
      %v5864 = vadd.f32 %v5558, %v5762
      %v5865 = vadd.f32 %v5559, %v5765
      %v5866 = vadd.f32 %v5560, %v5770
      %v5867 = vadd.f32 %v5561, %v5773
      %v5868 = vadd.f32 %v5562, %v5778
      %v5869 = vadd.f32 %v5563, %v5781
      %v5870 = vadd.f32 %v5564, %v5786
      %v5871 = vadd.f32 %v5565, %v5789
      %v5872 = vadd.f32 %v5566, %v5794
      %v5873 = vadd.f32 %v5567, %v5797
      %v5874 = vadd.f32 %v5568, %v5802
      %v5875 = vadd.f32 %v5569, %v5805
      %v5876 = vadd.f32 %v5570, %v5810
      %v5877 = vadd.f32 %v5571, %v5813
      %v5878 = vadd.f32 %v5572, %v5818
      %v5879 = vadd.f32 %v5573, %v5821
      %v5880 = vadd.f32 %v5574, %v5826
      %v5881 = vadd.f32 %v5575, %v5829
      %v5882 = vadd.f32 %v5576, %v5834
      %v5883 = vadd.f32 %v5577, %v5837
      %v5884 = vadd.f32 %v5578, %v5842
      %v5885 = vadd.f32 %v5579, %v5845
      %v5886 = vadd.f32 %v5580, %v5850
      %v5887 = vadd.f32 %v5581, %v5853
      %v5888 = vld [vmem:[%s4] sm:$0x1]
      %v5890 = vlaneseq
      %v5891 = vshrl.u32 %v5890, 7
      %v5892 = vsub.s32 0, %v5891
      %v5893 = vrot.slane %v5888, %v5892
      %v5895 = vmul.f32 %v5856, %v5893
      %v5896 = vmul.f32 %v5857, %v5893
      %v5897 = vmul.f32 %v5858, %v5893
      %v5898 = vmul.f32 %v5859, %v5893
      %v5899 = vmul.f32 %v5860, %v5893
      %v5900 = vmul.f32 %v5861, %v5893
      %v5901 = vmul.f32 %v5862, %v5893
      %v5902 = vmul.f32 %v5863, %v5893
      %v5903 = vmul.f32 %v5864, %v5893
      %v5904 = vmul.f32 %v5865, %v5893
      %v5905 = vmul.f32 %v5866, %v5893
      %v5906 = vmul.f32 %v5867, %v5893
      %v5907 = vmul.f32 %v5868, %v5893
      %v5908 = vmul.f32 %v5869, %v5893
      %v5909 = vmul.f32 %v5870, %v5893
      %v5910 = vmul.f32 %v5871, %v5893
      %v5911 = vmul.f32 %v5872, %v5893
      %v5912 = vmul.f32 %v5873, %v5893
      %v5913 = vmul.f32 %v5874, %v5893
      %v5914 = vmul.f32 %v5875, %v5893
      %v5915 = vmul.f32 %v5876, %v5893
      %v5916 = vmul.f32 %v5877, %v5893
      %v5917 = vmul.f32 %v5878, %v5893
      %v5918 = vmul.f32 %v5879, %v5893
      %v5919 = vmul.f32 %v5880, %v5893
      %v5920 = vmul.f32 %v5881, %v5893
      %v5921 = vmul.f32 %v5882, %v5893
      %v5922 = vmul.f32 %v5883, %v5893
      %v5923 = vmul.f32 %v5884, %v5893
      %v5924 = vmul.f32 %v5885, %v5893
      %v5925 = vmul.f32 %v5886, %v5893
      %v5926 = vmul.f32 %v5887, %v5893
      %v5927 = vld [vmem:[%s5] sm:$0x1]
      %v5929 = vlaneseq
      %v5930 = vshrl.u32 %v5929, 7
      %v5931 = vsub.s32 0, %v5930
      %v5932 = vrot.slane %v5927, %v5931
      %v5934 = vadd.f32 %v5895, %v5932
      %v5935 = vadd.f32 %v5896, %v5932
      %v5936 = vadd.f32 %v5897, %v5932
      %v5937 = vadd.f32 %v5898, %v5932
      %v5938 = vadd.f32 %v5899, %v5932
      %v5939 = vadd.f32 %v5900, %v5932
      %v5940 = vadd.f32 %v5901, %v5932
      %v5941 = vadd.f32 %v5902, %v5932
      %v5942 = vadd.f32 %v5903, %v5932
      %v5943 = vadd.f32 %v5904, %v5932
      %v5944 = vadd.f32 %v5905, %v5932
      %v5945 = vadd.f32 %v5906, %v5932
      %v5946 = vadd.f32 %v5907, %v5932
      %v5947 = vadd.f32 %v5908, %v5932
      %v5948 = vadd.f32 %v5909, %v5932
      %v5949 = vadd.f32 %v5910, %v5932
      %v5950 = vadd.f32 %v5911, %v5932
      %v5951 = vadd.f32 %v5912, %v5932
      %v5952 = vadd.f32 %v5913, %v5932
      %v5953 = vadd.f32 %v5914, %v5932
      %v5954 = vadd.f32 %v5915, %v5932
      %v5955 = vadd.f32 %v5916, %v5932
      %v5956 = vadd.f32 %v5917, %v5932
      %v5957 = vadd.f32 %v5918, %v5932
      %v5958 = vadd.f32 %v5919, %v5932
      %v5959 = vadd.f32 %v5920, %v5932
      %v5960 = vadd.f32 %v5921, %v5932
      %v5961 = vadd.f32 %v5922, %v5932
      %v5962 = vadd.f32 %v5923, %v5932
      %v5963 = vadd.f32 %v5924, %v5932
      %v5964 = vadd.f32 %v5925, %v5932
      %v5965 = vadd.f32 %v5926, %v5932
      %v5966 = vmax.f32 %v5934, 0.0
      %v5967 = vmax.f32 %v5935, 0.0
      %v5968 = vmax.f32 %v5936, 0.0
      %v5969 = vmax.f32 %v5937, 0.0
      %v5970 = vmax.f32 %v5938, 0.0
      %v5971 = vmax.f32 %v5939, 0.0
      %v5972 = vmax.f32 %v5940, 0.0
      %v5973 = vmax.f32 %v5941, 0.0
      %v5974 = vmax.f32 %v5942, 0.0
      %v5975 = vmax.f32 %v5943, 0.0
      %v5976 = vmax.f32 %v5944, 0.0
      %v5977 = vmax.f32 %v5945, 0.0
      %v5978 = vmax.f32 %v5946, 0.0
      %v5979 = vmax.f32 %v5947, 0.0
      %v5980 = vmax.f32 %v5948, 0.0
      %v5981 = vmax.f32 %v5949, 0.0
      %v5982 = vmax.f32 %v5950, 0.0
      %v5983 = vmax.f32 %v5951, 0.0
      %v5984 = vmax.f32 %v5952, 0.0
      %v5985 = vmax.f32 %v5953, 0.0
      %v5986 = vmax.f32 %v5954, 0.0
      %v5987 = vmax.f32 %v5955, 0.0
      %v5988 = vmax.f32 %v5956, 0.0
      %v5989 = vmax.f32 %v5957, 0.0
      %v5990 = vmax.f32 %v5958, 0.0
      %v5991 = vmax.f32 %v5959, 0.0
      %v5992 = vmax.f32 %v5960, 0.0
      %v5993 = vmax.f32 %v5961, 0.0
      %v5994 = vmax.f32 %v5962, 0.0
      %v5995 = vmax.f32 %v5963, 0.0
      %v5996 = vmax.f32 %v5964, 0.0
      %v5997 = vmax.f32 %v5965, 0.0
      %5998 = vst [vmem:[%s251] sm:$0xff] %v5966
      %5999 = vst [vmem:[%s251 + $0x8] sm:$0xff] %v5967
      %6000 = vst [vmem:[%s251 + $0x10] sm:$0xff] %v5968
      %6001 = vst [vmem:[%s251 + $0x18] sm:$0xff] %v5969
      %6002 = vst [vmem:[%s251 + $0x20] sm:$0xff] %v5970
      %6003 = vst [vmem:[%s251 + $0x28] sm:$0xff] %v5971
      %6004 = vst [vmem:[%s251 + $0x30] sm:$0xff] %v5972
      %6005 = vst [vmem:[%s251 + $0x38] sm:$0xff] %v5973
      %6006 = vst [vmem:[%s251 + $0x40] sm:$0xff] %v5974
      %6007 = vst [vmem:[%s251 + $0x48] sm:$0xff] %v5975
      %6008 = vst [vmem:[%s251 + $0x50] sm:$0xff] %v5976
      %6009 = vst [vmem:[%s251 + $0x58] sm:$0xff] %v5977
      %6010 = vst [vmem:[%s251 + $0x60] sm:$0xff] %v5978
      %6011 = vst [vmem:[%s251 + $0x68] sm:$0xff] %v5979
      %6012 = vst [vmem:[%s251 + $0x70] sm:$0xff] %v5980
      %6013 = vst [vmem:[%s251 + $0x78] sm:$0xff] %v5981
      %6014 = vst [vmem:[%s251 + $0x80] sm:$0xff] %v5982
      %6015 = vst [vmem:[%s251 + $0x88] sm:$0xff] %v5983
      %6016 = vst [vmem:[%s251 + $0x90] sm:$0xff] %v5984
      %6017 = vst [vmem:[%s251 + $0x98] sm:$0xff] %v5985
      %6018 = vst [vmem:[%s251 + $0xa0] sm:$0xff] %v5986
      %6019 = vst [vmem:[%s251 + $0xa8] sm:$0xff] %v5987
      %6020 = vst [vmem:[%s251 + $0xb0] sm:$0xff] %v5988
      %6021 = vst [vmem:[%s251 + $0xb8] sm:$0xff] %v5989
      %6022 = vst [vmem:[%s251 + $0xc0] sm:$0xff] %v5990
      %6023 = vst [vmem:[%s251 + $0xc8] sm:$0xff] %v5991
      %6024 = vst [vmem:[%s251 + $0xd0] sm:$0xff] %v5992
      %6025 = vst [vmem:[%s251 + $0xd8] sm:$0xff] %v5993
      %6026 = vst [vmem:[%s251 + $0xe0] sm:$0xff] %v5994
      %6027 = vst [vmem:[%s251 + $0xe8] sm:$0xff] %v5995
      %6028 = vst [vmem:[%s251 + $0xf0] sm:$0xff] %v5996
      %6029 = vst [vmem:[%s251 + $0xf8] sm:$0xff] %v5997
      %p6030 = scmp.lt.s32.totalorder %s17, 1
      %s6031 = scalar_select %p6030, %s17, 1
      %s6032 = smul.addr %s6031, 32
      %s6033 = smul.addr %s6032, 8
      %s6034 = scalar_lea.vmem %s6, %s6033
      // Predicated region
      $region45: #{convblock_forward.1} parent=43 // pred_check
        %p6035 = pneg %p166
      $region46: #{convblock_forward.1} parent=43 // pred_check_branch
        %6037 = sbr.rel (%p6035) target = $region48
      $region47: #{convblock_forward.1} parent=43 // pred_region
        _
      $region48: #{convblock_forward.1} parent=43 // pred_fallthru
        _
    $region44: #{convblock_forward.1} parent=5 // pred_fallthru
      _
    %p6038 = scmp.le.s32.totalorder 2, %s12
    // Predicated region
    $region49: #{convblock_forward.1} parent=5 // pred_check
      %p6039 = pneg %p6038
    $region50: #{convblock_forward.1} parent=5 // pred_check_branch
      %6041 = sbr.rel (%p6039) target = $region52
    $region51: #{convblock_forward.1} parent=5 // pred_region
      %s6042 = ssub.s32 %s12, 2
      // Predicated region
      $region53: #{convblock_forward.1} parent=51 // pred_check
        %p6043 = pneg %p172
      $region54: #{convblock_forward.1} parent=51 // pred_check_branch
        %6045 = sbr.rel (%p6043) target = $region56
      $region55: #{convblock_forward.1} parent=51 // pred_region
        %p6046 = scmp.lt.s32.totalorder %s18, 1
        %s6047 = scalar_select %p6046, %s18, 1
        %s6048 = smul.addr %s6047, 32
        %s6049 = smul.addr %s6048, 8
        %s6050 = scalar_lea.vmem %s6, %s6049
      $region56: #{convblock_forward.1} parent=51 // pred_fallthru
        _
    $region52: #{convblock_forward.1} parent=5 // pred_fallthru
      _
  $region6: #{convblock_forward.1} parent=0 // loop_footer
    %s16 = sadd.s32 1, %s12
  $region7: #{convblock_forward.1} parent=0 // loop_footer_branch
    %11 = sbr.rel target = $region3
  $region8: #{convblock_forward.1} parent=0 // loop_exit
    _

</llo_original>
